<compile_context>
chip_gen: v7x
topology: tpu7x:2x2x1
jax: 0.10.0
libtpu: 0.0.40
codegen_flags: <defaults>
</compile_context>

<pallas_src>
import functools

import numpy as np
import jax
import jax.numpy as jnp
from jax import lax
from jax.experimental import pallas as pl
from jax.experimental.pallas import tpu as pltpu

LATENT = 20
_VMEM_LIMIT = 32 * 1024 * 1024     # explicit scoped-VMEM limit (safe on v5e/v6e/v7x)
_CONV_BATCH_TILE = 128             # batch rows per grid step for the conv/deconv kernels
_FC_BATCH_TILE = 256               # batch rows per grid step for the FC/latent kernel


# ---------------------------------------------------------------------------
# Kernel 1: fused encoder  (conv1 -> conv2 -> NHWC flatten), batch grid
# ---------------------------------------------------------------------------

def _encoder_kernel(x4_ref, w1_ref, b1_ref, w2_ref, b2_ref, o_ref):
    """x4_ref: (BT,8,8,16) bf16 = 4x4 space-to-depth of the zero-padded 28x28 image.
    o_ref:  (BT,49,32) bf16 = conv2 activations, rows=(h,w), cols=channels."""
    x4 = x4_ref[...]
    bt = x4.shape[0]
    # conv1: every 3x3/stride-2 tap lives inside a 2x2 window of 4x4 blocks -> K=64.
    p1 = jnp.concatenate(
        [x4[:, da:da + 7, db:db + 7, :] for da in (0, 1) for db in (0, 1)], axis=-1)
    g = jnp.dot(p1.reshape(bt * 49, 64), w1_ref[...],
                preferred_element_type=jnp.float32) + b1_ref[...]
    # g columns = 16*(2p+q)+co : conv1 output at spatial parity (p,q) of the 14x14 map.
    g = jnp.maximum(g, 0.0).astype(jnp.bfloat16).reshape(bt, 7, 7, 64)
    # zero parity-block in front == the conv2 padding row/col of the 14x14 map.
    g = jnp.concatenate([jnp.zeros((bt, 1, 7, 64), jnp.bfloat16), g], axis=1)
    g = jnp.concatenate([jnp.zeros((bt, 8, 1, 64), jnp.bfloat16), g], axis=2)
    # conv2: 2x2 window of parity blocks -> K=256 matmul.
    p2 = jnp.concatenate(
        [g[:, dm:dm + 7, dn:dn + 7, :] for dm in (0, 1) for dn in (0, 1)], axis=-1)
    h2 = jnp.dot(p2.reshape(bt * 49, 256), w2_ref[...],
                 preferred_element_type=jnp.float32) + b2_ref[...]
    h2 = jnp.maximum(h2, 0.0)
    o_ref[...] = h2.reshape(bt, 49, 32).astype(o_ref.dtype)


# ---------------------------------------------------------------------------
# Kernel 2: fused FC / latent stack, batch grid
#   enc_fc1(relu) -> merged [mean|log_var] -> reparameterize -> dec_fc1(relu) -> dec_fc2(relu)
# ---------------------------------------------------------------------------

def _fc_latent_kernel(h_ref, eps_ref, w1_ref, b1_ref, w2_ref, b2_ref,
                      w3_ref, b3_ref, w4_ref, b4_ref, mulv_ref, d2_ref, *, latent):
    h1 = jnp.dot(h_ref[...], w1_ref[...], preferred_element_type=jnp.float32) + b1_ref[...]
    h1 = jnp.maximum(h1, 0.0)
    ml = jnp.dot(h1.astype(jnp.bfloat16), w2_ref[...],
                 preferred_element_type=jnp.float32) + b2_ref[...]
    mu = ml[:, :latent]
    lv = ml[:, latent:]
    z = mu + eps_ref[...] * jnp.exp(0.5 * lv)          # f32 elementwise, exp on the EUP
    d1 = jnp.dot(z.astype(jnp.bfloat16), w3_ref[...],
                 preferred_element_type=jnp.float32) + b3_ref[...]
    d1 = jnp.maximum(d1, 0.0)
    d2 = jnp.dot(d1.astype(jnp.bfloat16), w4_ref[...],
                 preferred_element_type=jnp.float32) + b4_ref[...]
    d2 = jnp.maximum(d2, 0.0)
    mulv_ref[...] = ml                                  # single merged (BT,40) store
    d2_ref[...] = d2.astype(d2_ref.dtype)


# ---------------------------------------------------------------------------
# Kernel 3: fused decoder  (deconv1 -> deconv2, both de-zeroed), batch grid
# ---------------------------------------------------------------------------

def _decoder_kernel(d_ref, w1_ref, b1_ref, w2_ref, b2_ref, o_ref):
    """d_ref: (BT,7,7,32) bf16.  o_ref: (BT,7,7,16) f32 where channel = 4*(row%4)+(col%4)
    phase of the 28x28 slab (wrapper crops it to 25x25)."""
    d = d_ref[...]
    bt = d.shape[0]
    # deconv1: far-edge zero pad + 2x2 patches -> one K=128 matmul -> phase layout.
    dp = jnp.concatenate([d, jnp.zeros((bt, 1, 7, 32), d.dtype)], axis=1)
    dp = jnp.concatenate([dp, jnp.zeros((bt, 8, 1, 32), d.dtype)], axis=2)
    p1 = jnp.concatenate(
        [dp[:, di:di + 7, dj:dj + 7, :] for di in (0, 1) for dj in (0, 1)], axis=-1)
    y1 = jnp.dot(p1.reshape(bt * 49, 128), w1_ref[...],
                 preferred_element_type=jnp.float32) + b1_ref[...]
    # y1 columns = 16*(2u+v)+co : deconv1 output phases of the (uncropped) 14x14 map.
    y1 = jnp.maximum(y1, 0.0).astype(jnp.bfloat16).reshape(bt, 7, 7, 64)
    # deconv2 composed with deconv1's phase layout: far-edge pad + 2x2 patches, K=256.
    y1 = jnp.concatenate([y1, jnp.zeros((bt, 1, 7, 64), jnp.bfloat16)], axis=1)
    y1 = jnp.concatenate([y1, jnp.zeros((bt, 8, 1, 64), jnp.bfloat16)], axis=2)
    p2 = jnp.concatenate(
        [y1[:, dk:dk + 7, dl:dl + 7, :] for dk in (0, 1) for dl in (0, 1)], axis=-1)
    o = jnp.dot(p2.reshape(bt * 49, 256), w2_ref[...],
                preferred_element_type=jnp.float32) + b2_ref[...]
    o_ref[...] = jnp.tanh(o).reshape(bt, 7, 7, 16).astype(o_ref.dtype)


# ---------------------------------------------------------------------------
# pallas_call wrappers
# ---------------------------------------------------------------------------

def _batch_tile(batch, cap):
    """Full batch for tiny B; otherwise a multiple of 8 giving >= 2 grid steps
    (dual-TensorCore sharding on v7x), capped to bound VMEM."""
    if batch <= 8:
        return batch
    half = -(-batch // 2)
    return min(cap, max(8, -(-half // 8) * 8))


def _full_spec(arr):
    nd = arr.ndim
    return pl.BlockSpec(arr.shape, lambda *_: (0,) * nd)


def encoder_conv(x4, p, block_b):
    batch = x4.shape[0]
    return pl.pallas_call(
        _encoder_kernel,
        out_shape=jax.ShapeDtypeStruct((batch, 49, 32), jnp.bfloat16),
        grid=(pl.cdiv(batch, block_b),),
        in_specs=[
            pl.BlockSpec((block_b, 8, 8, 16), lambda i: (i, 0, 0, 0)),
            _full_spec(p["enc_conv1_w"]), _full_spec(p["enc_conv1_b"]),
            _full_spec(p["enc_conv2_w"]), _full_spec(p["enc_conv2_b"]),
        ],
        out_specs=pl.BlockSpec((block_b, 49, 32), lambda i: (i, 0, 0)),
        compiler_params=pltpu.CompilerParams(
            dimension_semantics=("parallel",), vmem_limit_bytes=_VMEM_LIMIT),
    )(x4, p["enc_conv1_w"], p["enc_conv1_b"], p["enc_conv2_w"], p["enc_conv2_b"])


def fc_latent(h, eps, p, block_b):
    batch = h.shape[0]
    return pl.pallas_call(
        functools.partial(_fc_latent_kernel, latent=LATENT),
        out_shape=(jax.ShapeDtypeStruct((batch, 2 * LATENT), jnp.float32),
                   jax.ShapeDtypeStruct((batch, 7 * 7 * 32), jnp.bfloat16)),
        grid=(pl.cdiv(batch, block_b),),
        in_specs=[
            pl.BlockSpec((block_b, 7 * 7 * 32), lambda i: (i, 0)),
            pl.BlockSpec((block_b, LATENT), lambda i: (i, 0)),
            _full_spec(p["enc_fc1_w"]), _full_spec(p["enc_fc1_b"]),
            _full_spec(p["enc_fc2_w"]), _full_spec(p["enc_fc2_b"]),
            _full_spec(p["dec_fc1_w"]), _full_spec(p["dec_fc1_b"]),
            _full_spec(p["dec_fc2_w"]), _full_spec(p["dec_fc2_b"]),
        ],
        out_specs=(pl.BlockSpec((block_b, 2 * LATENT), lambda i: (i, 0)),
                   pl.BlockSpec((block_b, 7 * 7 * 32), lambda i: (i, 0))),
        compiler_params=pltpu.CompilerParams(
            dimension_semantics=("parallel",), vmem_limit_bytes=_VMEM_LIMIT),
    )(h, eps, p["enc_fc1_w"], p["enc_fc1_b"], p["enc_fc2_w"], p["enc_fc2_b"],
      p["dec_fc1_w"], p["dec_fc1_b"], p["dec_fc2_w"], p["dec_fc2_b"])


def decoder_conv(d, p, block_b):
    batch = d.shape[0]
    return pl.pallas_call(
        _decoder_kernel,
        out_shape=jax.ShapeDtypeStruct((batch, 7, 7, 16), jnp.float32),
        grid=(pl.cdiv(batch, block_b),),
        in_specs=[
            pl.BlockSpec((block_b, 7, 7, 32), lambda i: (i, 0, 0, 0)),
            _full_spec(p["dec_conv1_w"]), _full_spec(p["dec_conv1_b"]),
            _full_spec(p["dec_conv2_w"]), _full_spec(p["dec_conv2_b"]),
        ],
        out_specs=pl.BlockSpec((block_b, 7, 7, 16), lambda i: (i, 0, 0, 0)),
        compiler_params=pltpu.CompilerParams(
            dimension_semantics=("parallel",), vmem_limit_bytes=_VMEM_LIMIT),
    )(d, p["dec_conv1_w"], p["dec_conv1_b"], p["dec_conv2_w"], p["dec_conv2_b"])


# ---------------------------------------------------------------------------
# Host-side (one-time / tiny) layout helpers
# ---------------------------------------------------------------------------

def _space_to_depth4(x):
    """(B,28,28) -> (B,8,8,16): pad to 32x32 (1 front = conv pad, 3 back = zeros) and
    fold 4x4 spatial blocks into the channel dim (channel index = 4*r + s)."""
    batch = x.shape[0]
    xp = jnp.pad(x, ((0, 0), (1, 3), (1, 3)))
    return xp.reshape(batch, 8, 4, 8, 4).transpose(0, 1, 3, 2, 4).reshape(batch, 8, 8, 16)


def _conv1_s2d_weight(w, b):
    """Conv2d(1->16,k3,s2,p1) on the 4x4 space-to-depth input.
    Rows: 16*(2da+db)+4r+s ; Cols: 16*(2p+q)+co (conv1 output spatial parity (p,q))."""
    w = np.asarray(w)
    cout = w.shape[0]
    mat = np.zeros((64, 4 * cout), np.float32)
    for da in range(2):
        for db in range(2):
            for r in range(4):
                for s in range(4):
                    f = 16 * (2 * da + db) + 4 * r + s
                    for p in range(2):
                        for q in range(2):
                            ki = 4 * da + r - 2 * p
                            kj = 4 * db + s - 2 * q
                            if 0 <= ki <= 2 and 0 <= kj <= 2:
                                c0 = cout * (2 * p + q)
                                mat[f, c0:c0 + cout] = w[:, 0, ki, kj]
    return mat, np.tile(np.asarray(b), 4).reshape(1, -1)


def _conv2_s2d_weight(w, b):
    """Conv2d(16->32,k3,s2,p1) consuming conv1's zero-padded parity layout.
    Rows: 64*(2dm+dn) + 16*(2p+q) + c ; Cols: conv2 output channel."""
    w = np.asarray(w)
    cout, cin = w.shape[0], w.shape[1]
    mat = np.zeros((16 * cin, cout), np.float32)
    for dm in range(2):
        for dn in range(2):
            for p in range(2):
                for q in range(2):
                    ki = 2 * dm + p - 1
                    kj = 2 * dn + q - 1
                    if 0 <= ki <= 2 and 0 <= kj <= 2:
                        r0 = 4 * cin * (2 * dm + dn) + cin * (2 * p + q)
                        mat[r0:r0 + cin, :] = w[:, :, ki, kj].T
    return mat, np.asarray(b).reshape(1, -1)


def _deconv1_phase_weight(w, b):
    """ConvTranspose2d(32->16,k3,s2,p1), de-zeroed.
    Rows: 32*(2di+dj)+ci (2x2 input taps); Cols: 16*(2u+v)+co (output phases)."""
    w = np.asarray(w)
    cin, cout = w.shape[0], w.shape[1]
    z = np.zeros((cin, cout), np.float32)
    g = lambda ki, kj: w[:, :, ki, kj]
    rows = [
        np.concatenate([g(1, 1), g(1, 2), g(2, 1), g(2, 2)], axis=1),  # tap x[i,   j  ]
        np.concatenate([z,       g(1, 0), z,       g(2, 0)], axis=1),  # tap x[i,   j+1]
        np.concatenate([z,       z,       g(0, 1), g(0, 2)], axis=1),  # tap x[i+1, j  ]
        np.concatenate([z,       z,       z,       g(0, 0)], axis=1),  # tap x[i+1, j+1]
    ]
    return np.concatenate(rows, axis=0), np.tile(np.asarray(b), 4).reshape(1, -1)


def _deconv2_composed_weight(w, b):
    """ConvTranspose2d(16->1,k3,s2,p1) composed with deconv1's phase layout.
    Rows: 64*(2dk+dl) + 16*(2u1+v1) + ci ; Cols: 4*t_r + t_c (4x4 output phases of the
    28x28 slab, later cropped to 25x25)."""
    w = np.asarray(w)
    cin = w.shape[0]
    mat = np.zeros((16 * cin, 16), np.float32)
    for dk in range(2):
        for dl in range(2):
            for u1 in range(2):
                for v1 in range(2):
                    r0 = 4 * cin * (2 * dk + dl) + cin * (2 * u1 + v1)
                    for t_r in range(4):
                        for t_c in range(4):
                            u2, v2 = t_r % 2, t_c % 2
                            di2 = 2 * dk + u1 - t_r // 2
                            dj2 = 2 * dl + v1 - t_c // 2
                            if 0 <= di2 <= u2 and 0 <= dj2 <= v2:
                                ki = 1 + u2 - 2 * di2
                                kj = 1 + v2 - 2 * dj2
                                mat[r0:r0 + cin, 4 * t_r + t_c] = w[:, 0, ki, kj]
    bias = np.full((1, 16), float(np.asarray(b).reshape(-1)[0]), np.float32)
    return mat, bias


def init_params(key):
    ks = jax.random.split(key, 9)
    n = lambda k, s, scale=0.05: scale * jax.random.normal(k, s, jnp.float32)
    return {
        "enc_conv1_w": n(ks[0], (16, 1, 3, 3)),   "enc_conv1_b": jnp.zeros((16,), jnp.float32),
        "enc_conv2_w": n(ks[1], (32, 16, 3, 3)),  "enc_conv2_b": jnp.zeros((32,), jnp.float32),
        "enc_fc1_w": n(ks[2], (7 * 7 * 32, 128)), "enc_fc1_b": jnp.zeros((128,), jnp.float32),
        "enc_fc2_mean_w": n(ks[3], (128, LATENT)),    "enc_fc2_mean_b": jnp.zeros((LATENT,), jnp.float32),
        "enc_fc2_log_var_w": n(ks[4], (128, LATENT)), "enc_fc2_log_var_b": jnp.zeros((LATENT,), jnp.float32),
        "dec_fc1_w": n(ks[5], (LATENT, 128)),     "dec_fc1_b": jnp.zeros((128,), jnp.float32),
        "dec_fc2_w": n(ks[6], (128, 7 * 7 * 32)), "dec_fc2_b": jnp.zeros((7 * 7 * 32,), jnp.float32),
        "dec_conv1_w": n(ks[7], (32, 16, 3, 3)),  "dec_conv1_b": jnp.zeros((16,), jnp.float32),
        "dec_conv2_w": n(ks[8], (16, 1, 3, 3)),   "dec_conv2_b": jnp.zeros((1,), jnp.float32),
    }


def prepare_params(raw):
    """One-time (outside jit) layout prep: space-to-depth conv matrices, phase-composed
    deconv matrices, PyTorch NCHW-flatten <-> NHWC-flatten permutations for the FC
    boundary layers, mean|log_var merge, bf16 weights + f32 (1,N) biases."""
    c2, s = 32, 7
    w1m, b1m = _conv1_s2d_weight(raw["enc_conv1_w"], raw["enc_conv1_b"])
    w2m, b2m = _conv2_s2d_weight(raw["enc_conv2_w"], raw["enc_conv2_b"])
    wd1, bd1 = _deconv1_phase_weight(raw["dec_conv1_w"], raw["dec_conv1_b"])
    wd2, bd2 = _deconv2_composed_weight(raw["dec_conv2_w"], raw["dec_conv2_b"])
    w_fc1 = np.asarray(raw["enc_fc1_w"]).reshape(c2, s, s, 128).transpose(1, 2, 0, 3)
    w_fc1 = w_fc1.reshape(c2 * s * s, 128)
    w_dfc2 = np.asarray(raw["dec_fc2_w"]).reshape(128, c2, s, s).transpose(0, 2, 3, 1)
    w_dfc2 = w_dfc2.reshape(128, c2 * s * s)
    b_dfc2 = np.asarray(raw["dec_fc2_b"]).reshape(c2, s, s).transpose(1, 2, 0).reshape(-1)
    w_fc2 = np.concatenate([np.asarray(raw["enc_fc2_mean_w"]),
                            np.asarray(raw["enc_fc2_log_var_w"])], axis=1)
    b_fc2 = np.concatenate([np.asarray(raw["enc_fc2_mean_b"]),
                            np.asarray(raw["enc_fc2_log_var_b"])])
    bf = lambda a: jnp.asarray(a, jnp.bfloat16)
    rowf = lambda a: jnp.asarray(np.asarray(a).reshape(1, -1), jnp.float32)
    return {
        "enc_conv1_w": bf(w1m), "enc_conv1_b": jnp.asarray(b1m, jnp.float32),
        "enc_conv2_w": bf(w2m), "enc_conv2_b": jnp.asarray(b2m, jnp.float32),
        "enc_fc1_w": bf(w_fc1), "enc_fc1_b": rowf(raw["enc_fc1_b"]),
        "enc_fc2_w": bf(w_fc2), "enc_fc2_b": rowf(b_fc2),
        "dec_fc1_w": bf(np.asarray(raw["dec_fc1_w"])), "dec_fc1_b": rowf(raw["dec_fc1_b"]),
        "dec_fc2_w": bf(w_dfc2), "dec_fc2_b": rowf(b_dfc2),
        "dec_conv1_w": bf(wd1), "dec_conv1_b": jnp.asarray(bd1, jnp.float32),
        "dec_conv2_w": bf(wd2), "dec_conv2_b": jnp.asarray(bd2, jnp.float32),
    }


# ---------------------------------------------------------------------------
# Forward pass (mirrors VAE.forward; 3 pallas_call launches total)
# ---------------------------------------------------------------------------

def vae_forward(p, x_nhwc, eps):
    batch = x_nhwc.shape[0]
    bt_conv = _batch_tile(batch, _CONV_BATCH_TILE)
    bt_fc = _batch_tile(batch, _FC_BATCH_TILE)
    # ---- encode ----
    x4 = _space_to_depth4(x_nhwc[..., 0].astype(jnp.bfloat16))      # (B,8,8,16), 1x data
    h2 = encoder_conv(x4, p, bt_conv)                               # (B,49,32) bf16
    h = h2.reshape(batch, 7 * 7 * 32)                               # NHWC flatten (tiny, XLA)
    # ---- fused FC / latent stack ----
    mulv, d2 = fc_latent(h, eps.astype(jnp.float32), p, bt_fc)      # (B,40),(B,1568)
    mu, log_var = mulv[:, :LATENT], mulv[:, LATENT:]
    # ---- decode ----
    d = d2.reshape(batch, 7, 7, 32)
    o = decoder_conv(d, p, bt_conv)                                 # (B,7,7,16) f32 phase slab
    recon = o.reshape(batch, 7, 7, 4, 4).transpose(0, 1, 3, 2, 4).reshape(batch, 28, 28)
    recon = recon[:, :25, :25][:, None, :, :]                       # crop + NCHW
    return recon, mu, log_var


# ---------------------------------------------------------------------------
# Pure-XLA f32 reference (exact PyTorch semantics) for the correctness check
# ---------------------------------------------------------------------------

def _deconv_ref(x, w, b):
    """PyTorch ConvTranspose2d(k=3, stride=2, padding=1, output_padding=0), NCHW."""
    bsz, cin, hh, ww = x.shape
    cout = w.shape[1]
    out = jnp.zeros((bsz, cout, 2 * hh + 1, 2 * ww + 1), jnp.float32)
    for ki in range(3):
        for kj in range(3):
            contrib = jnp.einsum("bihw,io->bohw", x, w[:, :, ki, kj])
            out = out.at[:, :, ki:ki + 2 * hh:2, kj:kj + 2 * ww:2].add(contrib)
    return out[:, :, 1:2 * hh, 1:2 * ww] + b.reshape(1, -1, 1, 1)


def vae_reference(raw, x_nhwc, eps):
    x = x_nhwc.transpose(0, 3, 1, 2)
    dn = ("NCHW", "OIHW", "NCHW")
    y = lax.conv_general_dilated(x, raw["enc_conv1_w"], (2, 2), ((1, 1), (1, 1)),
                                 dimension_numbers=dn)
    y = jax.nn.relu(y + raw["enc_conv1_b"].reshape(1, -1, 1, 1))
    y = lax.conv_general_dilated(y, raw["enc_conv2_w"], (2, 2), ((1, 1), (1, 1)),
                                 dimension_numbers=dn)
    y = jax.nn.relu(y + raw["enc_conv2_b"].reshape(1, -1, 1, 1))
    h = y.reshape(y.shape[0], -1)                                   # NCHW flatten, as PyTorch
    h = jax.nn.relu(h @ raw["enc_fc1_w"] + raw["enc_fc1_b"])
    mu = h @ raw["enc_fc2_mean_w"] + raw["enc_fc2_mean_b"]
    lv = h @ raw["enc_fc2_log_var_w"] + raw["enc_fc2_log_var_b"]
    z = mu + eps * jnp.exp(0.5 * lv)
    d = jax.nn.relu(z @ raw["dec_fc1_w"] + raw["dec_fc1_b"])
    d = jax.nn.relu(d @ raw["dec_fc2_w"] + raw["dec_fc2_b"])
    d = d.reshape(-1, 32, 7, 7)
    d = jax.nn.relu(_deconv_ref(d, raw["dec_conv1_w"], raw["dec_conv1_b"]))
    d = jnp.tanh(_deconv_ref(d, raw["dec_conv2_w"], raw["dec_conv2_b"]))
    return d, mu, lv


if __name__ == "__main__":
    key = jax.random.PRNGKey(0)
    pkey, xkey, ekey = jax.random.split(key, 3)
    raw = init_params(pkey)
    params = prepare_params(raw)          # one-time layout/merge/bf16 prep, outside jit

    B = 2
    x = jax.random.normal(xkey, (B, 28, 28, 1), jnp.float32)   # NHWC, as the module expects
    eps = jax.random.normal(ekey, (B, LATENT), jnp.float32)    # reparameterization noise

    recon, mu, log_var = jax.jit(vae_forward)(params, x, eps)
    jax.block_until_ready((recon, mu, log_var))

    assert recon.shape == (B, 1, 25, 25), recon.shape
    assert mu.shape == (B, LATENT) and log_var.shape == (B, LATENT)

    # Numerical check against the pure-XLA f32 reference (bf16-aware tolerance).
    recon_r, mu_r, lv_r = jax.jit(vae_reference)(raw, x, eps)
    jax.block_until_ready((recon_r, mu_r, lv_r))

    def _check(got, ref, name, rel=0.10, atol=1e-3):
        err = float(jnp.max(jnp.abs(got.astype(jnp.float32) - ref)))
        tol = rel * float(jnp.max(jnp.abs(ref))) + atol
        assert err <= tol, f"{name}: max|diff|={err:.4e} > tol={tol:.4e}"

    _check(recon, recon_r, "recon")
    _check(mu, mu_r, "mu")
    _check(log_var, lv_r, "log_var")
    print("KERNEL_OK")
</pallas_src>

<mosaic_0001>
module attributes {stable_mosaic.version = 11 : i64} {
  func.func @_encoder_kernel(%arg0: i32, %arg1: memref<2x8x8x16xbf16, #tpu.memory_space<vmem>>, %arg2: memref<64x64xbf16, #tpu.memory_space<vmem>>, %arg3: memref<1x64xf32, #tpu.memory_space<vmem>>, %arg4: memref<256x32xbf16, #tpu.memory_space<vmem>>, %arg5: memref<1x32xf32, #tpu.memory_space<vmem>>, %arg6: memref<2x49x32xbf16, #tpu.memory_space<vmem>>) attributes {dimension_semantics = [#tpu.dimension_semantics<parallel>], iteration_bounds = array<i64: 1>, scalar_prefetch = 0 : i64, scratch_operands = 0 : i64, tpu.core_type = #tpu.core_type<tc>, window_params = [{transform_indices = @transform_0, window_bounds = array<i64: 2, 8, 8, 16>}, {pipeline_mode = #tpu.pipeline_mode<synchronous>, transform_indices = @transform_1, window_bounds = array<i64: 64, 64>}, {pipeline_mode = #tpu.pipeline_mode<synchronous>, transform_indices = @transform_2, window_bounds = array<i64: 1, 64>}, {pipeline_mode = #tpu.pipeline_mode<synchronous>, transform_indices = @transform_3, window_bounds = array<i64: 256, 32>}, {pipeline_mode = #tpu.pipeline_mode<synchronous>, transform_indices = @transform_4, window_bounds = array<i64: 1, 32>}, {transform_indices = @transform_5, window_bounds = array<i64: 2, 49, 32>}]} {
    %c0 = arith.constant 0 : index
    %c0_0 = arith.constant 0 : index
    %c0_1 = arith.constant 0 : index
    %c0_2 = arith.constant 0 : index
    %0 = vector.load %arg1[%c0, %c0_0, %c0_1, %c0_2] : memref<2x8x8x16xbf16, #tpu.memory_space<vmem>>, vector<2x8x8x16xbf16>
    %1 = vector.extract_strided_slice %0 {offsets = [0, 0, 0, 0], sizes = [2, 7, 7, 16], strides = [1, 1, 1, 1]} : vector<2x8x8x16xbf16> to vector<2x7x7x16xbf16>
    %2 = vector.extract_strided_slice %0 {offsets = [0, 0, 1, 0], sizes = [2, 7, 7, 16], strides = [1, 1, 1, 1]} : vector<2x8x8x16xbf16> to vector<2x7x7x16xbf16>
    %3 = vector.extract_strided_slice %0 {offsets = [0, 1, 0, 0], sizes = [2, 7, 7, 16], strides = [1, 1, 1, 1]} : vector<2x8x8x16xbf16> to vector<2x7x7x16xbf16>
    %4 = vector.extract_strided_slice %0 {offsets = [0, 1, 1, 0], sizes = [2, 7, 7, 16], strides = [1, 1, 1, 1]} : vector<2x8x8x16xbf16> to vector<2x7x7x16xbf16>
    %5 = tpu.concatenate %1, %2, %3, %4 in 3 : vector<2x7x7x16xbf16>, vector<2x7x7x16xbf16>, vector<2x7x7x16xbf16>, vector<2x7x7x16xbf16> -> vector<2x7x7x64xbf16>
    %6 = vector.shape_cast %5 : vector<2x7x7x64xbf16> to vector<98x64xbf16>
    %c0_3 = arith.constant 0 : index
    %c0_4 = arith.constant 0 : index
    %7 = vector.load %arg2[%c0_3, %c0_4] : memref<64x64xbf16, #tpu.memory_space<vmem>>, vector<64x64xbf16>
    %cst = arith.constant dense<0.000000e+00> : vector<98x64xf32>
    %8 = tpu.matmul %6, %7, %cst {dimension_numbers = #tpu.dot_dimension_numbers<[1], [0], [0], [1], [0, 0, 1, 1], [], []>} : vector<98x64xbf16>, vector<64x64xbf16>, vector<98x64xf32> -> vector<98x64xf32>
    %c0_5 = arith.constant 0 : index
    %c0_6 = arith.constant 0 : index
    %9 = vector.load %arg3[%c0_5, %c0_6] : memref<1x64xf32, #tpu.memory_space<vmem>>, vector<1x64xf32>
    %10 = vector.broadcast %9 : vector<1x64xf32> to vector<98x64xf32>
    %11 = arith.addf %8, %10 : vector<98x64xf32>
    %cst_7 = arith.constant 0.000000e+00 : f32
    %12 = vector.broadcast %cst_7 : f32 to vector<98x64xf32>
    %13 = arith.maximumf %11, %12 : vector<98x64xf32>
    %14 = arith.truncf %13 : vector<98x64xf32> to vector<98x64xbf16>
    %15 = vector.shape_cast %14 : vector<98x64xbf16> to vector<2x7x7x64xbf16>
    %cst_8 = arith.constant 0.000000e+00 : bf16
    %16 = vector.broadcast %cst_8 : bf16 to vector<2x1x7x64xbf16>
    %17 = tpu.concatenate %16, %15 in 1 : vector<2x1x7x64xbf16>, vector<2x7x7x64xbf16> -> vector<2x8x7x64xbf16>
    %cst_9 = arith.constant 0.000000e+00 : bf16
    %18 = vector.broadcast %cst_9 : bf16 to vector<2x8x1x64xbf16>
    %19 = tpu.concatenate %18, %17 in 2 : vector<2x8x1x64xbf16>, vector<2x8x7x64xbf16> -> vector<2x8x8x64xbf16>
    %20 = vector.extract_strided_slice %19 {offsets = [0, 0, 0, 0], sizes = [2, 7, 7, 64], strides = [1, 1, 1, 1]} : vector<2x8x8x64xbf16> to vector<2x7x7x64xbf16>
    %21 = vector.extract_strided_slice %19 {offsets = [0, 0, 1, 0], sizes = [2, 7, 7, 64], strides = [1, 1, 1, 1]} : vector<2x8x8x64xbf16> to vector<2x7x7x64xbf16>
    %22 = vector.extract_strided_slice %19 {offsets = [0, 1, 0, 0], sizes = [2, 7, 7, 64], strides = [1, 1, 1, 1]} : vector<2x8x8x64xbf16> to vector<2x7x7x64xbf16>
    %23 = vector.extract_strided_slice %19 {offsets = [0, 1, 1, 0], sizes = [2, 7, 7, 64], strides = [1, 1, 1, 1]} : vector<2x8x8x64xbf16> to vector<2x7x7x64xbf16>
    %24 = tpu.concatenate %20, %21, %22, %23 in 3 : vector<2x7x7x64xbf16>, vector<2x7x7x64xbf16>, vector<2x7x7x64xbf16>, vector<2x7x7x64xbf16> -> vector<2x7x7x256xbf16>
    %25 = vector.shape_cast %24 : vector<2x7x7x256xbf16> to vector<98x256xbf16>
    %c0_10 = arith.constant 0 : index
    %c0_11 = arith.constant 0 : index
    %26 = vector.load %arg4[%c0_10, %c0_11] : memref<256x32xbf16, #tpu.memory_space<vmem>>, vector<256x32xbf16>
    %cst_12 = arith.constant dense<0.000000e+00> : vector<98x32xf32>
    %27 = tpu.matmul %25, %26, %cst_12 {dimension_numbers = #tpu.dot_dimension_numbers<[1], [0], [0], [1], [0, 0, 1, 1], [], []>} : vector<98x256xbf16>, vector<256x32xbf16>, vector<98x32xf32> -> vector<98x32xf32>
    %c0_13 = arith.constant 0 : index
    %c0_14 = arith.constant 0 : index
    %28 = vector.load %arg5[%c0_13, %c0_14] : memref<1x32xf32, #tpu.memory_space<vmem>>, vector<1x32xf32>
    %29 = vector.broadcast %28 : vector<1x32xf32> to vector<98x32xf32>
    %30 = arith.addf %27, %29 : vector<98x32xf32>
    %cst_15 = arith.constant 0.000000e+00 : f32
    %31 = vector.broadcast %cst_15 : f32 to vector<98x32xf32>
    %32 = arith.maximumf %30, %31 : vector<98x32xf32>
    %33 = vector.shape_cast %32 : vector<98x32xf32> to vector<2x49x32xf32>
    %34 = arith.truncf %33 : vector<2x49x32xf32> to vector<2x49x32xbf16>
    %c0_16 = arith.constant 0 : index
    %c0_17 = arith.constant 0 : index
    %c0_18 = arith.constant 0 : index
    %35 = vector.load %arg6[%c0_16, %c0_17, %c0_18] : memref<2x49x32xbf16, #tpu.memory_space<vmem>>, vector<2x49x32xbf16>
    tpu.vector_store %arg6[%c0_16, %c0_17, %c0_18], %34 {strides = array<i32>} : memref<2x49x32xbf16, #tpu.memory_space<vmem>>, vector<2x49x32xbf16>,
    return
  }
  func.func @transform_0(%arg0: i32) -> (i32, i32, i32, i32) {
    %c0_i32 = arith.constant 0 : i32
    %c0_i32_0 = arith.constant 0 : i32
    %c0_i32_1 = arith.constant 0 : i32
    %c0_i32_2 = arith.constant 0 : i32
    return %arg0, %c0_i32, %c0_i32_0, %c0_i32_1 : i32, i32, i32, i32
  }
  func.func @transform_1(%arg0: i32) -> (i32, i32) {
    %c0_i32 = arith.constant 0 : i32
    %c0_i32_0 = arith.constant 0 : i32
    %c0_i32_1 = arith.constant 0 : i32
    return %c0_i32, %c0_i32_0 : i32, i32
  }
  func.func @transform_2(%arg0: i32) -> (i32, i32) {
    %c0_i32 = arith.constant 0 : i32
    %c0_i32_0 = arith.constant 0 : i32
    %c0_i32_1 = arith.constant 0 : i32
    return %c0_i32, %c0_i32_0 : i32, i32
  }
  func.func @transform_3(%arg0: i32) -> (i32, i32) {
    %c0_i32 = arith.constant 0 : i32
    %c0_i32_0 = arith.constant 0 : i32
    %c0_i32_1 = arith.constant 0 : i32
    return %c0_i32, %c0_i32_0 : i32, i32
  }
  func.func @transform_4(%arg0: i32) -> (i32, i32) {
    %c0_i32 = arith.constant 0 : i32
    %c0_i32_0 = arith.constant 0 : i32
    %c0_i32_1 = arith.constant 0 : i32
    return %c0_i32, %c0_i32_0 : i32, i32
  }
  func.func @transform_5(%arg0: i32) -> (i32, i32, i32) {
    %c0_i32 = arith.constant 0 : i32
    %c0_i32_0 = arith.constant 0 : i32
    %c0_i32_1 = arith.constant 0 : i32
    return %arg0, %c0_i32, %c0_i32_0 : i32, i32, i32
  }
}

module attributes {stable_mosaic.version = 11 : i64} {
  func.func @_fc_latent_kernel(%arg0: i32, %arg1: memref<2x1568xbf16, #tpu.memory_space<vmem>>, %arg2: memref<2x20xf32, #tpu.memory_space<vmem>>, %arg3: memref<1568x128xbf16, #tpu.memory_space<vmem>>, %arg4: memref<1x128xf32, #tpu.memory_space<vmem>>, %arg5: memref<128x40xbf16, #tpu.memory_space<vmem>>, %arg6: memref<1x40xf32, #tpu.memory_space<vmem>>, %arg7: memref<20x128xbf16, #tpu.memory_space<vmem>>, %arg8: memref<1x128xf32, #tpu.memory_space<vmem>>, %arg9: memref<128x1568xbf16, #tpu.memory_space<vmem>>, %arg10: memref<1x1568xf32, #tpu.memory_space<vmem>>, %arg11: memref<2x40xf32, #tpu.memory_space<vmem>>, %arg12: memref<2x1568xbf16, #tpu.memory_space<vmem>>) attributes {dimension_semantics = [#tpu.dimension_semantics<parallel>], iteration_bounds = array<i64: 1>, scalar_prefetch = 0 : i64, scratch_operands = 0 : i64, tpu.core_type = #tpu.core_type<tc>, window_params = [{transform_indices = @transform_0, window_bounds = array<i64: 2, 1568>}, {transform_indices = @transform_1, window_bounds = array<i64: 2, 20>}, {pipeline_mode = #tpu.pipeline_mode<synchronous>, transform_indices = @transform_2, window_bounds = array<i64: 1568, 128>}, {pipeline_mode = #tpu.pipeline_mode<synchronous>, transform_indices = @transform_3, window_bounds = array<i64: 1, 128>}, {pipeline_mode = #tpu.pipeline_mode<synchronous>, transform_indices = @transform_4, window_bounds = array<i64: 128, 40>}, {pipeline_mode = #tpu.pipeline_mode<synchronous>, transform_indices = @transform_5, window_bounds = array<i64: 1, 40>}, {pipeline_mode = #tpu.pipeline_mode<synchronous>, transform_indices = @transform_6, window_bounds = array<i64: 20, 128>}, {pipeline_mode = #tpu.pipeline_mode<synchronous>, transform_indices = @transform_7, window_bounds = array<i64: 1, 128>}, {pipeline_mode = #tpu.pipeline_mode<synchronous>, transform_indices = @transform_8, window_bounds = array<i64: 128, 1568>}, {pipeline_mode = #tpu.pipeline_mode<synchronous>, transform_indices = @transform_9, window_bounds = array<i64: 1, 1568>}, {transform_indices = @transform_10, window_bounds = array<i64: 2, 40>}, {transform_indices = @transform_11, window_bounds = array<i64: 2, 1568>}]} {
    %c0 = arith.constant 0 : index
    %c0_0 = arith.constant 0 : index
    %0 = vector.load %arg1[%c0, %c0_0] : memref<2x1568xbf16, #tpu.memory_space<vmem>>, vector<2x1568xbf16>
    %c0_1 = arith.constant 0 : index
    %c0_2 = arith.constant 0 : index
    %1 = vector.load %arg3[%c0_1, %c0_2] : memref<1568x128xbf16, #tpu.memory_space<vmem>>, vector<1568x128xbf16>
    %cst = arith.constant dense<0.000000e+00> : vector<2x128xf32>
    %2 = tpu.matmul %0, %1, %cst {dimension_numbers = #tpu.dot_dimension_numbers<[1], [0], [0], [1], [0, 0, 1, 1], [], []>} : vector<2x1568xbf16>, vector<1568x128xbf16>, vector<2x128xf32> -> vector<2x128xf32>
    %c0_3 = arith.constant 0 : index
    %c0_4 = arith.constant 0 : index
    %3 = vector.load %arg4[%c0_3, %c0_4] : memref<1x128xf32, #tpu.memory_space<vmem>>, vector<1x128xf32>
    %4 = vector.broadcast %3 : vector<1x128xf32> to vector<2x128xf32>
    %5 = arith.addf %2, %4 : vector<2x128xf32>
    %cst_5 = arith.constant 0.000000e+00 : f32
    %6 = vector.broadcast %cst_5 : f32 to vector<2x128xf32>
    %7 = arith.maximumf %5, %6 : vector<2x128xf32>
    %8 = arith.truncf %7 : vector<2x128xf32> to vector<2x128xbf16>
    %c0_6 = arith.constant 0 : index
    %c0_7 = arith.constant 0 : index
    %9 = vector.load %arg5[%c0_6, %c0_7] : memref<128x40xbf16, #tpu.memory_space<vmem>>, vector<128x40xbf16>
    %cst_8 = arith.constant dense<0.000000e+00> : vector<2x40xf32>
    %10 = tpu.matmul %8, %9, %cst_8 {dimension_numbers = #tpu.dot_dimension_numbers<[1], [0], [0], [1], [0, 0, 1, 1], [], []>} : vector<2x128xbf16>, vector<128x40xbf16>, vector<2x40xf32> -> vector<2x40xf32>
    %c0_9 = arith.constant 0 : index
    %c0_10 = arith.constant 0 : index
    %11 = vector.load %arg6[%c0_9, %c0_10] : memref<1x40xf32, #tpu.memory_space<vmem>>, vector<1x40xf32>
    %12 = vector.broadcast %11 : vector<1x40xf32> to vector<2x40xf32>
    %13 = arith.addf %10, %12 : vector<2x40xf32>
    %14 = vector.extract_strided_slice %13 {offsets = [0, 0], sizes = [2, 20], strides = [1, 1]} : vector<2x40xf32> to vector<2x20xf32>
    %15 = vector.extract_strided_slice %13 {offsets = [0, 20], sizes = [2, 20], strides = [1, 1]} : vector<2x40xf32> to vector<2x20xf32>
    %c0_11 = arith.constant 0 : index
    %c0_12 = arith.constant 0 : index
    %16 = vector.load %arg2[%c0_11, %c0_12] : memref<2x20xf32, #tpu.memory_space<vmem>>, vector<2x20xf32>
    %cst_13 = arith.constant 5.000000e-01 : f32
    %17 = vector.broadcast %cst_13 : f32 to vector<2x20xf32>
    %18 = arith.mulf %17, %15 : vector<2x20xf32>
    %19 = math.exp %18 : vector<2x20xf32>
    %20 = arith.mulf %16, %19 : vector<2x20xf32>
    %21 = arith.addf %14, %20 : vector<2x20xf32>
    %22 = arith.truncf %21 : vector<2x20xf32> to vector<2x20xbf16>
    %c0_14 = arith.constant 0 : index
    %c0_15 = arith.constant 0 : index
    %23 = vector.load %arg7[%c0_14, %c0_15] : memref<20x128xbf16, #tpu.memory_space<vmem>>, vector<20x128xbf16>
    %cst_16 = arith.constant dense<0.000000e+00> : vector<2x128xf32>
    %24 = tpu.matmul %22, %23, %cst_16 {dimension_numbers = #tpu.dot_dimension_numbers<[1], [0], [0], [1], [0, 0, 1, 1], [], []>} : vector<2x20xbf16>, vector<20x128xbf16>, vector<2x128xf32> -> vector<2x128xf32>
    %c0_17 = arith.constant 0 : index
    %c0_18 = arith.constant 0 : index
    %25 = vector.load %arg8[%c0_17, %c0_18] : memref<1x128xf32, #tpu.memory_space<vmem>>, vector<1x128xf32>
    %26 = vector.broadcast %25 : vector<1x128xf32> to vector<2x128xf32>
    %27 = arith.addf %24, %26 : vector<2x128xf32>
    %cst_19 = arith.constant 0.000000e+00 : f32
    %28 = vector.broadcast %cst_19 : f32 to vector<2x128xf32>
    %29 = arith.maximumf %27, %28 : vector<2x128xf32>
    %30 = arith.truncf %29 : vector<2x128xf32> to vector<2x128xbf16>
    %c0_20 = arith.constant 0 : index
    %c0_21 = arith.constant 0 : index
    %31 = vector.load %arg9[%c0_20, %c0_21] : memref<128x1568xbf16, #tpu.memory_space<vmem>>, vector<128x1568xbf16>
    %cst_22 = arith.constant dense<0.000000e+00> : vector<2x1568xf32>
    %32 = tpu.matmul %30, %31, %cst_22 {dimension_numbers = #tpu.dot_dimension_numbers<[1], [0], [0], [1], [0, 0, 1, 1], [], []>} : vector<2x128xbf16>, vector<128x1568xbf16>, vector<2x1568xf32> -> vector<2x1568xf32>
    %c0_23 = arith.constant 0 : index
    %c0_24 = arith.constant 0 : index
    %33 = vector.load %arg10[%c0_23, %c0_24] : memref<1x1568xf32, #tpu.memory_space<vmem>>, vector<1x1568xf32>
    %34 = vector.broadcast %33 : vector<1x1568xf32> to vector<2x1568xf32>
    %35 = arith.addf %32, %34 : vector<2x1568xf32>
    %cst_25 = arith.constant 0.000000e+00 : f32
    %36 = vector.broadcast %cst_25 : f32 to vector<2x1568xf32>
    %37 = arith.maximumf %35, %36 : vector<2x1568xf32>
    %c0_26 = arith.constant 0 : index
    %c0_27 = arith.constant 0 : index
    %38 = vector.load %arg11[%c0_26, %c0_27] : memref<2x40xf32, #tpu.memory_space<vmem>>, vector<2x40xf32>
    tpu.vector_store %arg11[%c0_26, %c0_27], %13 {strides = array<i32>} : memref<2x40xf32, #tpu.memory_space<vmem>>, vector<2x40xf32>,
    %39 = arith.truncf %37 : vector<2x1568xf32> to vector<2x1568xbf16>
    %c0_28 = arith.constant 0 : index
    %c0_29 = arith.constant 0 : index
    %40 = vector.load %arg12[%c0_28, %c0_29] : memref<2x1568xbf16, #tpu.memory_space<vmem>>, vector<2x1568xbf16>
    tpu.vector_store %arg12[%c0_28, %c0_29], %39 {strides = array<i32>} : memref<2x1568xbf16, #tpu.memory_space<vmem>>, vector<2x1568xbf16>,
    return
  }
  func.func @transform_0(%arg0: i32) -> (i32, i32) {
    %c0_i32 = arith.constant 0 : i32
    %c0_i32_0 = arith.constant 0 : i32
    return %arg0, %c0_i32 : i32, i32
  }
  func.func @transform_1(%arg0: i32) -> (i32, i32) {
    %c0_i32 = arith.constant 0 : i32
    %c0_i32_0 = arith.constant 0 : i32
    return %arg0, %c0_i32 : i32, i32
  }
  func.func @transform_2(%arg0: i32) -> (i32, i32) {
    %c0_i32 = arith.constant 0 : i32
    %c0_i32_0 = arith.constant 0 : i32
    %c0_i32_1 = arith.constant 0 : i32
    return %c0_i32, %c0_i32_0 : i32, i32
  }
  func.func @transform_3(%arg0: i32) -> (i32, i32) {
    %c0_i32 = arith.constant 0 : i32
    %c0_i32_0 = arith.constant 0 : i32
    %c0_i32_1 = arith.constant 0 : i32
    return %c0_i32, %c0_i32_0 : i32, i32
  }
  func.func @transform_4(%arg0: i32) -> (i32, i32) {
    %c0_i32 = arith.constant 0 : i32
    %c0_i32_0 = arith.constant 0 : i32
    %c0_i32_1 = arith.constant 0 : i32
    return %c0_i32, %c0_i32_0 : i32, i32
  }
  func.func @transform_5(%arg0: i32) -> (i32, i32) {
    %c0_i32 = arith.constant 0 : i32
    %c0_i32_0 = arith.constant 0 : i32
    %c0_i32_1 = arith.constant 0 : i32
    return %c0_i32, %c0_i32_0 : i32, i32
  }
  func.func @transform_6(%arg0: i32) -> (i32, i32) {
    %c0_i32 = arith.constant 0 : i32
    %c0_i32_0 = arith.constant 0 : i32
    %c0_i32_1 = arith.constant 0 : i32
    return %c0_i32, %c0_i32_0 : i32, i32
  }
  func.func @transform_7(%arg0: i32) -> (i32, i32) {
    %c0_i32 = arith.constant 0 : i32
    %c0_i32_0 = arith.constant 0 : i32
    %c0_i32_1 = arith.constant 0 : i32
    return %c0_i32, %c0_i32_0 : i32, i32
  }
  func.func @transform_8(%arg0: i32) -> (i32, i32) {
    %c0_i32 = arith.constant 0 : i32
    %c0_i32_0 = arith.constant 0 : i32
    %c0_i32_1 = arith.constant 0 : i32
    return %c0_i32, %c0_i32_0 : i32, i32
  }
  func.func @transform_9(%arg0: i32) -> (i32, i32) {
    %c0_i32 = arith.constant 0 : i32
    %c0_i32_0 = arith.constant 0 : i32
    %c0_i32_1 = arith.constant 0 : i32
    return %c0_i32, %c0_i32_0 : i32, i32
  }
  func.func @transform_10(%arg0: i32) -> (i32, i32) {
    %c0_i32 = arith.constant 0 : i32
    %c0_i32_0 = arith.constant 0 : i32
    return %arg0, %c0_i32 : i32, i32
  }
  func.func @transform_11(%arg0: i32) -> (i32, i32) {
    %c0_i32 = arith.constant 0 : i32
    %c0_i32_0 = arith.constant 0 : i32
    return %arg0, %c0_i32 : i32, i32
  }
}

module attributes {stable_mosaic.version = 11 : i64} {
  func.func @_decoder_kernel(%arg0: i32, %arg1: memref<2x7x7x32xbf16, #tpu.memory_space<vmem>>, %arg2: memref<128x64xbf16, #tpu.memory_space<vmem>>, %arg3: memref<1x64xf32, #tpu.memory_space<vmem>>, %arg4: memref<256x16xbf16, #tpu.memory_space<vmem>>, %arg5: memref<1x16xf32, #tpu.memory_space<vmem>>, %arg6: memref<2x7x7x16xf32, #tpu.memory_space<vmem>>) attributes {dimension_semantics = [#tpu.dimension_semantics<parallel>], iteration_bounds = array<i64: 1>, scalar_prefetch = 0 : i64, scratch_operands = 0 : i64, tpu.core_type = #tpu.core_type<tc>, window_params = [{transform_indices = @transform_0, window_bounds = array<i64: 2, 7, 7, 32>}, {pipeline_mode = #tpu.pipeline_mode<synchronous>, transform_indices = @transform_1, window_bounds = array<i64: 128, 64>}, {pipeline_mode = #tpu.pipeline_mode<synchronous>, transform_indices = @transform_2, window_bounds = array<i64: 1, 64>}, {pipeline_mode = #tpu.pipeline_mode<synchronous>, transform_indices = @transform_3, window_bounds = array<i64: 256, 16>}, {pipeline_mode = #tpu.pipeline_mode<synchronous>, transform_indices = @transform_4, window_bounds = array<i64: 1, 16>}, {transform_indices = @transform_5, window_bounds = array<i64: 2, 7, 7, 16>}]} {
    %c0 = arith.constant 0 : index
    %c0_0 = arith.constant 0 : index
    %c0_1 = arith.constant 0 : index
    %c0_2 = arith.constant 0 : index
    %0 = vector.load %arg1[%c0, %c0_0, %c0_1, %c0_2] : memref<2x7x7x32xbf16, #tpu.memory_space<vmem>>, vector<2x7x7x32xbf16>
    %cst = arith.constant 0.000000e+00 : bf16
    %1 = vector.broadcast %cst : bf16 to vector<2x1x7x32xbf16>
    %2 = tpu.concatenate %0, %1 in 1 : vector<2x7x7x32xbf16>, vector<2x1x7x32xbf16> -> vector<2x8x7x32xbf16>
    %cst_3 = arith.constant 0.000000e+00 : bf16
    %3 = vector.broadcast %cst_3 : bf16 to vector<2x8x1x32xbf16>
    %4 = tpu.concatenate %2, %3 in 2 : vector<2x8x7x32xbf16>, vector<2x8x1x32xbf16> -> vector<2x8x8x32xbf16>
    %5 = vector.extract_strided_slice %4 {offsets = [0, 0, 0, 0], sizes = [2, 7, 7, 32], strides = [1, 1, 1, 1]} : vector<2x8x8x32xbf16> to vector<2x7x7x32xbf16>
    %6 = vector.extract_strided_slice %4 {offsets = [0, 0, 1, 0], sizes = [2, 7, 7, 32], strides = [1, 1, 1, 1]} : vector<2x8x8x32xbf16> to vector<2x7x7x32xbf16>
    %7 = vector.extract_strided_slice %4 {offsets = [0, 1, 0, 0], sizes = [2, 7, 7, 32], strides = [1, 1, 1, 1]} : vector<2x8x8x32xbf16> to vector<2x7x7x32xbf16>
    %8 = vector.extract_strided_slice %4 {offsets = [0, 1, 1, 0], sizes = [2, 7, 7, 32], strides = [1, 1, 1, 1]} : vector<2x8x8x32xbf16> to vector<2x7x7x32xbf16>
    %9 = tpu.concatenate %5, %6, %7, %8 in 3 : vector<2x7x7x32xbf16>, vector<2x7x7x32xbf16>, vector<2x7x7x32xbf16>, vector<2x7x7x32xbf16> -> vector<2x7x7x128xbf16>
    %10 = vector.shape_cast %9 : vector<2x7x7x128xbf16> to vector<98x128xbf16>
    %c0_4 = arith.constant 0 : index
    %c0_5 = arith.constant 0 : index
    %11 = vector.load %arg2[%c0_4, %c0_5] : memref<128x64xbf16, #tpu.memory_space<vmem>>, vector<128x64xbf16>
    %cst_6 = arith.constant dense<0.000000e+00> : vector<98x64xf32>
    %12 = tpu.matmul %10, %11, %cst_6 {dimension_numbers = #tpu.dot_dimension_numbers<[1], [0], [0], [1], [0, 0, 1, 1], [], []>} : vector<98x128xbf16>, vector<128x64xbf16>, vector<98x64xf32> -> vector<98x64xf32>
    %c0_7 = arith.constant 0 : index
    %c0_8 = arith.constant 0 : index
    %13 = vector.load %arg3[%c0_7, %c0_8] : memref<1x64xf32, #tpu.memory_space<vmem>>, vector<1x64xf32>
    %14 = vector.broadcast %13 : vector<1x64xf32> to vector<98x64xf32>
    %15 = arith.addf %12, %14 : vector<98x64xf32>
    %cst_9 = arith.constant 0.000000e+00 : f32
    %16 = vector.broadcast %cst_9 : f32 to vector<98x64xf32>
    %17 = arith.maximumf %15, %16 : vector<98x64xf32>
    %18 = arith.truncf %17 : vector<98x64xf32> to vector<98x64xbf16>
    %19 = vector.shape_cast %18 : vector<98x64xbf16> to vector<2x7x7x64xbf16>
    %cst_10 = arith.constant 0.000000e+00 : bf16
    %20 = vector.broadcast %cst_10 : bf16 to vector<2x1x7x64xbf16>
    %21 = tpu.concatenate %19, %20 in 1 : vector<2x7x7x64xbf16>, vector<2x1x7x64xbf16> -> vector<2x8x7x64xbf16>
    %cst_11 = arith.constant 0.000000e+00 : bf16
    %22 = vector.broadcast %cst_11 : bf16 to vector<2x8x1x64xbf16>
    %23 = tpu.concatenate %21, %22 in 2 : vector<2x8x7x64xbf16>, vector<2x8x1x64xbf16> -> vector<2x8x8x64xbf16>
    %24 = vector.extract_strided_slice %23 {offsets = [0, 0, 0, 0], sizes = [2, 7, 7, 64], strides = [1, 1, 1, 1]} : vector<2x8x8x64xbf16> to vector<2x7x7x64xbf16>
    %25 = vector.extract_strided_slice %23 {offsets = [0, 0, 1, 0], sizes = [2, 7, 7, 64], strides = [1, 1, 1, 1]} : vector<2x8x8x64xbf16> to vector<2x7x7x64xbf16>
    %26 = vector.extract_strided_slice %23 {offsets = [0, 1, 0, 0], sizes = [2, 7, 7, 64], strides = [1, 1, 1, 1]} : vector<2x8x8x64xbf16> to vector<2x7x7x64xbf16>
    %27 = vector.extract_strided_slice %23 {offsets = [0, 1, 1, 0], sizes = [2, 7, 7, 64], strides = [1, 1, 1, 1]} : vector<2x8x8x64xbf16> to vector<2x7x7x64xbf16>
    %28 = tpu.concatenate %24, %25, %26, %27 in 3 : vector<2x7x7x64xbf16>, vector<2x7x7x64xbf16>, vector<2x7x7x64xbf16>, vector<2x7x7x64xbf16> -> vector<2x7x7x256xbf16>
    %29 = vector.shape_cast %28 : vector<2x7x7x256xbf16> to vector<98x256xbf16>
    %c0_12 = arith.constant 0 : index
    %c0_13 = arith.constant 0 : index
    %30 = vector.load %arg4[%c0_12, %c0_13] : memref<256x16xbf16, #tpu.memory_space<vmem>>, vector<256x16xbf16>
    %cst_14 = arith.constant dense<0.000000e+00> : vector<98x16xf32>
    %31 = tpu.matmul %29, %30, %cst_14 {dimension_numbers = #tpu.dot_dimension_numbers<[1], [0], [0], [1], [0, 0, 1, 1], [], []>} : vector<98x256xbf16>, vector<256x16xbf16>, vector<98x16xf32> -> vector<98x16xf32>
    %c0_15 = arith.constant 0 : index
    %c0_16 = arith.constant 0 : index
    %32 = vector.load %arg5[%c0_15, %c0_16] : memref<1x16xf32, #tpu.memory_space<vmem>>, vector<1x16xf32>
    %33 = vector.broadcast %32 : vector<1x16xf32> to vector<98x16xf32>
    %34 = arith.addf %31, %33 : vector<98x16xf32>
    %35 = math.tanh %34 : vector<98x16xf32>
    %36 = vector.shape_cast %35 : vector<98x16xf32> to vector<2x7x7x16xf32>
    %c0_17 = arith.constant 0 : index
    %c0_18 = arith.constant 0 : index
    %c0_19 = arith.constant 0 : index
    %c0_20 = arith.constant 0 : index
    %37 = vector.load %arg6[%c0_17, %c0_18, %c0_19, %c0_20] : memref<2x7x7x16xf32, #tpu.memory_space<vmem>>, vector<2x7x7x16xf32>
    tpu.vector_store %arg6[%c0_17, %c0_18, %c0_19, %c0_20], %36 {strides = array<i32>} : memref<2x7x7x16xf32, #tpu.memory_space<vmem>>, vector<2x7x7x16xf32>,
    return
  }
  func.func @transform_0(%arg0: i32) -> (i32, i32, i32, i32) {
    %c0_i32 = arith.constant 0 : i32
    %c0_i32_0 = arith.constant 0 : i32
    %c0_i32_1 = arith.constant 0 : i32
    %c0_i32_2 = arith.constant 0 : i32
    return %arg0, %c0_i32, %c0_i32_0, %c0_i32_1 : i32, i32, i32, i32
  }
  func.func @transform_1(%arg0: i32) -> (i32, i32) {
    %c0_i32 = arith.constant 0 : i32
    %c0_i32_0 = arith.constant 0 : i32
    %c0_i32_1 = arith.constant 0 : i32
    return %c0_i32, %c0_i32_0 : i32, i32
  }
  func.func @transform_2(%arg0: i32) -> (i32, i32) {
    %c0_i32 = arith.constant 0 : i32
    %c0_i32_0 = arith.constant 0 : i32
    %c0_i32_1 = arith.constant 0 : i32
    return %c0_i32, %c0_i32_0 : i32, i32
  }
  func.func @transform_3(%arg0: i32) -> (i32, i32) {
    %c0_i32 = arith.constant 0 : i32
    %c0_i32_0 = arith.constant 0 : i32
    %c0_i32_1 = arith.constant 0 : i32
    return %c0_i32, %c0_i32_0 : i32, i32
  }
  func.func @transform_4(%arg0: i32) -> (i32, i32) {
    %c0_i32 = arith.constant 0 : i32
    %c0_i32_0 = arith.constant 0 : i32
    %c0_i32_1 = arith.constant 0 : i32
    return %c0_i32, %c0_i32_0 : i32, i32
  }
  func.func @transform_5(%arg0: i32) -> (i32, i32, i32, i32) {
    %c0_i32 = arith.constant 0 : i32
    %c0_i32_0 = arith.constant 0 : i32
    %c0_i32_1 = arith.constant 0 : i32
    %c0_i32_2 = arith.constant 0 : i32
    return %arg0, %c0_i32, %c0_i32_0, %c0_i32_1 : i32, i32, i32, i32
  }
}

</mosaic_0001>

<llo_original>
// kernel: vae_forward.4
$region0: #{vae_forward.4}
  #allocation0 [shape = 'u32[]', space=smem, size = 0x4, offset = 0x4, fixed_abs, tag = 'smem constant byte address 0x4 - core index']
  #allocation1 [shape = 'u32[144,128]{1,0:T(1,128)}', space=vmem, size = 0x12000, scoped, tag = 'internal scratch']
  %s0 = inlined_call_operand.vmem [shape: bf16[2,1568], index: 0, kind: input, shape index: {}]
  %s1 = inlined_call_operand.vmem [shape: f32[2,20], index: 1, kind: input, shape index: {}]
  %s2 = inlined_call_operand.vmem [shape: bf16[1568,128], index: 2, kind: input, shape index: {}]
  %s3 = inlined_call_operand.vmem [shape: f32[1,128], index: 3, kind: input, shape index: {}]
  %s4 = inlined_call_operand.vmem [shape: bf16[128,40], index: 4, kind: input, shape index: {}]
  %s5 = inlined_call_operand.vmem [shape: f32[1,40], index: 5, kind: input, shape index: {}]
  %s6 = inlined_call_operand.vmem [shape: bf16[20,128], index: 6, kind: input, shape index: {}]
  %s7 = inlined_call_operand.vmem [shape: f32[1,128], index: 7, kind: input, shape index: {}]
  %s8 = inlined_call_operand.vmem [shape: bf16[128,1568], index: 8, kind: input, shape index: {}]
  %s9 = inlined_call_operand.vmem [shape: f32[1,1568], index: 9, kind: input, shape index: {}]
  %s10 = inlined_call_operand.vmem [shape: f32[2,40], index: 10, kind: output, shape index: {0}]
  %s11 = inlined_call_operand.vmem [shape: bf16[2,1568], index: 11, kind: output, shape index: {1}]
  %12 = xla_tuple %s10, %s11
  %s13 = sld [smem:[#allocation0]]
  $region58: #{vae_forward.4} parent=0
    _
  %s15 = ssub.s32 1, %s13
  %s16 = scalar_select 0, %s15, %s13
  // Predicated region
  $region2: #{vae_forward.4} parent=0 // pred_check
    _
  $region3: #{vae_forward.4} parent=0 // pred_check_branch
    %18 = sbr.rel (0) target = $region5
  $region4: #{vae_forward.4} parent=0 // pred_region
    _
  $region5: #{vae_forward.4} parent=0 // pred_fallthru
    _
  // Predicated region
  $region6: #{vae_forward.4} parent=0 // pred_check
    _
  $region7: #{vae_forward.4} parent=0 // pred_check_branch
    %20 = sbr.rel (0) target = $region9
  $region8: #{vae_forward.4} parent=0 // pred_region
    _
  $region9: #{vae_forward.4} parent=0 // pred_fallthru
    _
  // Predicated region
  $region10: #{vae_forward.4} parent=0 // pred_check
    _
  $region11: #{vae_forward.4} parent=0 // pred_check_branch
    %22 = sbr.rel (0) target = $region13
  $region12: #{vae_forward.4} parent=0 // pred_region
    _
  $region13: #{vae_forward.4} parent=0 // pred_fallthru
    _
  // Predicated region
  $region14: #{vae_forward.4} parent=0 // pred_check
    _
  $region15: #{vae_forward.4} parent=0 // pred_check_branch
    %24 = sbr.rel (0) target = $region17
  $region16: #{vae_forward.4} parent=0 // pred_region
    _
  $region17: #{vae_forward.4} parent=0 // pred_fallthru
    _
  // Predicated region
  $region18: #{vae_forward.4} parent=0 // pred_check
    _
  $region19: #{vae_forward.4} parent=0 // pred_check_branch
    %26 = sbr.rel (0) target = $region21
  $region20: #{vae_forward.4} parent=0 // pred_region
    _
  $region21: #{vae_forward.4} parent=0 // pred_fallthru
    _
  // Predicated region
  $region22: #{vae_forward.4} parent=0 // pred_check
    _
  $region23: #{vae_forward.4} parent=0 // pred_check_branch
    %28 = sbr.rel (0) target = $region25
  $region24: #{vae_forward.4} parent=0 // pred_region
    _
  $region25: #{vae_forward.4} parent=0 // pred_fallthru
    _
  // Predicated region
  $region26: #{vae_forward.4} parent=0 // pred_check
    _
  $region27: #{vae_forward.4} parent=0 // pred_check_branch
    %30 = sbr.rel (0) target = $region29
  $region28: #{vae_forward.4} parent=0 // pred_region
    _
  $region29: #{vae_forward.4} parent=0 // pred_fallthru
    _
  // Predicated region
  $region30: #{vae_forward.4} parent=0 // pred_check
    _
  $region31: #{vae_forward.4} parent=0 // pred_check_branch
    %32 = sbr.rel (0) target = $region33
  $region32: #{vae_forward.4} parent=0 // pred_region
    _
  $region33: #{vae_forward.4} parent=0 // pred_fallthru
    _
  // Predicated region
  $region34: #{vae_forward.4} parent=0 // pred_check
    _
  $region35: #{vae_forward.4} parent=0 // pred_check_branch
    %34 = sbr.rel (0) target = $region37
  $region36: #{vae_forward.4} parent=0 // pred_region
    _
  $region37: #{vae_forward.4} parent=0 // pred_fallthru
    _
  // Predicated region
  $region38: #{vae_forward.4} parent=0 // pred_check
    _
  $region39: #{vae_forward.4} parent=0 // pred_check_branch
    %36 = sbr.rel (0) target = $region41
  $region40: #{vae_forward.4} parent=0 // pred_region
    _
  $region41: #{vae_forward.4} parent=0 // pred_fallthru
    _
  %v38 = vld [vmem:[%s0] sm:$0xff]
  %v39 = vld [vmem:[%s0 + $0x8] sm:$0x1f]
  %v40 = vld [vmem:[%s2] sm:$0xf]
  %v41 = vld [vmem:[%s2 + $0x4] sm:$0xf]
  %v42 = vld [vmem:[%s2 + $0x8] sm:$0xf]
  %v43 = vld [vmem:[%s2 + $0xc] sm:$0xf]
  %v44 = vld [vmem:[%s2 + $0x10] sm:$0xf]
  %v45 = vld [vmem:[%s2 + $0x14] sm:$0xf]
  %v46 = vld [vmem:[%s2 + $0x18] sm:$0xf]
  %v47 = vld [vmem:[%s2 + $0x1c] sm:$0xf]
  %v48 = vld [vmem:[%s2 + $0x20] sm:$0xf]
  %v49 = vld [vmem:[%s2 + $0x24] sm:$0xf]
  %v50 = vld [vmem:[%s2 + $0x28] sm:$0xf]
  %v51 = vld [vmem:[%s2 + $0x2c] sm:$0xf]
  %v52 = vld [vmem:[%s2 + $0x30] sm:$0xf]
  %v53 = vld [vmem:[%s2 + $0x34] sm:$0xf]
  %v54 = vld [vmem:[%s2 + $0x38] sm:$0xf]
  %v55 = vld [vmem:[%s2 + $0x3c] sm:$0xf]
  %v56 = vld [vmem:[%s2 + $0x40] sm:$0xf]
  %v57 = vld [vmem:[%s2 + $0x44] sm:$0xf]
  %v58 = vld [vmem:[%s2 + $0x48] sm:$0xf]
  %v59 = vld [vmem:[%s2 + $0x4c] sm:$0xf]
  %v60 = vld [vmem:[%s2 + $0x50] sm:$0xf]
  %v61 = vld [vmem:[%s2 + $0x54] sm:$0xf]
  %v62 = vld [vmem:[%s2 + $0x58] sm:$0xf]
  %v63 = vld [vmem:[%s2 + $0x5c] sm:$0xf]
  %v64 = vld [vmem:[%s2 + $0x60] sm:$0xf]
  %v65 = vld [vmem:[%s2 + $0x64] sm:$0xf]
  %v66 = vld [vmem:[%s2 + $0x68] sm:$0xf]
  %v67 = vld [vmem:[%s2 + $0x6c] sm:$0xf]
  %v68 = vld [vmem:[%s2 + $0x70] sm:$0xf]
  %v69 = vld [vmem:[%s2 + $0x74] sm:$0xf]
  %v70 = vld [vmem:[%s2 + $0x78] sm:$0xf]
  %v71 = vld [vmem:[%s2 + $0x7c] sm:$0xf]
  %v72 = vld [vmem:[%s2 + $0x80] sm:$0xf]
  %v73 = vld [vmem:[%s2 + $0x84] sm:$0xf]
  %v74 = vld [vmem:[%s2 + $0x88] sm:$0xf]
  %v75 = vld [vmem:[%s2 + $0x8c] sm:$0xf]
  %v76 = vld [vmem:[%s2 + $0x90] sm:$0xf]
  %v77 = vld [vmem:[%s2 + $0x94] sm:$0xf]
  %v78 = vld [vmem:[%s2 + $0x98] sm:$0xf]
  %v79 = vld [vmem:[%s2 + $0x9c] sm:$0xf]
  %v80 = vld [vmem:[%s2 + $0xa0] sm:$0xf]
  %v81 = vld [vmem:[%s2 + $0xa4] sm:$0xf]
  %v82 = vld [vmem:[%s2 + $0xa8] sm:$0xf]
  %v83 = vld [vmem:[%s2 + $0xac] sm:$0xf]
  %v84 = vld [vmem:[%s2 + $0xb0] sm:$0xf]
  %v85 = vld [vmem:[%s2 + $0xb4] sm:$0xf]
  %v86 = vld [vmem:[%s2 + $0xb8] sm:$0xf]
  %v87 = vld [vmem:[%s2 + $0xbc] sm:$0xf]
  %v88 = vld [vmem:[%s2 + $0xc0] sm:$0xf]
  %v89 = vld [vmem:[%s2 + $0xc4] sm:$0xf]
  %v90 = vld [vmem:[%s2 + $0xc8] sm:$0xf]
  %v91 = vld [vmem:[%s2 + $0xcc] sm:$0xf]
  %v92 = vld [vmem:[%s2 + $0xd0] sm:$0xf]
  %v93 = vld [vmem:[%s2 + $0xd4] sm:$0xf]
  %v94 = vld [vmem:[%s2 + $0xd8] sm:$0xf]
  %v95 = vld [vmem:[%s2 + $0xdc] sm:$0xf]
  %v96 = vld [vmem:[%s2 + $0xe0] sm:$0xf]
  %v97 = vld [vmem:[%s2 + $0xe4] sm:$0xf]
  %v98 = vld [vmem:[%s2 + $0xe8] sm:$0xf]
  %v99 = vld [vmem:[%s2 + $0xec] sm:$0xf]
  %v100 = vld [vmem:[%s2 + $0xf0] sm:$0xf]
  %v101 = vld [vmem:[%s2 + $0xf4] sm:$0xf]
  %v102 = vld [vmem:[%s2 + $0xf8] sm:$0xf]
  %v103 = vld [vmem:[%s2 + $0xfc] sm:$0xf]
  %v104 = vld [vmem:[%s2 + $0x100] sm:$0xf]
  %v105 = vld [vmem:[%s2 + $0x104] sm:$0xf]
  %v106 = vld [vmem:[%s2 + $0x108] sm:$0xf]
  %v107 = vld [vmem:[%s2 + $0x10c] sm:$0xf]
  %v108 = vld [vmem:[%s2 + $0x110] sm:$0xf]
  %v109 = vld [vmem:[%s2 + $0x114] sm:$0xf]
  %v110 = vld [vmem:[%s2 + $0x118] sm:$0xf]
  %v111 = vld [vmem:[%s2 + $0x11c] sm:$0xf]
  %v112 = vld [vmem:[%s2 + $0x120] sm:$0xf]
  %v113 = vld [vmem:[%s2 + $0x124] sm:$0xf]
  %v114 = vld [vmem:[%s2 + $0x128] sm:$0xf]
  %v115 = vld [vmem:[%s2 + $0x12c] sm:$0xf]
  %v116 = vld [vmem:[%s2 + $0x130] sm:$0xf]
  %v117 = vld [vmem:[%s2 + $0x134] sm:$0xf]
  %v118 = vld [vmem:[%s2 + $0x138] sm:$0xf]
  %v119 = vld [vmem:[%s2 + $0x13c] sm:$0xf]
  %v120 = vld [vmem:[%s2 + $0x140] sm:$0xf]
  %v121 = vld [vmem:[%s2 + $0x144] sm:$0xf]
  %v122 = vld [vmem:[%s2 + $0x148] sm:$0xf]
  %v123 = vld [vmem:[%s2 + $0x14c] sm:$0xf]
  %v124 = vld [vmem:[%s2 + $0x150] sm:$0xf]
  %v125 = vld [vmem:[%s2 + $0x154] sm:$0xf]
  %v126 = vld [vmem:[%s2 + $0x158] sm:$0xf]
  %v127 = vld [vmem:[%s2 + $0x15c] sm:$0xf]
  %v128 = vld [vmem:[%s2 + $0x160] sm:$0xf]
  %v129 = vld [vmem:[%s2 + $0x164] sm:$0xf]
  %v130 = vld [vmem:[%s2 + $0x168] sm:$0xf]
  %v131 = vld [vmem:[%s2 + $0x16c] sm:$0xf]
  %v132 = vld [vmem:[%s2 + $0x170] sm:$0xf]
  %v133 = vld [vmem:[%s2 + $0x174] sm:$0xf]
  %v134 = vld [vmem:[%s2 + $0x178] sm:$0xf]
  %v135 = vld [vmem:[%s2 + $0x17c] sm:$0xf]
  %v136 = vld [vmem:[%s2 + $0x180] sm:$0xf]
  %v137 = vld [vmem:[%s2 + $0x184] sm:$0xf]
  %v138 = vld [vmem:[%s2 + $0x188] sm:$0xf]
  %v139 = vld [vmem:[%s2 + $0x18c] sm:$0xf]
  %v140 = vld [vmem:[%s2 + $0x190] sm:$0xf]
  %v141 = vld [vmem:[%s2 + $0x194] sm:$0xf]
  %v142 = vld [vmem:[%s2 + $0x198] sm:$0xf]
  %v143 = vld [vmem:[%s2 + $0x19c] sm:$0xf]
  %v144 = vld [vmem:[%s2 + $0x1a0] sm:$0xf]
  %v145 = vld [vmem:[%s2 + $0x1a4] sm:$0xf]
  %v146 = vld [vmem:[%s2 + $0x1a8] sm:$0xf]
  %v147 = vld [vmem:[%s2 + $0x1ac] sm:$0xf]
  %v148 = vld [vmem:[%s2 + $0x1b0] sm:$0xf]
  %v149 = vld [vmem:[%s2 + $0x1b4] sm:$0xf]
  %v150 = vld [vmem:[%s2 + $0x1b8] sm:$0xf]
  %v151 = vld [vmem:[%s2 + $0x1bc] sm:$0xf]
  %v152 = vld [vmem:[%s2 + $0x1c0] sm:$0xf]
  %v153 = vld [vmem:[%s2 + $0x1c4] sm:$0xf]
  %v154 = vld [vmem:[%s2 + $0x1c8] sm:$0xf]
  %v155 = vld [vmem:[%s2 + $0x1cc] sm:$0xf]
  %v156 = vld [vmem:[%s2 + $0x1d0] sm:$0xf]
  %v157 = vld [vmem:[%s2 + $0x1d4] sm:$0xf]
  %v158 = vld [vmem:[%s2 + $0x1d8] sm:$0xf]
  %v159 = vld [vmem:[%s2 + $0x1dc] sm:$0xf]
  %v160 = vld [vmem:[%s2 + $0x1e0] sm:$0xf]
  %v161 = vld [vmem:[%s2 + $0x1e4] sm:$0xf]
  %v162 = vld [vmem:[%s2 + $0x1e8] sm:$0xf]
  %v163 = vld [vmem:[%s2 + $0x1ec] sm:$0xf]
  %v164 = vld [vmem:[%s2 + $0x1f0] sm:$0xf]
  %v165 = vld [vmem:[%s2 + $0x1f4] sm:$0xf]
  %v166 = vld [vmem:[%s2 + $0x1f8] sm:$0xf]
  %v167 = vld [vmem:[%s2 + $0x1fc] sm:$0xf]
  %v168 = vld [vmem:[%s2 + $0x200] sm:$0xf]
  %v169 = vld [vmem:[%s2 + $0x204] sm:$0xf]
  %v170 = vld [vmem:[%s2 + $0x208] sm:$0xf]
  %v171 = vld [vmem:[%s2 + $0x20c] sm:$0xf]
  %v172 = vld [vmem:[%s2 + $0x210] sm:$0xf]
  %v173 = vld [vmem:[%s2 + $0x214] sm:$0xf]
  %v174 = vld [vmem:[%s2 + $0x218] sm:$0xf]
  %v175 = vld [vmem:[%s2 + $0x21c] sm:$0xf]
  %v176 = vld [vmem:[%s2 + $0x220] sm:$0xf]
  %v177 = vld [vmem:[%s2 + $0x224] sm:$0xf]
  %v178 = vld [vmem:[%s2 + $0x228] sm:$0xf]
  %v179 = vld [vmem:[%s2 + $0x22c] sm:$0xf]
  %v180 = vld [vmem:[%s2 + $0x230] sm:$0xf]
  %v181 = vld [vmem:[%s2 + $0x234] sm:$0xf]
  %v182 = vld [vmem:[%s2 + $0x238] sm:$0xf]
  %v183 = vld [vmem:[%s2 + $0x23c] sm:$0xf]
  %v184 = vld [vmem:[%s2 + $0x240] sm:$0xf]
  %v185 = vld [vmem:[%s2 + $0x244] sm:$0xf]
  %v186 = vld [vmem:[%s2 + $0x248] sm:$0xf]
  %v187 = vld [vmem:[%s2 + $0x24c] sm:$0xf]
  %v188 = vld [vmem:[%s2 + $0x250] sm:$0xf]
  %v189 = vld [vmem:[%s2 + $0x254] sm:$0xf]
  %v190 = vld [vmem:[%s2 + $0x258] sm:$0xf]
  %v191 = vld [vmem:[%s2 + $0x25c] sm:$0xf]
  %v192 = vld [vmem:[%s2 + $0x260] sm:$0xf]
  %v193 = vld [vmem:[%s2 + $0x264] sm:$0xf]
  %v194 = vld [vmem:[%s2 + $0x268] sm:$0xf]
  %v195 = vld [vmem:[%s2 + $0x26c] sm:$0xf]
  %v196 = vld [vmem:[%s2 + $0x270] sm:$0xf]
  %v197 = vld [vmem:[%s2 + $0x274] sm:$0xf]
  %v198 = vld [vmem:[%s2 + $0x278] sm:$0xf]
  %v199 = vld [vmem:[%s2 + $0x27c] sm:$0xf]
  %v200 = vld [vmem:[%s2 + $0x280] sm:$0xf]
  %v201 = vld [vmem:[%s2 + $0x284] sm:$0xf]
  %v202 = vld [vmem:[%s2 + $0x288] sm:$0xf]
  %v203 = vld [vmem:[%s2 + $0x28c] sm:$0xf]
  %v204 = vld [vmem:[%s2 + $0x290] sm:$0xf]
  %v205 = vld [vmem:[%s2 + $0x294] sm:$0xf]
  %v206 = vld [vmem:[%s2 + $0x298] sm:$0xf]
  %v207 = vld [vmem:[%s2 + $0x29c] sm:$0xf]
  %v208 = vld [vmem:[%s2 + $0x2a0] sm:$0xf]
  %v209 = vld [vmem:[%s2 + $0x2a4] sm:$0xf]
  %v210 = vld [vmem:[%s2 + $0x2a8] sm:$0xf]
  %v211 = vld [vmem:[%s2 + $0x2ac] sm:$0xf]
  %v212 = vld [vmem:[%s2 + $0x2b0] sm:$0xf]
  %v213 = vld [vmem:[%s2 + $0x2b4] sm:$0xf]
  %v214 = vld [vmem:[%s2 + $0x2b8] sm:$0xf]
  %v215 = vld [vmem:[%s2 + $0x2bc] sm:$0xf]
  %v216 = vld [vmem:[%s2 + $0x2c0] sm:$0xf]
  %v217 = vld [vmem:[%s2 + $0x2c4] sm:$0xf]
  %v218 = vld [vmem:[%s2 + $0x2c8] sm:$0xf]
  %v219 = vld [vmem:[%s2 + $0x2cc] sm:$0xf]
  %v220 = vld [vmem:[%s2 + $0x2d0] sm:$0xf]
  %v221 = vld [vmem:[%s2 + $0x2d4] sm:$0xf]
  %v222 = vld [vmem:[%s2 + $0x2d8] sm:$0xf]
  %v223 = vld [vmem:[%s2 + $0x2dc] sm:$0xf]
  %v224 = vld [vmem:[%s2 + $0x2e0] sm:$0xf]
  %v225 = vld [vmem:[%s2 + $0x2e4] sm:$0xf]
  %v226 = vld [vmem:[%s2 + $0x2e8] sm:$0xf]
  %v227 = vld [vmem:[%s2 + $0x2ec] sm:$0xf]
  %v228 = vld [vmem:[%s2 + $0x2f0] sm:$0xf]
  %v229 = vld [vmem:[%s2 + $0x2f4] sm:$0xf]
  %v230 = vld [vmem:[%s2 + $0x2f8] sm:$0xf]
  %v231 = vld [vmem:[%s2 + $0x2fc] sm:$0xf]
  %v232 = vld [vmem:[%s2 + $0x300] sm:$0xf]
  %v233 = vld [vmem:[%s2 + $0x304] sm:$0xf]
  %v234 = vld [vmem:[%s2 + $0x308] sm:$0xf]
  %v235 = vld [vmem:[%s2 + $0x30c] sm:$0xf]
  %v236 = vld [vmem:[%s3] sm:$0x1]
  %v238 = vlaneseq
  %v239 = vshrl.u32 %v238, 7
  %v240 = vsub.s32 0, %v239
  %v241 = vrot.slane %v236, %v240
  %v245 = vcombine.high %v38, %v38
  %v247 = vunpack.c.l.s4 1966171168
  %v248 = vunpack.c.0.s8 %v247
  %v249 = vlaneseq
  %v250 = vshrl.u32 %v249, 7
  %v251 = vsub.s32 %v248, %v250
  %v252 = vrot.slane %v38, %v251
  %v254 = vunpack.c.l.s4 1966171168
  %v255 = vunpack.c.0.s8 %v254
  %v256 = vlaneseq
  %v257 = vshrl.u32 %v256, 7
  %v258 = vsub.s32 %v255, %v257
  %v259 = vrot.slane %v245, %v258
  %v260 = vcombine.high %v252, %v252
  %v261 = vcombine.high %v259, %v259
  %v263 = vunpack.c.l.s4 1966171168
  %v264 = vunpack.c.0.s8 %v263
  %v265 = vlaneseq
  %v266 = vshrl.u32 %v265, 7
  %v267 = vsub.s32 %v264, %v266
  %v268 = vrot.slane %v252, %v267
  %v270 = vunpack.c.l.s4 1966171168
  %v271 = vunpack.c.0.s8 %v270
  %v272 = vlaneseq
  %v273 = vshrl.u32 %v272, 7
  %v274 = vsub.s32 %v271, %v273
  %v275 = vrot.slane %v259, %v274
  %v277 = vunpack.c.l.s4 1966171168
  %v278 = vunpack.c.0.s8 %v277
  %v279 = vlaneseq
  %v280 = vshrl.u32 %v279, 7
  %v281 = vsub.s32 %v278, %v280
  %v282 = vrot.slane %v260, %v281
  %v284 = vunpack.c.l.s4 1966171168
  %v285 = vunpack.c.0.s8 %v284
  %v286 = vlaneseq
  %v287 = vshrl.u32 %v286, 7
  %v288 = vsub.s32 %v285, %v287
  %v289 = vrot.slane %v261, %v288
  %v290 = vcombine.high %v268, %v268
  %v291 = vcombine.high %v275, %v275
  %v292 = vcombine.high %v282, %v282
  %v293 = vcombine.high %v289, %v289
  %v294 = vcombine.high %v39, %v39
  %v296 = vunpack.c.l.s4 1966171168
  %v297 = vunpack.c.0.s8 %v296
  %v298 = vlaneseq
  %v299 = vshrl.u32 %v298, 7
  %v300 = vsub.s32 %v297, %v299
  %v301 = vrot.slane %v39, %v300
  %v303 = vunpack.c.l.s4 1966171168
  %v304 = vunpack.c.0.s8 %v303
  %v305 = vlaneseq
  %v306 = vshrl.u32 %v305, 7
  %v307 = vsub.s32 %v304, %v306
  %v308 = vrot.slane %v294, %v307
  %v309 = vcombine.high %v301, %v301
  %v311 = vunpack.c.l.s4 1966171168
  %v312 = vunpack.c.0.s8 %v311
  %v313 = vlaneseq
  %v314 = vshrl.u32 %v313, 7
  %v315 = vsub.s32 %v312, %v314
  %v316 = vrot.slane %v301, %v315
  %v318 = vunpack.c.l.s4 1966171168
  %v319 = vunpack.c.0.s8 %v318
  %v320 = vlaneseq
  %v321 = vshrl.u32 %v320, 7
  %v322 = vsub.s32 %v319, %v321
  %v323 = vrot.slane %v308, %v322
  %v325 = vunpack.c.l.s4 1966171168
  %v326 = vunpack.c.0.s8 %v325
  %v327 = vlaneseq
  %v328 = vshrl.u32 %v327, 7
  %v329 = vsub.s32 %v326, %v328
  %v330 = vrot.slane %v309, %v329
  %v331 = vcombine.high %v316, %v316
  %v332 = vcombine.high %v330, %v330
  %v541 = vunpack.c.l.b16 %v40
  %v542 = vunpack.c.l.b16 %v41
  %v543 = vunpack.c.l.b16 %v42
  %v544 = vunpack.c.l.b16 %v43
  %v545 = vunpack.c.l.b16 %v44
  %v546 = vunpack.c.l.b16 %v45
  %v547 = vunpack.c.l.b16 %v46
  %v548 = vunpack.c.l.b16 %v47
  %v549 = vunpack.c.l.b16 %v48
  %v550 = vunpack.c.l.b16 %v49
  %v551 = vunpack.c.l.b16 %v50
  %v552 = vunpack.c.l.b16 %v51
  %v553 = vunpack.c.l.b16 %v52
  %v554 = vunpack.c.l.b16 %v53
  %v555 = vunpack.c.l.b16 %v54
  %v556 = vunpack.c.l.b16 %v55
  %v557 = vunpack.c.l.b16 %v56
  %v558 = vunpack.c.l.b16 %v57
  %v559 = vunpack.c.l.b16 %v58
  %v560 = vunpack.c.l.b16 %v59
  %v561 = vunpack.c.l.b16 %v60
  %v562 = vunpack.c.l.b16 %v61
  %v563 = vunpack.c.l.b16 %v62
  %v564 = vunpack.c.l.b16 %v63
  %v565 = vunpack.c.l.b16 %v64
  %v566 = vunpack.c.l.b16 %v65
  %v567 = vunpack.c.l.b16 %v66
  %v568 = vunpack.c.l.b16 %v67
  %v569 = vunpack.c.l.b16 %v68
  %v570 = vunpack.c.l.b16 %v69
  %v571 = vunpack.c.l.b16 %v70
  %v572 = vunpack.c.l.b16 %v71
  %v573 = vunpack.c.l.b16 %v72
  %v574 = vunpack.c.l.b16 %v73
  %v575 = vunpack.c.l.b16 %v74
  %v576 = vunpack.c.l.b16 %v75
  %v577 = vunpack.c.l.b16 %v76
  %v578 = vunpack.c.l.b16 %v77
  %v579 = vunpack.c.l.b16 %v78
  %v580 = vunpack.c.l.b16 %v79
  %v581 = vunpack.c.l.b16 %v80
  %v582 = vunpack.c.l.b16 %v81
  %v583 = vunpack.c.l.b16 %v82
  %v584 = vunpack.c.l.b16 %v83
  %v585 = vunpack.c.l.b16 %v84
  %v586 = vunpack.c.l.b16 %v85
  %v587 = vunpack.c.l.b16 %v86
  %v588 = vunpack.c.l.b16 %v87
  %v589 = vunpack.c.l.b16 %v88
  %v590 = vunpack.c.l.b16 %v89
  %v591 = vunpack.c.l.b16 %v90
  %v592 = vunpack.c.l.b16 %v91
  %v593 = vunpack.c.l.b16 %v92
  %v594 = vunpack.c.l.b16 %v93
  %v595 = vunpack.c.l.b16 %v94
  %v596 = vunpack.c.l.b16 %v95
  %v597 = vunpack.c.l.b16 %v96
  %v598 = vunpack.c.l.b16 %v97
  %v599 = vunpack.c.l.b16 %v98
  %v600 = vunpack.c.l.b16 %v99
  %v601 = vunpack.c.l.b16 %v100
  %v602 = vunpack.c.l.b16 %v101
  %v603 = vunpack.c.l.b16 %v102
  %v604 = vunpack.c.l.b16 %v103
  %v605 = vunpack.c.l.b16 %v104
  %v606 = vunpack.c.l.b16 %v105
  %v607 = vunpack.c.l.b16 %v106
  %v608 = vunpack.c.l.b16 %v107
  %v609 = vunpack.c.l.b16 %v108
  %v610 = vunpack.c.l.b16 %v109
  %v611 = vunpack.c.l.b16 %v110
  %v612 = vunpack.c.l.b16 %v111
  %v613 = vunpack.c.l.b16 %v112
  %v614 = vunpack.c.l.b16 %v113
  %v615 = vunpack.c.l.b16 %v114
  %v616 = vunpack.c.l.b16 %v115
  %v617 = vunpack.c.l.b16 %v116
  %v618 = vunpack.c.l.b16 %v117
  %v619 = vunpack.c.l.b16 %v118
  %v620 = vunpack.c.l.b16 %v119
  %v621 = vunpack.c.l.b16 %v120
  %v622 = vunpack.c.l.b16 %v121
  %v623 = vunpack.c.l.b16 %v122
  %v624 = vunpack.c.l.b16 %v123
  %v625 = vunpack.c.l.b16 %v124
  %v626 = vunpack.c.l.b16 %v125
  %v627 = vunpack.c.l.b16 %v126
  %v628 = vunpack.c.l.b16 %v127
  %v629 = vunpack.c.l.b16 %v128
  %v630 = vunpack.c.l.b16 %v129
  %v631 = vunpack.c.l.b16 %v130
  %v632 = vunpack.c.l.b16 %v131
  %v633 = vunpack.c.l.b16 %v132
  %v634 = vunpack.c.l.b16 %v133
  %v635 = vunpack.c.l.b16 %v134
  %v636 = vunpack.c.l.b16 %v135
  %v637 = vunpack.c.l.b16 %v136
  %v638 = vunpack.c.l.b16 %v137
  %v639 = vunpack.c.l.b16 %v138
  %v640 = vunpack.c.l.b16 %v139
  %v641 = vunpack.c.l.b16 %v140
  %v642 = vunpack.c.l.b16 %v141
  %v643 = vunpack.c.l.b16 %v142
  %v644 = vunpack.c.l.b16 %v143
  %v645 = vunpack.c.l.b16 %v144
  %v646 = vunpack.c.l.b16 %v145
  %v647 = vunpack.c.l.b16 %v146
  %v648 = vunpack.c.l.b16 %v147
  %v649 = vunpack.c.l.b16 %v148
  %v650 = vunpack.c.l.b16 %v149
  %v651 = vunpack.c.l.b16 %v150
  %v652 = vunpack.c.l.b16 %v151
  %v653 = vunpack.c.l.b16 %v152
  %v654 = vunpack.c.l.b16 %v153
  %v655 = vunpack.c.l.b16 %v154
  %v656 = vunpack.c.l.b16 %v155
  %v657 = vunpack.c.l.b16 %v156
  %v658 = vunpack.c.l.b16 %v157
  %v659 = vunpack.c.l.b16 %v158
  %v660 = vunpack.c.l.b16 %v159
  %v661 = vunpack.c.l.b16 %v160
  %v662 = vunpack.c.l.b16 %v161
  %v663 = vunpack.c.l.b16 %v162
  %v664 = vunpack.c.l.b16 %v163
  %v665 = vunpack.c.l.b16 %v164
  %v666 = vunpack.c.l.b16 %v165
  %v667 = vunpack.c.l.b16 %v166
  %v668 = vunpack.c.l.b16 %v167
  %v669 = vunpack.c.l.b16 %v168
  %v670 = vunpack.c.l.b16 %v169
  %v671 = vunpack.c.l.b16 %v170
  %v672 = vunpack.c.l.b16 %v171
  %v673 = vunpack.c.l.b16 %v172
  %v674 = vunpack.c.l.b16 %v173
  %v675 = vunpack.c.l.b16 %v174
  %v676 = vunpack.c.l.b16 %v175
  %v677 = vunpack.c.l.b16 %v176
  %v678 = vunpack.c.l.b16 %v177
  %v679 = vunpack.c.l.b16 %v178
  %v680 = vunpack.c.l.b16 %v179
  %v681 = vunpack.c.l.b16 %v180
  %v682 = vunpack.c.l.b16 %v181
  %v683 = vunpack.c.l.b16 %v182
  %v684 = vunpack.c.l.b16 %v183
  %v685 = vunpack.c.l.b16 %v184
  %v686 = vunpack.c.l.b16 %v185
  %v687 = vunpack.c.l.b16 %v186
  %v688 = vunpack.c.l.b16 %v187
  %v689 = vunpack.c.l.b16 %v188
  %v690 = vunpack.c.l.b16 %v189
  %v691 = vunpack.c.l.b16 %v190
  %v692 = vunpack.c.l.b16 %v191
  %v693 = vunpack.c.l.b16 %v192
  %v694 = vunpack.c.l.b16 %v193
  %v695 = vunpack.c.l.b16 %v194
  %v696 = vunpack.c.l.b16 %v195
  %v697 = vunpack.c.l.b16 %v196
  %v698 = vunpack.c.l.b16 %v197
  %v699 = vunpack.c.l.b16 %v198
  %v700 = vunpack.c.l.b16 %v199
  %v701 = vunpack.c.l.b16 %v200
  %v702 = vunpack.c.l.b16 %v201
  %v703 = vunpack.c.l.b16 %v202
  %v704 = vunpack.c.l.b16 %v203
  %v705 = vunpack.c.l.b16 %v204
  %v706 = vunpack.c.l.b16 %v205
  %v707 = vunpack.c.l.b16 %v206
  %v708 = vunpack.c.l.b16 %v207
  %v709 = vunpack.c.l.b16 %v208
  %v710 = vunpack.c.l.b16 %v209
  %v711 = vunpack.c.l.b16 %v210
  %v712 = vunpack.c.l.b16 %v211
  %v713 = vunpack.c.l.b16 %v212
  %v714 = vunpack.c.l.b16 %v213
  %v715 = vunpack.c.l.b16 %v214
  %v716 = vunpack.c.l.b16 %v215
  %v717 = vunpack.c.l.b16 %v216
  %v718 = vunpack.c.l.b16 %v217
  %v719 = vunpack.c.l.b16 %v218
  %v720 = vunpack.c.l.b16 %v219
  %v721 = vunpack.c.l.b16 %v220
  %v722 = vunpack.c.l.b16 %v221
  %v723 = vunpack.c.l.b16 %v222
  %v724 = vunpack.c.l.b16 %v223
  %v725 = vunpack.c.l.b16 %v224
  %v726 = vunpack.c.l.b16 %v225
  %v727 = vunpack.c.l.b16 %v226
  %v728 = vunpack.c.l.b16 %v227
  %v729 = vunpack.c.l.b16 %v228
  %v730 = vunpack.c.l.b16 %v229
  %v731 = vunpack.c.l.b16 %v230
  %v732 = vunpack.c.l.b16 %v231
  %v733 = vunpack.c.l.b16 %v232
  %v734 = vunpack.c.l.b16 %v233
  %v735 = vunpack.c.l.b16 %v234
  %v736 = vunpack.c.l.b16 %v235
  %v737 = vpack.c.b16 %v542, %v541
  %v738 = vpack.c.b16 %v544, %v543
  %v739 = vpack.c.b16 %v546, %v545
  %v740 = vpack.c.b16 %v548, %v547
  %v741 = vpack.c.b16 %v550, %v549
  %v742 = vpack.c.b16 %v552, %v551
  %v743 = vpack.c.b16 %v554, %v553
  %v744 = vpack.c.b16 %v556, %v555
  %v745 = vpack.c.b16 %v558, %v557
  %v746 = vpack.c.b16 %v560, %v559
  %v747 = vpack.c.b16 %v562, %v561
  %v748 = vpack.c.b16 %v564, %v563
  %v749 = vpack.c.b16 %v566, %v565
  %v750 = vpack.c.b16 %v568, %v567
  %v751 = vpack.c.b16 %v570, %v569
  %v752 = vpack.c.b16 %v572, %v571
  %v753 = vpack.c.b16 %v574, %v573
  %v754 = vpack.c.b16 %v576, %v575
  %v755 = vpack.c.b16 %v578, %v577
  %v756 = vpack.c.b16 %v580, %v579
  %v757 = vpack.c.b16 %v582, %v581
  %v758 = vpack.c.b16 %v584, %v583
  %v759 = vpack.c.b16 %v586, %v585
  %v760 = vpack.c.b16 %v588, %v587
  %v761 = vpack.c.b16 %v590, %v589
  %v762 = vpack.c.b16 %v592, %v591
  %v763 = vpack.c.b16 %v594, %v593
  %v764 = vpack.c.b16 %v596, %v595
  %v765 = vpack.c.b16 %v598, %v597
  %v766 = vpack.c.b16 %v600, %v599
  %v767 = vpack.c.b16 %v602, %v601
  %v768 = vpack.c.b16 %v604, %v603
  %v769 = vpack.c.b16 %v606, %v605
  %v770 = vpack.c.b16 %v608, %v607
  %v771 = vpack.c.b16 %v610, %v609
  %v772 = vpack.c.b16 %v612, %v611
  %v773 = vpack.c.b16 %v614, %v613
  %v774 = vpack.c.b16 %v616, %v615
  %v775 = vpack.c.b16 %v618, %v617
  %v776 = vpack.c.b16 %v620, %v619
  %v777 = vpack.c.b16 %v622, %v621
  %v778 = vpack.c.b16 %v624, %v623
  %v779 = vpack.c.b16 %v626, %v625
  %v780 = vpack.c.b16 %v628, %v627
  %v781 = vpack.c.b16 %v630, %v629
  %v782 = vpack.c.b16 %v632, %v631
  %v783 = vpack.c.b16 %v634, %v633
  %v784 = vpack.c.b16 %v636, %v635
  %v785 = vpack.c.b16 %v638, %v637
  %v786 = vpack.c.b16 %v640, %v639
  %v787 = vpack.c.b16 %v642, %v641
  %v788 = vpack.c.b16 %v644, %v643
  %v789 = vpack.c.b16 %v646, %v645
  %v790 = vpack.c.b16 %v648, %v647
  %v791 = vpack.c.b16 %v650, %v649
  %v792 = vpack.c.b16 %v652, %v651
  %v793 = vpack.c.b16 %v654, %v653
  %v794 = vpack.c.b16 %v656, %v655
  %v795 = vpack.c.b16 %v658, %v657
  %v796 = vpack.c.b16 %v660, %v659
  %v797 = vpack.c.b16 %v662, %v661
  %v798 = vpack.c.b16 %v664, %v663
  %v799 = vpack.c.b16 %v666, %v665
  %v800 = vpack.c.b16 %v668, %v667
  %v801 = vpack.c.b16 %v670, %v669
  %v802 = vpack.c.b16 %v672, %v671
  %v803 = vpack.c.b16 %v674, %v673
  %v804 = vpack.c.b16 %v676, %v675
  %v805 = vpack.c.b16 %v678, %v677
  %v806 = vpack.c.b16 %v680, %v679
  %v807 = vpack.c.b16 %v682, %v681
  %v808 = vpack.c.b16 %v684, %v683
  %v809 = vpack.c.b16 %v686, %v685
  %v810 = vpack.c.b16 %v688, %v687
  %v811 = vpack.c.b16 %v690, %v689
  %v812 = vpack.c.b16 %v692, %v691
  %v813 = vpack.c.b16 %v694, %v693
  %v814 = vpack.c.b16 %v696, %v695
  %v815 = vpack.c.b16 %v698, %v697
  %v816 = vpack.c.b16 %v700, %v699
  %v817 = vpack.c.b16 %v702, %v701
  %v818 = vpack.c.b16 %v704, %v703
  %v819 = vpack.c.b16 %v706, %v705
  %v820 = vpack.c.b16 %v708, %v707
  %v821 = vpack.c.b16 %v710, %v709
  %v822 = vpack.c.b16 %v712, %v711
  %v823 = vpack.c.b16 %v714, %v713
  %v824 = vpack.c.b16 %v716, %v715
  %v825 = vpack.c.b16 %v718, %v717
  %v826 = vpack.c.b16 %v720, %v719
  %v827 = vpack.c.b16 %v722, %v721
  %v828 = vpack.c.b16 %v724, %v723
  %v829 = vpack.c.b16 %v726, %v725
  %v830 = vpack.c.b16 %v728, %v727
  %v831 = vpack.c.b16 %v730, %v729
  %v832 = vpack.c.b16 %v732, %v731
  %v833 = vpack.c.b16 %v734, %v733
  %v834 = vpack.c.b16 %v736, %v735
  %vm933 = vcmask 261120
  %v935 = vsel %vm933, %v323, 0
  %937 = vmatprep.subr.bf16.mxu0 0
  %938 = vmatpush1.bf16.msra.mxu0 %v737
  %939 = vmatprep.subr.bf16.mxu0 0
  %940 = vmatpush1.bf16.msra.mxu0 %v738
  %941 = vmatprep.subr.bf16.mxu0 0
  %942 = vmatpush1.bf16.msra.mxu0 %v739
  %943 = vmatprep.subr.bf16.mxu0 0
  %944 = vmatpush1.bf16.msra.mxu0 %v740
  %945 = vmatprep.subr.bf16.mxu0 0
  %946 = vmatpush1.bf16.msra.mxu0 %v741
  %947 = vmatprep.subr.bf16.mxu0 0
  %948 = vmatpush1.bf16.msra.mxu0 %v742
  %949 = vmatprep.subr.bf16.mxu0 0
  %950 = vmatpush1.bf16.msra.mxu0 %v743
  %951 = vmatprep.subr.bf16.mxu0 0
  %952 = vmatpush1.bf16.msra.mxu0 %v744
  %953 = vmatprep.subr.bf16.mxu0 0
  %954 = vmatpush1.bf16.msra.mxu0 %v745
  %955 = vmatprep.subr.bf16.mxu0 0
  %956 = vmatpush1.bf16.msra.mxu0 %v746
  %957 = vmatprep.subr.bf16.mxu0 0
  %958 = vmatpush1.bf16.msra.mxu0 %v747
  %959 = vmatprep.subr.bf16.mxu0 0
  %960 = vmatpush1.bf16.msra.mxu0 %v748
  %961 = vmatprep.subr.bf16.mxu0 0
  %962 = vmatpush1.bf16.msra.mxu0 %v749
  %963 = vmatprep.subr.bf16.mxu0 0
  %964 = vmatpush1.bf16.msra.mxu0 %v750
  %965 = vmatprep.subr.bf16.mxu0 0
  %966 = vmatpush1.bf16.msra.mxu0 %v751
  %967 = vmatprep.subr.bf16.mxu0 0
  %968 = vmatpush1.bf16.msra.mxu0 %v752
  %969 = vmatprep.mubr.bf16.mxu0 %v282
  %970 = vmatmul.mubr.bf16.gmra.mrb[0].mxu0 %v268
  %v971 = vpop.f32.mrb[0].mxu0
  %v972 = vadd.f32 %v241, %v971
  %v973 = vpop.f32.mrb[0].mxu0
  %v974 = vpop.f32.mrb[0].mxu0
  %v975 = vpop.f32.mrb[0].mxu0
  %976 = vdwg.mxu0
  %977 = vmatprep.subr.bf16.mxu0 0
  %978 = vmatpush1.bf16.msra.mxu0 %v753
  %979 = vmatprep.subr.bf16.mxu0 0
  %980 = vmatpush1.bf16.msra.mxu0 %v754
  %981 = vmatprep.subr.bf16.mxu0 0
  %982 = vmatpush1.bf16.msra.mxu0 %v755
  %983 = vmatprep.subr.bf16.mxu0 0
  %984 = vmatpush1.bf16.msra.mxu0 %v756
  %985 = vmatprep.subr.bf16.mxu0 0
  %986 = vmatpush1.bf16.msra.mxu0 %v757
  %987 = vmatprep.subr.bf16.mxu0 0
  %988 = vmatpush1.bf16.msra.mxu0 %v758
  %989 = vmatprep.subr.bf16.mxu0 0
  %990 = vmatpush1.bf16.msra.mxu0 %v759
  %991 = vmatprep.subr.bf16.mxu0 0
  %992 = vmatpush1.bf16.msra.mxu0 %v760
  %993 = vmatprep.subr.bf16.mxu0 0
  %994 = vmatpush1.bf16.msra.mxu0 %v761
  %995 = vmatprep.subr.bf16.mxu0 0
  %996 = vmatpush1.bf16.msra.mxu0 %v762
  %997 = vmatprep.subr.bf16.mxu0 0
  %998 = vmatpush1.bf16.msra.mxu0 %v763
  %999 = vmatprep.subr.bf16.mxu0 0
  %1000 = vmatpush1.bf16.msra.mxu0 %v764
  %1001 = vmatprep.subr.bf16.mxu0 0
  %1002 = vmatpush1.bf16.msra.mxu0 %v765
  %1003 = vmatprep.subr.bf16.mxu0 0
  %1004 = vmatpush1.bf16.msra.mxu0 %v766
  %1005 = vmatprep.subr.bf16.mxu0 0
  %1006 = vmatpush1.bf16.msra.mxu0 %v767
  %1007 = vmatprep.subr.bf16.mxu0 0
  %1008 = vmatpush1.bf16.msra.mxu0 %v768
  %1009 = vmatprep.mubr.bf16.mxu0 %v292
  %1010 = vmatmul.mubr.bf16.gmra.mrb[0].mxu0 %v290
  %v1011 = vpop.f32.mrb[0].mxu0
  %v1012 = vadd.f32 %v972, %v1011
  %v1013 = vpop.f32.mrb[0].mxu0
  %v1014 = vpop.f32.mrb[0].mxu0
  %v1015 = vpop.f32.mrb[0].mxu0
  %1016 = vdwg.mxu0
  %1017 = vmatprep.subr.bf16.mxu0 0
  %1018 = vmatpush1.bf16.msra.mxu0 %v769
  %1019 = vmatprep.subr.bf16.mxu0 0
  %1020 = vmatpush1.bf16.msra.mxu0 %v770
  %1021 = vmatprep.subr.bf16.mxu0 0
  %1022 = vmatpush1.bf16.msra.mxu0 %v771
  %1023 = vmatprep.subr.bf16.mxu0 0
  %1024 = vmatpush1.bf16.msra.mxu0 %v772
  %1025 = vmatprep.subr.bf16.mxu0 0
  %1026 = vmatpush1.bf16.msra.mxu0 %v773
  %1027 = vmatprep.subr.bf16.mxu0 0
  %1028 = vmatpush1.bf16.msra.mxu0 %v774
  %1029 = vmatprep.subr.bf16.mxu0 0
  %1030 = vmatpush1.bf16.msra.mxu0 %v775
  %1031 = vmatprep.subr.bf16.mxu0 0
  %1032 = vmatpush1.bf16.msra.mxu0 %v776
  %1033 = vmatprep.subr.bf16.mxu0 0
  %1034 = vmatpush1.bf16.msra.mxu0 %v777
  %1035 = vmatprep.subr.bf16.mxu0 0
  %1036 = vmatpush1.bf16.msra.mxu0 %v778
  %1037 = vmatprep.subr.bf16.mxu0 0
  %1038 = vmatpush1.bf16.msra.mxu0 %v779
  %1039 = vmatprep.subr.bf16.mxu0 0
  %1040 = vmatpush1.bf16.msra.mxu0 %v780
  %1041 = vmatprep.subr.bf16.mxu0 0
  %1042 = vmatpush1.bf16.msra.mxu0 %v781
  %1043 = vmatprep.subr.bf16.mxu0 0
  %1044 = vmatpush1.bf16.msra.mxu0 %v782
  %1045 = vmatprep.subr.bf16.mxu0 0
  %1046 = vmatpush1.bf16.msra.mxu0 %v783
  %1047 = vmatprep.subr.bf16.mxu0 0
  %1048 = vmatpush1.bf16.msra.mxu0 %v784
  %1049 = vmatprep.mubr.bf16.mxu0 %v289
  %1050 = vmatmul.mubr.bf16.gmra.mrb[0].mxu0 %v275
  %v1051 = vpop.f32.mrb[0].mxu0
  %v1052 = vadd.f32 %v1012, %v1051
  %v1053 = vpop.f32.mrb[0].mxu0
  %v1054 = vpop.f32.mrb[0].mxu0
  %v1055 = vpop.f32.mrb[0].mxu0
  %1056 = vdwg.mxu0
  %1057 = vmatprep.subr.bf16.mxu0 0
  %1058 = vmatpush1.bf16.msra.mxu0 %v785
  %1059 = vmatprep.subr.bf16.mxu0 0
  %1060 = vmatpush1.bf16.msra.mxu0 %v786
  %1061 = vmatprep.subr.bf16.mxu0 0
  %1062 = vmatpush1.bf16.msra.mxu0 %v787
  %1063 = vmatprep.subr.bf16.mxu0 0
  %1064 = vmatpush1.bf16.msra.mxu0 %v788
  %1065 = vmatprep.subr.bf16.mxu0 0
  %1066 = vmatpush1.bf16.msra.mxu0 %v789
  %1067 = vmatprep.subr.bf16.mxu0 0
  %1068 = vmatpush1.bf16.msra.mxu0 %v790
  %1069 = vmatprep.subr.bf16.mxu0 0
  %1070 = vmatpush1.bf16.msra.mxu0 %v791
  %1071 = vmatprep.subr.bf16.mxu0 0
  %1072 = vmatpush1.bf16.msra.mxu0 %v792
  %1073 = vmatprep.subr.bf16.mxu0 0
  %1074 = vmatpush1.bf16.msra.mxu0 %v793
  %1075 = vmatprep.subr.bf16.mxu0 0
  %1076 = vmatpush1.bf16.msra.mxu0 %v794
  %1077 = vmatprep.subr.bf16.mxu0 0
  %1078 = vmatpush1.bf16.msra.mxu0 %v795
  %1079 = vmatprep.subr.bf16.mxu0 0
  %1080 = vmatpush1.bf16.msra.mxu0 %v796
  %1081 = vmatprep.subr.bf16.mxu0 0
  %1082 = vmatpush1.bf16.msra.mxu0 %v797
  %1083 = vmatprep.subr.bf16.mxu0 0
  %1084 = vmatpush1.bf16.msra.mxu0 %v798
  %1085 = vmatprep.subr.bf16.mxu0 0
  %1086 = vmatpush1.bf16.msra.mxu0 %v799
  %1087 = vmatprep.subr.bf16.mxu0 0
  %1088 = vmatpush1.bf16.msra.mxu0 %v800
  %1089 = vmatprep.mubr.bf16.mxu0 %v293
  %1090 = vmatmul.mubr.bf16.gmra.mrb[0].mxu0 %v291
  %v1091 = vpop.f32.mrb[0].mxu0
  %v1092 = vadd.f32 %v1052, %v1091
  %v1093 = vpop.f32.mrb[0].mxu0
  %v1094 = vpop.f32.mrb[0].mxu0
  %v1095 = vpop.f32.mrb[0].mxu0
  %1096 = vdwg.mxu0
  %1097 = vmatprep.subr.bf16.mxu0 0
  %1098 = vmatpush1.bf16.msra.mxu0 %v801
  %1099 = vmatprep.subr.bf16.mxu0 0
  %1100 = vmatpush1.bf16.msra.mxu0 %v802
  %1101 = vmatprep.subr.bf16.mxu0 0
  %1102 = vmatpush1.bf16.msra.mxu0 %v803
  %1103 = vmatprep.subr.bf16.mxu0 0
  %1104 = vmatpush1.bf16.msra.mxu0 %v804
  %1105 = vmatprep.subr.bf16.mxu0 0
  %1106 = vmatpush1.bf16.msra.mxu0 %v805
  %1107 = vmatprep.subr.bf16.mxu0 0
  %1108 = vmatpush1.bf16.msra.mxu0 %v806
  %1109 = vmatprep.subr.bf16.mxu0 0
  %1110 = vmatpush1.bf16.msra.mxu0 %v807
  %1111 = vmatprep.subr.bf16.mxu0 0
  %1112 = vmatpush1.bf16.msra.mxu0 %v808
  %1113 = vmatprep.subr.bf16.mxu0 0
  %1114 = vmatpush1.bf16.msra.mxu0 %v809
  %1115 = vmatprep.subr.bf16.mxu0 0
  %1116 = vmatpush1.bf16.msra.mxu0 %v810
  %1117 = vmatprep.subr.bf16.mxu0 0
  %1118 = vmatpush1.bf16.msra.mxu0 %v811
  %1119 = vmatprep.subr.bf16.mxu0 0
  %1120 = vmatpush1.bf16.msra.mxu0 %v812
  %1121 = vmatprep.subr.bf16.mxu0 0
  %1122 = vmatpush1.bf16.msra.mxu0 %v813
  %1123 = vmatprep.subr.bf16.mxu0 0
  %1124 = vmatpush1.bf16.msra.mxu0 %v814
  %1125 = vmatprep.subr.bf16.mxu0 0
  %1126 = vmatpush1.bf16.msra.mxu0 %v815
  %1127 = vmatprep.subr.bf16.mxu0 0
  %1128 = vmatpush1.bf16.msra.mxu0 %v816
  %1129 = vmatprep.mubr.bf16.mxu0 %v330
  %1130 = vmatmul.mubr.bf16.gmra.mrb[0].mxu0 %v316
  %v1131 = vpop.f32.mrb[0].mxu0
  %v1132 = vadd.f32 %v1092, %v1131
  %v1133 = vpop.f32.mrb[0].mxu0
  %v1134 = vpop.f32.mrb[0].mxu0
  %v1135 = vpop.f32.mrb[0].mxu0
  %1136 = vdwg.mxu0
  %1137 = vmatprep.subr.bf16.mxu0 0
  %1138 = vmatpush1.bf16.msra.mxu0 %v817
  %1139 = vmatprep.subr.bf16.mxu0 0
  %1140 = vmatpush1.bf16.msra.mxu0 %v818
  %1141 = vmatprep.subr.bf16.mxu0 0
  %1142 = vmatpush1.bf16.msra.mxu0 %v819
  %1143 = vmatprep.subr.bf16.mxu0 0
  %1144 = vmatpush1.bf16.msra.mxu0 %v820
  %1145 = vmatprep.subr.bf16.mxu0 0
  %1146 = vmatpush1.bf16.msra.mxu0 %v821
  %1147 = vmatprep.subr.bf16.mxu0 0
  %1148 = vmatpush1.bf16.msra.mxu0 %v822
  %1149 = vmatprep.subr.bf16.mxu0 0
  %1150 = vmatpush1.bf16.msra.mxu0 %v823
  %1151 = vmatprep.subr.bf16.mxu0 0
  %1152 = vmatpush1.bf16.msra.mxu0 %v824
  %1153 = vmatprep.subr.bf16.mxu0 0
  %1154 = vmatpush1.bf16.msra.mxu0 %v825
  %1155 = vmatprep.subr.bf16.mxu0 0
  %1156 = vmatpush1.bf16.msra.mxu0 %v826
  %1157 = vmatprep.subr.bf16.mxu0 0
  %1158 = vmatpush1.bf16.msra.mxu0 %v827
  %1159 = vmatprep.subr.bf16.mxu0 0
  %1160 = vmatpush1.bf16.msra.mxu0 %v828
  %1161 = vmatprep.subr.bf16.mxu0 0
  %1162 = vmatpush1.bf16.msra.mxu0 %v829
  %1163 = vmatprep.subr.bf16.mxu0 0
  %1164 = vmatpush1.bf16.msra.mxu0 %v830
  %1165 = vmatprep.subr.bf16.mxu0 0
  %1166 = vmatpush1.bf16.msra.mxu0 %v831
  %1167 = vmatprep.subr.bf16.mxu0 0
  %1168 = vmatpush1.bf16.msra.mxu0 %v832
  %1169 = vmatprep.mubr.bf16.mxu0 %v332
  %1170 = vmatmul.mubr.bf16.gmra.mrb[0].mxu0 %v331
  %v1171 = vpop.f32.mrb[0].mxu0
  %v1172 = vadd.f32 %v1132, %v1171
  %v1173 = vpop.f32.mrb[0].mxu0
  %v1174 = vpop.f32.mrb[0].mxu0
  %v1175 = vpop.f32.mrb[0].mxu0
  %1176 = vdwg.mxu0
  %1177 = vmatprep.subr.bf16.mxu0 0
  %1178 = vmatpush1.bf16.msra.mxu0 %v833
  %1179 = vmatprep.subr.bf16.mxu0 0
  %1180 = vmatpush1.bf16.msra.mxu0 %v834
  %1181 = vmatprep.subr.bf16.mxu0 0
  %1182 = vmatpush1.bf16.msra.mxu0 0
  %1183 = vmatprep.subr.bf16.mxu0 0
  %1184 = vmatpush1.bf16.msra.mxu0 0
  %1185 = vmatprep.subr.bf16.mxu0 0
  %1186 = vmatpush1.bf16.msra.mxu0 0
  %1187 = vmatprep.subr.bf16.mxu0 0
  %1188 = vmatpush1.bf16.msra.mxu0 0
  %1189 = vmatprep.subr.bf16.mxu0 0
  %1190 = vmatpush1.bf16.msra.mxu0 0
  %1191 = vmatprep.subr.bf16.mxu0 0
  %1192 = vmatpush1.bf16.msra.mxu0 0
  %1193 = vmatprep.subr.bf16.mxu0 0
  %1194 = vmatpush1.bf16.msra.mxu0 0
  %1195 = vmatprep.subr.bf16.mxu0 0
  %1196 = vmatpush1.bf16.msra.mxu0 0
  %1197 = vmatprep.subr.bf16.mxu0 0
  %1198 = vmatpush1.bf16.msra.mxu0 0
  %1199 = vmatprep.subr.bf16.mxu0 0
  %1200 = vmatpush1.bf16.msra.mxu0 0
  %1201 = vmatprep.subr.bf16.mxu0 0
  %1202 = vmatpush1.bf16.msra.mxu0 0
  %1203 = vmatprep.subr.bf16.mxu0 0
  %1204 = vmatpush1.bf16.msra.mxu0 0
  %1205 = vmatprep.subr.bf16.mxu0 0
  %1206 = vmatpush1.bf16.msra.mxu0 0
  %1207 = vmatprep.subr.bf16.mxu0 0
  %1208 = vmatpush1.bf16.msra.mxu0 0
  %1209 = vmatprep.mubr.bf16.mxu0 0
  %1210 = vmatmul.mubr.bf16.gmra.mrb[0].mxu0 %v935
  %v1211 = vpop.f32.mrb[0].mxu0
  %v1212 = vadd.f32 %v1172, %v1211
  %v1213 = vpop.f32.mrb[0].mxu0
  %v1214 = vpop.f32.mrb[0].mxu0
  %v1215 = vpop.f32.mrb[0].mxu0
  %1216 = vdwg.mxu0
  %v1217 = vmax.f32 %v1212, 0.0
  %v1218 = vpack.c.bf16 %v1217, %v1217
  %v1219 = vld [vmem:[%s4] sm:$0xf]
  %v1220 = vld [vmem:[%s4 + $0x4] sm:$0xf]
  %v1221 = vld [vmem:[%s4 + $0x8] sm:$0xf]
  %v1222 = vld [vmem:[%s4 + $0xc] sm:$0xf]
  %v1223 = vld [vmem:[%s4 + $0x10] sm:$0xf]
  %v1224 = vld [vmem:[%s4 + $0x14] sm:$0xf]
  %v1225 = vld [vmem:[%s4 + $0x18] sm:$0xf]
  %v1226 = vld [vmem:[%s4 + $0x1c] sm:$0xf]
  %v1227 = vld [vmem:[%s4 + $0x20] sm:$0xf]
  %v1228 = vld [vmem:[%s4 + $0x24] sm:$0xf]
  %v1229 = vld [vmem:[%s4 + $0x28] sm:$0xf]
  %v1230 = vld [vmem:[%s4 + $0x2c] sm:$0xf]
  %v1231 = vld [vmem:[%s4 + $0x30] sm:$0xf]
  %v1232 = vld [vmem:[%s4 + $0x34] sm:$0xf]
  %v1233 = vld [vmem:[%s4 + $0x38] sm:$0xf]
  %v1234 = vld [vmem:[%s4 + $0x3c] sm:$0xf]
  %v1235 = vld [vmem:[%s5] sm:$0x1]
  %v1237 = vlaneseq
  %v1238 = vshrl.u32 %v1237, 7
  %v1239 = vsub.s32 0, %v1238
  %v1240 = vrot.slane %v1235, %v1239
  %v1258 = vunpack.c.l.b16 %v1219
  %v1259 = vunpack.c.l.b16 %v1220
  %v1260 = vunpack.c.l.b16 %v1221
  %v1261 = vunpack.c.l.b16 %v1222
  %v1262 = vunpack.c.l.b16 %v1223
  %v1263 = vunpack.c.l.b16 %v1224
  %v1264 = vunpack.c.l.b16 %v1225
  %v1265 = vunpack.c.l.b16 %v1226
  %v1266 = vunpack.c.l.b16 %v1227
  %v1267 = vunpack.c.l.b16 %v1228
  %v1268 = vunpack.c.l.b16 %v1229
  %v1269 = vunpack.c.l.b16 %v1230
  %v1270 = vunpack.c.l.b16 %v1231
  %v1271 = vunpack.c.l.b16 %v1232
  %v1272 = vunpack.c.l.b16 %v1233
  %v1273 = vunpack.c.l.b16 %v1234
  %v1274 = vpack.c.b16 %v1259, %v1258
  %v1275 = vpack.c.b16 %v1261, %v1260
  %v1276 = vpack.c.b16 %v1263, %v1262
  %v1277 = vpack.c.b16 %v1265, %v1264
  %v1278 = vpack.c.b16 %v1267, %v1266
  %v1279 = vpack.c.b16 %v1269, %v1268
  %v1280 = vpack.c.b16 %v1271, %v1270
  %v1281 = vpack.c.b16 %v1273, %v1272
  %1290 = vmatprep.subr.bf16.mxu0 0
  %1291 = vmatpush1.bf16.msra.mxu0 %v1274
  %1292 = vmatprep.subr.bf16.mxu0 0
  %1293 = vmatpush1.bf16.msra.mxu0 %v1275
  %1294 = vmatprep.subr.bf16.mxu0 0
  %1295 = vmatpush1.bf16.msra.mxu0 %v1276
  %1296 = vmatprep.subr.bf16.mxu0 0
  %1297 = vmatpush1.bf16.msra.mxu0 %v1277
  %1298 = vmatprep.subr.bf16.mxu0 0
  %1299 = vmatpush1.bf16.msra.mxu0 %v1278
  %1300 = vmatprep.subr.bf16.mxu0 0
  %1301 = vmatpush1.bf16.msra.mxu0 %v1279
  %1302 = vmatprep.subr.bf16.mxu0 0
  %1303 = vmatpush1.bf16.msra.mxu0 %v1280
  %1304 = vmatprep.subr.bf16.mxu0 0
  %1305 = vmatpush1.bf16.msra.mxu0 %v1281
  %1306 = vmatprep.subr.bf16.mxu0 0
  %1307 = vmatpush1.bf16.msra.mxu0 0
  %1308 = vmatprep.subr.bf16.mxu0 0
  %1309 = vmatpush1.bf16.msra.mxu0 0
  %1310 = vmatprep.subr.bf16.mxu0 0
  %1311 = vmatpush1.bf16.msra.mxu0 0
  %1312 = vmatprep.subr.bf16.mxu0 0
  %1313 = vmatpush1.bf16.msra.mxu0 0
  %1314 = vmatprep.subr.bf16.mxu0 0
  %1315 = vmatpush1.bf16.msra.mxu0 0
  %1316 = vmatprep.subr.bf16.mxu0 0
  %1317 = vmatpush1.bf16.msra.mxu0 0
  %1318 = vmatprep.subr.bf16.mxu0 0
  %1319 = vmatpush1.bf16.msra.mxu0 0
  %1320 = vmatprep.subr.bf16.mxu0 0
  %1321 = vmatpush1.bf16.msra.mxu0 0
  %1322 = vmatprep.mubr.bf16.mxu0 0
  %1323 = vmatmul.mubr.bf16.gmra.mrb[0].mxu0 %v1218
  %v1324 = vpop.f32.mrb[0].mxu0
  %v1325 = vadd.f32 %v1240, %v1324
  %v1326 = vpop.f32.mrb[0].mxu0
  %v1327 = vpop.f32.mrb[0].mxu0
  %v1328 = vpop.f32.mrb[0].mxu0
  %1329 = vdwg.mxu0
  %v1330 = vld [vmem:[%s1] sm:$0x3]
  %v1331 = vmul.f32 %v1325, 0.5
  %v1332 = vmul.f32 %v1331, 1.442695
  %v1333 = vpow.pop %v1332
  %1335 = vrot.lane.b32.xlu0 %v1333, 108
  %v1336 = vpop.permute.xlu0 %1335
  %v1338 = vmul.f32 %v1330, %v1336
  %v1339 = vadd.f32 %v1325, %v1338
  %v1340 = vpack.c.bf16 %v1339, %v1339
  %v1341 = vld [vmem:[%s6] sm:$0xf]
  %v1342 = vld [vmem:[%s6 + $0x4] sm:$0xf]
  %v1343 = vld [vmem:[%s6 + $0x8] sm:$0x3]
  %v1344 = vld [vmem:[%s7] sm:$0x1]
  %v1346 = vlaneseq
  %v1347 = vshrl.u32 %v1346, 7
  %v1348 = vsub.s32 0, %v1347
  %v1349 = vrot.slane %v1344, %v1348
  %v1354 = vunpack.c.l.b16 %v1341
  %v1355 = vunpack.c.l.b16 %v1342
  %v1356 = vunpack.c.l.b16 %v1343
  %v1357 = vpack.c.b16 %v1355, %v1354
  %v1358 = vpack.c.b16 %v1356, %v1356
  %vm1360 = vcmask 162816
  %v1362 = vsel %vm1360, %v1340, 0
  %vm1364 = vcmask 1041408
  %v1366 = vsel %vm1364, %v1358, 0
  %1368 = vmatprep.subr.bf16.mxu0 0
  %1369 = vmatpush1.bf16.msra.mxu0 %v1357
  %1370 = vmatprep.subr.bf16.mxu0 0
  %1371 = vmatpush1.bf16.msra.mxu0 %v1366
  %1372 = vmatprep.subr.bf16.mxu0 0
  %1373 = vmatpush1.bf16.msra.mxu0 0
  %1374 = vmatprep.subr.bf16.mxu0 0
  %1375 = vmatpush1.bf16.msra.mxu0 0
  %1376 = vmatprep.subr.bf16.mxu0 0
  %1377 = vmatpush1.bf16.msra.mxu0 0
  %1378 = vmatprep.subr.bf16.mxu0 0
  %1379 = vmatpush1.bf16.msra.mxu0 0
  %1380 = vmatprep.subr.bf16.mxu0 0
  %1381 = vmatpush1.bf16.msra.mxu0 0
  %1382 = vmatprep.subr.bf16.mxu0 0
  %1383 = vmatpush1.bf16.msra.mxu0 0
  %1384 = vmatprep.subr.bf16.mxu0 0
  %1385 = vmatpush1.bf16.msra.mxu0 0
  %1386 = vmatprep.subr.bf16.mxu0 0
  %1387 = vmatpush1.bf16.msra.mxu0 0
  %1388 = vmatprep.subr.bf16.mxu0 0
  %1389 = vmatpush1.bf16.msra.mxu0 0
  %1390 = vmatprep.subr.bf16.mxu0 0
  %1391 = vmatpush1.bf16.msra.mxu0 0
  %1392 = vmatprep.subr.bf16.mxu0 0
  %1393 = vmatpush1.bf16.msra.mxu0 0
  %1394 = vmatprep.subr.bf16.mxu0 0
  %1395 = vmatpush1.bf16.msra.mxu0 0
  %1396 = vmatprep.subr.bf16.mxu0 0
  %1397 = vmatpush1.bf16.msra.mxu0 0
  %1398 = vmatprep.subr.bf16.mxu0 0
  %1399 = vmatpush1.bf16.msra.mxu0 0
  %1400 = vmatprep.mubr.bf16.mxu0 0
  %1401 = vmatmul.mubr.bf16.gmra.mrb[0].mxu0 %v1362
  %v1402 = vpop.f32.mrb[0].mxu0
  %v1403 = vadd.f32 %v1349, %v1402
  %v1404 = vpop.f32.mrb[0].mxu0
  %v1405 = vpop.f32.mrb[0].mxu0
  %v1406 = vpop.f32.mrb[0].mxu0
  %1407 = vdwg.mxu0
  %v1408 = vmax.f32 %v1403, 0.0
  %v1409 = vpack.c.bf16 %v1408, %v1408
  %v1410 = vld [vmem:[%s8] sm:$0xff]
  %v1411 = vld [vmem:[%s8 + $0x8] sm:$0xff]
  %v1412 = vld [vmem:[%s8 + $0x10] sm:$0xff]
  %v1413 = vld [vmem:[%s8 + $0x18] sm:$0xff]
  %v1414 = vld [vmem:[%s8 + $0x20] sm:$0xff]
  %v1415 = vld [vmem:[%s8 + $0x28] sm:$0xff]
  %v1416 = vld [vmem:[%s8 + $0x30] sm:$0xf]
  %v1417 = vld [vmem:[%s8 + $0x34] sm:$0xff]
  %v1418 = vld [vmem:[%s8 + $0x3c] sm:$0xff]
  %v1419 = vld [vmem:[%s8 + $0x44] sm:$0xff]
  %v1420 = vld [vmem:[%s8 + $0x4c] sm:$0xff]
  %v1421 = vld [vmem:[%s8 + $0x54] sm:$0xff]
  %v1422 = vld [vmem:[%s8 + $0x5c] sm:$0xff]
  %v1423 = vld [vmem:[%s8 + $0x64] sm:$0xf]
  %v1424 = vld [vmem:[%s8 + $0x68] sm:$0xff]
  %v1425 = vld [vmem:[%s8 + $0x70] sm:$0xff]
  %v1426 = vld [vmem:[%s8 + $0x78] sm:$0xff]
  %v1427 = vld [vmem:[%s8 + $0x80] sm:$0xff]
  %v1428 = vld [vmem:[%s8 + $0x88] sm:$0xff]
  %v1429 = vld [vmem:[%s8 + $0x90] sm:$0xff]
  %v1430 = vld [vmem:[%s8 + $0x98] sm:$0xf]
  %v1431 = vld [vmem:[%s8 + $0x9c] sm:$0xff]
  %v1432 = vld [vmem:[%s8 + $0xa4] sm:$0xff]
  %v1433 = vld [vmem:[%s8 + $0xac] sm:$0xff]
  %v1434 = vld [vmem:[%s8 + $0xb4] sm:$0xff]
  %v1435 = vld [vmem:[%s8 + $0xbc] sm:$0xff]
  %v1436 = vld [vmem:[%s8 + $0xc4] sm:$0xff]
  %v1437 = vld [vmem:[%s8 + $0xcc] sm:$0xf]
  %v1438 = vld [vmem:[%s8 + $0xd0] sm:$0xff]
  %v1439 = vld [vmem:[%s8 + $0xd8] sm:$0xff]
  %v1440 = vld [vmem:[%s8 + $0xe0] sm:$0xff]
  %v1441 = vld [vmem:[%s8 + $0xe8] sm:$0xff]
  %v1442 = vld [vmem:[%s8 + $0xf0] sm:$0xff]
  %v1443 = vld [vmem:[%s8 + $0xf8] sm:$0xff]
  %v1444 = vld [vmem:[%s8 + $0x100] sm:$0xf]
  %v1445 = vld [vmem:[%s8 + $0x104] sm:$0xff]
  %v1446 = vld [vmem:[%s8 + $0x10c] sm:$0xff]
  %v1447 = vld [vmem:[%s8 + $0x114] sm:$0xff]
  %v1448 = vld [vmem:[%s8 + $0x11c] sm:$0xff]
  %v1449 = vld [vmem:[%s8 + $0x124] sm:$0xff]
  %v1450 = vld [vmem:[%s8 + $0x12c] sm:$0xff]
  %v1451 = vld [vmem:[%s8 + $0x134] sm:$0xf]
  %v1452 = vld [vmem:[%s8 + $0x138] sm:$0xff]
  %v1453 = vld [vmem:[%s8 + $0x140] sm:$0xff]
  %v1454 = vld [vmem:[%s8 + $0x148] sm:$0xff]
  %v1455 = vld [vmem:[%s8 + $0x150] sm:$0xff]
  %v1456 = vld [vmem:[%s8 + $0x158] sm:$0xff]
  %v1457 = vld [vmem:[%s8 + $0x160] sm:$0xff]
  %v1458 = vld [vmem:[%s8 + $0x168] sm:$0xf]
  %v1459 = vld [vmem:[%s8 + $0x16c] sm:$0xff]
  %v1460 = vld [vmem:[%s8 + $0x174] sm:$0xff]
  %v1461 = vld [vmem:[%s8 + $0x17c] sm:$0xff]
  %v1462 = vld [vmem:[%s8 + $0x184] sm:$0xff]
  %v1463 = vld [vmem:[%s8 + $0x18c] sm:$0xff]
  %v1464 = vld [vmem:[%s8 + $0x194] sm:$0xff]
  %v1465 = vld [vmem:[%s8 + $0x19c] sm:$0xf]
  %v1466 = vld [vmem:[%s8 + $0x1a0] sm:$0xff]
  %v1467 = vld [vmem:[%s8 + $0x1a8] sm:$0xff]
  %v1468 = vld [vmem:[%s8 + $0x1b0] sm:$0xff]
  %v1469 = vld [vmem:[%s8 + $0x1b8] sm:$0xff]
  %v1470 = vld [vmem:[%s8 + $0x1c0] sm:$0xff]
  %v1471 = vld [vmem:[%s8 + $0x1c8] sm:$0xff]
  %v1472 = vld [vmem:[%s8 + $0x1d0] sm:$0xf]
  %v1473 = vld [vmem:[%s8 + $0x1d4] sm:$0xff]
  %v1474 = vld [vmem:[%s8 + $0x1dc] sm:$0xff]
  %v1475 = vld [vmem:[%s8 + $0x1e4] sm:$0xff]
  %v1476 = vld [vmem:[%s8 + $0x1ec] sm:$0xff]
  %v1477 = vld [vmem:[%s8 + $0x1f4] sm:$0xff]
  %v1478 = vld [vmem:[%s8 + $0x1fc] sm:$0xff]
  %v1479 = vld [vmem:[%s8 + $0x204] sm:$0xf]
  %v1480 = vld [vmem:[%s8 + $0x208] sm:$0xff]
  %v1481 = vld [vmem:[%s8 + $0x210] sm:$0xff]
  %v1482 = vld [vmem:[%s8 + $0x218] sm:$0xff]
  %v1483 = vld [vmem:[%s8 + $0x220] sm:$0xff]
  %v1484 = vld [vmem:[%s8 + $0x228] sm:$0xff]
  %v1485 = vld [vmem:[%s8 + $0x230] sm:$0xff]
  %v1486 = vld [vmem:[%s8 + $0x238] sm:$0xf]
  %v1487 = vld [vmem:[%s8 + $0x23c] sm:$0xff]
  %v1488 = vld [vmem:[%s8 + $0x244] sm:$0xff]
  %v1489 = vld [vmem:[%s8 + $0x24c] sm:$0xff]
  %v1490 = vld [vmem:[%s8 + $0x254] sm:$0xff]
  %v1491 = vld [vmem:[%s8 + $0x25c] sm:$0xff]
  %v1492 = vld [vmem:[%s8 + $0x264] sm:$0xff]
  %v1493 = vld [vmem:[%s8 + $0x26c] sm:$0xf]
  %v1494 = vld [vmem:[%s8 + $0x270] sm:$0xff]
  %v1495 = vld [vmem:[%s8 + $0x278] sm:$0xff]
  %v1496 = vld [vmem:[%s8 + $0x280] sm:$0xff]
  %v1497 = vld [vmem:[%s8 + $0x288] sm:$0xff]
  %v1498 = vld [vmem:[%s8 + $0x290] sm:$0xff]
  %v1499 = vld [vmem:[%s8 + $0x298] sm:$0xff]
  %v1500 = vld [vmem:[%s8 + $0x2a0] sm:$0xf]
  %v1501 = vld [vmem:[%s8 + $0x2a4] sm:$0xff]
  %v1502 = vld [vmem:[%s8 + $0x2ac] sm:$0xff]
  %v1503 = vld [vmem:[%s8 + $0x2b4] sm:$0xff]
  %v1504 = vld [vmem:[%s8 + $0x2bc] sm:$0xff]
  %v1505 = vld [vmem:[%s8 + $0x2c4] sm:$0xff]
  %v1506 = vld [vmem:[%s8 + $0x2cc] sm:$0xff]
  %v1507 = vld [vmem:[%s8 + $0x2d4] sm:$0xf]
  %v1508 = vld [vmem:[%s8 + $0x2d8] sm:$0xff]
  %v1509 = vld [vmem:[%s8 + $0x2e0] sm:$0xff]
  %v1510 = vld [vmem:[%s8 + $0x2e8] sm:$0xff]
  %v1511 = vld [vmem:[%s8 + $0x2f0] sm:$0xff]
  %v1512 = vld [vmem:[%s8 + $0x2f8] sm:$0xff]
  %v1513 = vld [vmem:[%s8 + $0x300] sm:$0xff]
  %v1514 = vld [vmem:[%s8 + $0x308] sm:$0xf]
  %v1515 = vld [vmem:[%s8 + $0x30c] sm:$0xff]
  %v1516 = vld [vmem:[%s8 + $0x314] sm:$0xff]
  %v1517 = vld [vmem:[%s8 + $0x31c] sm:$0xff]
  %v1518 = vld [vmem:[%s8 + $0x324] sm:$0xff]
  %v1519 = vld [vmem:[%s8 + $0x32c] sm:$0xff]
  %v1520 = vld [vmem:[%s8 + $0x334] sm:$0xff]
  %v1521 = vld [vmem:[%s8 + $0x33c] sm:$0xf]
  %v1522 = vld [vmem:[%s9] sm:$0xff]
  %v1523 = vld [vmem:[%s9 + $0x8] sm:$0x1f]
  %v1526 = vlaneseq
  %v1527 = vshrl.u32 %v1526, 7
  %v1528 = vsub.s32 0, %v1527
  %v1529 = vrot.slane %v1522, %v1528
  %v1530 = vlaneseq
  %v1531 = vshrl.u32 %v1530, 7
  %v1532 = vsub.s32 1, %v1531
  %v1533 = vrot.slane %v1522, %v1532
  %v1534 = vlaneseq
  %v1535 = vshrl.u32 %v1534, 7
  %v1536 = vsub.s32 2, %v1535
  %v1537 = vrot.slane %v1522, %v1536
  %v1538 = vlaneseq
  %v1539 = vshrl.u32 %v1538, 7
  %v1540 = vsub.s32 3, %v1539
  %v1541 = vrot.slane %v1522, %v1540
  %v1542 = vlaneseq
  %v1543 = vshrl.u32 %v1542, 7
  %v1544 = vsub.s32 4, %v1543
  %v1545 = vrot.slane %v1522, %v1544
  %v1546 = vlaneseq
  %v1547 = vshrl.u32 %v1546, 7
  %v1548 = vsub.s32 5, %v1547
  %v1549 = vrot.slane %v1522, %v1548
  %v1550 = vlaneseq
  %v1551 = vshrl.u32 %v1550, 7
  %v1552 = vsub.s32 6, %v1551
  %v1553 = vrot.slane %v1522, %v1552
  %v1554 = vlaneseq
  %v1555 = vshrl.u32 %v1554, 7
  %v1556 = vsub.s32 7, %v1555
  %v1557 = vrot.slane %v1522, %v1556
  %v1558 = vlaneseq
  %v1559 = vshrl.u32 %v1558, 7
  %v1560 = vsub.s32 0, %v1559
  %v1561 = vrot.slane %v1523, %v1560
  %v1562 = vlaneseq
  %v1563 = vshrl.u32 %v1562, 7
  %v1564 = vsub.s32 1, %v1563
  %v1565 = vrot.slane %v1523, %v1564
  %v1566 = vlaneseq
  %v1567 = vshrl.u32 %v1566, 7
  %v1568 = vsub.s32 2, %v1567
  %v1569 = vrot.slane %v1523, %v1568
  %v1570 = vlaneseq
  %v1571 = vshrl.u32 %v1570, 7
  %v1572 = vsub.s32 3, %v1571
  %v1573 = vrot.slane %v1523, %v1572
  %v1574 = vlaneseq
  %v1575 = vshrl.u32 %v1574, 7
  %v1576 = vsub.s32 4, %v1575
  %v1577 = vrot.slane %v1523, %v1576
  %v1703 = vunpack.c.l.b16 %v1410
  %v1704 = vunpack.c.h.b16 %v1410
  %v1705 = vunpack.c.l.b16 %v1411
  %v1706 = vunpack.c.h.b16 %v1411
  %v1707 = vunpack.c.l.b16 %v1412
  %v1708 = vunpack.c.h.b16 %v1412
  %v1709 = vunpack.c.l.b16 %v1413
  %v1710 = vunpack.c.h.b16 %v1413
  %v1711 = vunpack.c.l.b16 %v1414
  %v1712 = vunpack.c.h.b16 %v1414
  %v1713 = vunpack.c.l.b16 %v1415
  %v1714 = vunpack.c.h.b16 %v1415
  %v1715 = vunpack.c.l.b16 %v1416
  %v1716 = vunpack.c.l.b16 %v1417
  %v1717 = vunpack.c.h.b16 %v1417
  %v1718 = vunpack.c.l.b16 %v1418
  %v1719 = vunpack.c.h.b16 %v1418
  %v1720 = vunpack.c.l.b16 %v1419
  %v1721 = vunpack.c.h.b16 %v1419
  %v1722 = vunpack.c.l.b16 %v1420
  %v1723 = vunpack.c.h.b16 %v1420
  %v1724 = vunpack.c.l.b16 %v1421
  %v1725 = vunpack.c.h.b16 %v1421
  %v1726 = vunpack.c.l.b16 %v1422
  %v1727 = vunpack.c.h.b16 %v1422
  %v1728 = vunpack.c.l.b16 %v1423
  %v1729 = vunpack.c.l.b16 %v1424
  %v1730 = vunpack.c.h.b16 %v1424
  %v1731 = vunpack.c.l.b16 %v1425
  %v1732 = vunpack.c.h.b16 %v1425
  %v1733 = vunpack.c.l.b16 %v1426
  %v1734 = vunpack.c.h.b16 %v1426
  %v1735 = vunpack.c.l.b16 %v1427
  %v1736 = vunpack.c.h.b16 %v1427
  %v1737 = vunpack.c.l.b16 %v1428
  %v1738 = vunpack.c.h.b16 %v1428
  %v1739 = vunpack.c.l.b16 %v1429
  %v1740 = vunpack.c.h.b16 %v1429
  %v1741 = vunpack.c.l.b16 %v1430
  %v1742 = vunpack.c.l.b16 %v1431
  %v1743 = vunpack.c.h.b16 %v1431
  %v1744 = vunpack.c.l.b16 %v1432
  %v1745 = vunpack.c.h.b16 %v1432
  %v1746 = vunpack.c.l.b16 %v1433
  %v1747 = vunpack.c.h.b16 %v1433
  %v1748 = vunpack.c.l.b16 %v1434
  %v1749 = vunpack.c.h.b16 %v1434
  %v1750 = vunpack.c.l.b16 %v1435
  %v1751 = vunpack.c.h.b16 %v1435
  %v1752 = vunpack.c.l.b16 %v1436
  %v1753 = vunpack.c.h.b16 %v1436
  %v1754 = vunpack.c.l.b16 %v1437
  %v1755 = vunpack.c.l.b16 %v1438
  %v1756 = vunpack.c.h.b16 %v1438
  %v1757 = vunpack.c.l.b16 %v1439
  %v1758 = vunpack.c.h.b16 %v1439
  %v1759 = vunpack.c.l.b16 %v1440
  %v1760 = vunpack.c.h.b16 %v1440
  %v1761 = vunpack.c.l.b16 %v1441
  %v1762 = vunpack.c.h.b16 %v1441
  %v1763 = vunpack.c.l.b16 %v1442
  %v1764 = vunpack.c.h.b16 %v1442
  %v1765 = vunpack.c.l.b16 %v1443
  %v1766 = vunpack.c.h.b16 %v1443
  %v1767 = vunpack.c.l.b16 %v1444
  %v1768 = vunpack.c.l.b16 %v1445
  %v1769 = vunpack.c.h.b16 %v1445
  %v1770 = vunpack.c.l.b16 %v1446
  %v1771 = vunpack.c.h.b16 %v1446
  %v1772 = vunpack.c.l.b16 %v1447
  %v1773 = vunpack.c.h.b16 %v1447
  %v1774 = vunpack.c.l.b16 %v1448
  %v1775 = vunpack.c.h.b16 %v1448
  %v1776 = vunpack.c.l.b16 %v1449
  %v1777 = vunpack.c.h.b16 %v1449
  %v1778 = vunpack.c.l.b16 %v1450
  %v1779 = vunpack.c.h.b16 %v1450
  %v1780 = vunpack.c.l.b16 %v1451
  %v1781 = vunpack.c.l.b16 %v1452
  %v1782 = vunpack.c.h.b16 %v1452
  %v1783 = vunpack.c.l.b16 %v1453
  %v1784 = vunpack.c.h.b16 %v1453
  %v1785 = vunpack.c.l.b16 %v1454
  %v1786 = vunpack.c.h.b16 %v1454
  %v1787 = vunpack.c.l.b16 %v1455
  %v1788 = vunpack.c.h.b16 %v1455
  %v1789 = vunpack.c.l.b16 %v1456
  %v1790 = vunpack.c.h.b16 %v1456
  %v1791 = vunpack.c.l.b16 %v1457
  %v1792 = vunpack.c.h.b16 %v1457
  %v1793 = vunpack.c.l.b16 %v1458
  %v1794 = vunpack.c.l.b16 %v1459
  %v1795 = vunpack.c.h.b16 %v1459
  %v1796 = vunpack.c.l.b16 %v1460
  %v1797 = vunpack.c.h.b16 %v1460
  %v1798 = vunpack.c.l.b16 %v1461
  %v1799 = vunpack.c.h.b16 %v1461
  %v1800 = vunpack.c.l.b16 %v1462
  %v1801 = vunpack.c.h.b16 %v1462
  %v1802 = vunpack.c.l.b16 %v1463
  %v1803 = vunpack.c.h.b16 %v1463
  %v1804 = vunpack.c.l.b16 %v1464
  %v1805 = vunpack.c.h.b16 %v1464
  %v1806 = vunpack.c.l.b16 %v1465
  %v1807 = vunpack.c.l.b16 %v1466
  %v1808 = vunpack.c.h.b16 %v1466
  %v1809 = vunpack.c.l.b16 %v1467
  %v1810 = vunpack.c.h.b16 %v1467
  %v1811 = vunpack.c.l.b16 %v1468
  %v1812 = vunpack.c.h.b16 %v1468
  %v1813 = vunpack.c.l.b16 %v1469
  %v1814 = vunpack.c.h.b16 %v1469
  %v1815 = vunpack.c.l.b16 %v1470
  %v1816 = vunpack.c.h.b16 %v1470
  %v1817 = vunpack.c.l.b16 %v1471
  %v1818 = vunpack.c.h.b16 %v1471
  %v1819 = vunpack.c.l.b16 %v1472
  %v1820 = vunpack.c.l.b16 %v1473
  %v1821 = vunpack.c.h.b16 %v1473
  %v1822 = vunpack.c.l.b16 %v1474
  %v1823 = vunpack.c.h.b16 %v1474
  %v1824 = vunpack.c.l.b16 %v1475
  %v1825 = vunpack.c.h.b16 %v1475
  %v1826 = vunpack.c.l.b16 %v1476
  %v1827 = vunpack.c.h.b16 %v1476
  %v1828 = vunpack.c.l.b16 %v1477
  %v1829 = vunpack.c.h.b16 %v1477
  %v1830 = vunpack.c.l.b16 %v1478
  %v1831 = vunpack.c.h.b16 %v1478
  %v1832 = vunpack.c.l.b16 %v1479
  %v1833 = vunpack.c.l.b16 %v1480
  %v1834 = vunpack.c.h.b16 %v1480
  %v1835 = vunpack.c.l.b16 %v1481
  %v1836 = vunpack.c.h.b16 %v1481
  %v1837 = vunpack.c.l.b16 %v1482
  %v1838 = vunpack.c.h.b16 %v1482
  %v1839 = vunpack.c.l.b16 %v1483
  %v1840 = vunpack.c.h.b16 %v1483
  %v1841 = vunpack.c.l.b16 %v1484
  %v1842 = vunpack.c.h.b16 %v1484
  %v1843 = vunpack.c.l.b16 %v1485
  %v1844 = vunpack.c.h.b16 %v1485
  %v1845 = vunpack.c.l.b16 %v1486
  %v1846 = vunpack.c.l.b16 %v1487
  %v1847 = vunpack.c.h.b16 %v1487
  %v1848 = vunpack.c.l.b16 %v1488
  %v1849 = vunpack.c.h.b16 %v1488
  %v1850 = vunpack.c.l.b16 %v1489
  %v1851 = vunpack.c.h.b16 %v1489
  %v1852 = vunpack.c.l.b16 %v1490
  %v1853 = vunpack.c.h.b16 %v1490
  %v1854 = vunpack.c.l.b16 %v1491
  %v1855 = vunpack.c.h.b16 %v1491
  %v1856 = vunpack.c.l.b16 %v1492
  %v1857 = vunpack.c.h.b16 %v1492
  %v1858 = vunpack.c.l.b16 %v1493
  %v1859 = vunpack.c.l.b16 %v1494
  %v1860 = vunpack.c.h.b16 %v1494
  %v1861 = vunpack.c.l.b16 %v1495
  %v1862 = vunpack.c.h.b16 %v1495
  %v1863 = vunpack.c.l.b16 %v1496
  %v1864 = vunpack.c.h.b16 %v1496
  %v1865 = vunpack.c.l.b16 %v1497
  %v1866 = vunpack.c.h.b16 %v1497
  %v1867 = vunpack.c.l.b16 %v1498
  %v1868 = vunpack.c.h.b16 %v1498
  %v1869 = vunpack.c.l.b16 %v1499
  %v1870 = vunpack.c.h.b16 %v1499
  %v1871 = vunpack.c.l.b16 %v1500
  %v1872 = vunpack.c.l.b16 %v1501
  %v1873 = vunpack.c.h.b16 %v1501
  %v1874 = vunpack.c.l.b16 %v1502
  %v1875 = vunpack.c.h.b16 %v1502
  %v1876 = vunpack.c.l.b16 %v1503
  %v1877 = vunpack.c.h.b16 %v1503
  %v1878 = vunpack.c.l.b16 %v1504
  %v1879 = vunpack.c.h.b16 %v1504
  %v1880 = vunpack.c.l.b16 %v1505
  %v1881 = vunpack.c.h.b16 %v1505
  %v1882 = vunpack.c.l.b16 %v1506
  %v1883 = vunpack.c.h.b16 %v1506
  %v1884 = vunpack.c.l.b16 %v1507
  %v1885 = vunpack.c.l.b16 %v1508
  %v1886 = vunpack.c.h.b16 %v1508
  %v1887 = vunpack.c.l.b16 %v1509
  %v1888 = vunpack.c.h.b16 %v1509
  %v1889 = vunpack.c.l.b16 %v1510
  %v1890 = vunpack.c.h.b16 %v1510
  %v1891 = vunpack.c.l.b16 %v1511
  %v1892 = vunpack.c.h.b16 %v1511
  %v1893 = vunpack.c.l.b16 %v1512
  %v1894 = vunpack.c.h.b16 %v1512
  %v1895 = vunpack.c.l.b16 %v1513
  %v1896 = vunpack.c.h.b16 %v1513
  %v1897 = vunpack.c.l.b16 %v1514
  %v1898 = vunpack.c.l.b16 %v1515
  %v1899 = vunpack.c.h.b16 %v1515
  %v1900 = vunpack.c.l.b16 %v1516
  %v1901 = vunpack.c.h.b16 %v1516
  %v1902 = vunpack.c.l.b16 %v1517
  %v1903 = vunpack.c.h.b16 %v1517
  %v1904 = vunpack.c.l.b16 %v1518
  %v1905 = vunpack.c.h.b16 %v1518
  %v1906 = vunpack.c.l.b16 %v1519
  %v1907 = vunpack.c.h.b16 %v1519
  %v1908 = vunpack.c.l.b16 %v1520
  %v1909 = vunpack.c.h.b16 %v1520
  %v1910 = vunpack.c.l.b16 %v1521
  %v1911 = vpack.c.b16 %v1716, %v1703
  %v1912 = vpack.c.b16 %v1717, %v1704
  %v1913 = vpack.c.b16 %v1718, %v1705
  %v1914 = vpack.c.b16 %v1719, %v1706
  %v1915 = vpack.c.b16 %v1720, %v1707
  %v1916 = vpack.c.b16 %v1721, %v1708
  %v1917 = vpack.c.b16 %v1722, %v1709
  %v1918 = vpack.c.b16 %v1723, %v1710
  %v1919 = vpack.c.b16 %v1724, %v1711
  %v1920 = vpack.c.b16 %v1725, %v1712
  %v1921 = vpack.c.b16 %v1726, %v1713
  %v1922 = vpack.c.b16 %v1727, %v1714
  %v1923 = vpack.c.b16 %v1728, %v1715
  %v1924 = vpack.c.b16 %v1742, %v1729
  %v1925 = vpack.c.b16 %v1743, %v1730
  %v1926 = vpack.c.b16 %v1744, %v1731
  %v1927 = vpack.c.b16 %v1745, %v1732
  %v1928 = vpack.c.b16 %v1746, %v1733
  %v1929 = vpack.c.b16 %v1747, %v1734
  %v1930 = vpack.c.b16 %v1748, %v1735
  %v1931 = vpack.c.b16 %v1749, %v1736
  %v1932 = vpack.c.b16 %v1750, %v1737
  %v1933 = vpack.c.b16 %v1751, %v1738
  %v1934 = vpack.c.b16 %v1752, %v1739
  %v1935 = vpack.c.b16 %v1753, %v1740
  %v1936 = vpack.c.b16 %v1754, %v1741
  %v1937 = vpack.c.b16 %v1768, %v1755
  %v1938 = vpack.c.b16 %v1769, %v1756
  %v1939 = vpack.c.b16 %v1770, %v1757
  %v1940 = vpack.c.b16 %v1771, %v1758
  %v1941 = vpack.c.b16 %v1772, %v1759
  %v1942 = vpack.c.b16 %v1773, %v1760
  %v1943 = vpack.c.b16 %v1774, %v1761
  %v1944 = vpack.c.b16 %v1775, %v1762
  %v1945 = vpack.c.b16 %v1776, %v1763
  %v1946 = vpack.c.b16 %v1777, %v1764
  %v1947 = vpack.c.b16 %v1778, %v1765
  %v1948 = vpack.c.b16 %v1779, %v1766
  %v1949 = vpack.c.b16 %v1780, %v1767
  %v1950 = vpack.c.b16 %v1794, %v1781
  %v1951 = vpack.c.b16 %v1795, %v1782
  %v1952 = vpack.c.b16 %v1796, %v1783
  %v1953 = vpack.c.b16 %v1797, %v1784
  %v1954 = vpack.c.b16 %v1798, %v1785
  %v1955 = vpack.c.b16 %v1799, %v1786
  %v1956 = vpack.c.b16 %v1800, %v1787
  %v1957 = vpack.c.b16 %v1801, %v1788
  %v1958 = vpack.c.b16 %v1802, %v1789
  %v1959 = vpack.c.b16 %v1803, %v1790
  %v1960 = vpack.c.b16 %v1804, %v1791
  %v1961 = vpack.c.b16 %v1805, %v1792
  %v1962 = vpack.c.b16 %v1806, %v1793
  %v1963 = vpack.c.b16 %v1820, %v1807
  %v1964 = vpack.c.b16 %v1821, %v1808
  %v1965 = vpack.c.b16 %v1822, %v1809
  %v1966 = vpack.c.b16 %v1823, %v1810
  %v1967 = vpack.c.b16 %v1824, %v1811
  %v1968 = vpack.c.b16 %v1825, %v1812
  %v1969 = vpack.c.b16 %v1826, %v1813
  %v1970 = vpack.c.b16 %v1827, %v1814
  %v1971 = vpack.c.b16 %v1828, %v1815
  %v1972 = vpack.c.b16 %v1829, %v1816
  %v1973 = vpack.c.b16 %v1830, %v1817
  %v1974 = vpack.c.b16 %v1831, %v1818
  %v1975 = vpack.c.b16 %v1832, %v1819
  %v1976 = vpack.c.b16 %v1846, %v1833
  %v1977 = vpack.c.b16 %v1847, %v1834
  %v1978 = vpack.c.b16 %v1848, %v1835
  %v1979 = vpack.c.b16 %v1849, %v1836
  %v1980 = vpack.c.b16 %v1850, %v1837
  %v1981 = vpack.c.b16 %v1851, %v1838
  %v1982 = vpack.c.b16 %v1852, %v1839
  %v1983 = vpack.c.b16 %v1853, %v1840
  %v1984 = vpack.c.b16 %v1854, %v1841
  %v1985 = vpack.c.b16 %v1855, %v1842
  %v1986 = vpack.c.b16 %v1856, %v1843
  %v1987 = vpack.c.b16 %v1857, %v1844
  %v1988 = vpack.c.b16 %v1858, %v1845
  %v1989 = vpack.c.b16 %v1872, %v1859
  %v1990 = vpack.c.b16 %v1873, %v1860
  %v1991 = vpack.c.b16 %v1874, %v1861
  %v1992 = vpack.c.b16 %v1875, %v1862
  %v1993 = vpack.c.b16 %v1876, %v1863
  %v1994 = vpack.c.b16 %v1877, %v1864
  %v1995 = vpack.c.b16 %v1878, %v1865
  %v1996 = vpack.c.b16 %v1879, %v1866
  %v1997 = vpack.c.b16 %v1880, %v1867
  %v1998 = vpack.c.b16 %v1881, %v1868
  %v1999 = vpack.c.b16 %v1882, %v1869
  %v2000 = vpack.c.b16 %v1883, %v1870
  %v2001 = vpack.c.b16 %v1884, %v1871
  %v2002 = vpack.c.b16 %v1898, %v1885
  %v2003 = vpack.c.b16 %v1899, %v1886
  %v2004 = vpack.c.b16 %v1900, %v1887
  %v2005 = vpack.c.b16 %v1901, %v1888
  %v2006 = vpack.c.b16 %v1902, %v1889
  %v2007 = vpack.c.b16 %v1903, %v1890
  %v2008 = vpack.c.b16 %v1904, %v1891
  %v2009 = vpack.c.b16 %v1905, %v1892
  %v2010 = vpack.c.b16 %v1906, %v1893
  %v2011 = vpack.c.b16 %v1907, %v1894
  %v2012 = vpack.c.b16 %v1908, %v1895
  %v2013 = vpack.c.b16 %v1909, %v1896
  %v2014 = vpack.c.b16 %v1910, %v1897
  %2119 = vmatprep.subr.bf16.mxu0 %v1912
  %2120 = vmatpush1.bf16.msra.mxu0 %v1911
  %2121 = vmatprep.subr.bf16.mxu0 %v1925
  %2122 = vmatpush1.bf16.msra.mxu0 %v1924
  %2123 = vmatprep.subr.bf16.mxu0 %v1938
  %2124 = vmatpush1.bf16.msra.mxu0 %v1937
  %2125 = vmatprep.subr.bf16.mxu0 %v1951
  %2126 = vmatpush1.bf16.msra.mxu0 %v1950
  %2127 = vmatprep.subr.bf16.mxu0 %v1964
  %2128 = vmatpush1.bf16.msra.mxu0 %v1963
  %2129 = vmatprep.subr.bf16.mxu0 %v1977
  %2130 = vmatpush1.bf16.msra.mxu0 %v1976
  %2131 = vmatprep.subr.bf16.mxu0 %v1990
  %2132 = vmatpush1.bf16.msra.mxu0 %v1989
  %2133 = vmatprep.subr.bf16.mxu0 %v2003
  %2134 = vmatpush1.bf16.msra.mxu0 %v2002
  %2135 = vmatprep.subr.bf16.mxu0 0
  %2136 = vmatpush1.bf16.msra.mxu0 0
  %2137 = vmatprep.subr.bf16.mxu0 0
  %2138 = vmatpush1.bf16.msra.mxu0 0
  %2139 = vmatprep.subr.bf16.mxu0 0
  %2140 = vmatpush1.bf16.msra.mxu0 0
  %2141 = vmatprep.subr.bf16.mxu0 0
  %2142 = vmatpush1.bf16.msra.mxu0 0
  %2143 = vmatprep.subr.bf16.mxu0 0
  %2144 = vmatpush1.bf16.msra.mxu0 0
  %2145 = vmatprep.subr.bf16.mxu0 0
  %2146 = vmatpush1.bf16.msra.mxu0 0
  %2147 = vmatprep.subr.bf16.mxu0 0
  %2148 = vmatpush1.bf16.msra.mxu0 0
  %2149 = vmatprep.subr.bf16.mxu0 0
  %2150 = vmatpush1.bf16.msra.mxu0 0
  %2151 = vmatprep.mubr.bf16.mxu0 0
  %2152 = vmatmul.mubr.bf16.gmra.mrb[0].mxu0 %v1409
  %v2153 = vpop.f32.mrb[0].mxu0
  %v2154 = vadd.f32 %v1529, %v2153
  %v2155 = vpop.f32.mrb[0].mxu0
  %v2156 = vadd.f32 %v1533, %v2155
  %v2157 = vpop.f32.mrb[0].mxu0
  %v2158 = vpop.f32.mrb[0].mxu0
  %2159 = vdwg.mxu0
  %2160 = vmatprep.subr.bf16.mxu0 %v1914
  %2161 = vmatpush1.bf16.msra.mxu0 %v1913
  %2162 = vmatprep.subr.bf16.mxu0 %v1927
  %2163 = vmatpush1.bf16.msra.mxu0 %v1926
  %2164 = vmatprep.subr.bf16.mxu0 %v1940
  %2165 = vmatpush1.bf16.msra.mxu0 %v1939
  %2166 = vmatprep.subr.bf16.mxu0 %v1953
  %2167 = vmatpush1.bf16.msra.mxu0 %v1952
  %2168 = vmatprep.subr.bf16.mxu0 %v1966
  %2169 = vmatpush1.bf16.msra.mxu0 %v1965
  %2170 = vmatprep.subr.bf16.mxu0 %v1979
  %2171 = vmatpush1.bf16.msra.mxu0 %v1978
  %2172 = vmatprep.subr.bf16.mxu0 %v1992
  %2173 = vmatpush1.bf16.msra.mxu0 %v1991
  %2174 = vmatprep.subr.bf16.mxu0 %v2005
  %2175 = vmatpush1.bf16.msra.mxu0 %v2004
  %2176 = vmatprep.subr.bf16.mxu0 0
  %2177 = vmatpush1.bf16.msra.mxu0 0
  %2178 = vmatprep.subr.bf16.mxu0 0
  %2179 = vmatpush1.bf16.msra.mxu0 0
  %2180 = vmatprep.subr.bf16.mxu0 0
  %2181 = vmatpush1.bf16.msra.mxu0 0
  %2182 = vmatprep.subr.bf16.mxu0 0
  %2183 = vmatpush1.bf16.msra.mxu0 0
  %2184 = vmatprep.subr.bf16.mxu0 0
  %2185 = vmatpush1.bf16.msra.mxu0 0
  %2186 = vmatprep.subr.bf16.mxu0 0
  %2187 = vmatpush1.bf16.msra.mxu0 0
  %2188 = vmatprep.subr.bf16.mxu0 0
  %2189 = vmatpush1.bf16.msra.mxu0 0
  %2190 = vmatprep.subr.bf16.mxu0 0
  %2191 = vmatpush1.bf16.msra.mxu0 0
  %2192 = vmatprep.mubr.bf16.mxu0 0
  %2193 = vmatmul.mubr.bf16.gmra.mrb[0].mxu0 %v1409
  %v2194 = vpop.f32.mrb[0].mxu0
  %v2195 = vadd.f32 %v1537, %v2194
  %v2196 = vpop.f32.mrb[0].mxu0
  %v2197 = vadd.f32 %v1541, %v2196
  %v2198 = vpop.f32.mrb[0].mxu0
  %v2199 = vpop.f32.mrb[0].mxu0
  %2200 = vdwg.mxu0
  %2201 = vmatprep.subr.bf16.mxu0 %v1916
  %2202 = vmatpush1.bf16.msra.mxu0 %v1915
  %2203 = vmatprep.subr.bf16.mxu0 %v1929
  %2204 = vmatpush1.bf16.msra.mxu0 %v1928
  %2205 = vmatprep.subr.bf16.mxu0 %v1942
  %2206 = vmatpush1.bf16.msra.mxu0 %v1941
  %2207 = vmatprep.subr.bf16.mxu0 %v1955
  %2208 = vmatpush1.bf16.msra.mxu0 %v1954
  %2209 = vmatprep.subr.bf16.mxu0 %v1968
  %2210 = vmatpush1.bf16.msra.mxu0 %v1967
  %2211 = vmatprep.subr.bf16.mxu0 %v1981
  %2212 = vmatpush1.bf16.msra.mxu0 %v1980
  %2213 = vmatprep.subr.bf16.mxu0 %v1994
  %2214 = vmatpush1.bf16.msra.mxu0 %v1993
  %2215 = vmatprep.subr.bf16.mxu0 %v2007
  %2216 = vmatpush1.bf16.msra.mxu0 %v2006
  %2217 = vmatprep.subr.bf16.mxu0 0
  %2218 = vmatpush1.bf16.msra.mxu0 0
  %2219 = vmatprep.subr.bf16.mxu0 0
  %2220 = vmatpush1.bf16.msra.mxu0 0
  %2221 = vmatprep.subr.bf16.mxu0 0
  %2222 = vmatpush1.bf16.msra.mxu0 0
  %2223 = vmatprep.subr.bf16.mxu0 0
  %2224 = vmatpush1.bf16.msra.mxu0 0
  %2225 = vmatprep.subr.bf16.mxu0 0
  %2226 = vmatpush1.bf16.msra.mxu0 0
  %2227 = vmatprep.subr.bf16.mxu0 0
  %2228 = vmatpush1.bf16.msra.mxu0 0
  %2229 = vmatprep.subr.bf16.mxu0 0
  %2230 = vmatpush1.bf16.msra.mxu0 0
  %2231 = vmatprep.subr.bf16.mxu0 0
  %2232 = vmatpush1.bf16.msra.mxu0 0
  %2233 = vmatprep.mubr.bf16.mxu0 0
  %2234 = vmatmul.mubr.bf16.gmra.mrb[0].mxu0 %v1409
  %v2235 = vpop.f32.mrb[0].mxu0
  %v2236 = vadd.f32 %v1545, %v2235
  %v2237 = vpop.f32.mrb[0].mxu0
  %v2238 = vadd.f32 %v1549, %v2237
  %v2239 = vpop.f32.mrb[0].mxu0
  %v2240 = vpop.f32.mrb[0].mxu0
  %2241 = vdwg.mxu0
  %2242 = vmatprep.subr.bf16.mxu0 %v1918
  %2243 = vmatpush1.bf16.msra.mxu0 %v1917
  %2244 = vmatprep.subr.bf16.mxu0 %v1931
  %2245 = vmatpush1.bf16.msra.mxu0 %v1930
  %2246 = vmatprep.subr.bf16.mxu0 %v1944
  %2247 = vmatpush1.bf16.msra.mxu0 %v1943
  %2248 = vmatprep.subr.bf16.mxu0 %v1957
  %2249 = vmatpush1.bf16.msra.mxu0 %v1956
  %2250 = vmatprep.subr.bf16.mxu0 %v1970
  %2251 = vmatpush1.bf16.msra.mxu0 %v1969
  %2252 = vmatprep.subr.bf16.mxu0 %v1983
  %2253 = vmatpush1.bf16.msra.mxu0 %v1982
  %2254 = vmatprep.subr.bf16.mxu0 %v1996
  %2255 = vmatpush1.bf16.msra.mxu0 %v1995
  %2256 = vmatprep.subr.bf16.mxu0 %v2009
  %2257 = vmatpush1.bf16.msra.mxu0 %v2008
  %2258 = vmatprep.subr.bf16.mxu0 0
  %2259 = vmatpush1.bf16.msra.mxu0 0
  %2260 = vmatprep.subr.bf16.mxu0 0
  %2261 = vmatpush1.bf16.msra.mxu0 0
  %2262 = vmatprep.subr.bf16.mxu0 0
  %2263 = vmatpush1.bf16.msra.mxu0 0
  %2264 = vmatprep.subr.bf16.mxu0 0
  %2265 = vmatpush1.bf16.msra.mxu0 0
  %2266 = vmatprep.subr.bf16.mxu0 0
  %2267 = vmatpush1.bf16.msra.mxu0 0
  %2268 = vmatprep.subr.bf16.mxu0 0
  %2269 = vmatpush1.bf16.msra.mxu0 0
  %2270 = vmatprep.subr.bf16.mxu0 0
  %2271 = vmatpush1.bf16.msra.mxu0 0
  %2272 = vmatprep.subr.bf16.mxu0 0
  %2273 = vmatpush1.bf16.msra.mxu0 0
  %2274 = vmatprep.mubr.bf16.mxu0 0
  %2275 = vmatmul.mubr.bf16.gmra.mrb[0].mxu0 %v1409
  %v2276 = vpop.f32.mrb[0].mxu0
  %v2277 = vadd.f32 %v1553, %v2276
  %v2278 = vpop.f32.mrb[0].mxu0
  %v2279 = vadd.f32 %v1557, %v2278
  %v2280 = vpop.f32.mrb[0].mxu0
  %v2281 = vpop.f32.mrb[0].mxu0
  %2282 = vdwg.mxu0
  %2283 = vmatprep.subr.bf16.mxu0 %v1920
  %2284 = vmatpush1.bf16.msra.mxu0 %v1919
  %2285 = vmatprep.subr.bf16.mxu0 %v1933
  %2286 = vmatpush1.bf16.msra.mxu0 %v1932
  %2287 = vmatprep.subr.bf16.mxu0 %v1946
  %2288 = vmatpush1.bf16.msra.mxu0 %v1945
  %2289 = vmatprep.subr.bf16.mxu0 %v1959
  %2290 = vmatpush1.bf16.msra.mxu0 %v1958
  %2291 = vmatprep.subr.bf16.mxu0 %v1972
  %2292 = vmatpush1.bf16.msra.mxu0 %v1971
  %2293 = vmatprep.subr.bf16.mxu0 %v1985
  %2294 = vmatpush1.bf16.msra.mxu0 %v1984
  %2295 = vmatprep.subr.bf16.mxu0 %v1998
  %2296 = vmatpush1.bf16.msra.mxu0 %v1997
  %2297 = vmatprep.subr.bf16.mxu0 %v2011
  %2298 = vmatpush1.bf16.msra.mxu0 %v2010
  %2299 = vmatprep.subr.bf16.mxu0 0
  %2300 = vmatpush1.bf16.msra.mxu0 0
  %2301 = vmatprep.subr.bf16.mxu0 0
  %2302 = vmatpush1.bf16.msra.mxu0 0
  %2303 = vmatprep.subr.bf16.mxu0 0
  %2304 = vmatpush1.bf16.msra.mxu0 0
  %2305 = vmatprep.subr.bf16.mxu0 0
  %2306 = vmatpush1.bf16.msra.mxu0 0
  %2307 = vmatprep.subr.bf16.mxu0 0
  %2308 = vmatpush1.bf16.msra.mxu0 0
  %2309 = vmatprep.subr.bf16.mxu0 0
  %2310 = vmatpush1.bf16.msra.mxu0 0
  %2311 = vmatprep.subr.bf16.mxu0 0
  %2312 = vmatpush1.bf16.msra.mxu0 0
  %2313 = vmatprep.subr.bf16.mxu0 0
  %2314 = vmatpush1.bf16.msra.mxu0 0
  %2315 = vmatprep.mubr.bf16.mxu0 0
  %2316 = vmatmul.mubr.bf16.gmra.mrb[0].mxu0 %v1409
  %v2317 = vpop.f32.mrb[0].mxu0
  %v2318 = vadd.f32 %v1561, %v2317
  %v2319 = vpop.f32.mrb[0].mxu0
  %v2320 = vadd.f32 %v1565, %v2319
  %v2321 = vpop.f32.mrb[0].mxu0
  %v2322 = vpop.f32.mrb[0].mxu0
  %2323 = vdwg.mxu0
  %2324 = vmatprep.subr.bf16.mxu0 %v1922
  %2325 = vmatpush1.bf16.msra.mxu0 %v1921
  %2326 = vmatprep.subr.bf16.mxu0 %v1935
  %2327 = vmatpush1.bf16.msra.mxu0 %v1934
  %2328 = vmatprep.subr.bf16.mxu0 %v1948
  %2329 = vmatpush1.bf16.msra.mxu0 %v1947
  %2330 = vmatprep.subr.bf16.mxu0 %v1961
  %2331 = vmatpush1.bf16.msra.mxu0 %v1960
  %2332 = vmatprep.subr.bf16.mxu0 %v1974
  %2333 = vmatpush1.bf16.msra.mxu0 %v1973
  %2334 = vmatprep.subr.bf16.mxu0 %v1987
  %2335 = vmatpush1.bf16.msra.mxu0 %v1986
  %2336 = vmatprep.subr.bf16.mxu0 %v2000
  %2337 = vmatpush1.bf16.msra.mxu0 %v1999
  %2338 = vmatprep.subr.bf16.mxu0 %v2013
  %2339 = vmatpush1.bf16.msra.mxu0 %v2012
  %2340 = vmatprep.subr.bf16.mxu0 0
  %2341 = vmatpush1.bf16.msra.mxu0 0
  %2342 = vmatprep.subr.bf16.mxu0 0
  %2343 = vmatpush1.bf16.msra.mxu0 0
  %2344 = vmatprep.subr.bf16.mxu0 0
  %2345 = vmatpush1.bf16.msra.mxu0 0
  %2346 = vmatprep.subr.bf16.mxu0 0
  %2347 = vmatpush1.bf16.msra.mxu0 0
  %2348 = vmatprep.subr.bf16.mxu0 0
  %2349 = vmatpush1.bf16.msra.mxu0 0
  %2350 = vmatprep.subr.bf16.mxu0 0
  %2351 = vmatpush1.bf16.msra.mxu0 0
  %2352 = vmatprep.subr.bf16.mxu0 0
  %2353 = vmatpush1.bf16.msra.mxu0 0
  %2354 = vmatprep.subr.bf16.mxu0 0
  %2355 = vmatpush1.bf16.msra.mxu0 0
  %2356 = vmatprep.mubr.bf16.mxu0 0
  %2357 = vmatmul.mubr.bf16.gmra.mrb[0].mxu0 %v1409
  %v2358 = vpop.f32.mrb[0].mxu0
  %v2359 = vadd.f32 %v1569, %v2358
  %v2360 = vpop.f32.mrb[0].mxu0
  %v2361 = vadd.f32 %v1573, %v2360
  %v2362 = vpop.f32.mrb[0].mxu0
  %v2363 = vpop.f32.mrb[0].mxu0
  %2364 = vdwg.mxu0
  %2365 = vmatprep.subr.bf16.mxu0 0
  %2366 = vmatpush1.bf16.msra.mxu0 %v1923
  %2367 = vmatprep.subr.bf16.mxu0 0
  %2368 = vmatpush1.bf16.msra.mxu0 %v1936
  %2369 = vmatprep.subr.bf16.mxu0 0
  %2370 = vmatpush1.bf16.msra.mxu0 %v1949
  %2371 = vmatprep.subr.bf16.mxu0 0
  %2372 = vmatpush1.bf16.msra.mxu0 %v1962
  %2373 = vmatprep.subr.bf16.mxu0 0
  %2374 = vmatpush1.bf16.msra.mxu0 %v1975
  %2375 = vmatprep.subr.bf16.mxu0 0
  %2376 = vmatpush1.bf16.msra.mxu0 %v1988
  %2377 = vmatprep.subr.bf16.mxu0 0
  %2378 = vmatpush1.bf16.msra.mxu0 %v2001
  %2379 = vmatprep.subr.bf16.mxu0 0
  %2380 = vmatpush1.bf16.msra.mxu0 %v2014
  %2381 = vmatprep.subr.bf16.mxu0 0
  %2382 = vmatpush1.bf16.msra.mxu0 0
  %2383 = vmatprep.subr.bf16.mxu0 0
  %2384 = vmatpush1.bf16.msra.mxu0 0
  %2385 = vmatprep.subr.bf16.mxu0 0
  %2386 = vmatpush1.bf16.msra.mxu0 0
  %2387 = vmatprep.subr.bf16.mxu0 0
  %2388 = vmatpush1.bf16.msra.mxu0 0
  %2389 = vmatprep.subr.bf16.mxu0 0
  %2390 = vmatpush1.bf16.msra.mxu0 0
  %2391 = vmatprep.subr.bf16.mxu0 0
  %2392 = vmatpush1.bf16.msra.mxu0 0
  %2393 = vmatprep.subr.bf16.mxu0 0
  %2394 = vmatpush1.bf16.msra.mxu0 0
  %2395 = vmatprep.subr.bf16.mxu0 0
  %2396 = vmatpush1.bf16.msra.mxu0 0
  %2397 = vmatprep.mubr.bf16.mxu0 0
  %2398 = vmatmul.mubr.bf16.gmra.mrb[0].mxu0 %v1409
  %v2399 = vpop.f32.mrb[0].mxu0
  %v2400 = vadd.f32 %v1577, %v2399
  %v2401 = vpop.f32.mrb[0].mxu0
  %v2402 = vpop.f32.mrb[0].mxu0
  %v2403 = vpop.f32.mrb[0].mxu0
  %2404 = vdwg.mxu0
  %v2405 = vmax.f32 %v2154, 0.0
  %v2406 = vmax.f32 %v2156, 0.0
  %v2407 = vmax.f32 %v2195, 0.0
  %v2408 = vmax.f32 %v2197, 0.0
  %v2409 = vmax.f32 %v2236, 0.0
  %v2410 = vmax.f32 %v2238, 0.0
  %v2411 = vmax.f32 %v2277, 0.0
  %v2412 = vmax.f32 %v2279, 0.0
  %v2413 = vmax.f32 %v2318, 0.0
  %v2414 = vmax.f32 %v2320, 0.0
  %v2415 = vmax.f32 %v2359, 0.0
  %v2416 = vmax.f32 %v2361, 0.0
  %v2417 = vmax.f32 %v2400, 0.0
  %vm2418 = vcmask 320512
  %2419 = vst.msk [vmem:[%s10] sm:$0x3] %vm2418, %v1325
  %v2420 = vpack.c.bf16 %v2405, %v2405
  %v2421 = vpack.c.bf16 %v2406, %v2406
  %v2422 = vpack.c.bf16 %v2407, %v2407
  %v2423 = vpack.c.bf16 %v2408, %v2408
  %v2424 = vpack.c.bf16 %v2409, %v2409
  %v2425 = vpack.c.bf16 %v2410, %v2410
  %v2426 = vpack.c.bf16 %v2411, %v2411
  %v2427 = vpack.c.bf16 %v2412, %v2412
  %v2428 = vpack.c.bf16 %v2413, %v2413
  %v2429 = vpack.c.bf16 %v2414, %v2414
  %v2430 = vpack.c.bf16 %v2415, %v2415
  %v2431 = vpack.c.bf16 %v2416, %v2416
  %v2432 = vpack.c.bf16 %v2417, %v2417
  %v2446 = vcombine.low %v2420, %v2421
  %v2447 = vcombine.low %v2422, %v2423
  %v2448 = vcombine.low %v2424, %v2425
  %v2449 = vcombine.low %v2426, %v2427
  %v2451 = vunpack.c.l.s4 1966171168
  %v2452 = vunpack.c.0.s8 %v2451
  %v2453 = vlaneseq
  %v2454 = vshrl.u32 %v2453, 7
  %v2455 = vsub.s32 %v2452, %v2454
  %v2456 = vrot.slane %v2446, %v2455
  %v2458 = vunpack.c.l.s4 1966171168
  %v2459 = vunpack.c.0.s8 %v2458
  %v2460 = vlaneseq
  %v2461 = vshrl.u32 %v2460, 7
  %v2462 = vsub.s32 %v2459, %v2461
  %v2463 = vrot.slane %v2447, %v2462
  %v2465 = vunpack.c.l.s4 1966171168
  %v2466 = vunpack.c.0.s8 %v2465
  %v2467 = vlaneseq
  %v2468 = vshrl.u32 %v2467, 7
  %v2469 = vsub.s32 %v2466, %v2468
  %v2470 = vrot.slane %v2448, %v2469
  %v2472 = vunpack.c.l.s4 1966171168
  %v2473 = vunpack.c.0.s8 %v2472
  %v2474 = vlaneseq
  %v2475 = vshrl.u32 %v2474, 7
  %v2476 = vsub.s32 %v2473, %v2475
  %v2477 = vrot.slane %v2449, %v2476
  %v2478 = vcombine.low %v2456, %v2463
  %v2479 = vcombine.low %v2470, %v2477
  %v2481 = vunpack.c.l.s4 1966171168
  %v2482 = vunpack.c.0.s8 %v2481
  %v2483 = vlaneseq
  %v2484 = vshrl.u32 %v2483, 7
  %v2485 = vsub.s32 %v2482, %v2484
  %v2486 = vrot.slane %v2478, %v2485
  %v2488 = vunpack.c.l.s4 1966171168
  %v2489 = vunpack.c.0.s8 %v2488
  %v2490 = vlaneseq
  %v2491 = vshrl.u32 %v2490, 7
  %v2492 = vsub.s32 %v2489, %v2491
  %v2493 = vrot.slane %v2479, %v2492
  %v2494 = vcombine.low %v2486, %v2493
  %v2495 = vcombine.low %v2428, %v2429
  %v2496 = vcombine.low %v2430, %v2431
  %v2498 = vunpack.c.l.s4 1966171168
  %v2499 = vunpack.c.0.s8 %v2498
  %v2500 = vlaneseq
  %v2501 = vshrl.u32 %v2500, 7
  %v2502 = vsub.s32 %v2499, %v2501
  %v2503 = vrot.slane %v2495, %v2502
  %v2505 = vunpack.c.l.s4 1966171168
  %v2506 = vunpack.c.0.s8 %v2505
  %v2507 = vlaneseq
  %v2508 = vshrl.u32 %v2507, 7
  %v2509 = vsub.s32 %v2506, %v2508
  %v2510 = vrot.slane %v2496, %v2509
  %v2512 = vunpack.c.l.s4 1966171168
  %v2513 = vunpack.c.0.s8 %v2512
  %v2514 = vlaneseq
  %v2515 = vshrl.u32 %v2514, 7
  %v2516 = vsub.s32 %v2513, %v2515
  %v2517 = vrot.slane %v2432, %v2516
  %v2518 = vcombine.low %v2503, %v2510
  %v2520 = vunpack.c.l.s4 1966171168
  %v2521 = vunpack.c.0.s8 %v2520
  %v2522 = vlaneseq
  %v2523 = vshrl.u32 %v2522, 7
  %v2524 = vsub.s32 %v2521, %v2523
  %v2525 = vrot.slane %v2518, %v2524
  %v2527 = vunpack.c.l.s4 1966171168
  %v2528 = vunpack.c.0.s8 %v2527
  %v2529 = vlaneseq
  %v2530 = vshrl.u32 %v2529, 7
  %v2531 = vsub.s32 %v2528, %v2530
  %v2532 = vrot.slane %v2517, %v2531
  %v2533 = vcombine.low %v2525, %v2532
  %2536 = vst [vmem:[%s11] sm:$0xff] %v2494
  %vm2537 = vcmask 1040384
  %vm2538 = vcmask 1041409
  %vm2539 = vmor %vm2538, %vm2537
  %vm2540 = vcmask 1042434
  %vm2541 = vmor %vm2540, %vm2539
  %vm2542 = vcmask 1043459
  %vm2543 = vmor %vm2542, %vm2541
  %vm2544 = vcmask 258052
  %vm2545 = vmor %vm2544, %vm2543
  %2546 = vst.msk [vmem:[%s11 + $0x8] sm:$0x1f] %vm2545, %v2533
  // Predicated region
  $region42: #{vae_forward.4} parent=0 // pred_check
    _
  $region43: #{vae_forward.4} parent=0 // pred_check_branch
    %2548 = sbr.rel (0) target = $region45
  $region44: #{vae_forward.4} parent=0 // pred_region
    _
  $region45: #{vae_forward.4} parent=0 // pred_fallthru
    _
  // Predicated region
  $region46: #{vae_forward.4} parent=0 // pred_check
    _
  $region47: #{vae_forward.4} parent=0 // pred_check_branch
    %2550 = sbr.rel (0) target = $region49
  $region48: #{vae_forward.4} parent=0 // pred_region
    _
  $region49: #{vae_forward.4} parent=0 // pred_fallthru
    _
  // Predicated region
  $region50: #{vae_forward.4} parent=0 // pred_check
    _
  $region51: #{vae_forward.4} parent=0 // pred_check_branch
    %2552 = sbr.rel (0) target = $region53
  $region52: #{vae_forward.4} parent=0 // pred_region
    _
  $region53: #{vae_forward.4} parent=0 // pred_fallthru
    _
  // Predicated region
  $region54: #{vae_forward.4} parent=0 // pred_check
    _
  $region55: #{vae_forward.4} parent=0 // pred_check_branch
    %2554 = sbr.rel (0) target = $region57
  $region56: #{vae_forward.4} parent=0 // pred_region
    _
  $region57: #{vae_forward.4} parent=0 // pred_fallthru
    _

// kernel: vae_forward.3
$region0: #{vae_forward.3}
  #allocation0 [shape = 'u32[]', space=smem, size = 0x4, offset = 0x4, fixed_abs, tag = 'smem constant byte address 0x4 - core index']
  #allocation1 [shape = 'u32[144,128]{1,0:T(1,128)}', space=vmem, size = 0x12000, scoped, tag = 'internal scratch']
  %s0 = inlined_call_operand.vmem [shape: bf16[2,8,8,16], index: 0, kind: input, shape index: {}]
  %s1 = inlined_call_operand.vmem [shape: bf16[64,64], index: 1, kind: input, shape index: {}]
  %s2 = inlined_call_operand.vmem [shape: f32[1,64], index: 2, kind: input, shape index: {}]
  %s3 = inlined_call_operand.vmem [shape: bf16[256,32], index: 3, kind: input, shape index: {}]
  %s4 = inlined_call_operand.vmem [shape: f32[1,32], index: 4, kind: input, shape index: {}]
  %s5 = inlined_call_operand.vmem [shape: bf16[2,49,32], index: 5, kind: output, shape index: {}]
  %s6 = sld [smem:[#allocation0]]
  $region30: #{vae_forward.3} parent=0
    _
  %s8 = ssub.s32 1, %s6
  %s9 = scalar_select 0, %s8, %s6
  // Predicated region
  $region2: #{vae_forward.3} parent=0 // pred_check
    _
  $region3: #{vae_forward.3} parent=0 // pred_check_branch
    %11 = sbr.rel (0) target = $region5
  $region4: #{vae_forward.3} parent=0 // pred_region
    _
  $region5: #{vae_forward.3} parent=0 // pred_fallthru
    _
  // Predicated region
  $region6: #{vae_forward.3} parent=0 // pred_check
    _
  $region7: #{vae_forward.3} parent=0 // pred_check_branch
    %13 = sbr.rel (0) target = $region9
  $region8: #{vae_forward.3} parent=0 // pred_region
    _
  $region9: #{vae_forward.3} parent=0 // pred_fallthru
    _
  // Predicated region
  $region10: #{vae_forward.3} parent=0 // pred_check
    _
  $region11: #{vae_forward.3} parent=0 // pred_check_branch
    %15 = sbr.rel (0) target = $region13
  $region12: #{vae_forward.3} parent=0 // pred_region
    _
  $region13: #{vae_forward.3} parent=0 // pred_fallthru
    _
  // Predicated region
  $region14: #{vae_forward.3} parent=0 // pred_check
    _
  $region15: #{vae_forward.3} parent=0 // pred_check_branch
    %17 = sbr.rel (0) target = $region17
  $region16: #{vae_forward.3} parent=0 // pred_region
    _
  $region17: #{vae_forward.3} parent=0 // pred_fallthru
    _
  // Predicated region
  $region18: #{vae_forward.3} parent=0 // pred_check
    _
  $region19: #{vae_forward.3} parent=0 // pred_check_branch
    %19 = sbr.rel (0) target = $region21
  $region20: #{vae_forward.3} parent=0 // pred_region
    _
  $region21: #{vae_forward.3} parent=0 // pred_fallthru
    _
  %v21 = vld [vmem:[%s0] sm:$0xf]
  %v22 = vld [vmem:[%s0 + $0x4] sm:$0xf]
  %v23 = vld [vmem:[%s0 + $0x8] sm:$0xf]
  %v24 = vld [vmem:[%s0 + $0xc] sm:$0xf]
  %v25 = vld [vmem:[%s0 + $0x10] sm:$0xf]
  %v26 = vld [vmem:[%s0 + $0x14] sm:$0xf]
  %v27 = vld [vmem:[%s0 + $0x18] sm:$0xf]
  %v28 = vld [vmem:[%s0 + $0x1c] sm:$0xf]
  %v29 = vld [vmem:[%s0 + $0x20] sm:$0xf]
  %v30 = vld [vmem:[%s0 + $0x24] sm:$0xf]
  %v31 = vld [vmem:[%s0 + $0x28] sm:$0xf]
  %v32 = vld [vmem:[%s0 + $0x2c] sm:$0xf]
  %v33 = vld [vmem:[%s0 + $0x30] sm:$0xf]
  %v34 = vld [vmem:[%s0 + $0x34] sm:$0xf]
  %v35 = vld [vmem:[%s0 + $0x38] sm:$0xf]
  %v36 = vld [vmem:[%s0 + $0x3c] sm:$0xf]
  %v51 = vunpack.c.l.b16 %v21
  %v52 = vunpack.c.l.b16 %v22
  %v53 = vunpack.c.l.b16 %v23
  %v54 = vunpack.c.l.b16 %v24
  %v55 = vunpack.c.l.b16 %v25
  %v56 = vunpack.c.l.b16 %v26
  %v57 = vunpack.c.l.b16 %v27
  %v58 = vunpack.c.l.b16 %v29
  %v59 = vunpack.c.l.b16 %v30
  %v60 = vunpack.c.l.b16 %v31
  %v61 = vunpack.c.l.b16 %v32
  %v62 = vunpack.c.l.b16 %v33
  %v63 = vunpack.c.l.b16 %v34
  %v64 = vunpack.c.l.b16 %v35
  %v65 = vpack.c.b16 %v51, %v51
  %v66 = vpack.c.b16 %v52, %v52
  %v67 = vpack.c.b16 %v53, %v53
  %v68 = vpack.c.b16 %v54, %v54
  %v69 = vpack.c.b16 %v55, %v55
  %v70 = vpack.c.b16 %v56, %v56
  %v71 = vpack.c.b16 %v57, %v57
  %v72 = vpack.c.b16 %v58, %v58
  %v73 = vpack.c.b16 %v59, %v59
  %v74 = vpack.c.b16 %v60, %v60
  %v75 = vpack.c.b16 %v61, %v61
  %v76 = vpack.c.b16 %v62, %v62
  %v77 = vpack.c.b16 %v63, %v63
  %v78 = vpack.c.b16 %v64, %v64
  %v80 = vshrl.u32 %v65, 16
  %v82 = vshll.u32 %v65, 16
  %v84 = vrot.slane %v82, 1
  %v85 = vor.u32 %v80, %v84
  %v87 = vshrl.u32 %v66, 16
  %v89 = vshll.u32 %v66, 16
  %v91 = vrot.slane %v89, 1
  %v92 = vor.u32 %v87, %v91
  %v94 = vshrl.u32 %v67, 16
  %v96 = vshll.u32 %v67, 16
  %v98 = vrot.slane %v96, 1
  %v99 = vor.u32 %v94, %v98
  %v101 = vshrl.u32 %v68, 16
  %v103 = vshll.u32 %v68, 16
  %v105 = vrot.slane %v103, 1
  %v106 = vor.u32 %v101, %v105
  %v108 = vshrl.u32 %v69, 16
  %v110 = vshll.u32 %v69, 16
  %v112 = vrot.slane %v110, 1
  %v113 = vor.u32 %v108, %v112
  %v115 = vshrl.u32 %v70, 16
  %v117 = vshll.u32 %v70, 16
  %v119 = vrot.slane %v117, 1
  %v120 = vor.u32 %v115, %v119
  %v122 = vshrl.u32 %v71, 16
  %v124 = vshll.u32 %v71, 16
  %v126 = vrot.slane %v124, 1
  %v127 = vor.u32 %v122, %v126
  %v129 = vshrl.u32 %v72, 16
  %v131 = vshll.u32 %v72, 16
  %v133 = vrot.slane %v131, 1
  %v134 = vor.u32 %v129, %v133
  %v136 = vshrl.u32 %v73, 16
  %v138 = vshll.u32 %v73, 16
  %v140 = vrot.slane %v138, 1
  %v141 = vor.u32 %v136, %v140
  %v143 = vshrl.u32 %v74, 16
  %v145 = vshll.u32 %v74, 16
  %v147 = vrot.slane %v145, 1
  %v148 = vor.u32 %v143, %v147
  %v150 = vshrl.u32 %v75, 16
  %v152 = vshll.u32 %v75, 16
  %v154 = vrot.slane %v152, 1
  %v155 = vor.u32 %v150, %v154
  %v157 = vshrl.u32 %v76, 16
  %v159 = vshll.u32 %v76, 16
  %v161 = vrot.slane %v159, 1
  %v162 = vor.u32 %v157, %v161
  %v164 = vshrl.u32 %v77, 16
  %v166 = vshll.u32 %v77, 16
  %v168 = vrot.slane %v166, 1
  %v169 = vor.u32 %v164, %v168
  %v171 = vshrl.u32 %v78, 16
  %v173 = vshll.u32 %v78, 16
  %v175 = vrot.slane %v173, 1
  %v176 = vor.u32 %v171, %v175
  %177 = vrot.lane.b32.xlu0 %v85, 16
  %v178 = vpop.permute.xlu0 %177
  %179 = vrot.lane.b32.xlu0 %v92, 16
  %v180 = vpop.permute.xlu0 %179
  %181 = vrot.lane.b32.xlu0 %v99, 16
  %v182 = vpop.permute.xlu0 %181
  %183 = vrot.lane.b32.xlu0 %v106, 16
  %v184 = vpop.permute.xlu0 %183
  %185 = vrot.lane.b32.xlu0 %v113, 16
  %v186 = vpop.permute.xlu0 %185
  %187 = vrot.lane.b32.xlu0 %v120, 16
  %v188 = vpop.permute.xlu0 %187
  %189 = vrot.lane.b32.xlu0 %v127, 16
  %v190 = vpop.permute.xlu0 %189
  %191 = vrot.lane.b32.xlu0 %v134, 16
  %v192 = vpop.permute.xlu0 %191
  %193 = vrot.lane.b32.xlu0 %v141, 16
  %v194 = vpop.permute.xlu0 %193
  %195 = vrot.lane.b32.xlu0 %v148, 16
  %v196 = vpop.permute.xlu0 %195
  %197 = vrot.lane.b32.xlu0 %v155, 16
  %v198 = vpop.permute.xlu0 %197
  %199 = vrot.lane.b32.xlu0 %v162, 16
  %v200 = vpop.permute.xlu0 %199
  %201 = vrot.lane.b32.xlu0 %v169, 16
  %v202 = vpop.permute.xlu0 %201
  %203 = vrot.lane.b32.xlu0 %v176, 16
  %v204 = vpop.permute.xlu0 %203
  %v207 = vunpack.c.l.b16 %v28
  %v208 = vunpack.c.l.b16 %v36
  %v209 = vpack.c.b16 %v207, %v207
  %v210 = vpack.c.b16 %v208, %v208
  %211 = vrot.lane.b32.xlu0 %v66, 32
  %v212 = vpop.permute.xlu0 %211
  %213 = vrot.lane.b32.xlu0 %v67, 32
  %v214 = vpop.permute.xlu0 %213
  %215 = vrot.lane.b32.xlu0 %v68, 32
  %v216 = vpop.permute.xlu0 %215
  %217 = vrot.lane.b32.xlu0 %v69, 32
  %v218 = vpop.permute.xlu0 %217
  %219 = vrot.lane.b32.xlu0 %v70, 32
  %v220 = vpop.permute.xlu0 %219
  %221 = vrot.lane.b32.xlu0 %v71, 32
  %v222 = vpop.permute.xlu0 %221
  %223 = vrot.lane.b32.xlu0 %v209, 32
  %v224 = vpop.permute.xlu0 %223
  %225 = vrot.lane.b32.xlu0 %v73, 32
  %v226 = vpop.permute.xlu0 %225
  %227 = vrot.lane.b32.xlu0 %v74, 32
  %v228 = vpop.permute.xlu0 %227
  %229 = vrot.lane.b32.xlu0 %v75, 32
  %v230 = vpop.permute.xlu0 %229
  %231 = vrot.lane.b32.xlu0 %v76, 32
  %v232 = vpop.permute.xlu0 %231
  %233 = vrot.lane.b32.xlu0 %v77, 32
  %v234 = vpop.permute.xlu0 %233
  %235 = vrot.lane.b32.xlu0 %v78, 32
  %v236 = vpop.permute.xlu0 %235
  %237 = vrot.lane.b32.xlu0 %v210, 32
  %v238 = vpop.permute.xlu0 %237
  %v240 = vshrl.u32 %v209, 16
  %v242 = vshll.u32 %v209, 16
  %v244 = vrot.slane %v242, 1
  %v245 = vor.u32 %v240, %v244
  %v247 = vshrl.u32 %v210, 16
  %v249 = vshll.u32 %v210, 16
  %v251 = vrot.slane %v249, 1
  %v252 = vor.u32 %v247, %v251
  %253 = vrot.lane.b32.xlu0 %v92, 48
  %v254 = vpop.permute.xlu0 %253
  %255 = vrot.lane.b32.xlu0 %v99, 48
  %v256 = vpop.permute.xlu0 %255
  %257 = vrot.lane.b32.xlu0 %v106, 48
  %v258 = vpop.permute.xlu0 %257
  %259 = vrot.lane.b32.xlu0 %v113, 48
  %v260 = vpop.permute.xlu0 %259
  %261 = vrot.lane.b32.xlu0 %v120, 48
  %v262 = vpop.permute.xlu0 %261
  %263 = vrot.lane.b32.xlu0 %v127, 48
  %v264 = vpop.permute.xlu0 %263
  %265 = vrot.lane.b32.xlu0 %v245, 48
  %v266 = vpop.permute.xlu0 %265
  %267 = vrot.lane.b32.xlu0 %v141, 48
  %v268 = vpop.permute.xlu0 %267
  %269 = vrot.lane.b32.xlu0 %v148, 48
  %v270 = vpop.permute.xlu0 %269
  %271 = vrot.lane.b32.xlu0 %v155, 48
  %v272 = vpop.permute.xlu0 %271
  %273 = vrot.lane.b32.xlu0 %v162, 48
  %v274 = vpop.permute.xlu0 %273
  %275 = vrot.lane.b32.xlu0 %v169, 48
  %v276 = vpop.permute.xlu0 %275
  %277 = vrot.lane.b32.xlu0 %v176, 48
  %v278 = vpop.permute.xlu0 %277
  %279 = vrot.lane.b32.xlu0 %v252, 48
  %v280 = vpop.permute.xlu0 %279
  %vm281 = vcmask 130048
  %v284 = vsel %vm281, %v21, %v178
  %v287 = vsel %vm281, %v22, %v180
  %v290 = vsel %vm281, %v23, %v182
  %v293 = vsel %vm281, %v24, %v184
  %v296 = vsel %vm281, %v25, %v186
  %v299 = vsel %vm281, %v26, %v188
  %v302 = vsel %vm281, %v27, %v190
  %v305 = vsel %vm281, %v29, %v192
  %v308 = vsel %vm281, %v30, %v194
  %v311 = vsel %vm281, %v31, %v196
  %v314 = vsel %vm281, %v32, %v198
  %v317 = vsel %vm281, %v33, %v200
  %v320 = vsel %vm281, %v34, %v202
  %v323 = vsel %vm281, %v35, %v204
  %vm324 = vcmask 261120
  %v326 = vsel %vm324, %v284, %v212
  %v328 = vsel %vm324, %v287, %v214
  %v330 = vsel %vm324, %v290, %v216
  %v332 = vsel %vm324, %v293, %v218
  %v334 = vsel %vm324, %v296, %v220
  %v336 = vsel %vm324, %v299, %v222
  %v338 = vsel %vm324, %v302, %v224
  %v340 = vsel %vm324, %v305, %v226
  %v342 = vsel %vm324, %v308, %v228
  %v344 = vsel %vm324, %v311, %v230
  %v346 = vsel %vm324, %v314, %v232
  %v348 = vsel %vm324, %v317, %v234
  %v350 = vsel %vm324, %v320, %v236
  %v352 = vsel %vm324, %v323, %v238
  %vm353 = vcmask 392192
  %v355 = vsel %vm353, %v326, %v254
  %v357 = vsel %vm353, %v328, %v256
  %v359 = vsel %vm353, %v330, %v258
  %v361 = vsel %vm353, %v332, %v260
  %v363 = vsel %vm353, %v334, %v262
  %v365 = vsel %vm353, %v336, %v264
  %v367 = vsel %vm353, %v338, %v266
  %v369 = vsel %vm353, %v340, %v268
  %v371 = vsel %vm353, %v342, %v270
  %v373 = vsel %vm353, %v344, %v272
  %v375 = vsel %vm353, %v346, %v274
  %v377 = vsel %vm353, %v348, %v276
  %v379 = vsel %vm353, %v350, %v278
  %v381 = vsel %vm353, %v352, %v280
  %v397 = vunpack.c.l.s4 1966171168
  %v398 = vunpack.c.0.s8 %v397
  %v399 = vlaneseq
  %v400 = vshrl.u32 %v399, 7
  %v401 = vsub.s32 %v398, %v400
  %v402 = vrot.slane %v355, %v401
  %v403 = vcombine.high %v402, %v402
  %v405 = vunpack.c.l.s4 1966171168
  %v406 = vunpack.c.0.s8 %v405
  %v407 = vlaneseq
  %v408 = vshrl.u32 %v407, 7
  %v409 = vsub.s32 %v406, %v408
  %v410 = vrot.slane %v402, %v409
  %v412 = vunpack.c.l.s4 1966171168
  %v413 = vunpack.c.0.s8 %v412
  %v414 = vlaneseq
  %v415 = vshrl.u32 %v414, 7
  %v416 = vsub.s32 %v413, %v415
  %v417 = vrot.slane %v403, %v416
  %v418 = vcombine.high %v410, %v410
  %v419 = vcombine.high %v417, %v417
  %v421 = vunpack.c.l.s4 1966171168
  %v422 = vunpack.c.0.s8 %v421
  %v423 = vlaneseq
  %v424 = vshrl.u32 %v423, 7
  %v425 = vsub.s32 %v422, %v424
  %v426 = vrot.slane %v357, %v425
  %v427 = vcombine.high %v426, %v426
  %v429 = vunpack.c.l.s4 1966171168
  %v430 = vunpack.c.0.s8 %v429
  %v431 = vlaneseq
  %v432 = vshrl.u32 %v431, 7
  %v433 = vsub.s32 %v430, %v432
  %v434 = vrot.slane %v426, %v433
  %v436 = vunpack.c.l.s4 1966171168
  %v437 = vunpack.c.0.s8 %v436
  %v438 = vlaneseq
  %v439 = vshrl.u32 %v438, 7
  %v440 = vsub.s32 %v437, %v439
  %v441 = vrot.slane %v427, %v440
  %v442 = vcombine.high %v434, %v434
  %v443 = vcombine.high %v441, %v441
  %v445 = vunpack.c.l.s4 1966171168
  %v446 = vunpack.c.0.s8 %v445
  %v447 = vlaneseq
  %v448 = vshrl.u32 %v447, 7
  %v449 = vsub.s32 %v446, %v448
  %v450 = vrot.slane %v359, %v449
  %v451 = vcombine.high %v450, %v450
  %v453 = vunpack.c.l.s4 1966171168
  %v454 = vunpack.c.0.s8 %v453
  %v455 = vlaneseq
  %v456 = vshrl.u32 %v455, 7
  %v457 = vsub.s32 %v454, %v456
  %v458 = vrot.slane %v450, %v457
  %v460 = vunpack.c.l.s4 1966171168
  %v461 = vunpack.c.0.s8 %v460
  %v462 = vlaneseq
  %v463 = vshrl.u32 %v462, 7
  %v464 = vsub.s32 %v461, %v463
  %v465 = vrot.slane %v451, %v464
  %v466 = vcombine.high %v458, %v458
  %v467 = vcombine.high %v465, %v465
  %v469 = vunpack.c.l.s4 1966171168
  %v470 = vunpack.c.0.s8 %v469
  %v471 = vlaneseq
  %v472 = vshrl.u32 %v471, 7
  %v473 = vsub.s32 %v470, %v472
  %v474 = vrot.slane %v361, %v473
  %v475 = vcombine.high %v474, %v474
  %v477 = vunpack.c.l.s4 1966171168
  %v478 = vunpack.c.0.s8 %v477
  %v479 = vlaneseq
  %v480 = vshrl.u32 %v479, 7
  %v481 = vsub.s32 %v478, %v480
  %v482 = vrot.slane %v474, %v481
  %v484 = vunpack.c.l.s4 1966171168
  %v485 = vunpack.c.0.s8 %v484
  %v486 = vlaneseq
  %v487 = vshrl.u32 %v486, 7
  %v488 = vsub.s32 %v485, %v487
  %v489 = vrot.slane %v475, %v488
  %v490 = vcombine.high %v482, %v482
  %v491 = vcombine.high %v489, %v489
  %v493 = vunpack.c.l.s4 1966171168
  %v494 = vunpack.c.0.s8 %v493
  %v495 = vlaneseq
  %v496 = vshrl.u32 %v495, 7
  %v497 = vsub.s32 %v494, %v496
  %v498 = vrot.slane %v363, %v497
  %v499 = vcombine.high %v498, %v498
  %v501 = vunpack.c.l.s4 1966171168
  %v502 = vunpack.c.0.s8 %v501
  %v503 = vlaneseq
  %v504 = vshrl.u32 %v503, 7
  %v505 = vsub.s32 %v502, %v504
  %v506 = vrot.slane %v498, %v505
  %v508 = vunpack.c.l.s4 1966171168
  %v509 = vunpack.c.0.s8 %v508
  %v510 = vlaneseq
  %v511 = vshrl.u32 %v510, 7
  %v512 = vsub.s32 %v509, %v511
  %v513 = vrot.slane %v499, %v512
  %v514 = vcombine.high %v506, %v506
  %v515 = vcombine.high %v513, %v513
  %v517 = vunpack.c.l.s4 1966171168
  %v518 = vunpack.c.0.s8 %v517
  %v519 = vlaneseq
  %v520 = vshrl.u32 %v519, 7
  %v521 = vsub.s32 %v518, %v520
  %v522 = vrot.slane %v365, %v521
  %v523 = vcombine.high %v522, %v522
  %v525 = vunpack.c.l.s4 1966171168
  %v526 = vunpack.c.0.s8 %v525
  %v527 = vlaneseq
  %v528 = vshrl.u32 %v527, 7
  %v529 = vsub.s32 %v526, %v528
  %v530 = vrot.slane %v522, %v529
  %v532 = vunpack.c.l.s4 1966171168
  %v533 = vunpack.c.0.s8 %v532
  %v534 = vlaneseq
  %v535 = vshrl.u32 %v534, 7
  %v536 = vsub.s32 %v533, %v535
  %v537 = vrot.slane %v523, %v536
  %v538 = vcombine.high %v530, %v530
  %v539 = vcombine.high %v537, %v537
  %v541 = vunpack.c.l.s4 1966171168
  %v542 = vunpack.c.0.s8 %v541
  %v543 = vlaneseq
  %v544 = vshrl.u32 %v543, 7
  %v545 = vsub.s32 %v542, %v544
  %v546 = vrot.slane %v367, %v545
  %v547 = vcombine.high %v546, %v546
  %v549 = vunpack.c.l.s4 1966171168
  %v550 = vunpack.c.0.s8 %v549
  %v551 = vlaneseq
  %v552 = vshrl.u32 %v551, 7
  %v553 = vsub.s32 %v550, %v552
  %v554 = vrot.slane %v546, %v553
  %v556 = vunpack.c.l.s4 1966171168
  %v557 = vunpack.c.0.s8 %v556
  %v558 = vlaneseq
  %v559 = vshrl.u32 %v558, 7
  %v560 = vsub.s32 %v557, %v559
  %v561 = vrot.slane %v547, %v560
  %v562 = vcombine.high %v554, %v554
  %v563 = vcombine.high %v561, %v561
  %v565 = vunpack.c.l.s4 1966171168
  %v566 = vunpack.c.0.s8 %v565
  %v567 = vlaneseq
  %v568 = vshrl.u32 %v567, 7
  %v569 = vsub.s32 %v566, %v568
  %v570 = vrot.slane %v369, %v569
  %v571 = vcombine.high %v570, %v570
  %v573 = vunpack.c.l.s4 1966171168
  %v574 = vunpack.c.0.s8 %v573
  %v575 = vlaneseq
  %v576 = vshrl.u32 %v575, 7
  %v577 = vsub.s32 %v574, %v576
  %v578 = vrot.slane %v570, %v577
  %v580 = vunpack.c.l.s4 1966171168
  %v581 = vunpack.c.0.s8 %v580
  %v582 = vlaneseq
  %v583 = vshrl.u32 %v582, 7
  %v584 = vsub.s32 %v581, %v583
  %v585 = vrot.slane %v571, %v584
  %v586 = vcombine.high %v578, %v578
  %v587 = vcombine.high %v585, %v585
  %v589 = vunpack.c.l.s4 1966171168
  %v590 = vunpack.c.0.s8 %v589
  %v591 = vlaneseq
  %v592 = vshrl.u32 %v591, 7
  %v593 = vsub.s32 %v590, %v592
  %v594 = vrot.slane %v371, %v593
  %v595 = vcombine.high %v594, %v594
  %v597 = vunpack.c.l.s4 1966171168
  %v598 = vunpack.c.0.s8 %v597
  %v599 = vlaneseq
  %v600 = vshrl.u32 %v599, 7
  %v601 = vsub.s32 %v598, %v600
  %v602 = vrot.slane %v594, %v601
  %v604 = vunpack.c.l.s4 1966171168
  %v605 = vunpack.c.0.s8 %v604
  %v606 = vlaneseq
  %v607 = vshrl.u32 %v606, 7
  %v608 = vsub.s32 %v605, %v607
  %v609 = vrot.slane %v595, %v608
  %v610 = vcombine.high %v602, %v602
  %v611 = vcombine.high %v609, %v609
  %v613 = vunpack.c.l.s4 1966171168
  %v614 = vunpack.c.0.s8 %v613
  %v615 = vlaneseq
  %v616 = vshrl.u32 %v615, 7
  %v617 = vsub.s32 %v614, %v616
  %v618 = vrot.slane %v373, %v617
  %v619 = vcombine.high %v618, %v618
  %v621 = vunpack.c.l.s4 1966171168
  %v622 = vunpack.c.0.s8 %v621
  %v623 = vlaneseq
  %v624 = vshrl.u32 %v623, 7
  %v625 = vsub.s32 %v622, %v624
  %v626 = vrot.slane %v618, %v625
  %v628 = vunpack.c.l.s4 1966171168
  %v629 = vunpack.c.0.s8 %v628
  %v630 = vlaneseq
  %v631 = vshrl.u32 %v630, 7
  %v632 = vsub.s32 %v629, %v631
  %v633 = vrot.slane %v619, %v632
  %v634 = vcombine.high %v626, %v626
  %v635 = vcombine.high %v633, %v633
  %v637 = vunpack.c.l.s4 1966171168
  %v638 = vunpack.c.0.s8 %v637
  %v639 = vlaneseq
  %v640 = vshrl.u32 %v639, 7
  %v641 = vsub.s32 %v638, %v640
  %v642 = vrot.slane %v375, %v641
  %v643 = vcombine.high %v642, %v642
  %v645 = vunpack.c.l.s4 1966171168
  %v646 = vunpack.c.0.s8 %v645
  %v647 = vlaneseq
  %v648 = vshrl.u32 %v647, 7
  %v649 = vsub.s32 %v646, %v648
  %v650 = vrot.slane %v642, %v649
  %v652 = vunpack.c.l.s4 1966171168
  %v653 = vunpack.c.0.s8 %v652
  %v654 = vlaneseq
  %v655 = vshrl.u32 %v654, 7
  %v656 = vsub.s32 %v653, %v655
  %v657 = vrot.slane %v643, %v656
  %v658 = vcombine.high %v650, %v650
  %v659 = vcombine.high %v657, %v657
  %v661 = vunpack.c.l.s4 1966171168
  %v662 = vunpack.c.0.s8 %v661
  %v663 = vlaneseq
  %v664 = vshrl.u32 %v663, 7
  %v665 = vsub.s32 %v662, %v664
  %v666 = vrot.slane %v377, %v665
  %v667 = vcombine.high %v666, %v666
  %v669 = vunpack.c.l.s4 1966171168
  %v670 = vunpack.c.0.s8 %v669
  %v671 = vlaneseq
  %v672 = vshrl.u32 %v671, 7
  %v673 = vsub.s32 %v670, %v672
  %v674 = vrot.slane %v666, %v673
  %v676 = vunpack.c.l.s4 1966171168
  %v677 = vunpack.c.0.s8 %v676
  %v678 = vlaneseq
  %v679 = vshrl.u32 %v678, 7
  %v680 = vsub.s32 %v677, %v679
  %v681 = vrot.slane %v667, %v680
  %v682 = vcombine.high %v674, %v674
  %v683 = vcombine.high %v681, %v681
  %v685 = vunpack.c.l.s4 1966171168
  %v686 = vunpack.c.0.s8 %v685
  %v687 = vlaneseq
  %v688 = vshrl.u32 %v687, 7
  %v689 = vsub.s32 %v686, %v688
  %v690 = vrot.slane %v379, %v689
  %v691 = vcombine.high %v690, %v690
  %v693 = vunpack.c.l.s4 1966171168
  %v694 = vunpack.c.0.s8 %v693
  %v695 = vlaneseq
  %v696 = vshrl.u32 %v695, 7
  %v697 = vsub.s32 %v694, %v696
  %v698 = vrot.slane %v690, %v697
  %v700 = vunpack.c.l.s4 1966171168
  %v701 = vunpack.c.0.s8 %v700
  %v702 = vlaneseq
  %v703 = vshrl.u32 %v702, 7
  %v704 = vsub.s32 %v701, %v703
  %v705 = vrot.slane %v691, %v704
  %v706 = vcombine.high %v698, %v698
  %v707 = vcombine.high %v705, %v705
  %v709 = vunpack.c.l.s4 1966171168
  %v710 = vunpack.c.0.s8 %v709
  %v711 = vlaneseq
  %v712 = vshrl.u32 %v711, 7
  %v713 = vsub.s32 %v710, %v712
  %v714 = vrot.slane %v381, %v713
  %v715 = vcombine.high %v714, %v714
  %v717 = vunpack.c.l.s4 1966171168
  %v718 = vunpack.c.0.s8 %v717
  %v719 = vlaneseq
  %v720 = vshrl.u32 %v719, 7
  %v721 = vsub.s32 %v718, %v720
  %v722 = vrot.slane %v714, %v721
  %v724 = vunpack.c.l.s4 1966171168
  %v725 = vunpack.c.0.s8 %v724
  %v726 = vlaneseq
  %v727 = vshrl.u32 %v726, 7
  %v728 = vsub.s32 %v725, %v727
  %v729 = vrot.slane %v715, %v728
  %v730 = vcombine.high %v722, %v722
  %v731 = vcombine.high %v729, %v729
  %v732 = vunpack.i.l.s16 %v410
  %v733 = vunpack.i.h.s16 %v410
  %v734 = vunpack.i.l.s16 %v417
  %v735 = vunpack.i.h.s16 %v417
  %v736 = vunpack.i.l.s16 %v418
  %v737 = vunpack.i.h.s16 %v418
  %v738 = vunpack.i.l.s16 %v419
  %v739 = vunpack.i.l.s16 %v434
  %v740 = vunpack.i.h.s16 %v434
  %v741 = vunpack.i.l.s16 %v441
  %v742 = vunpack.i.h.s16 %v441
  %v743 = vunpack.i.l.s16 %v442
  %v744 = vunpack.i.h.s16 %v442
  %v745 = vunpack.i.l.s16 %v443
  %v746 = vunpack.i.l.s16 %v458
  %v747 = vunpack.i.h.s16 %v458
  %v748 = vunpack.i.l.s16 %v465
  %v749 = vunpack.i.h.s16 %v465
  %v750 = vunpack.i.l.s16 %v466
  %v751 = vunpack.i.h.s16 %v466
  %v752 = vunpack.i.l.s16 %v467
  %v753 = vunpack.i.l.s16 %v482
  %v754 = vunpack.i.h.s16 %v482
  %v755 = vunpack.i.l.s16 %v489
  %v756 = vunpack.i.h.s16 %v489
  %v757 = vunpack.i.l.s16 %v490
  %v758 = vunpack.i.h.s16 %v490
  %v759 = vunpack.i.l.s16 %v491
  %v760 = vunpack.i.l.s16 %v506
  %v761 = vunpack.i.h.s16 %v506
  %v762 = vunpack.i.l.s16 %v513
  %v763 = vunpack.i.h.s16 %v513
  %v764 = vunpack.i.l.s16 %v514
  %v765 = vunpack.i.h.s16 %v514
  %v766 = vunpack.i.l.s16 %v515
  %v767 = vunpack.i.l.s16 %v530
  %v768 = vunpack.i.h.s16 %v530
  %v769 = vunpack.i.l.s16 %v537
  %v770 = vunpack.i.h.s16 %v537
  %v771 = vunpack.i.l.s16 %v538
  %v772 = vunpack.i.h.s16 %v538
  %v773 = vunpack.i.l.s16 %v539
  %v774 = vunpack.i.l.s16 %v554
  %v775 = vunpack.i.h.s16 %v554
  %v776 = vunpack.i.l.s16 %v561
  %v777 = vunpack.i.h.s16 %v561
  %v778 = vunpack.i.l.s16 %v562
  %v779 = vunpack.i.h.s16 %v562
  %v780 = vunpack.i.l.s16 %v563
  %v781 = vunpack.i.l.s16 %v578
  %v782 = vunpack.i.h.s16 %v578
  %v783 = vunpack.i.l.s16 %v585
  %v784 = vunpack.i.h.s16 %v585
  %v785 = vunpack.i.l.s16 %v586
  %v786 = vunpack.i.h.s16 %v586
  %v787 = vunpack.i.l.s16 %v587
  %v788 = vunpack.i.l.s16 %v602
  %v789 = vunpack.i.h.s16 %v602
  %v790 = vunpack.i.l.s16 %v609
  %v791 = vunpack.i.h.s16 %v609
  %v792 = vunpack.i.l.s16 %v610
  %v793 = vunpack.i.h.s16 %v610
  %v794 = vunpack.i.l.s16 %v611
  %v795 = vunpack.i.l.s16 %v626
  %v796 = vunpack.i.h.s16 %v626
  %v797 = vunpack.i.l.s16 %v633
  %v798 = vunpack.i.h.s16 %v633
  %v799 = vunpack.i.l.s16 %v634
  %v800 = vunpack.i.h.s16 %v634
  %v801 = vunpack.i.l.s16 %v635
  %v802 = vunpack.i.l.s16 %v650
  %v803 = vunpack.i.h.s16 %v650
  %v804 = vunpack.i.l.s16 %v657
  %v805 = vunpack.i.h.s16 %v657
  %v806 = vunpack.i.l.s16 %v658
  %v807 = vunpack.i.h.s16 %v658
  %v808 = vunpack.i.l.s16 %v659
  %v809 = vunpack.i.l.s16 %v674
  %v810 = vunpack.i.h.s16 %v674
  %v811 = vunpack.i.l.s16 %v681
  %v812 = vunpack.i.h.s16 %v681
  %v813 = vunpack.i.l.s16 %v682
  %v814 = vunpack.i.h.s16 %v682
  %v815 = vunpack.i.l.s16 %v683
  %v816 = vunpack.i.l.s16 %v698
  %v817 = vunpack.i.h.s16 %v698
  %v818 = vunpack.i.l.s16 %v705
  %v819 = vunpack.i.h.s16 %v705
  %v820 = vunpack.i.l.s16 %v706
  %v821 = vunpack.i.h.s16 %v706
  %v822 = vunpack.i.l.s16 %v707
  %v823 = vunpack.i.l.s16 %v722
  %v824 = vunpack.i.h.s16 %v722
  %v825 = vunpack.i.l.s16 %v729
  %v826 = vunpack.i.h.s16 %v729
  %v827 = vunpack.i.l.s16 %v730
  %v828 = vunpack.i.h.s16 %v730
  %v829 = vunpack.i.l.s16 %v731
  %v830 = vld [vmem:[%s1] sm:$0xf]
  %v831 = vld [vmem:[%s1 + $0x4] sm:$0xf]
  %v832 = vld [vmem:[%s1 + $0x8] sm:$0xf]
  %v833 = vld [vmem:[%s1 + $0xc] sm:$0xf]
  %v834 = vld [vmem:[%s1 + $0x10] sm:$0xf]
  %v835 = vld [vmem:[%s1 + $0x14] sm:$0xf]
  %v836 = vld [vmem:[%s1 + $0x18] sm:$0xf]
  %v837 = vld [vmem:[%s1 + $0x1c] sm:$0xf]
  %v838 = vld [vmem:[%s2] sm:$0x1]
  %v840 = vlaneseq
  %v841 = vshrl.u32 %v840, 7
  %v842 = vsub.s32 0, %v841
  %v843 = vrot.slane %v838, %v842
  %v845 = vpack.i.b16 %v733, %v732
  %v846 = vpack.i.b16 %v735, %v734
  %v847 = vpack.i.b16 %v737, %v736
  %v848 = vpack.i.b16 %v739, %v738
  %v849 = vpack.i.b16 %v741, %v740
  %v850 = vpack.i.b16 %v743, %v742
  %v851 = vpack.i.b16 %v745, %v744
  %v852 = vpack.i.b16 %v747, %v746
  %v853 = vpack.i.b16 %v749, %v748
  %v854 = vpack.i.b16 %v751, %v750
  %v855 = vpack.i.b16 %v753, %v752
  %v856 = vpack.i.b16 %v755, %v754
  %v857 = vpack.i.b16 %v757, %v756
  %v858 = vpack.i.b16 %v759, %v758
  %v859 = vpack.i.b16 %v761, %v760
  %v860 = vpack.i.b16 %v763, %v762
  %v861 = vpack.i.b16 %v765, %v764
  %v862 = vpack.i.b16 %v767, %v766
  %v863 = vpack.i.b16 %v769, %v768
  %v864 = vpack.i.b16 %v771, %v770
  %v865 = vpack.i.b16 %v773, %v772
  %v866 = vpack.i.b16 %v775, %v774
  %v867 = vpack.i.b16 %v777, %v776
  %v868 = vpack.i.b16 %v779, %v778
  %v869 = vpack.i.b16 %v781, %v780
  %v870 = vpack.i.b16 %v783, %v782
  %v871 = vpack.i.b16 %v785, %v784
  %v872 = vpack.i.b16 %v787, %v786
  %v873 = vpack.i.b16 %v789, %v788
  %v874 = vpack.i.b16 %v791, %v790
  %v875 = vpack.i.b16 %v793, %v792
  %v876 = vpack.i.b16 %v795, %v794
  %v877 = vpack.i.b16 %v797, %v796
  %v878 = vpack.i.b16 %v799, %v798
  %v879 = vpack.i.b16 %v801, %v800
  %v880 = vpack.i.b16 %v803, %v802
  %v881 = vpack.i.b16 %v805, %v804
  %v882 = vpack.i.b16 %v807, %v806
  %v883 = vpack.i.b16 %v809, %v808
  %v884 = vpack.i.b16 %v811, %v810
  %v885 = vpack.i.b16 %v813, %v812
  %v886 = vpack.i.b16 %v815, %v814
  %v887 = vpack.i.b16 %v817, %v816
  %v888 = vpack.i.b16 %v819, %v818
  %v889 = vpack.i.b16 %v821, %v820
  %v890 = vpack.i.b16 %v823, %v822
  %v891 = vpack.i.b16 %v825, %v824
  %v892 = vpack.i.b16 %v827, %v826
  %v893 = vpack.i.b16 %v829, %v828
  %v894 = vcombine.low %v845, %v846
  %v895 = vcombine.low %v847, %v848
  %v896 = vcombine.low %v849, %v850
  %v897 = vcombine.low %v851, %v852
  %v899 = vunpack.c.l.s4 1966171168
  %v900 = vunpack.c.0.s8 %v899
  %v901 = vlaneseq
  %v902 = vshrl.u32 %v901, 7
  %v903 = vsub.s32 %v900, %v902
  %v904 = vrot.slane %v894, %v903
  %v906 = vunpack.c.l.s4 1966171168
  %v907 = vunpack.c.0.s8 %v906
  %v908 = vlaneseq
  %v909 = vshrl.u32 %v908, 7
  %v910 = vsub.s32 %v907, %v909
  %v911 = vrot.slane %v895, %v910
  %v913 = vunpack.c.l.s4 1966171168
  %v914 = vunpack.c.0.s8 %v913
  %v915 = vlaneseq
  %v916 = vshrl.u32 %v915, 7
  %v917 = vsub.s32 %v914, %v916
  %v918 = vrot.slane %v896, %v917
  %v920 = vunpack.c.l.s4 1966171168
  %v921 = vunpack.c.0.s8 %v920
  %v922 = vlaneseq
  %v923 = vshrl.u32 %v922, 7
  %v924 = vsub.s32 %v921, %v923
  %v925 = vrot.slane %v897, %v924
  %v926 = vcombine.low %v904, %v911
  %v927 = vcombine.low %v918, %v925
  %v929 = vunpack.c.l.s4 1966171168
  %v930 = vunpack.c.0.s8 %v929
  %v931 = vlaneseq
  %v932 = vshrl.u32 %v931, 7
  %v933 = vsub.s32 %v930, %v932
  %v934 = vrot.slane %v926, %v933
  %v936 = vunpack.c.l.s4 1966171168
  %v937 = vunpack.c.0.s8 %v936
  %v938 = vlaneseq
  %v939 = vshrl.u32 %v938, 7
  %v940 = vsub.s32 %v937, %v939
  %v941 = vrot.slane %v927, %v940
  %v942 = vcombine.low %v934, %v941
  %v943 = vcombine.low %v853, %v854
  %v944 = vcombine.low %v855, %v856
  %v945 = vcombine.low %v857, %v858
  %v946 = vcombine.low %v859, %v860
  %v948 = vunpack.c.l.s4 1966171168
  %v949 = vunpack.c.0.s8 %v948
  %v950 = vlaneseq
  %v951 = vshrl.u32 %v950, 7
  %v952 = vsub.s32 %v949, %v951
  %v953 = vrot.slane %v943, %v952
  %v955 = vunpack.c.l.s4 1966171168
  %v956 = vunpack.c.0.s8 %v955
  %v957 = vlaneseq
  %v958 = vshrl.u32 %v957, 7
  %v959 = vsub.s32 %v956, %v958
  %v960 = vrot.slane %v944, %v959
  %v962 = vunpack.c.l.s4 1966171168
  %v963 = vunpack.c.0.s8 %v962
  %v964 = vlaneseq
  %v965 = vshrl.u32 %v964, 7
  %v966 = vsub.s32 %v963, %v965
  %v967 = vrot.slane %v945, %v966
  %v969 = vunpack.c.l.s4 1966171168
  %v970 = vunpack.c.0.s8 %v969
  %v971 = vlaneseq
  %v972 = vshrl.u32 %v971, 7
  %v973 = vsub.s32 %v970, %v972
  %v974 = vrot.slane %v946, %v973
  %v975 = vcombine.low %v953, %v960
  %v976 = vcombine.low %v967, %v974
  %v978 = vunpack.c.l.s4 1966171168
  %v979 = vunpack.c.0.s8 %v978
  %v980 = vlaneseq
  %v981 = vshrl.u32 %v980, 7
  %v982 = vsub.s32 %v979, %v981
  %v983 = vrot.slane %v975, %v982
  %v985 = vunpack.c.l.s4 1966171168
  %v986 = vunpack.c.0.s8 %v985
  %v987 = vlaneseq
  %v988 = vshrl.u32 %v987, 7
  %v989 = vsub.s32 %v986, %v988
  %v990 = vrot.slane %v976, %v989
  %v991 = vcombine.low %v983, %v990
  %v992 = vcombine.low %v861, %v862
  %v993 = vcombine.low %v863, %v864
  %v994 = vcombine.low %v865, %v866
  %v995 = vcombine.low %v867, %v868
  %v997 = vunpack.c.l.s4 1966171168
  %v998 = vunpack.c.0.s8 %v997
  %v999 = vlaneseq
  %v1000 = vshrl.u32 %v999, 7
  %v1001 = vsub.s32 %v998, %v1000
  %v1002 = vrot.slane %v992, %v1001
  %v1004 = vunpack.c.l.s4 1966171168
  %v1005 = vunpack.c.0.s8 %v1004
  %v1006 = vlaneseq
  %v1007 = vshrl.u32 %v1006, 7
  %v1008 = vsub.s32 %v1005, %v1007
  %v1009 = vrot.slane %v993, %v1008
  %v1011 = vunpack.c.l.s4 1966171168
  %v1012 = vunpack.c.0.s8 %v1011
  %v1013 = vlaneseq
  %v1014 = vshrl.u32 %v1013, 7
  %v1015 = vsub.s32 %v1012, %v1014
  %v1016 = vrot.slane %v994, %v1015
  %v1018 = vunpack.c.l.s4 1966171168
  %v1019 = vunpack.c.0.s8 %v1018
  %v1020 = vlaneseq
  %v1021 = vshrl.u32 %v1020, 7
  %v1022 = vsub.s32 %v1019, %v1021
  %v1023 = vrot.slane %v995, %v1022
  %v1024 = vcombine.low %v1002, %v1009
  %v1025 = vcombine.low %v1016, %v1023
  %v1027 = vunpack.c.l.s4 1966171168
  %v1028 = vunpack.c.0.s8 %v1027
  %v1029 = vlaneseq
  %v1030 = vshrl.u32 %v1029, 7
  %v1031 = vsub.s32 %v1028, %v1030
  %v1032 = vrot.slane %v1024, %v1031
  %v1034 = vunpack.c.l.s4 1966171168
  %v1035 = vunpack.c.0.s8 %v1034
  %v1036 = vlaneseq
  %v1037 = vshrl.u32 %v1036, 7
  %v1038 = vsub.s32 %v1035, %v1037
  %v1039 = vrot.slane %v1025, %v1038
  %v1040 = vcombine.low %v1032, %v1039
  %v1041 = vcombine.low %v869, %v870
  %v1042 = vcombine.low %v871, %v872
  %v1043 = vcombine.low %v873, %v874
  %v1044 = vcombine.low %v875, %v876
  %v1046 = vunpack.c.l.s4 1966171168
  %v1047 = vunpack.c.0.s8 %v1046
  %v1048 = vlaneseq
  %v1049 = vshrl.u32 %v1048, 7
  %v1050 = vsub.s32 %v1047, %v1049
  %v1051 = vrot.slane %v1041, %v1050
  %v1053 = vunpack.c.l.s4 1966171168
  %v1054 = vunpack.c.0.s8 %v1053
  %v1055 = vlaneseq
  %v1056 = vshrl.u32 %v1055, 7
  %v1057 = vsub.s32 %v1054, %v1056
  %v1058 = vrot.slane %v1042, %v1057
  %v1060 = vunpack.c.l.s4 1966171168
  %v1061 = vunpack.c.0.s8 %v1060
  %v1062 = vlaneseq
  %v1063 = vshrl.u32 %v1062, 7
  %v1064 = vsub.s32 %v1061, %v1063
  %v1065 = vrot.slane %v1043, %v1064
  %v1067 = vunpack.c.l.s4 1966171168
  %v1068 = vunpack.c.0.s8 %v1067
  %v1069 = vlaneseq
  %v1070 = vshrl.u32 %v1069, 7
  %v1071 = vsub.s32 %v1068, %v1070
  %v1072 = vrot.slane %v1044, %v1071
  %v1073 = vcombine.low %v1051, %v1058
  %v1074 = vcombine.low %v1065, %v1072
  %v1076 = vunpack.c.l.s4 1966171168
  %v1077 = vunpack.c.0.s8 %v1076
  %v1078 = vlaneseq
  %v1079 = vshrl.u32 %v1078, 7
  %v1080 = vsub.s32 %v1077, %v1079
  %v1081 = vrot.slane %v1073, %v1080
  %v1083 = vunpack.c.l.s4 1966171168
  %v1084 = vunpack.c.0.s8 %v1083
  %v1085 = vlaneseq
  %v1086 = vshrl.u32 %v1085, 7
  %v1087 = vsub.s32 %v1084, %v1086
  %v1088 = vrot.slane %v1074, %v1087
  %v1089 = vcombine.low %v1081, %v1088
  %v1090 = vcombine.low %v877, %v878
  %v1091 = vcombine.low %v879, %v880
  %v1092 = vcombine.low %v881, %v882
  %v1093 = vcombine.low %v883, %v884
  %v1095 = vunpack.c.l.s4 1966171168
  %v1096 = vunpack.c.0.s8 %v1095
  %v1097 = vlaneseq
  %v1098 = vshrl.u32 %v1097, 7
  %v1099 = vsub.s32 %v1096, %v1098
  %v1100 = vrot.slane %v1090, %v1099
  %v1102 = vunpack.c.l.s4 1966171168
  %v1103 = vunpack.c.0.s8 %v1102
  %v1104 = vlaneseq
  %v1105 = vshrl.u32 %v1104, 7
  %v1106 = vsub.s32 %v1103, %v1105
  %v1107 = vrot.slane %v1091, %v1106
  %v1109 = vunpack.c.l.s4 1966171168
  %v1110 = vunpack.c.0.s8 %v1109
  %v1111 = vlaneseq
  %v1112 = vshrl.u32 %v1111, 7
  %v1113 = vsub.s32 %v1110, %v1112
  %v1114 = vrot.slane %v1092, %v1113
  %v1116 = vunpack.c.l.s4 1966171168
  %v1117 = vunpack.c.0.s8 %v1116
  %v1118 = vlaneseq
  %v1119 = vshrl.u32 %v1118, 7
  %v1120 = vsub.s32 %v1117, %v1119
  %v1121 = vrot.slane %v1093, %v1120
  %v1122 = vcombine.low %v1100, %v1107
  %v1123 = vcombine.low %v1114, %v1121
  %v1125 = vunpack.c.l.s4 1966171168
  %v1126 = vunpack.c.0.s8 %v1125
  %v1127 = vlaneseq
  %v1128 = vshrl.u32 %v1127, 7
  %v1129 = vsub.s32 %v1126, %v1128
  %v1130 = vrot.slane %v1122, %v1129
  %v1132 = vunpack.c.l.s4 1966171168
  %v1133 = vunpack.c.0.s8 %v1132
  %v1134 = vlaneseq
  %v1135 = vshrl.u32 %v1134, 7
  %v1136 = vsub.s32 %v1133, %v1135
  %v1137 = vrot.slane %v1123, %v1136
  %v1138 = vcombine.low %v1130, %v1137
  %v1139 = vcombine.low %v885, %v886
  %v1140 = vcombine.low %v887, %v888
  %v1141 = vcombine.low %v889, %v890
  %v1142 = vcombine.low %v891, %v892
  %v1144 = vunpack.c.l.s4 1966171168
  %v1145 = vunpack.c.0.s8 %v1144
  %v1146 = vlaneseq
  %v1147 = vshrl.u32 %v1146, 7
  %v1148 = vsub.s32 %v1145, %v1147
  %v1149 = vrot.slane %v1139, %v1148
  %v1151 = vunpack.c.l.s4 1966171168
  %v1152 = vunpack.c.0.s8 %v1151
  %v1153 = vlaneseq
  %v1154 = vshrl.u32 %v1153, 7
  %v1155 = vsub.s32 %v1152, %v1154
  %v1156 = vrot.slane %v1140, %v1155
  %v1158 = vunpack.c.l.s4 1966171168
  %v1159 = vunpack.c.0.s8 %v1158
  %v1160 = vlaneseq
  %v1161 = vshrl.u32 %v1160, 7
  %v1162 = vsub.s32 %v1159, %v1161
  %v1163 = vrot.slane %v1141, %v1162
  %v1165 = vunpack.c.l.s4 1966171168
  %v1166 = vunpack.c.0.s8 %v1165
  %v1167 = vlaneseq
  %v1168 = vshrl.u32 %v1167, 7
  %v1169 = vsub.s32 %v1166, %v1168
  %v1170 = vrot.slane %v1142, %v1169
  %v1171 = vcombine.low %v1149, %v1156
  %v1172 = vcombine.low %v1163, %v1170
  %v1174 = vunpack.c.l.s4 1966171168
  %v1175 = vunpack.c.0.s8 %v1174
  %v1176 = vlaneseq
  %v1177 = vshrl.u32 %v1176, 7
  %v1178 = vsub.s32 %v1175, %v1177
  %v1179 = vrot.slane %v1171, %v1178
  %v1181 = vunpack.c.l.s4 1966171168
  %v1182 = vunpack.c.0.s8 %v1181
  %v1183 = vlaneseq
  %v1184 = vshrl.u32 %v1183, 7
  %v1185 = vsub.s32 %v1182, %v1184
  %v1186 = vrot.slane %v1172, %v1185
  %v1187 = vcombine.low %v1179, %v1186
  %v1189 = vunpack.c.l.s4 1966171168
  %v1190 = vunpack.c.0.s8 %v1189
  %v1191 = vlaneseq
  %v1192 = vshrl.u32 %v1191, 7
  %v1193 = vsub.s32 %v1190, %v1192
  %v1194 = vrot.slane %v893, %v1193
  %v1196 = vunpack.c.l.s4 1966171168
  %v1197 = vunpack.c.0.s8 %v1196
  %v1198 = vlaneseq
  %v1199 = vshrl.u32 %v1198, 7
  %v1200 = vsub.s32 %v1197, %v1199
  %v1201 = vrot.slane %v1194, %v1200
  %v1210 = vunpack.c.l.b16 %v830
  %v1211 = vunpack.c.l.b16 %v831
  %v1212 = vunpack.c.l.b16 %v832
  %v1213 = vunpack.c.l.b16 %v833
  %v1214 = vunpack.c.l.b16 %v834
  %v1215 = vunpack.c.l.b16 %v835
  %v1216 = vunpack.c.l.b16 %v836
  %v1217 = vunpack.c.l.b16 %v837
  %v1218 = vpack.c.b16 %v1211, %v1210
  %v1219 = vpack.c.b16 %v1213, %v1212
  %v1220 = vpack.c.b16 %v1215, %v1214
  %v1221 = vpack.c.b16 %v1217, %v1216
  %vm1226 = vcmask 523264
  %v1228 = vsel %vm1226, %v942, 0
  %v1231 = vsel %vm1226, %v991, 0
  %v1234 = vsel %vm1226, %v1040, 0
  %v1237 = vsel %vm1226, %v1089, 0
  %v1240 = vsel %vm1226, %v1138, 0
  %v1243 = vsel %vm1226, %v1187, 0
  %v1246 = vsel %vm1226, %v1201, 0
  %1248 = vmatprep.subr.bf16.mxu0 0
  %1249 = vmatpush1.bf16.msra.mxu0 %v1218
  %1250 = vmatprep.subr.bf16.mxu0 0
  %1251 = vmatpush1.bf16.msra.mxu0 %v1219
  %1252 = vmatprep.subr.bf16.mxu0 0
  %1253 = vmatpush1.bf16.msra.mxu0 %v1220
  %1254 = vmatprep.subr.bf16.mxu0 0
  %1255 = vmatpush1.bf16.msra.mxu0 %v1221
  %1256 = vmatprep.subr.bf16.mxu0 0
  %1257 = vmatpush1.bf16.msra.mxu0 0
  %1258 = vmatprep.subr.bf16.mxu0 0
  %1259 = vmatpush1.bf16.msra.mxu0 0
  %1260 = vmatprep.subr.bf16.mxu0 0
  %1261 = vmatpush1.bf16.msra.mxu0 0
  %1262 = vmatprep.subr.bf16.mxu0 0
  %1263 = vmatpush1.bf16.msra.mxu0 0
  %1264 = vmatprep.subr.bf16.mxu0 0
  %1265 = vmatpush1.bf16.msra.mxu0 0
  %1266 = vmatprep.subr.bf16.mxu0 0
  %1267 = vmatpush1.bf16.msra.mxu0 0
  %1268 = vmatprep.subr.bf16.mxu0 0
  %1269 = vmatpush1.bf16.msra.mxu0 0
  %1270 = vmatprep.subr.bf16.mxu0 0
  %1271 = vmatpush1.bf16.msra.mxu0 0
  %1272 = vmatprep.subr.bf16.mxu0 0
  %1273 = vmatpush1.bf16.msra.mxu0 0
  %1274 = vmatprep.subr.bf16.mxu0 0
  %1275 = vmatpush1.bf16.msra.mxu0 0
  %1276 = vmatprep.subr.bf16.mxu0 0
  %1277 = vmatpush1.bf16.msra.mxu0 0
  %1278 = vmatprep.subr.bf16.mxu0 0
  %1279 = vmatpush1.bf16.msra.mxu0 0
  %1280 = vmatprep.mubr.bf16.mxu0 0
  %1281 = vmatmul.mubr.bf16.gmra.mrb[0].mxu0 %v1228
  %v1282 = vpop.f32.mrb[0].mxu0
  %v1283 = vadd.f32 %v843, %v1282
  %v1284 = vpop.f32.mrb[0].mxu0
  %v1285 = vpop.f32.mrb[0].mxu0
  %v1286 = vadd.f32 %v843, %v1285
  %v1287 = vpop.f32.mrb[0].mxu0
  %1288 = vmatprep.mubr.bf16.mxu0 0
  %1289 = vmatmul.mubr.bf16.gmra.mrb[0].mxu0 %v1231
  %v1290 = vpop.f32.mrb[0].mxu0
  %v1291 = vadd.f32 %v843, %v1290
  %v1292 = vpop.f32.mrb[0].mxu0
  %v1293 = vpop.f32.mrb[0].mxu0
  %v1294 = vadd.f32 %v843, %v1293
  %v1295 = vpop.f32.mrb[0].mxu0
  %1296 = vmatprep.mubr.bf16.mxu0 0
  %1297 = vmatmul.mubr.bf16.gmra.mrb[0].mxu0 %v1234
  %v1298 = vpop.f32.mrb[0].mxu0
  %v1299 = vadd.f32 %v843, %v1298
  %v1300 = vpop.f32.mrb[0].mxu0
  %v1301 = vpop.f32.mrb[0].mxu0
  %v1302 = vadd.f32 %v843, %v1301
  %v1303 = vpop.f32.mrb[0].mxu0
  %1304 = vmatprep.mubr.bf16.mxu0 0
  %1305 = vmatmul.mubr.bf16.gmra.mrb[0].mxu0 %v1237
  %v1306 = vpop.f32.mrb[0].mxu0
  %v1307 = vadd.f32 %v843, %v1306
  %v1308 = vpop.f32.mrb[0].mxu0
  %v1309 = vpop.f32.mrb[0].mxu0
  %v1310 = vadd.f32 %v843, %v1309
  %v1311 = vpop.f32.mrb[0].mxu0
  %1312 = vmatprep.mubr.bf16.mxu0 0
  %1313 = vmatmul.mubr.bf16.gmra.mrb[0].mxu0 %v1240
  %v1314 = vpop.f32.mrb[0].mxu0
  %v1315 = vadd.f32 %v843, %v1314
  %v1316 = vpop.f32.mrb[0].mxu0
  %v1317 = vpop.f32.mrb[0].mxu0
  %v1318 = vadd.f32 %v843, %v1317
  %v1319 = vpop.f32.mrb[0].mxu0
  %1320 = vmatprep.mubr.bf16.mxu0 0
  %1321 = vmatmul.mubr.bf16.gmra.mrb[0].mxu0 %v1243
  %v1322 = vpop.f32.mrb[0].mxu0
  %v1323 = vadd.f32 %v843, %v1322
  %v1324 = vpop.f32.mrb[0].mxu0
  %v1325 = vpop.f32.mrb[0].mxu0
  %v1326 = vadd.f32 %v843, %v1325
  %v1327 = vpop.f32.mrb[0].mxu0
  %1328 = vmatprep.mubr.bf16.mxu0 0
  %1329 = vmatmul.mubr.bf16.gmra.mrb[0].mxu0 %v1246
  %v1330 = vpop.f32.mrb[0].mxu0
  %v1331 = vadd.f32 %v843, %v1330
  %v1332 = vpop.f32.mrb[0].mxu0
  %v1333 = vpop.f32.mrb[0].mxu0
  %v1334 = vpop.f32.mrb[0].mxu0
  %1335 = vdwg.mxu0
  %v1336 = vmax.f32 %v1283, 0.0
  %v1337 = vmax.f32 %v1286, 0.0
  %v1338 = vmax.f32 %v1291, 0.0
  %v1339 = vmax.f32 %v1294, 0.0
  %v1340 = vmax.f32 %v1299, 0.0
  %v1341 = vmax.f32 %v1302, 0.0
  %v1342 = vmax.f32 %v1307, 0.0
  %v1343 = vmax.f32 %v1310, 0.0
  %v1344 = vmax.f32 %v1315, 0.0
  %v1345 = vmax.f32 %v1318, 0.0
  %v1346 = vmax.f32 %v1323, 0.0
  %v1347 = vmax.f32 %v1326, 0.0
  %v1348 = vmax.f32 %v1331, 0.0
  %v1349 = vpack.c.bf16 %v1337, %v1336
  %v1350 = vpack.c.bf16 %v1339, %v1338
  %v1351 = vpack.c.bf16 %v1341, %v1340
  %v1352 = vpack.c.bf16 %v1343, %v1342
  %v1353 = vpack.c.bf16 %v1345, %v1344
  %v1354 = vpack.c.bf16 %v1347, %v1346
  %v1355 = vpack.c.bf16 %v1348, %v1348
  %v1363 = vcombine.high %v1349, %v1349
  %v1365 = vunpack.c.l.s4 1966171168
  %v1366 = vunpack.c.0.s8 %v1365
  %v1367 = vlaneseq
  %v1368 = vshrl.u32 %v1367, 7
  %v1369 = vsub.s32 %v1366, %v1368
  %v1370 = vrot.slane %v1349, %v1369
  %v1372 = vunpack.c.l.s4 1966171168
  %v1373 = vunpack.c.0.s8 %v1372
  %v1374 = vlaneseq
  %v1375 = vshrl.u32 %v1374, 7
  %v1376 = vsub.s32 %v1373, %v1375
  %v1377 = vrot.slane %v1363, %v1376
  %v1378 = vcombine.high %v1370, %v1370
  %v1379 = vcombine.high %v1377, %v1377
  %v1381 = vunpack.c.l.s4 1966171168
  %v1382 = vunpack.c.0.s8 %v1381
  %v1383 = vlaneseq
  %v1384 = vshrl.u32 %v1383, 7
  %v1385 = vsub.s32 %v1382, %v1384
  %v1386 = vrot.slane %v1370, %v1385
  %v1388 = vunpack.c.l.s4 1966171168
  %v1389 = vunpack.c.0.s8 %v1388
  %v1390 = vlaneseq
  %v1391 = vshrl.u32 %v1390, 7
  %v1392 = vsub.s32 %v1389, %v1391
  %v1393 = vrot.slane %v1377, %v1392
  %v1395 = vunpack.c.l.s4 1966171168
  %v1396 = vunpack.c.0.s8 %v1395
  %v1397 = vlaneseq
  %v1398 = vshrl.u32 %v1397, 7
  %v1399 = vsub.s32 %v1396, %v1398
  %v1400 = vrot.slane %v1378, %v1399
  %v1402 = vunpack.c.l.s4 1966171168
  %v1403 = vunpack.c.0.s8 %v1402
  %v1404 = vlaneseq
  %v1405 = vshrl.u32 %v1404, 7
  %v1406 = vsub.s32 %v1403, %v1405
  %v1407 = vrot.slane %v1379, %v1406
  %v1408 = vcombine.high %v1386, %v1386
  %v1409 = vcombine.high %v1393, %v1393
  %v1410 = vcombine.high %v1400, %v1400
  %v1411 = vcombine.high %v1407, %v1407
  %v1412 = vcombine.high %v1350, %v1350
  %v1414 = vunpack.c.l.s4 1966171168
  %v1415 = vunpack.c.0.s8 %v1414
  %v1416 = vlaneseq
  %v1417 = vshrl.u32 %v1416, 7
  %v1418 = vsub.s32 %v1415, %v1417
  %v1419 = vrot.slane %v1350, %v1418
  %v1421 = vunpack.c.l.s4 1966171168
  %v1422 = vunpack.c.0.s8 %v1421
  %v1423 = vlaneseq
  %v1424 = vshrl.u32 %v1423, 7
  %v1425 = vsub.s32 %v1422, %v1424
  %v1426 = vrot.slane %v1412, %v1425
  %v1427 = vcombine.high %v1419, %v1419
  %v1428 = vcombine.high %v1426, %v1426
  %v1430 = vunpack.c.l.s4 1966171168
  %v1431 = vunpack.c.0.s8 %v1430
  %v1432 = vlaneseq
  %v1433 = vshrl.u32 %v1432, 7
  %v1434 = vsub.s32 %v1431, %v1433
  %v1435 = vrot.slane %v1419, %v1434
  %v1437 = vunpack.c.l.s4 1966171168
  %v1438 = vunpack.c.0.s8 %v1437
  %v1439 = vlaneseq
  %v1440 = vshrl.u32 %v1439, 7
  %v1441 = vsub.s32 %v1438, %v1440
  %v1442 = vrot.slane %v1426, %v1441
  %v1444 = vunpack.c.l.s4 1966171168
  %v1445 = vunpack.c.0.s8 %v1444
  %v1446 = vlaneseq
  %v1447 = vshrl.u32 %v1446, 7
  %v1448 = vsub.s32 %v1445, %v1447
  %v1449 = vrot.slane %v1427, %v1448
  %v1451 = vunpack.c.l.s4 1966171168
  %v1452 = vunpack.c.0.s8 %v1451
  %v1453 = vlaneseq
  %v1454 = vshrl.u32 %v1453, 7
  %v1455 = vsub.s32 %v1452, %v1454
  %v1456 = vrot.slane %v1428, %v1455
  %v1457 = vcombine.high %v1435, %v1435
  %v1458 = vcombine.high %v1442, %v1442
  %v1459 = vcombine.high %v1449, %v1449
  %v1460 = vcombine.high %v1456, %v1456
  %v1461 = vcombine.high %v1351, %v1351
  %v1463 = vunpack.c.l.s4 1966171168
  %v1464 = vunpack.c.0.s8 %v1463
  %v1465 = vlaneseq
  %v1466 = vshrl.u32 %v1465, 7
  %v1467 = vsub.s32 %v1464, %v1466
  %v1468 = vrot.slane %v1351, %v1467
  %v1470 = vunpack.c.l.s4 1966171168
  %v1471 = vunpack.c.0.s8 %v1470
  %v1472 = vlaneseq
  %v1473 = vshrl.u32 %v1472, 7
  %v1474 = vsub.s32 %v1471, %v1473
  %v1475 = vrot.slane %v1461, %v1474
  %v1476 = vcombine.high %v1468, %v1468
  %v1477 = vcombine.high %v1475, %v1475
  %v1479 = vunpack.c.l.s4 1966171168
  %v1480 = vunpack.c.0.s8 %v1479
  %v1481 = vlaneseq
  %v1482 = vshrl.u32 %v1481, 7
  %v1483 = vsub.s32 %v1480, %v1482
  %v1484 = vrot.slane %v1468, %v1483
  %v1486 = vunpack.c.l.s4 1966171168
  %v1487 = vunpack.c.0.s8 %v1486
  %v1488 = vlaneseq
  %v1489 = vshrl.u32 %v1488, 7
  %v1490 = vsub.s32 %v1487, %v1489
  %v1491 = vrot.slane %v1475, %v1490
  %v1493 = vunpack.c.l.s4 1966171168
  %v1494 = vunpack.c.0.s8 %v1493
  %v1495 = vlaneseq
  %v1496 = vshrl.u32 %v1495, 7
  %v1497 = vsub.s32 %v1494, %v1496
  %v1498 = vrot.slane %v1476, %v1497
  %v1500 = vunpack.c.l.s4 1966171168
  %v1501 = vunpack.c.0.s8 %v1500
  %v1502 = vlaneseq
  %v1503 = vshrl.u32 %v1502, 7
  %v1504 = vsub.s32 %v1501, %v1503
  %v1505 = vrot.slane %v1477, %v1504
  %v1506 = vcombine.high %v1484, %v1484
  %v1507 = vcombine.high %v1491, %v1491
  %v1508 = vcombine.high %v1498, %v1498
  %v1509 = vcombine.high %v1505, %v1505
  %v1510 = vcombine.high %v1352, %v1352
  %v1512 = vunpack.c.l.s4 1966171168
  %v1513 = vunpack.c.0.s8 %v1512
  %v1514 = vlaneseq
  %v1515 = vshrl.u32 %v1514, 7
  %v1516 = vsub.s32 %v1513, %v1515
  %v1517 = vrot.slane %v1352, %v1516
  %v1519 = vunpack.c.l.s4 1966171168
  %v1520 = vunpack.c.0.s8 %v1519
  %v1521 = vlaneseq
  %v1522 = vshrl.u32 %v1521, 7
  %v1523 = vsub.s32 %v1520, %v1522
  %v1524 = vrot.slane %v1510, %v1523
  %v1525 = vcombine.high %v1517, %v1517
  %v1526 = vcombine.high %v1524, %v1524
  %v1528 = vunpack.c.l.s4 1966171168
  %v1529 = vunpack.c.0.s8 %v1528
  %v1530 = vlaneseq
  %v1531 = vshrl.u32 %v1530, 7
  %v1532 = vsub.s32 %v1529, %v1531
  %v1533 = vrot.slane %v1517, %v1532
  %v1535 = vunpack.c.l.s4 1966171168
  %v1536 = vunpack.c.0.s8 %v1535
  %v1537 = vlaneseq
  %v1538 = vshrl.u32 %v1537, 7
  %v1539 = vsub.s32 %v1536, %v1538
  %v1540 = vrot.slane %v1524, %v1539
  %v1542 = vunpack.c.l.s4 1966171168
  %v1543 = vunpack.c.0.s8 %v1542
  %v1544 = vlaneseq
  %v1545 = vshrl.u32 %v1544, 7
  %v1546 = vsub.s32 %v1543, %v1545
  %v1547 = vrot.slane %v1525, %v1546
  %v1549 = vunpack.c.l.s4 1966171168
  %v1550 = vunpack.c.0.s8 %v1549
  %v1551 = vlaneseq
  %v1552 = vshrl.u32 %v1551, 7
  %v1553 = vsub.s32 %v1550, %v1552
  %v1554 = vrot.slane %v1526, %v1553
  %v1555 = vcombine.high %v1533, %v1533
  %v1556 = vcombine.high %v1540, %v1540
  %v1557 = vcombine.high %v1547, %v1547
  %v1558 = vcombine.high %v1554, %v1554
  %v1559 = vcombine.high %v1353, %v1353
  %v1561 = vunpack.c.l.s4 1966171168
  %v1562 = vunpack.c.0.s8 %v1561
  %v1563 = vlaneseq
  %v1564 = vshrl.u32 %v1563, 7
  %v1565 = vsub.s32 %v1562, %v1564
  %v1566 = vrot.slane %v1353, %v1565
  %v1568 = vunpack.c.l.s4 1966171168
  %v1569 = vunpack.c.0.s8 %v1568
  %v1570 = vlaneseq
  %v1571 = vshrl.u32 %v1570, 7
  %v1572 = vsub.s32 %v1569, %v1571
  %v1573 = vrot.slane %v1559, %v1572
  %v1574 = vcombine.high %v1566, %v1566
  %v1575 = vcombine.high %v1573, %v1573
  %v1577 = vunpack.c.l.s4 1966171168
  %v1578 = vunpack.c.0.s8 %v1577
  %v1579 = vlaneseq
  %v1580 = vshrl.u32 %v1579, 7
  %v1581 = vsub.s32 %v1578, %v1580
  %v1582 = vrot.slane %v1566, %v1581
  %v1584 = vunpack.c.l.s4 1966171168
  %v1585 = vunpack.c.0.s8 %v1584
  %v1586 = vlaneseq
  %v1587 = vshrl.u32 %v1586, 7
  %v1588 = vsub.s32 %v1585, %v1587
  %v1589 = vrot.slane %v1573, %v1588
  %v1591 = vunpack.c.l.s4 1966171168
  %v1592 = vunpack.c.0.s8 %v1591
  %v1593 = vlaneseq
  %v1594 = vshrl.u32 %v1593, 7
  %v1595 = vsub.s32 %v1592, %v1594
  %v1596 = vrot.slane %v1574, %v1595
  %v1598 = vunpack.c.l.s4 1966171168
  %v1599 = vunpack.c.0.s8 %v1598
  %v1600 = vlaneseq
  %v1601 = vshrl.u32 %v1600, 7
  %v1602 = vsub.s32 %v1599, %v1601
  %v1603 = vrot.slane %v1575, %v1602
  %v1604 = vcombine.high %v1582, %v1582
  %v1605 = vcombine.high %v1589, %v1589
  %v1606 = vcombine.high %v1596, %v1596
  %v1607 = vcombine.high %v1603, %v1603
  %v1608 = vcombine.high %v1354, %v1354
  %v1610 = vunpack.c.l.s4 1966171168
  %v1611 = vunpack.c.0.s8 %v1610
  %v1612 = vlaneseq
  %v1613 = vshrl.u32 %v1612, 7
  %v1614 = vsub.s32 %v1611, %v1613
  %v1615 = vrot.slane %v1354, %v1614
  %v1617 = vunpack.c.l.s4 1966171168
  %v1618 = vunpack.c.0.s8 %v1617
  %v1619 = vlaneseq
  %v1620 = vshrl.u32 %v1619, 7
  %v1621 = vsub.s32 %v1618, %v1620
  %v1622 = vrot.slane %v1608, %v1621
  %v1623 = vcombine.high %v1615, %v1615
  %v1624 = vcombine.high %v1622, %v1622
  %v1626 = vunpack.c.l.s4 1966171168
  %v1627 = vunpack.c.0.s8 %v1626
  %v1628 = vlaneseq
  %v1629 = vshrl.u32 %v1628, 7
  %v1630 = vsub.s32 %v1627, %v1629
  %v1631 = vrot.slane %v1615, %v1630
  %v1633 = vunpack.c.l.s4 1966171168
  %v1634 = vunpack.c.0.s8 %v1633
  %v1635 = vlaneseq
  %v1636 = vshrl.u32 %v1635, 7
  %v1637 = vsub.s32 %v1634, %v1636
  %v1638 = vrot.slane %v1622, %v1637
  %v1640 = vunpack.c.l.s4 1966171168
  %v1641 = vunpack.c.0.s8 %v1640
  %v1642 = vlaneseq
  %v1643 = vshrl.u32 %v1642, 7
  %v1644 = vsub.s32 %v1641, %v1643
  %v1645 = vrot.slane %v1623, %v1644
  %v1647 = vunpack.c.l.s4 1966171168
  %v1648 = vunpack.c.0.s8 %v1647
  %v1649 = vlaneseq
  %v1650 = vshrl.u32 %v1649, 7
  %v1651 = vsub.s32 %v1648, %v1650
  %v1652 = vrot.slane %v1624, %v1651
  %v1653 = vcombine.high %v1631, %v1631
  %v1654 = vcombine.high %v1638, %v1638
  %v1655 = vcombine.high %v1645, %v1645
  %v1656 = vcombine.high %v1652, %v1652
  %v1658 = vunpack.c.l.s4 1966171168
  %v1659 = vunpack.c.0.s8 %v1658
  %v1660 = vlaneseq
  %v1661 = vshrl.u32 %v1660, 7
  %v1662 = vsub.s32 %v1659, %v1661
  %v1663 = vrot.slane %v1355, %v1662
  %v1665 = vunpack.c.l.s4 1966171168
  %v1666 = vunpack.c.0.s8 %v1665
  %v1667 = vlaneseq
  %v1668 = vshrl.u32 %v1667, 7
  %v1669 = vsub.s32 %v1666, %v1668
  %v1670 = vrot.slane %v1663, %v1669
  %v1671 = vunpack.i.l.s16 %v1386
  %v1672 = vunpack.i.h.s16 %v1386
  %v1673 = vunpack.i.l.s16 %v1400
  %v1674 = vunpack.i.h.s16 %v1400
  %v1675 = vunpack.i.l.s16 %v1408
  %v1676 = vunpack.i.h.s16 %v1408
  %v1677 = vunpack.i.l.s16 %v1410
  %v1678 = vunpack.i.h.s16 %v1410
  %v1679 = vunpack.i.l.s16 %v1393
  %v1680 = vunpack.i.h.s16 %v1393
  %v1681 = vunpack.i.l.s16 %v1407
  %v1682 = vunpack.i.h.s16 %v1407
  %v1683 = vunpack.i.l.s16 %v1409
  %v1684 = vunpack.i.h.s16 %v1409
  %v1685 = vunpack.i.l.s16 %v1411
  %v1686 = vunpack.i.h.s16 %v1411
  %v1687 = vunpack.i.l.s16 %v1435
  %v1688 = vunpack.i.h.s16 %v1435
  %v1689 = vunpack.i.l.s16 %v1449
  %v1690 = vunpack.i.h.s16 %v1449
  %v1691 = vunpack.i.l.s16 %v1457
  %v1692 = vunpack.i.h.s16 %v1457
  %v1693 = vunpack.i.l.s16 %v1459
  %v1694 = vunpack.i.h.s16 %v1459
  %v1695 = vunpack.i.l.s16 %v1442
  %v1696 = vunpack.i.h.s16 %v1442
  %v1697 = vunpack.i.l.s16 %v1456
  %v1698 = vunpack.i.h.s16 %v1456
  %v1699 = vunpack.i.l.s16 %v1458
  %v1700 = vunpack.i.h.s16 %v1458
  %v1701 = vunpack.i.l.s16 %v1460
  %v1702 = vunpack.i.h.s16 %v1460
  %v1703 = vunpack.i.l.s16 %v1484
  %v1704 = vunpack.i.h.s16 %v1484
  %v1705 = vunpack.i.l.s16 %v1498
  %v1706 = vunpack.i.h.s16 %v1498
  %v1707 = vunpack.i.l.s16 %v1506
  %v1708 = vunpack.i.h.s16 %v1506
  %v1709 = vunpack.i.l.s16 %v1508
  %v1710 = vunpack.i.h.s16 %v1508
  %v1711 = vunpack.i.l.s16 %v1491
  %v1712 = vunpack.i.h.s16 %v1491
  %v1713 = vunpack.i.l.s16 %v1505
  %v1714 = vunpack.i.h.s16 %v1505
  %v1715 = vunpack.i.l.s16 %v1507
  %v1716 = vunpack.i.h.s16 %v1507
  %v1717 = vunpack.i.l.s16 %v1509
  %v1718 = vunpack.i.h.s16 %v1509
  %v1719 = vunpack.i.l.s16 %v1533
  %v1720 = vunpack.i.h.s16 %v1533
  %v1721 = vunpack.i.l.s16 %v1547
  %v1722 = vunpack.i.h.s16 %v1547
  %v1723 = vunpack.i.l.s16 %v1555
  %v1724 = vunpack.i.h.s16 %v1555
  %v1725 = vunpack.i.l.s16 %v1557
  %v1726 = vunpack.i.h.s16 %v1557
  %v1727 = vunpack.i.l.s16 %v1540
  %v1728 = vunpack.i.h.s16 %v1540
  %v1729 = vunpack.i.l.s16 %v1554
  %v1730 = vunpack.i.h.s16 %v1554
  %v1731 = vunpack.i.l.s16 %v1556
  %v1732 = vunpack.i.h.s16 %v1556
  %v1733 = vunpack.i.l.s16 %v1558
  %v1734 = vunpack.i.h.s16 %v1558
  %v1735 = vunpack.i.l.s16 %v1582
  %v1736 = vunpack.i.h.s16 %v1582
  %v1737 = vunpack.i.l.s16 %v1596
  %v1738 = vunpack.i.h.s16 %v1596
  %v1739 = vunpack.i.l.s16 %v1604
  %v1740 = vunpack.i.h.s16 %v1604
  %v1741 = vunpack.i.l.s16 %v1606
  %v1742 = vunpack.i.h.s16 %v1606
  %v1743 = vunpack.i.l.s16 %v1589
  %v1744 = vunpack.i.h.s16 %v1589
  %v1745 = vunpack.i.l.s16 %v1603
  %v1746 = vunpack.i.h.s16 %v1603
  %v1747 = vunpack.i.l.s16 %v1605
  %v1748 = vunpack.i.h.s16 %v1605
  %v1749 = vunpack.i.l.s16 %v1607
  %v1750 = vunpack.i.h.s16 %v1607
  %v1751 = vunpack.i.l.s16 %v1631
  %v1752 = vunpack.i.h.s16 %v1631
  %v1753 = vunpack.i.l.s16 %v1645
  %v1754 = vunpack.i.h.s16 %v1645
  %v1755 = vunpack.i.l.s16 %v1653
  %v1756 = vunpack.i.h.s16 %v1653
  %v1757 = vunpack.i.l.s16 %v1655
  %v1758 = vunpack.i.h.s16 %v1655
  %v1759 = vunpack.i.l.s16 %v1638
  %v1760 = vunpack.i.h.s16 %v1638
  %v1761 = vunpack.i.l.s16 %v1652
  %v1762 = vunpack.i.h.s16 %v1652
  %v1763 = vunpack.i.l.s16 %v1654
  %v1764 = vunpack.i.h.s16 %v1654
  %v1765 = vunpack.i.l.s16 %v1656
  %v1766 = vunpack.i.h.s16 %v1656
  %v1767 = vunpack.i.l.s16 %v1670
  %v1768 = vunpack.i.h.s16 %v1670
  %v1769 = vpack.i.b16 %v1672, %v1671
  %v1770 = vpack.i.b16 %v1674, %v1673
  %v1771 = vpack.i.b16 %v1676, %v1675
  %v1773 = vpack.i.b16 %v1679, %v1678
  %v1774 = vpack.i.b16 %v1681, %v1680
  %v1775 = vpack.i.b16 %v1683, %v1682
  %v1777 = vpack.i.b16 %v1686, %v1685
  %v1778 = vpack.i.b16 %v1688, %v1687
  %v1779 = vpack.i.b16 %v1690, %v1689
  %v1781 = vpack.i.b16 %v1693, %v1692
  %v1782 = vpack.i.b16 %v1695, %v1694
  %v1783 = vpack.i.b16 %v1697, %v1696
  %v1785 = vpack.i.b16 %v1700, %v1699
  %v1786 = vpack.i.b16 %v1702, %v1701
  %v1787 = vpack.i.b16 %v1704, %v1703
  %v1789 = vpack.i.b16 %v1707, %v1706
  %v1790 = vpack.i.b16 %v1709, %v1708
  %v1791 = vpack.i.b16 %v1711, %v1710
  %v1793 = vpack.i.b16 %v1714, %v1713
  %v1794 = vpack.i.b16 %v1716, %v1715
  %v1795 = vpack.i.b16 %v1718, %v1717
  %v1797 = vpack.i.b16 %v1721, %v1720
  %v1798 = vpack.i.b16 %v1723, %v1722
  %v1799 = vpack.i.b16 %v1725, %v1724
  %v1801 = vpack.i.b16 %v1728, %v1727
  %v1802 = vpack.i.b16 %v1730, %v1729
  %v1803 = vpack.i.b16 %v1732, %v1731
  %v1805 = vpack.i.b16 %v1735, %v1734
  %v1806 = vpack.i.b16 %v1737, %v1736
  %v1807 = vpack.i.b16 %v1739, %v1738
  %v1809 = vpack.i.b16 %v1742, %v1741
  %v1810 = vpack.i.b16 %v1744, %v1743
  %v1811 = vpack.i.b16 %v1746, %v1745
  %v1813 = vpack.i.b16 %v1749, %v1748
  %v1814 = vpack.i.b16 %v1751, %v1750
  %v1815 = vpack.i.b16 %v1753, %v1752
  %v1817 = vpack.i.b16 %v1756, %v1755
  %v1818 = vpack.i.b16 %v1758, %v1757
  %v1819 = vpack.i.b16 %v1760, %v1759
  %v1821 = vpack.i.b16 %v1763, %v1762
  %v1822 = vpack.i.b16 %v1765, %v1764
  %v1823 = vpack.i.b16 %v1767, %v1766
  %v1825 = vcombine.low %v1769, %v1770
  %v1826 = vcombine.low %v1771, %v1677
  %v1828 = vunpack.c.l.s4 1966171168
  %v1829 = vunpack.c.0.s8 %v1828
  %v1830 = vlaneseq
  %v1831 = vshrl.u32 %v1830, 7
  %v1832 = vsub.s32 %v1829, %v1831
  %v1833 = vrot.slane %v1825, %v1832
  %v1835 = vunpack.c.l.s4 1966171168
  %v1836 = vunpack.c.0.s8 %v1835
  %v1837 = vlaneseq
  %v1838 = vshrl.u32 %v1837, 7
  %v1839 = vsub.s32 %v1836, %v1838
  %v1840 = vrot.slane %v1826, %v1839
  %v1841 = vcombine.low %v1833, %v1840
  %v1843 = vunpack.c.l.s4 1966171168
  %v1844 = vunpack.c.0.s8 %v1843
  %v1845 = vlaneseq
  %v1846 = vshrl.u32 %v1845, 7
  %v1847 = vsub.s32 %v1844, %v1846
  %v1848 = vrot.slane %v1841, %v1847
  %v1849 = vcombine.low %v1773, %v1774
  %v1850 = vcombine.low %v1775, %v1684
  %v1852 = vunpack.c.l.s4 1966171168
  %v1853 = vunpack.c.0.s8 %v1852
  %v1854 = vlaneseq
  %v1855 = vshrl.u32 %v1854, 7
  %v1856 = vsub.s32 %v1853, %v1855
  %v1857 = vrot.slane %v1849, %v1856
  %v1859 = vunpack.c.l.s4 1966171168
  %v1860 = vunpack.c.0.s8 %v1859
  %v1861 = vlaneseq
  %v1862 = vshrl.u32 %v1861, 7
  %v1863 = vsub.s32 %v1860, %v1862
  %v1864 = vrot.slane %v1850, %v1863
  %v1865 = vcombine.low %v1857, %v1864
  %v1867 = vunpack.c.l.s4 1966171168
  %v1868 = vunpack.c.0.s8 %v1867
  %v1869 = vlaneseq
  %v1870 = vshrl.u32 %v1869, 7
  %v1871 = vsub.s32 %v1868, %v1870
  %v1872 = vrot.slane %v1865, %v1871
  %v1873 = vcombine.low %v1777, %v1778
  %v1874 = vcombine.low %v1779, %v1691
  %v1876 = vunpack.c.l.s4 1966171168
  %v1877 = vunpack.c.0.s8 %v1876
  %v1878 = vlaneseq
  %v1879 = vshrl.u32 %v1878, 7
  %v1880 = vsub.s32 %v1877, %v1879
  %v1881 = vrot.slane %v1873, %v1880
  %v1883 = vunpack.c.l.s4 1966171168
  %v1884 = vunpack.c.0.s8 %v1883
  %v1885 = vlaneseq
  %v1886 = vshrl.u32 %v1885, 7
  %v1887 = vsub.s32 %v1884, %v1886
  %v1888 = vrot.slane %v1874, %v1887
  %v1889 = vcombine.low %v1881, %v1888
  %v1891 = vunpack.c.l.s4 1966171168
  %v1892 = vunpack.c.0.s8 %v1891
  %v1893 = vlaneseq
  %v1894 = vshrl.u32 %v1893, 7
  %v1895 = vsub.s32 %v1892, %v1894
  %v1896 = vrot.slane %v1889, %v1895
  %v1897 = vcombine.low %v1781, %v1782
  %v1898 = vcombine.low %v1783, %v1698
  %v1900 = vunpack.c.l.s4 1966171168
  %v1901 = vunpack.c.0.s8 %v1900
  %v1902 = vlaneseq
  %v1903 = vshrl.u32 %v1902, 7
  %v1904 = vsub.s32 %v1901, %v1903
  %v1905 = vrot.slane %v1897, %v1904
  %v1907 = vunpack.c.l.s4 1966171168
  %v1908 = vunpack.c.0.s8 %v1907
  %v1909 = vlaneseq
  %v1910 = vshrl.u32 %v1909, 7
  %v1911 = vsub.s32 %v1908, %v1910
  %v1912 = vrot.slane %v1898, %v1911
  %v1913 = vcombine.low %v1905, %v1912
  %v1915 = vunpack.c.l.s4 1966171168
  %v1916 = vunpack.c.0.s8 %v1915
  %v1917 = vlaneseq
  %v1918 = vshrl.u32 %v1917, 7
  %v1919 = vsub.s32 %v1916, %v1918
  %v1920 = vrot.slane %v1913, %v1919
  %v1921 = vcombine.low %v1785, %v1786
  %v1922 = vcombine.low %v1787, %v1705
  %v1924 = vunpack.c.l.s4 1966171168
  %v1925 = vunpack.c.0.s8 %v1924
  %v1926 = vlaneseq
  %v1927 = vshrl.u32 %v1926, 7
  %v1928 = vsub.s32 %v1925, %v1927
  %v1929 = vrot.slane %v1921, %v1928
  %v1931 = vunpack.c.l.s4 1966171168
  %v1932 = vunpack.c.0.s8 %v1931
  %v1933 = vlaneseq
  %v1934 = vshrl.u32 %v1933, 7
  %v1935 = vsub.s32 %v1932, %v1934
  %v1936 = vrot.slane %v1922, %v1935
  %v1937 = vcombine.low %v1929, %v1936
  %v1939 = vunpack.c.l.s4 1966171168
  %v1940 = vunpack.c.0.s8 %v1939
  %v1941 = vlaneseq
  %v1942 = vshrl.u32 %v1941, 7
  %v1943 = vsub.s32 %v1940, %v1942
  %v1944 = vrot.slane %v1937, %v1943
  %v1945 = vcombine.low %v1789, %v1790
  %v1946 = vcombine.low %v1791, %v1712
  %v1948 = vunpack.c.l.s4 1966171168
  %v1949 = vunpack.c.0.s8 %v1948
  %v1950 = vlaneseq
  %v1951 = vshrl.u32 %v1950, 7
  %v1952 = vsub.s32 %v1949, %v1951
  %v1953 = vrot.slane %v1945, %v1952
  %v1955 = vunpack.c.l.s4 1966171168
  %v1956 = vunpack.c.0.s8 %v1955
  %v1957 = vlaneseq
  %v1958 = vshrl.u32 %v1957, 7
  %v1959 = vsub.s32 %v1956, %v1958
  %v1960 = vrot.slane %v1946, %v1959
  %v1961 = vcombine.low %v1953, %v1960
  %v1963 = vunpack.c.l.s4 1966171168
  %v1964 = vunpack.c.0.s8 %v1963
  %v1965 = vlaneseq
  %v1966 = vshrl.u32 %v1965, 7
  %v1967 = vsub.s32 %v1964, %v1966
  %v1968 = vrot.slane %v1961, %v1967
  %v1969 = vcombine.low %v1793, %v1794
  %v1970 = vcombine.low %v1795, %v1719
  %v1972 = vunpack.c.l.s4 1966171168
  %v1973 = vunpack.c.0.s8 %v1972
  %v1974 = vlaneseq
  %v1975 = vshrl.u32 %v1974, 7
  %v1976 = vsub.s32 %v1973, %v1975
  %v1977 = vrot.slane %v1969, %v1976
  %v1979 = vunpack.c.l.s4 1966171168
  %v1980 = vunpack.c.0.s8 %v1979
  %v1981 = vlaneseq
  %v1982 = vshrl.u32 %v1981, 7
  %v1983 = vsub.s32 %v1980, %v1982
  %v1984 = vrot.slane %v1970, %v1983
  %v1985 = vcombine.low %v1977, %v1984
  %v1987 = vunpack.c.l.s4 1966171168
  %v1988 = vunpack.c.0.s8 %v1987
  %v1989 = vlaneseq
  %v1990 = vshrl.u32 %v1989, 7
  %v1991 = vsub.s32 %v1988, %v1990
  %v1992 = vrot.slane %v1985, %v1991
  %v1993 = vcombine.low %v1797, %v1798
  %v1994 = vcombine.low %v1799, %v1726
  %v1996 = vunpack.c.l.s4 1966171168
  %v1997 = vunpack.c.0.s8 %v1996
  %v1998 = vlaneseq
  %v1999 = vshrl.u32 %v1998, 7
  %v2000 = vsub.s32 %v1997, %v1999
  %v2001 = vrot.slane %v1993, %v2000
  %v2003 = vunpack.c.l.s4 1966171168
  %v2004 = vunpack.c.0.s8 %v2003
  %v2005 = vlaneseq
  %v2006 = vshrl.u32 %v2005, 7
  %v2007 = vsub.s32 %v2004, %v2006
  %v2008 = vrot.slane %v1994, %v2007
  %v2009 = vcombine.low %v2001, %v2008
  %v2011 = vunpack.c.l.s4 1966171168
  %v2012 = vunpack.c.0.s8 %v2011
  %v2013 = vlaneseq
  %v2014 = vshrl.u32 %v2013, 7
  %v2015 = vsub.s32 %v2012, %v2014
  %v2016 = vrot.slane %v2009, %v2015
  %v2017 = vcombine.low %v1801, %v1802
  %v2018 = vcombine.low %v1803, %v1733
  %v2020 = vunpack.c.l.s4 1966171168
  %v2021 = vunpack.c.0.s8 %v2020
  %v2022 = vlaneseq
  %v2023 = vshrl.u32 %v2022, 7
  %v2024 = vsub.s32 %v2021, %v2023
  %v2025 = vrot.slane %v2017, %v2024
  %v2027 = vunpack.c.l.s4 1966171168
  %v2028 = vunpack.c.0.s8 %v2027
  %v2029 = vlaneseq
  %v2030 = vshrl.u32 %v2029, 7
  %v2031 = vsub.s32 %v2028, %v2030
  %v2032 = vrot.slane %v2018, %v2031
  %v2033 = vcombine.low %v2025, %v2032
  %v2035 = vunpack.c.l.s4 1966171168
  %v2036 = vunpack.c.0.s8 %v2035
  %v2037 = vlaneseq
  %v2038 = vshrl.u32 %v2037, 7
  %v2039 = vsub.s32 %v2036, %v2038
  %v2040 = vrot.slane %v2033, %v2039
  %v2041 = vcombine.low %v1805, %v1806
  %v2042 = vcombine.low %v1807, %v1740
  %v2044 = vunpack.c.l.s4 1966171168
  %v2045 = vunpack.c.0.s8 %v2044
  %v2046 = vlaneseq
  %v2047 = vshrl.u32 %v2046, 7
  %v2048 = vsub.s32 %v2045, %v2047
  %v2049 = vrot.slane %v2041, %v2048
  %v2051 = vunpack.c.l.s4 1966171168
  %v2052 = vunpack.c.0.s8 %v2051
  %v2053 = vlaneseq
  %v2054 = vshrl.u32 %v2053, 7
  %v2055 = vsub.s32 %v2052, %v2054
  %v2056 = vrot.slane %v2042, %v2055
  %v2057 = vcombine.low %v2049, %v2056
  %v2059 = vunpack.c.l.s4 1966171168
  %v2060 = vunpack.c.0.s8 %v2059
  %v2061 = vlaneseq
  %v2062 = vshrl.u32 %v2061, 7
  %v2063 = vsub.s32 %v2060, %v2062
  %v2064 = vrot.slane %v2057, %v2063
  %v2065 = vcombine.low %v1809, %v1810
  %v2066 = vcombine.low %v1811, %v1747
  %v2068 = vunpack.c.l.s4 1966171168
  %v2069 = vunpack.c.0.s8 %v2068
  %v2070 = vlaneseq
  %v2071 = vshrl.u32 %v2070, 7
  %v2072 = vsub.s32 %v2069, %v2071
  %v2073 = vrot.slane %v2065, %v2072
  %v2075 = vunpack.c.l.s4 1966171168
  %v2076 = vunpack.c.0.s8 %v2075
  %v2077 = vlaneseq
  %v2078 = vshrl.u32 %v2077, 7
  %v2079 = vsub.s32 %v2076, %v2078
  %v2080 = vrot.slane %v2066, %v2079
  %v2081 = vcombine.low %v2073, %v2080
  %v2083 = vunpack.c.l.s4 1966171168
  %v2084 = vunpack.c.0.s8 %v2083
  %v2085 = vlaneseq
  %v2086 = vshrl.u32 %v2085, 7
  %v2087 = vsub.s32 %v2084, %v2086
  %v2088 = vrot.slane %v2081, %v2087
  %v2089 = vcombine.low %v1813, %v1814
  %v2090 = vcombine.low %v1815, %v1754
  %v2092 = vunpack.c.l.s4 1966171168
  %v2093 = vunpack.c.0.s8 %v2092
  %v2094 = vlaneseq
  %v2095 = vshrl.u32 %v2094, 7
  %v2096 = vsub.s32 %v2093, %v2095
  %v2097 = vrot.slane %v2089, %v2096
  %v2099 = vunpack.c.l.s4 1966171168
  %v2100 = vunpack.c.0.s8 %v2099
  %v2101 = vlaneseq
  %v2102 = vshrl.u32 %v2101, 7
  %v2103 = vsub.s32 %v2100, %v2102
  %v2104 = vrot.slane %v2090, %v2103
  %v2105 = vcombine.low %v2097, %v2104
  %v2107 = vunpack.c.l.s4 1966171168
  %v2108 = vunpack.c.0.s8 %v2107
  %v2109 = vlaneseq
  %v2110 = vshrl.u32 %v2109, 7
  %v2111 = vsub.s32 %v2108, %v2110
  %v2112 = vrot.slane %v2105, %v2111
  %v2113 = vcombine.low %v1817, %v1818
  %v2114 = vcombine.low %v1819, %v1761
  %v2116 = vunpack.c.l.s4 1966171168
  %v2117 = vunpack.c.0.s8 %v2116
  %v2118 = vlaneseq
  %v2119 = vshrl.u32 %v2118, 7
  %v2120 = vsub.s32 %v2117, %v2119
  %v2121 = vrot.slane %v2113, %v2120
  %v2123 = vunpack.c.l.s4 1966171168
  %v2124 = vunpack.c.0.s8 %v2123
  %v2125 = vlaneseq
  %v2126 = vshrl.u32 %v2125, 7
  %v2127 = vsub.s32 %v2124, %v2126
  %v2128 = vrot.slane %v2114, %v2127
  %v2129 = vcombine.low %v2121, %v2128
  %v2131 = vunpack.c.l.s4 1966171168
  %v2132 = vunpack.c.0.s8 %v2131
  %v2133 = vlaneseq
  %v2134 = vshrl.u32 %v2133, 7
  %v2135 = vsub.s32 %v2132, %v2134
  %v2136 = vrot.slane %v2129, %v2135
  %v2137 = vcombine.low %v1821, %v1822
  %v2138 = vcombine.low %v1823, %v1768
  %v2140 = vunpack.c.l.s4 1966171168
  %v2141 = vunpack.c.0.s8 %v2140
  %v2142 = vlaneseq
  %v2143 = vshrl.u32 %v2142, 7
  %v2144 = vsub.s32 %v2141, %v2143
  %v2145 = vrot.slane %v2137, %v2144
  %v2147 = vunpack.c.l.s4 1966171168
  %v2148 = vunpack.c.0.s8 %v2147
  %v2149 = vlaneseq
  %v2150 = vshrl.u32 %v2149, 7
  %v2151 = vsub.s32 %v2148, %v2150
  %v2152 = vrot.slane %v2138, %v2151
  %v2153 = vcombine.low %v2145, %v2152
  %v2155 = vunpack.c.l.s4 1966171168
  %v2156 = vunpack.c.0.s8 %v2155
  %v2157 = vlaneseq
  %v2158 = vshrl.u32 %v2157, 7
  %v2159 = vsub.s32 %v2156, %v2158
  %v2160 = vrot.slane %v2153, %v2159
  %v2162 = vshrl.u32 0, 16
  %v2164 = vrot.slane %v2162, 7
  %v2165 = vshll.u32 0, 16
  %v2167 = vor.u32 %v2164, %v2165
  %v2169 = vshrl.u32 %v1848, 16
  %v2171 = vrot.slane %v2169, 7
  %v2172 = vshll.u32 %v1848, 16
  %v2174 = vor.u32 %v2171, %v2172
  %v2176 = vshrl.u32 %v1872, 16
  %v2178 = vrot.slane %v2176, 7
  %v2179 = vshll.u32 %v1872, 16
  %v2181 = vor.u32 %v2178, %v2179
  %v2183 = vshrl.u32 %v1896, 16
  %v2185 = vrot.slane %v2183, 7
  %v2186 = vshll.u32 %v1896, 16
  %v2188 = vor.u32 %v2185, %v2186
  %v2190 = vshrl.u32 %v1920, 16
  %v2192 = vrot.slane %v2190, 7
  %v2193 = vshll.u32 %v1920, 16
  %v2195 = vor.u32 %v2192, %v2193
  %v2197 = vshrl.u32 %v1944, 16
  %v2199 = vrot.slane %v2197, 7
  %v2200 = vshll.u32 %v1944, 16
  %v2202 = vor.u32 %v2199, %v2200
  %v2204 = vshrl.u32 %v1968, 16
  %v2206 = vrot.slane %v2204, 7
  %v2207 = vshll.u32 %v1968, 16
  %v2209 = vor.u32 %v2206, %v2207
  %v2211 = vshrl.u32 %v1992, 16
  %v2213 = vrot.slane %v2211, 7
  %v2214 = vshll.u32 %v1992, 16
  %v2216 = vor.u32 %v2213, %v2214
  %v2218 = vshrl.u32 %v2016, 16
  %v2220 = vrot.slane %v2218, 7
  %v2221 = vshll.u32 %v2016, 16
  %v2223 = vor.u32 %v2220, %v2221
  %v2225 = vshrl.u32 %v2040, 16
  %v2227 = vrot.slane %v2225, 7
  %v2228 = vshll.u32 %v2040, 16
  %v2230 = vor.u32 %v2227, %v2228
  %v2232 = vshrl.u32 %v2064, 16
  %v2234 = vrot.slane %v2232, 7
  %v2235 = vshll.u32 %v2064, 16
  %v2237 = vor.u32 %v2234, %v2235
  %v2239 = vshrl.u32 %v2088, 16
  %v2241 = vrot.slane %v2239, 7
  %v2242 = vshll.u32 %v2088, 16
  %v2244 = vor.u32 %v2241, %v2242
  %v2246 = vshrl.u32 %v2112, 16
  %v2248 = vrot.slane %v2246, 7
  %v2249 = vshll.u32 %v2112, 16
  %v2251 = vor.u32 %v2248, %v2249
  %v2253 = vshrl.u32 %v2136, 16
  %v2255 = vrot.slane %v2253, 7
  %v2256 = vshll.u32 %v2136, 16
  %v2258 = vor.u32 %v2255, %v2256
  %v2260 = vshrl.u32 %v2160, 16
  %v2262 = vrot.slane %v2260, 7
  %v2263 = vshll.u32 %v2160, 16
  %v2265 = vor.u32 %v2262, %v2263
  %vm2281 = vcmask 1040384
  %vm2282 = vsmask.f32 256
  %vm2283 = vmand %vm2281, %vm2282
  %v2284 = vsel %vm2283, 0, %v2167
  %v2285 = vsel %vm2283, 0, %v2174
  %v2286 = vsel %vm2283, 0, %v2181
  %v2287 = vsel %vm2283, 0, %v2188
  %v2288 = vsel %vm2283, 0, %v2195
  %v2289 = vsel %vm2283, 0, %v2202
  %v2290 = vsel %vm2283, 0, %v2209
  %v2291 = vsel %vm2283, 0, %v2216
  %v2292 = vsel %vm2283, 0, %v2223
  %v2293 = vsel %vm2283, 0, %v2230
  %v2294 = vsel %vm2283, 0, %v2237
  %v2295 = vsel %vm2283, 0, %v2244
  %v2296 = vsel %vm2283, 0, %v2251
  %v2297 = vsel %vm2283, 0, %v2258
  %v2298 = vsel %vm2283, 0, %v2265
  %v2300 = vshrl.u32 %v2284, 16
  %v2302 = vshll.u32 %v2284, 16
  %v2304 = vrot.slane %v2302, 1
  %v2305 = vor.u32 %v2300, %v2304
  %v2307 = vshrl.u32 %v2285, 16
  %v2309 = vshll.u32 %v2285, 16
  %v2311 = vrot.slane %v2309, 1
  %v2312 = vor.u32 %v2307, %v2311
  %v2314 = vshrl.u32 %v2286, 16
  %v2316 = vshll.u32 %v2286, 16
  %v2318 = vrot.slane %v2316, 1
  %v2319 = vor.u32 %v2314, %v2318
  %v2321 = vshrl.u32 %v2287, 16
  %v2323 = vshll.u32 %v2287, 16
  %v2325 = vrot.slane %v2323, 1
  %v2326 = vor.u32 %v2321, %v2325
  %v2328 = vshrl.u32 %v2288, 16
  %v2330 = vshll.u32 %v2288, 16
  %v2332 = vrot.slane %v2330, 1
  %v2333 = vor.u32 %v2328, %v2332
  %v2335 = vshrl.u32 %v2289, 16
  %v2337 = vshll.u32 %v2289, 16
  %v2339 = vrot.slane %v2337, 1
  %v2340 = vor.u32 %v2335, %v2339
  %v2342 = vshrl.u32 %v2290, 16
  %v2344 = vshll.u32 %v2290, 16
  %v2346 = vrot.slane %v2344, 1
  %v2347 = vor.u32 %v2342, %v2346
  %v2349 = vshrl.u32 %v2292, 16
  %v2351 = vshll.u32 %v2292, 16
  %v2353 = vrot.slane %v2351, 1
  %v2354 = vor.u32 %v2349, %v2353
  %v2356 = vshrl.u32 %v2293, 16
  %v2358 = vshll.u32 %v2293, 16
  %v2360 = vrot.slane %v2358, 1
  %v2361 = vor.u32 %v2356, %v2360
  %v2363 = vshrl.u32 %v2294, 16
  %v2365 = vshll.u32 %v2294, 16
  %v2367 = vrot.slane %v2365, 1
  %v2368 = vor.u32 %v2363, %v2367
  %v2370 = vshrl.u32 %v2295, 16
  %v2372 = vshll.u32 %v2295, 16
  %v2374 = vrot.slane %v2372, 1
  %v2375 = vor.u32 %v2370, %v2374
  %v2377 = vshrl.u32 %v2296, 16
  %v2379 = vshll.u32 %v2296, 16
  %v2381 = vrot.slane %v2379, 1
  %v2382 = vor.u32 %v2377, %v2381
  %v2384 = vshrl.u32 %v2297, 16
  %v2386 = vshll.u32 %v2297, 16
  %v2388 = vrot.slane %v2386, 1
  %v2389 = vor.u32 %v2384, %v2388
  %2390 = vrot.lane.b32.xlu0 %v2305, 64
  %v2391 = vpop.permute.xlu0 %2390
  %2392 = vrot.lane.b32.xlu0 %v2312, 64
  %v2393 = vpop.permute.xlu0 %2392
  %2394 = vrot.lane.b32.xlu0 %v2319, 64
  %v2395 = vpop.permute.xlu0 %2394
  %2396 = vrot.lane.b32.xlu0 %v2326, 64
  %v2397 = vpop.permute.xlu0 %2396
  %2398 = vrot.lane.b32.xlu0 %v2333, 64
  %v2399 = vpop.permute.xlu0 %2398
  %2400 = vrot.lane.b32.xlu0 %v2340, 64
  %v2401 = vpop.permute.xlu0 %2400
  %2402 = vrot.lane.b32.xlu0 %v2347, 64
  %v2403 = vpop.permute.xlu0 %2402
  %2404 = vrot.lane.b32.xlu0 %v2354, 64
  %v2405 = vpop.permute.xlu0 %2404
  %2406 = vrot.lane.b32.xlu0 %v2361, 64
  %v2407 = vpop.permute.xlu0 %2406
  %2408 = vrot.lane.b32.xlu0 %v2368, 64
  %v2409 = vpop.permute.xlu0 %2408
  %2410 = vrot.lane.b32.xlu0 %v2375, 64
  %v2411 = vpop.permute.xlu0 %2410
  %2412 = vrot.lane.b32.xlu0 %v2382, 64
  %v2413 = vpop.permute.xlu0 %2412
  %2414 = vrot.lane.b32.xlu0 %v2389, 64
  %v2415 = vpop.permute.xlu0 %2414
  %v2417 = vshrl.u32 %v2291, 16
  %v2419 = vshll.u32 %v2291, 16
  %v2421 = vrot.slane %v2419, 1
  %v2422 = vor.u32 %v2417, %v2421
  %v2424 = vshrl.u32 %v2298, 16
  %v2426 = vshll.u32 %v2298, 16
  %v2428 = vrot.slane %v2426, 1
  %v2429 = vor.u32 %v2424, %v2428
  %2430 = vrot.lane.b32.xlu0 %v2422, 64
  %v2431 = vpop.permute.xlu0 %2430
  %2432 = vrot.lane.b32.xlu0 %v2429, 64
  %v2433 = vpop.permute.xlu0 %2432
  %v2435 = vsel %vm1226, %v2284, %v2391
  %v2437 = vsel %vm1226, %v2285, %v2393
  %v2439 = vsel %vm1226, %v2286, %v2395
  %v2441 = vsel %vm1226, %v2287, %v2397
  %v2443 = vsel %vm1226, %v2288, %v2399
  %v2445 = vsel %vm1226, %v2289, %v2401
  %v2447 = vsel %vm1226, %v2290, %v2403
  %v2449 = vsel %vm1226, %v2292, %v2405
  %v2451 = vsel %vm1226, %v2293, %v2407
  %v2453 = vsel %vm1226, %v2294, %v2409
  %v2455 = vsel %vm1226, %v2295, %v2411
  %v2457 = vsel %vm1226, %v2296, %v2413
  %v2459 = vsel %vm1226, %v2297, %v2415
  %v2461 = vsel %vm1226, %v2291, %v2431
  %v2463 = vsel %vm1226, %v2298, %v2433
  %v2479 = vcombine.low %v2435, %v2437
  %v2481 = vunpack.c.l.s4 1966171168
  %v2482 = vunpack.c.0.s8 %v2481
  %v2483 = vlaneseq
  %v2484 = vshrl.u32 %v2483, 7
  %v2485 = vsub.s32 %v2482, %v2484
  %v2486 = vrot.slane %v2479, %v2485
  %v2487 = vcombine.high %v2486, %v2486
  %v2489 = vunpack.c.l.s4 1966171168
  %v2490 = vunpack.c.0.s8 %v2489
  %v2491 = vlaneseq
  %v2492 = vshrl.u32 %v2491, 7
  %v2493 = vsub.s32 %v2490, %v2492
  %v2494 = vrot.slane %v2486, %v2493
  %v2496 = vunpack.c.l.s4 1966171168
  %v2497 = vunpack.c.0.s8 %v2496
  %v2498 = vlaneseq
  %v2499 = vshrl.u32 %v2498, 7
  %v2500 = vsub.s32 %v2497, %v2499
  %v2501 = vrot.slane %v2487, %v2500
  %v2502 = vcombine.high %v2494, %v2494
  %v2503 = vcombine.high %v2501, %v2501
  %v2504 = vcombine.low %v2437, %v2439
  %v2506 = vunpack.c.l.s4 1966171168
  %v2507 = vunpack.c.0.s8 %v2506
  %v2508 = vlaneseq
  %v2509 = vshrl.u32 %v2508, 7
  %v2510 = vsub.s32 %v2507, %v2509
  %v2511 = vrot.slane %v2504, %v2510
  %v2512 = vcombine.high %v2511, %v2511
  %v2514 = vunpack.c.l.s4 1966171168
  %v2515 = vunpack.c.0.s8 %v2514
  %v2516 = vlaneseq
  %v2517 = vshrl.u32 %v2516, 7
  %v2518 = vsub.s32 %v2515, %v2517
  %v2519 = vrot.slane %v2511, %v2518
  %v2521 = vunpack.c.l.s4 1966171168
  %v2522 = vunpack.c.0.s8 %v2521
  %v2523 = vlaneseq
  %v2524 = vshrl.u32 %v2523, 7
  %v2525 = vsub.s32 %v2522, %v2524
  %v2526 = vrot.slane %v2512, %v2525
  %v2527 = vcombine.high %v2519, %v2519
  %v2528 = vcombine.high %v2526, %v2526
  %v2529 = vcombine.low %v2439, %v2441
  %v2531 = vunpack.c.l.s4 1966171168
  %v2532 = vunpack.c.0.s8 %v2531
  %v2533 = vlaneseq
  %v2534 = vshrl.u32 %v2533, 7
  %v2535 = vsub.s32 %v2532, %v2534
  %v2536 = vrot.slane %v2529, %v2535
  %v2537 = vcombine.high %v2536, %v2536
  %v2539 = vunpack.c.l.s4 1966171168
  %v2540 = vunpack.c.0.s8 %v2539
  %v2541 = vlaneseq
  %v2542 = vshrl.u32 %v2541, 7
  %v2543 = vsub.s32 %v2540, %v2542
  %v2544 = vrot.slane %v2536, %v2543
  %v2546 = vunpack.c.l.s4 1966171168
  %v2547 = vunpack.c.0.s8 %v2546
  %v2548 = vlaneseq
  %v2549 = vshrl.u32 %v2548, 7
  %v2550 = vsub.s32 %v2547, %v2549
  %v2551 = vrot.slane %v2537, %v2550
  %v2552 = vcombine.high %v2544, %v2544
  %v2553 = vcombine.high %v2551, %v2551
  %v2554 = vcombine.low %v2441, %v2443
  %v2556 = vunpack.c.l.s4 1966171168
  %v2557 = vunpack.c.0.s8 %v2556
  %v2558 = vlaneseq
  %v2559 = vshrl.u32 %v2558, 7
  %v2560 = vsub.s32 %v2557, %v2559
  %v2561 = vrot.slane %v2554, %v2560
  %v2562 = vcombine.high %v2561, %v2561
  %v2564 = vunpack.c.l.s4 1966171168
  %v2565 = vunpack.c.0.s8 %v2564
  %v2566 = vlaneseq
  %v2567 = vshrl.u32 %v2566, 7
  %v2568 = vsub.s32 %v2565, %v2567
  %v2569 = vrot.slane %v2561, %v2568
  %v2571 = vunpack.c.l.s4 1966171168
  %v2572 = vunpack.c.0.s8 %v2571
  %v2573 = vlaneseq
  %v2574 = vshrl.u32 %v2573, 7
  %v2575 = vsub.s32 %v2572, %v2574
  %v2576 = vrot.slane %v2562, %v2575
  %v2577 = vcombine.high %v2569, %v2569
  %v2578 = vcombine.high %v2576, %v2576
  %v2579 = vcombine.low %v2443, %v2445
  %v2581 = vunpack.c.l.s4 1966171168
  %v2582 = vunpack.c.0.s8 %v2581
  %v2583 = vlaneseq
  %v2584 = vshrl.u32 %v2583, 7
  %v2585 = vsub.s32 %v2582, %v2584
  %v2586 = vrot.slane %v2579, %v2585
  %v2587 = vcombine.high %v2586, %v2586
  %v2589 = vunpack.c.l.s4 1966171168
  %v2590 = vunpack.c.0.s8 %v2589
  %v2591 = vlaneseq
  %v2592 = vshrl.u32 %v2591, 7
  %v2593 = vsub.s32 %v2590, %v2592
  %v2594 = vrot.slane %v2586, %v2593
  %v2596 = vunpack.c.l.s4 1966171168
  %v2597 = vunpack.c.0.s8 %v2596
  %v2598 = vlaneseq
  %v2599 = vshrl.u32 %v2598, 7
  %v2600 = vsub.s32 %v2597, %v2599
  %v2601 = vrot.slane %v2587, %v2600
  %v2602 = vcombine.high %v2594, %v2594
  %v2603 = vcombine.high %v2601, %v2601
  %v2604 = vcombine.low %v2445, %v2447
  %v2606 = vunpack.c.l.s4 1966171168
  %v2607 = vunpack.c.0.s8 %v2606
  %v2608 = vlaneseq
  %v2609 = vshrl.u32 %v2608, 7
  %v2610 = vsub.s32 %v2607, %v2609
  %v2611 = vrot.slane %v2604, %v2610
  %v2612 = vcombine.high %v2611, %v2611
  %v2614 = vunpack.c.l.s4 1966171168
  %v2615 = vunpack.c.0.s8 %v2614
  %v2616 = vlaneseq
  %v2617 = vshrl.u32 %v2616, 7
  %v2618 = vsub.s32 %v2615, %v2617
  %v2619 = vrot.slane %v2611, %v2618
  %v2621 = vunpack.c.l.s4 1966171168
  %v2622 = vunpack.c.0.s8 %v2621
  %v2623 = vlaneseq
  %v2624 = vshrl.u32 %v2623, 7
  %v2625 = vsub.s32 %v2622, %v2624
  %v2626 = vrot.slane %v2612, %v2625
  %v2627 = vcombine.high %v2619, %v2619
  %v2628 = vcombine.high %v2626, %v2626
  %v2629 = vcombine.low %v2447, %v2461
  %v2631 = vunpack.c.l.s4 1966171168
  %v2632 = vunpack.c.0.s8 %v2631
  %v2633 = vlaneseq
  %v2634 = vshrl.u32 %v2633, 7
  %v2635 = vsub.s32 %v2632, %v2634
  %v2636 = vrot.slane %v2629, %v2635
  %v2637 = vcombine.high %v2636, %v2636
  %v2639 = vunpack.c.l.s4 1966171168
  %v2640 = vunpack.c.0.s8 %v2639
  %v2641 = vlaneseq
  %v2642 = vshrl.u32 %v2641, 7
  %v2643 = vsub.s32 %v2640, %v2642
  %v2644 = vrot.slane %v2636, %v2643
  %v2646 = vunpack.c.l.s4 1966171168
  %v2647 = vunpack.c.0.s8 %v2646
  %v2648 = vlaneseq
  %v2649 = vshrl.u32 %v2648, 7
  %v2650 = vsub.s32 %v2647, %v2649
  %v2651 = vrot.slane %v2637, %v2650
  %v2652 = vcombine.high %v2644, %v2644
  %v2653 = vcombine.high %v2651, %v2651
  %v2654 = vcombine.low %v2435, %v2449
  %v2656 = vunpack.c.l.s4 1966171168
  %v2657 = vunpack.c.0.s8 %v2656
  %v2658 = vlaneseq
  %v2659 = vshrl.u32 %v2658, 7
  %v2660 = vsub.s32 %v2657, %v2659
  %v2661 = vrot.slane %v2654, %v2660
  %v2662 = vcombine.high %v2661, %v2661
  %v2664 = vunpack.c.l.s4 1966171168
  %v2665 = vunpack.c.0.s8 %v2664
  %v2666 = vlaneseq
  %v2667 = vshrl.u32 %v2666, 7
  %v2668 = vsub.s32 %v2665, %v2667
  %v2669 = vrot.slane %v2661, %v2668
  %v2671 = vunpack.c.l.s4 1966171168
  %v2672 = vunpack.c.0.s8 %v2671
  %v2673 = vlaneseq
  %v2674 = vshrl.u32 %v2673, 7
  %v2675 = vsub.s32 %v2672, %v2674
  %v2676 = vrot.slane %v2662, %v2675
  %v2677 = vcombine.high %v2669, %v2669
  %v2678 = vcombine.high %v2676, %v2676
  %v2679 = vcombine.low %v2449, %v2451
  %v2681 = vunpack.c.l.s4 1966171168
  %v2682 = vunpack.c.0.s8 %v2681
  %v2683 = vlaneseq
  %v2684 = vshrl.u32 %v2683, 7
  %v2685 = vsub.s32 %v2682, %v2684
  %v2686 = vrot.slane %v2679, %v2685
  %v2687 = vcombine.high %v2686, %v2686
  %v2689 = vunpack.c.l.s4 1966171168
  %v2690 = vunpack.c.0.s8 %v2689
  %v2691 = vlaneseq
  %v2692 = vshrl.u32 %v2691, 7
  %v2693 = vsub.s32 %v2690, %v2692
  %v2694 = vrot.slane %v2686, %v2693
  %v2696 = vunpack.c.l.s4 1966171168
  %v2697 = vunpack.c.0.s8 %v2696
  %v2698 = vlaneseq
  %v2699 = vshrl.u32 %v2698, 7
  %v2700 = vsub.s32 %v2697, %v2699
  %v2701 = vrot.slane %v2687, %v2700
  %v2702 = vcombine.high %v2694, %v2694
  %v2703 = vcombine.high %v2701, %v2701
  %v2704 = vcombine.low %v2451, %v2453
  %v2706 = vunpack.c.l.s4 1966171168
  %v2707 = vunpack.c.0.s8 %v2706
  %v2708 = vlaneseq
  %v2709 = vshrl.u32 %v2708, 7
  %v2710 = vsub.s32 %v2707, %v2709
  %v2711 = vrot.slane %v2704, %v2710
  %v2712 = vcombine.high %v2711, %v2711
  %v2714 = vunpack.c.l.s4 1966171168
  %v2715 = vunpack.c.0.s8 %v2714
  %v2716 = vlaneseq
  %v2717 = vshrl.u32 %v2716, 7
  %v2718 = vsub.s32 %v2715, %v2717
  %v2719 = vrot.slane %v2711, %v2718
  %v2721 = vunpack.c.l.s4 1966171168
  %v2722 = vunpack.c.0.s8 %v2721
  %v2723 = vlaneseq
  %v2724 = vshrl.u32 %v2723, 7
  %v2725 = vsub.s32 %v2722, %v2724
  %v2726 = vrot.slane %v2712, %v2725
  %v2727 = vcombine.high %v2719, %v2719
  %v2728 = vcombine.high %v2726, %v2726
  %v2729 = vcombine.low %v2453, %v2455
  %v2731 = vunpack.c.l.s4 1966171168
  %v2732 = vunpack.c.0.s8 %v2731
  %v2733 = vlaneseq
  %v2734 = vshrl.u32 %v2733, 7
  %v2735 = vsub.s32 %v2732, %v2734
  %v2736 = vrot.slane %v2729, %v2735
  %v2737 = vcombine.high %v2736, %v2736
  %v2739 = vunpack.c.l.s4 1966171168
  %v2740 = vunpack.c.0.s8 %v2739
  %v2741 = vlaneseq
  %v2742 = vshrl.u32 %v2741, 7
  %v2743 = vsub.s32 %v2740, %v2742
  %v2744 = vrot.slane %v2736, %v2743
  %v2746 = vunpack.c.l.s4 1966171168
  %v2747 = vunpack.c.0.s8 %v2746
  %v2748 = vlaneseq
  %v2749 = vshrl.u32 %v2748, 7
  %v2750 = vsub.s32 %v2747, %v2749
  %v2751 = vrot.slane %v2737, %v2750
  %v2752 = vcombine.high %v2744, %v2744
  %v2753 = vcombine.high %v2751, %v2751
  %v2754 = vcombine.low %v2455, %v2457
  %v2756 = vunpack.c.l.s4 1966171168
  %v2757 = vunpack.c.0.s8 %v2756
  %v2758 = vlaneseq
  %v2759 = vshrl.u32 %v2758, 7
  %v2760 = vsub.s32 %v2757, %v2759
  %v2761 = vrot.slane %v2754, %v2760
  %v2762 = vcombine.high %v2761, %v2761
  %v2764 = vunpack.c.l.s4 1966171168
  %v2765 = vunpack.c.0.s8 %v2764
  %v2766 = vlaneseq
  %v2767 = vshrl.u32 %v2766, 7
  %v2768 = vsub.s32 %v2765, %v2767
  %v2769 = vrot.slane %v2761, %v2768
  %v2771 = vunpack.c.l.s4 1966171168
  %v2772 = vunpack.c.0.s8 %v2771
  %v2773 = vlaneseq
  %v2774 = vshrl.u32 %v2773, 7
  %v2775 = vsub.s32 %v2772, %v2774
  %v2776 = vrot.slane %v2762, %v2775
  %v2777 = vcombine.high %v2769, %v2769
  %v2778 = vcombine.high %v2776, %v2776
  %v2779 = vcombine.low %v2457, %v2459
  %v2781 = vunpack.c.l.s4 1966171168
  %v2782 = vunpack.c.0.s8 %v2781
  %v2783 = vlaneseq
  %v2784 = vshrl.u32 %v2783, 7
  %v2785 = vsub.s32 %v2782, %v2784
  %v2786 = vrot.slane %v2779, %v2785
  %v2787 = vcombine.high %v2786, %v2786
  %v2789 = vunpack.c.l.s4 1966171168
  %v2790 = vunpack.c.0.s8 %v2789
  %v2791 = vlaneseq
  %v2792 = vshrl.u32 %v2791, 7
  %v2793 = vsub.s32 %v2790, %v2792
  %v2794 = vrot.slane %v2786, %v2793
  %v2796 = vunpack.c.l.s4 1966171168
  %v2797 = vunpack.c.0.s8 %v2796
  %v2798 = vlaneseq
  %v2799 = vshrl.u32 %v2798, 7
  %v2800 = vsub.s32 %v2797, %v2799
  %v2801 = vrot.slane %v2787, %v2800
  %v2802 = vcombine.high %v2794, %v2794
  %v2803 = vcombine.high %v2801, %v2801
  %v2804 = vcombine.low %v2459, %v2463
  %v2806 = vunpack.c.l.s4 1966171168
  %v2807 = vunpack.c.0.s8 %v2806
  %v2808 = vlaneseq
  %v2809 = vshrl.u32 %v2808, 7
  %v2810 = vsub.s32 %v2807, %v2809
  %v2811 = vrot.slane %v2804, %v2810
  %v2812 = vcombine.high %v2811, %v2811
  %v2814 = vunpack.c.l.s4 1966171168
  %v2815 = vunpack.c.0.s8 %v2814
  %v2816 = vlaneseq
  %v2817 = vshrl.u32 %v2816, 7
  %v2818 = vsub.s32 %v2815, %v2817
  %v2819 = vrot.slane %v2811, %v2818
  %v2821 = vunpack.c.l.s4 1966171168
  %v2822 = vunpack.c.0.s8 %v2821
  %v2823 = vlaneseq
  %v2824 = vshrl.u32 %v2823, 7
  %v2825 = vsub.s32 %v2822, %v2824
  %v2826 = vrot.slane %v2812, %v2825
  %v2827 = vcombine.high %v2819, %v2819
  %v2828 = vcombine.high %v2826, %v2826
  %v2829 = vunpack.i.l.s16 %v2494
  %v2830 = vunpack.i.h.s16 %v2494
  %v2831 = vunpack.i.l.s16 %v2501
  %v2832 = vunpack.i.h.s16 %v2501
  %v2833 = vunpack.i.l.s16 %v2502
  %v2834 = vunpack.i.h.s16 %v2502
  %v2835 = vunpack.i.l.s16 %v2503
  %v2836 = vunpack.i.l.s16 %v2519
  %v2837 = vunpack.i.h.s16 %v2519
  %v2838 = vunpack.i.l.s16 %v2526
  %v2839 = vunpack.i.h.s16 %v2526
  %v2840 = vunpack.i.l.s16 %v2527
  %v2841 = vunpack.i.h.s16 %v2527
  %v2842 = vunpack.i.l.s16 %v2528
  %v2843 = vunpack.i.l.s16 %v2544
  %v2844 = vunpack.i.h.s16 %v2544
  %v2845 = vunpack.i.l.s16 %v2551
  %v2846 = vunpack.i.h.s16 %v2551
  %v2847 = vunpack.i.l.s16 %v2552
  %v2848 = vunpack.i.h.s16 %v2552
  %v2849 = vunpack.i.l.s16 %v2553
  %v2850 = vunpack.i.l.s16 %v2569
  %v2851 = vunpack.i.h.s16 %v2569
  %v2852 = vunpack.i.l.s16 %v2576
  %v2853 = vunpack.i.h.s16 %v2576
  %v2854 = vunpack.i.l.s16 %v2577
  %v2855 = vunpack.i.h.s16 %v2577
  %v2856 = vunpack.i.l.s16 %v2578
  %v2857 = vunpack.i.l.s16 %v2594
  %v2858 = vunpack.i.h.s16 %v2594
  %v2859 = vunpack.i.l.s16 %v2601
  %v2860 = vunpack.i.h.s16 %v2601
  %v2861 = vunpack.i.l.s16 %v2602
  %v2862 = vunpack.i.h.s16 %v2602
  %v2863 = vunpack.i.l.s16 %v2603
  %v2864 = vunpack.i.l.s16 %v2619
  %v2865 = vunpack.i.h.s16 %v2619
  %v2866 = vunpack.i.l.s16 %v2626
  %v2867 = vunpack.i.h.s16 %v2626
  %v2868 = vunpack.i.l.s16 %v2627
  %v2869 = vunpack.i.h.s16 %v2627
  %v2870 = vunpack.i.l.s16 %v2628
  %v2871 = vunpack.i.l.s16 %v2644
  %v2872 = vunpack.i.h.s16 %v2644
  %v2873 = vunpack.i.l.s16 %v2651
  %v2874 = vunpack.i.h.s16 %v2651
  %v2875 = vunpack.i.l.s16 %v2652
  %v2876 = vunpack.i.h.s16 %v2652
  %v2877 = vunpack.i.l.s16 %v2653
  %v2878 = vunpack.i.l.s16 %v2669
  %v2879 = vunpack.i.h.s16 %v2669
  %v2880 = vunpack.i.l.s16 %v2676
  %v2881 = vunpack.i.h.s16 %v2676
  %v2882 = vunpack.i.l.s16 %v2677
  %v2883 = vunpack.i.h.s16 %v2677
  %v2884 = vunpack.i.l.s16 %v2678
  %v2885 = vunpack.i.l.s16 %v2694
  %v2886 = vunpack.i.h.s16 %v2694
  %v2887 = vunpack.i.l.s16 %v2701
  %v2888 = vunpack.i.h.s16 %v2701
  %v2889 = vunpack.i.l.s16 %v2702
  %v2890 = vunpack.i.h.s16 %v2702
  %v2891 = vunpack.i.l.s16 %v2703
  %v2892 = vunpack.i.l.s16 %v2719
  %v2893 = vunpack.i.h.s16 %v2719
  %v2894 = vunpack.i.l.s16 %v2726
  %v2895 = vunpack.i.h.s16 %v2726
  %v2896 = vunpack.i.l.s16 %v2727
  %v2897 = vunpack.i.h.s16 %v2727
  %v2898 = vunpack.i.l.s16 %v2728
  %v2899 = vunpack.i.l.s16 %v2744
  %v2900 = vunpack.i.h.s16 %v2744
  %v2901 = vunpack.i.l.s16 %v2751
  %v2902 = vunpack.i.h.s16 %v2751
  %v2903 = vunpack.i.l.s16 %v2752
  %v2904 = vunpack.i.h.s16 %v2752
  %v2905 = vunpack.i.l.s16 %v2753
  %v2906 = vunpack.i.l.s16 %v2769
  %v2907 = vunpack.i.h.s16 %v2769
  %v2908 = vunpack.i.l.s16 %v2776
  %v2909 = vunpack.i.h.s16 %v2776
  %v2910 = vunpack.i.l.s16 %v2777
  %v2911 = vunpack.i.h.s16 %v2777
  %v2912 = vunpack.i.l.s16 %v2778
  %v2913 = vunpack.i.l.s16 %v2794
  %v2914 = vunpack.i.h.s16 %v2794
  %v2915 = vunpack.i.l.s16 %v2801
  %v2916 = vunpack.i.h.s16 %v2801
  %v2917 = vunpack.i.l.s16 %v2802
  %v2918 = vunpack.i.h.s16 %v2802
  %v2919 = vunpack.i.l.s16 %v2803
  %v2920 = vunpack.i.l.s16 %v2819
  %v2921 = vunpack.i.h.s16 %v2819
  %v2922 = vunpack.i.l.s16 %v2826
  %v2923 = vunpack.i.h.s16 %v2826
  %v2924 = vunpack.i.l.s16 %v2827
  %v2925 = vunpack.i.h.s16 %v2827
  %v2926 = vunpack.i.l.s16 %v2828
  %v2927 = vld [vmem:[%s3] sm:$0xf]
  %v2928 = vld [vmem:[%s3 + $0x4] sm:$0xf]
  %v2929 = vld [vmem:[%s3 + $0x8] sm:$0xf]
  %v2930 = vld [vmem:[%s3 + $0xc] sm:$0xf]
  %v2931 = vld [vmem:[%s3 + $0x10] sm:$0xf]
  %v2932 = vld [vmem:[%s3 + $0x14] sm:$0xf]
  %v2933 = vld [vmem:[%s3 + $0x18] sm:$0xf]
  %v2934 = vld [vmem:[%s3 + $0x1c] sm:$0xf]
  %v2935 = vld [vmem:[%s3 + $0x20] sm:$0xf]
  %v2936 = vld [vmem:[%s3 + $0x24] sm:$0xf]
  %v2937 = vld [vmem:[%s3 + $0x28] sm:$0xf]
  %v2938 = vld [vmem:[%s3 + $0x2c] sm:$0xf]
  %v2939 = vld [vmem:[%s3 + $0x30] sm:$0xf]
  %v2940 = vld [vmem:[%s3 + $0x34] sm:$0xf]
  %v2941 = vld [vmem:[%s3 + $0x38] sm:$0xf]
  %v2942 = vld [vmem:[%s3 + $0x3c] sm:$0xf]
  %v2943 = vld [vmem:[%s3 + $0x40] sm:$0xf]
  %v2944 = vld [vmem:[%s3 + $0x44] sm:$0xf]
  %v2945 = vld [vmem:[%s3 + $0x48] sm:$0xf]
  %v2946 = vld [vmem:[%s3 + $0x4c] sm:$0xf]
  %v2947 = vld [vmem:[%s3 + $0x50] sm:$0xf]
  %v2948 = vld [vmem:[%s3 + $0x54] sm:$0xf]
  %v2949 = vld [vmem:[%s3 + $0x58] sm:$0xf]
  %v2950 = vld [vmem:[%s3 + $0x5c] sm:$0xf]
  %v2951 = vld [vmem:[%s3 + $0x60] sm:$0xf]
  %v2952 = vld [vmem:[%s3 + $0x64] sm:$0xf]
  %v2953 = vld [vmem:[%s3 + $0x68] sm:$0xf]
  %v2954 = vld [vmem:[%s3 + $0x6c] sm:$0xf]
  %v2955 = vld [vmem:[%s3 + $0x70] sm:$0xf]
  %v2956 = vld [vmem:[%s3 + $0x74] sm:$0xf]
  %v2957 = vld [vmem:[%s3 + $0x78] sm:$0xf]
  %v2958 = vld [vmem:[%s3 + $0x7c] sm:$0xf]
  %v2959 = vld [vmem:[%s4] sm:$0x1]
  %v2961 = vlaneseq
  %v2962 = vshrl.u32 %v2961, 7
  %v2963 = vsub.s32 0, %v2962
  %v2964 = vrot.slane %v2959, %v2963
  %v2966 = vpack.i.b16 %v2830, %v2829
  %v2967 = vpack.i.b16 %v2832, %v2831
  %v2968 = vpack.i.b16 %v2834, %v2833
  %v2969 = vpack.i.b16 %v2836, %v2835
  %v2970 = vpack.i.b16 %v2838, %v2837
  %v2971 = vpack.i.b16 %v2840, %v2839
  %v2972 = vpack.i.b16 %v2842, %v2841
  %v2973 = vpack.i.b16 %v2844, %v2843
  %v2974 = vpack.i.b16 %v2846, %v2845
  %v2975 = vpack.i.b16 %v2848, %v2847
  %v2976 = vpack.i.b16 %v2850, %v2849
  %v2977 = vpack.i.b16 %v2852, %v2851
  %v2978 = vpack.i.b16 %v2854, %v2853
  %v2979 = vpack.i.b16 %v2856, %v2855
  %v2980 = vpack.i.b16 %v2858, %v2857
  %v2981 = vpack.i.b16 %v2860, %v2859
  %v2982 = vpack.i.b16 %v2862, %v2861
  %v2983 = vpack.i.b16 %v2864, %v2863
  %v2984 = vpack.i.b16 %v2866, %v2865
  %v2985 = vpack.i.b16 %v2868, %v2867
  %v2986 = vpack.i.b16 %v2870, %v2869
  %v2987 = vpack.i.b16 %v2872, %v2871
  %v2988 = vpack.i.b16 %v2874, %v2873
  %v2989 = vpack.i.b16 %v2876, %v2875
  %v2990 = vpack.i.b16 %v2878, %v2877
  %v2991 = vpack.i.b16 %v2880, %v2879
  %v2992 = vpack.i.b16 %v2882, %v2881
  %v2993 = vpack.i.b16 %v2884, %v2883
  %v2994 = vpack.i.b16 %v2886, %v2885
  %v2995 = vpack.i.b16 %v2888, %v2887
  %v2996 = vpack.i.b16 %v2890, %v2889
  %v2997 = vpack.i.b16 %v2892, %v2891
  %v2998 = vpack.i.b16 %v2894, %v2893
  %v2999 = vpack.i.b16 %v2896, %v2895
  %v3000 = vpack.i.b16 %v2898, %v2897
  %v3001 = vpack.i.b16 %v2900, %v2899
  %v3002 = vpack.i.b16 %v2902, %v2901
  %v3003 = vpack.i.b16 %v2904, %v2903
  %v3004 = vpack.i.b16 %v2906, %v2905
  %v3005 = vpack.i.b16 %v2908, %v2907
  %v3006 = vpack.i.b16 %v2910, %v2909
  %v3007 = vpack.i.b16 %v2912, %v2911
  %v3008 = vpack.i.b16 %v2914, %v2913
  %v3009 = vpack.i.b16 %v2916, %v2915
  %v3010 = vpack.i.b16 %v2918, %v2917
  %v3011 = vpack.i.b16 %v2920, %v2919
  %v3012 = vpack.i.b16 %v2922, %v2921
  %v3013 = vpack.i.b16 %v2924, %v2923
  %v3014 = vpack.i.b16 %v2926, %v2925
  %v3015 = vcombine.low %v2966, %v2967
  %v3016 = vcombine.low %v2968, %v2969
  %v3017 = vcombine.low %v2970, %v2971
  %v3018 = vcombine.low %v2972, %v2973
  %v3020 = vunpack.c.l.s4 1966171168
  %v3021 = vunpack.c.0.s8 %v3020
  %v3022 = vlaneseq
  %v3023 = vshrl.u32 %v3022, 7
  %v3024 = vsub.s32 %v3021, %v3023
  %v3025 = vrot.slane %v3015, %v3024
  %v3027 = vunpack.c.l.s4 1966171168
  %v3028 = vunpack.c.0.s8 %v3027
  %v3029 = vlaneseq
  %v3030 = vshrl.u32 %v3029, 7
  %v3031 = vsub.s32 %v3028, %v3030
  %v3032 = vrot.slane %v3016, %v3031
  %v3034 = vunpack.c.l.s4 1966171168
  %v3035 = vunpack.c.0.s8 %v3034
  %v3036 = vlaneseq
  %v3037 = vshrl.u32 %v3036, 7
  %v3038 = vsub.s32 %v3035, %v3037
  %v3039 = vrot.slane %v3017, %v3038
  %v3041 = vunpack.c.l.s4 1966171168
  %v3042 = vunpack.c.0.s8 %v3041
  %v3043 = vlaneseq
  %v3044 = vshrl.u32 %v3043, 7
  %v3045 = vsub.s32 %v3042, %v3044
  %v3046 = vrot.slane %v3018, %v3045
  %v3047 = vcombine.low %v3025, %v3032
  %v3048 = vcombine.high %v3025, %v3032
  %v3049 = vcombine.low %v3039, %v3046
  %v3050 = vcombine.high %v3039, %v3046
  %v3052 = vunpack.c.l.s4 1966171168
  %v3053 = vunpack.c.0.s8 %v3052
  %v3054 = vlaneseq
  %v3055 = vshrl.u32 %v3054, 7
  %v3056 = vsub.s32 %v3053, %v3055
  %v3057 = vrot.slane %v3047, %v3056
  %v3059 = vunpack.c.l.s4 1966171168
  %v3060 = vunpack.c.0.s8 %v3059
  %v3061 = vlaneseq
  %v3062 = vshrl.u32 %v3061, 7
  %v3063 = vsub.s32 %v3060, %v3062
  %v3064 = vrot.slane %v3048, %v3063
  %v3066 = vunpack.c.l.s4 1966171168
  %v3067 = vunpack.c.0.s8 %v3066
  %v3068 = vlaneseq
  %v3069 = vshrl.u32 %v3068, 7
  %v3070 = vsub.s32 %v3067, %v3069
  %v3071 = vrot.slane %v3049, %v3070
  %v3073 = vunpack.c.l.s4 1966171168
  %v3074 = vunpack.c.0.s8 %v3073
  %v3075 = vlaneseq
  %v3076 = vshrl.u32 %v3075, 7
  %v3077 = vsub.s32 %v3074, %v3076
  %v3078 = vrot.slane %v3050, %v3077
  %v3079 = vcombine.low %v3057, %v3071
  %v3080 = vcombine.low %v3064, %v3078
  %v3081 = vcombine.low %v2974, %v2975
  %v3082 = vcombine.low %v2976, %v2977
  %v3083 = vcombine.low %v2978, %v2979
  %v3084 = vcombine.low %v2980, %v2981
  %v3086 = vunpack.c.l.s4 1966171168
  %v3087 = vunpack.c.0.s8 %v3086
  %v3088 = vlaneseq
  %v3089 = vshrl.u32 %v3088, 7
  %v3090 = vsub.s32 %v3087, %v3089
  %v3091 = vrot.slane %v3081, %v3090
  %v3093 = vunpack.c.l.s4 1966171168
  %v3094 = vunpack.c.0.s8 %v3093
  %v3095 = vlaneseq
  %v3096 = vshrl.u32 %v3095, 7
  %v3097 = vsub.s32 %v3094, %v3096
  %v3098 = vrot.slane %v3082, %v3097
  %v3100 = vunpack.c.l.s4 1966171168
  %v3101 = vunpack.c.0.s8 %v3100
  %v3102 = vlaneseq
  %v3103 = vshrl.u32 %v3102, 7
  %v3104 = vsub.s32 %v3101, %v3103
  %v3105 = vrot.slane %v3083, %v3104
  %v3107 = vunpack.c.l.s4 1966171168
  %v3108 = vunpack.c.0.s8 %v3107
  %v3109 = vlaneseq
  %v3110 = vshrl.u32 %v3109, 7
  %v3111 = vsub.s32 %v3108, %v3110
  %v3112 = vrot.slane %v3084, %v3111
  %v3113 = vcombine.low %v3091, %v3098
  %v3114 = vcombine.high %v3091, %v3098
  %v3115 = vcombine.low %v3105, %v3112
  %v3116 = vcombine.high %v3105, %v3112
  %v3118 = vunpack.c.l.s4 1966171168
  %v3119 = vunpack.c.0.s8 %v3118
  %v3120 = vlaneseq
  %v3121 = vshrl.u32 %v3120, 7
  %v3122 = vsub.s32 %v3119, %v3121
  %v3123 = vrot.slane %v3113, %v3122
  %v3125 = vunpack.c.l.s4 1966171168
  %v3126 = vunpack.c.0.s8 %v3125
  %v3127 = vlaneseq
  %v3128 = vshrl.u32 %v3127, 7
  %v3129 = vsub.s32 %v3126, %v3128
  %v3130 = vrot.slane %v3114, %v3129
  %v3132 = vunpack.c.l.s4 1966171168
  %v3133 = vunpack.c.0.s8 %v3132
  %v3134 = vlaneseq
  %v3135 = vshrl.u32 %v3134, 7
  %v3136 = vsub.s32 %v3133, %v3135
  %v3137 = vrot.slane %v3115, %v3136
  %v3139 = vunpack.c.l.s4 1966171168
  %v3140 = vunpack.c.0.s8 %v3139
  %v3141 = vlaneseq
  %v3142 = vshrl.u32 %v3141, 7
  %v3143 = vsub.s32 %v3140, %v3142
  %v3144 = vrot.slane %v3116, %v3143
  %v3145 = vcombine.low %v3123, %v3137
  %v3146 = vcombine.low %v3130, %v3144
  %v3147 = vcombine.low %v2982, %v2983
  %v3148 = vcombine.low %v2984, %v2985
  %v3149 = vcombine.low %v2986, %v2987
  %v3150 = vcombine.low %v2988, %v2989
  %v3152 = vunpack.c.l.s4 1966171168
  %v3153 = vunpack.c.0.s8 %v3152
  %v3154 = vlaneseq
  %v3155 = vshrl.u32 %v3154, 7
  %v3156 = vsub.s32 %v3153, %v3155
  %v3157 = vrot.slane %v3147, %v3156
  %v3159 = vunpack.c.l.s4 1966171168
  %v3160 = vunpack.c.0.s8 %v3159
  %v3161 = vlaneseq
  %v3162 = vshrl.u32 %v3161, 7
  %v3163 = vsub.s32 %v3160, %v3162
  %v3164 = vrot.slane %v3148, %v3163
  %v3166 = vunpack.c.l.s4 1966171168
  %v3167 = vunpack.c.0.s8 %v3166
  %v3168 = vlaneseq
  %v3169 = vshrl.u32 %v3168, 7
  %v3170 = vsub.s32 %v3167, %v3169
  %v3171 = vrot.slane %v3149, %v3170
  %v3173 = vunpack.c.l.s4 1966171168
  %v3174 = vunpack.c.0.s8 %v3173
  %v3175 = vlaneseq
  %v3176 = vshrl.u32 %v3175, 7
  %v3177 = vsub.s32 %v3174, %v3176
  %v3178 = vrot.slane %v3150, %v3177
  %v3179 = vcombine.low %v3157, %v3164
  %v3180 = vcombine.high %v3157, %v3164
  %v3181 = vcombine.low %v3171, %v3178
  %v3182 = vcombine.high %v3171, %v3178
  %v3184 = vunpack.c.l.s4 1966171168
  %v3185 = vunpack.c.0.s8 %v3184
  %v3186 = vlaneseq
  %v3187 = vshrl.u32 %v3186, 7
  %v3188 = vsub.s32 %v3185, %v3187
  %v3189 = vrot.slane %v3179, %v3188
  %v3191 = vunpack.c.l.s4 1966171168
  %v3192 = vunpack.c.0.s8 %v3191
  %v3193 = vlaneseq
  %v3194 = vshrl.u32 %v3193, 7
  %v3195 = vsub.s32 %v3192, %v3194
  %v3196 = vrot.slane %v3180, %v3195
  %v3198 = vunpack.c.l.s4 1966171168
  %v3199 = vunpack.c.0.s8 %v3198
  %v3200 = vlaneseq
  %v3201 = vshrl.u32 %v3200, 7
  %v3202 = vsub.s32 %v3199, %v3201
  %v3203 = vrot.slane %v3181, %v3202
  %v3205 = vunpack.c.l.s4 1966171168
  %v3206 = vunpack.c.0.s8 %v3205
  %v3207 = vlaneseq
  %v3208 = vshrl.u32 %v3207, 7
  %v3209 = vsub.s32 %v3206, %v3208
  %v3210 = vrot.slane %v3182, %v3209
  %v3211 = vcombine.low %v3189, %v3203
  %v3212 = vcombine.low %v3196, %v3210
  %v3213 = vcombine.low %v2990, %v2991
  %v3214 = vcombine.low %v2992, %v2993
  %v3215 = vcombine.low %v2994, %v2995
  %v3216 = vcombine.low %v2996, %v2997
  %v3218 = vunpack.c.l.s4 1966171168
  %v3219 = vunpack.c.0.s8 %v3218
  %v3220 = vlaneseq
  %v3221 = vshrl.u32 %v3220, 7
  %v3222 = vsub.s32 %v3219, %v3221
  %v3223 = vrot.slane %v3213, %v3222
  %v3225 = vunpack.c.l.s4 1966171168
  %v3226 = vunpack.c.0.s8 %v3225
  %v3227 = vlaneseq
  %v3228 = vshrl.u32 %v3227, 7
  %v3229 = vsub.s32 %v3226, %v3228
  %v3230 = vrot.slane %v3214, %v3229
  %v3232 = vunpack.c.l.s4 1966171168
  %v3233 = vunpack.c.0.s8 %v3232
  %v3234 = vlaneseq
  %v3235 = vshrl.u32 %v3234, 7
  %v3236 = vsub.s32 %v3233, %v3235
  %v3237 = vrot.slane %v3215, %v3236
  %v3239 = vunpack.c.l.s4 1966171168
  %v3240 = vunpack.c.0.s8 %v3239
  %v3241 = vlaneseq
  %v3242 = vshrl.u32 %v3241, 7
  %v3243 = vsub.s32 %v3240, %v3242
  %v3244 = vrot.slane %v3216, %v3243
  %v3245 = vcombine.low %v3223, %v3230
  %v3246 = vcombine.high %v3223, %v3230
  %v3247 = vcombine.low %v3237, %v3244
  %v3248 = vcombine.high %v3237, %v3244
  %v3250 = vunpack.c.l.s4 1966171168
  %v3251 = vunpack.c.0.s8 %v3250
  %v3252 = vlaneseq
  %v3253 = vshrl.u32 %v3252, 7
  %v3254 = vsub.s32 %v3251, %v3253
  %v3255 = vrot.slane %v3245, %v3254
  %v3257 = vunpack.c.l.s4 1966171168
  %v3258 = vunpack.c.0.s8 %v3257
  %v3259 = vlaneseq
  %v3260 = vshrl.u32 %v3259, 7
  %v3261 = vsub.s32 %v3258, %v3260
  %v3262 = vrot.slane %v3246, %v3261
  %v3264 = vunpack.c.l.s4 1966171168
  %v3265 = vunpack.c.0.s8 %v3264
  %v3266 = vlaneseq
  %v3267 = vshrl.u32 %v3266, 7
  %v3268 = vsub.s32 %v3265, %v3267
  %v3269 = vrot.slane %v3247, %v3268
  %v3271 = vunpack.c.l.s4 1966171168
  %v3272 = vunpack.c.0.s8 %v3271
  %v3273 = vlaneseq
  %v3274 = vshrl.u32 %v3273, 7
  %v3275 = vsub.s32 %v3272, %v3274
  %v3276 = vrot.slane %v3248, %v3275
  %v3277 = vcombine.low %v3255, %v3269
  %v3278 = vcombine.low %v3262, %v3276
  %v3279 = vcombine.low %v2998, %v2999
  %v3280 = vcombine.low %v3000, %v3001
  %v3281 = vcombine.low %v3002, %v3003
  %v3282 = vcombine.low %v3004, %v3005
  %v3284 = vunpack.c.l.s4 1966171168
  %v3285 = vunpack.c.0.s8 %v3284
  %v3286 = vlaneseq
  %v3287 = vshrl.u32 %v3286, 7
  %v3288 = vsub.s32 %v3285, %v3287
  %v3289 = vrot.slane %v3279, %v3288
  %v3291 = vunpack.c.l.s4 1966171168
  %v3292 = vunpack.c.0.s8 %v3291
  %v3293 = vlaneseq
  %v3294 = vshrl.u32 %v3293, 7
  %v3295 = vsub.s32 %v3292, %v3294
  %v3296 = vrot.slane %v3280, %v3295
  %v3298 = vunpack.c.l.s4 1966171168
  %v3299 = vunpack.c.0.s8 %v3298
  %v3300 = vlaneseq
  %v3301 = vshrl.u32 %v3300, 7
  %v3302 = vsub.s32 %v3299, %v3301
  %v3303 = vrot.slane %v3281, %v3302
  %v3305 = vunpack.c.l.s4 1966171168
  %v3306 = vunpack.c.0.s8 %v3305
  %v3307 = vlaneseq
  %v3308 = vshrl.u32 %v3307, 7
  %v3309 = vsub.s32 %v3306, %v3308
  %v3310 = vrot.slane %v3282, %v3309
  %v3311 = vcombine.low %v3289, %v3296
  %v3312 = vcombine.high %v3289, %v3296
  %v3313 = vcombine.low %v3303, %v3310
  %v3314 = vcombine.high %v3303, %v3310
  %v3316 = vunpack.c.l.s4 1966171168
  %v3317 = vunpack.c.0.s8 %v3316
  %v3318 = vlaneseq
  %v3319 = vshrl.u32 %v3318, 7
  %v3320 = vsub.s32 %v3317, %v3319
  %v3321 = vrot.slane %v3311, %v3320
  %v3323 = vunpack.c.l.s4 1966171168
  %v3324 = vunpack.c.0.s8 %v3323
  %v3325 = vlaneseq
  %v3326 = vshrl.u32 %v3325, 7
  %v3327 = vsub.s32 %v3324, %v3326
  %v3328 = vrot.slane %v3312, %v3327
  %v3330 = vunpack.c.l.s4 1966171168
  %v3331 = vunpack.c.0.s8 %v3330
  %v3332 = vlaneseq
  %v3333 = vshrl.u32 %v3332, 7
  %v3334 = vsub.s32 %v3331, %v3333
  %v3335 = vrot.slane %v3313, %v3334
  %v3337 = vunpack.c.l.s4 1966171168
  %v3338 = vunpack.c.0.s8 %v3337
  %v3339 = vlaneseq
  %v3340 = vshrl.u32 %v3339, 7
  %v3341 = vsub.s32 %v3338, %v3340
  %v3342 = vrot.slane %v3314, %v3341
  %v3343 = vcombine.low %v3321, %v3335
  %v3344 = vcombine.low %v3328, %v3342
  %v3345 = vcombine.low %v3006, %v3007
  %v3346 = vcombine.low %v3008, %v3009
  %v3347 = vcombine.low %v3010, %v3011
  %v3348 = vcombine.low %v3012, %v3013
  %v3350 = vunpack.c.l.s4 1966171168
  %v3351 = vunpack.c.0.s8 %v3350
  %v3352 = vlaneseq
  %v3353 = vshrl.u32 %v3352, 7
  %v3354 = vsub.s32 %v3351, %v3353
  %v3355 = vrot.slane %v3345, %v3354
  %v3357 = vunpack.c.l.s4 1966171168
  %v3358 = vunpack.c.0.s8 %v3357
  %v3359 = vlaneseq
  %v3360 = vshrl.u32 %v3359, 7
  %v3361 = vsub.s32 %v3358, %v3360
  %v3362 = vrot.slane %v3346, %v3361
  %v3364 = vunpack.c.l.s4 1966171168
  %v3365 = vunpack.c.0.s8 %v3364
  %v3366 = vlaneseq
  %v3367 = vshrl.u32 %v3366, 7
  %v3368 = vsub.s32 %v3365, %v3367
  %v3369 = vrot.slane %v3347, %v3368
  %v3371 = vunpack.c.l.s4 1966171168
  %v3372 = vunpack.c.0.s8 %v3371
  %v3373 = vlaneseq
  %v3374 = vshrl.u32 %v3373, 7
  %v3375 = vsub.s32 %v3372, %v3374
  %v3376 = vrot.slane %v3348, %v3375
  %v3377 = vcombine.low %v3355, %v3362
  %v3378 = vcombine.high %v3355, %v3362
  %v3379 = vcombine.low %v3369, %v3376
  %v3380 = vcombine.high %v3369, %v3376
  %v3382 = vunpack.c.l.s4 1966171168
  %v3383 = vunpack.c.0.s8 %v3382
  %v3384 = vlaneseq
  %v3385 = vshrl.u32 %v3384, 7
  %v3386 = vsub.s32 %v3383, %v3385
  %v3387 = vrot.slane %v3377, %v3386
  %v3389 = vunpack.c.l.s4 1966171168
  %v3390 = vunpack.c.0.s8 %v3389
  %v3391 = vlaneseq
  %v3392 = vshrl.u32 %v3391, 7
  %v3393 = vsub.s32 %v3390, %v3392
  %v3394 = vrot.slane %v3378, %v3393
  %v3396 = vunpack.c.l.s4 1966171168
  %v3397 = vunpack.c.0.s8 %v3396
  %v3398 = vlaneseq
  %v3399 = vshrl.u32 %v3398, 7
  %v3400 = vsub.s32 %v3397, %v3399
  %v3401 = vrot.slane %v3379, %v3400
  %v3403 = vunpack.c.l.s4 1966171168
  %v3404 = vunpack.c.0.s8 %v3403
  %v3405 = vlaneseq
  %v3406 = vshrl.u32 %v3405, 7
  %v3407 = vsub.s32 %v3404, %v3406
  %v3408 = vrot.slane %v3380, %v3407
  %v3409 = vcombine.low %v3387, %v3401
  %v3410 = vcombine.low %v3394, %v3408
  %v3412 = vunpack.c.l.s4 1966171168
  %v3413 = vunpack.c.0.s8 %v3412
  %v3414 = vlaneseq
  %v3415 = vshrl.u32 %v3414, 7
  %v3416 = vsub.s32 %v3413, %v3415
  %v3417 = vrot.slane %v3014, %v3416
  %v3418 = vcombine.high %v3417, %v3417
  %v3420 = vunpack.c.l.s4 1966171168
  %v3421 = vunpack.c.0.s8 %v3420
  %v3422 = vlaneseq
  %v3423 = vshrl.u32 %v3422, 7
  %v3424 = vsub.s32 %v3421, %v3423
  %v3425 = vrot.slane %v3417, %v3424
  %v3427 = vunpack.c.l.s4 1966171168
  %v3428 = vunpack.c.0.s8 %v3427
  %v3429 = vlaneseq
  %v3430 = vshrl.u32 %v3429, 7
  %v3431 = vsub.s32 %v3428, %v3430
  %v3432 = vrot.slane %v3418, %v3431
  %v3479 = vunpack.c.l.b16 %v2927
  %v3480 = vunpack.c.l.b16 %v2928
  %v3481 = vunpack.c.l.b16 %v2929
  %v3482 = vunpack.c.l.b16 %v2930
  %v3483 = vunpack.c.l.b16 %v2931
  %v3484 = vunpack.c.l.b16 %v2932
  %v3485 = vunpack.c.l.b16 %v2933
  %v3486 = vunpack.c.l.b16 %v2934
  %v3487 = vunpack.c.l.b16 %v2935
  %v3488 = vunpack.c.l.b16 %v2936
  %v3489 = vunpack.c.l.b16 %v2937
  %v3490 = vunpack.c.l.b16 %v2938
  %v3491 = vunpack.c.l.b16 %v2939
  %v3492 = vunpack.c.l.b16 %v2940
  %v3493 = vunpack.c.l.b16 %v2941
  %v3494 = vunpack.c.l.b16 %v2942
  %v3495 = vunpack.c.l.b16 %v2943
  %v3496 = vunpack.c.l.b16 %v2944
  %v3497 = vunpack.c.l.b16 %v2945
  %v3498 = vunpack.c.l.b16 %v2946
  %v3499 = vunpack.c.l.b16 %v2947
  %v3500 = vunpack.c.l.b16 %v2948
  %v3501 = vunpack.c.l.b16 %v2949
  %v3502 = vunpack.c.l.b16 %v2950
  %v3503 = vunpack.c.l.b16 %v2951
  %v3504 = vunpack.c.l.b16 %v2952
  %v3505 = vunpack.c.l.b16 %v2953
  %v3506 = vunpack.c.l.b16 %v2954
  %v3507 = vunpack.c.l.b16 %v2955
  %v3508 = vunpack.c.l.b16 %v2956
  %v3509 = vunpack.c.l.b16 %v2957
  %v3510 = vunpack.c.l.b16 %v2958
  %v3511 = vpack.c.b16 %v3480, %v3479
  %v3512 = vpack.c.b16 %v3482, %v3481
  %v3513 = vpack.c.b16 %v3484, %v3483
  %v3514 = vpack.c.b16 %v3486, %v3485
  %v3515 = vpack.c.b16 %v3488, %v3487
  %v3516 = vpack.c.b16 %v3490, %v3489
  %v3517 = vpack.c.b16 %v3492, %v3491
  %v3518 = vpack.c.b16 %v3494, %v3493
  %v3519 = vpack.c.b16 %v3496, %v3495
  %v3520 = vpack.c.b16 %v3498, %v3497
  %v3521 = vpack.c.b16 %v3500, %v3499
  %v3522 = vpack.c.b16 %v3502, %v3501
  %v3523 = vpack.c.b16 %v3504, %v3503
  %v3524 = vpack.c.b16 %v3506, %v3505
  %v3525 = vpack.c.b16 %v3508, %v3507
  %v3526 = vpack.c.b16 %v3510, %v3509
  %3543 = vmatprep.subr.bf16.mxu0 0
  %3544 = vmatpush1.bf16.msra.mxu0 %v3511
  %3545 = vmatprep.subr.bf16.mxu0 0
  %3546 = vmatpush1.bf16.msra.mxu0 %v3512
  %3547 = vmatprep.subr.bf16.mxu0 0
  %3548 = vmatpush1.bf16.msra.mxu0 %v3513
  %3549 = vmatprep.subr.bf16.mxu0 0
  %3550 = vmatpush1.bf16.msra.mxu0 %v3514
  %3551 = vmatprep.subr.bf16.mxu0 0
  %3552 = vmatpush1.bf16.msra.mxu0 %v3515
  %3553 = vmatprep.subr.bf16.mxu0 0
  %3554 = vmatpush1.bf16.msra.mxu0 %v3516
  %3555 = vmatprep.subr.bf16.mxu0 0
  %3556 = vmatpush1.bf16.msra.mxu0 %v3517
  %3557 = vmatprep.subr.bf16.mxu0 0
  %3558 = vmatpush1.bf16.msra.mxu0 %v3518
  %3559 = vmatprep.subr.bf16.mxu0 0
  %3560 = vmatpush1.bf16.msra.mxu0 %v3519
  %3561 = vmatprep.subr.bf16.mxu0 0
  %3562 = vmatpush1.bf16.msra.mxu0 %v3520
  %3563 = vmatprep.subr.bf16.mxu0 0
  %3564 = vmatpush1.bf16.msra.mxu0 %v3521
  %3565 = vmatprep.subr.bf16.mxu0 0
  %3566 = vmatpush1.bf16.msra.mxu0 %v3522
  %3567 = vmatprep.subr.bf16.mxu0 0
  %3568 = vmatpush1.bf16.msra.mxu0 %v3523
  %3569 = vmatprep.subr.bf16.mxu0 0
  %3570 = vmatpush1.bf16.msra.mxu0 %v3524
  %3571 = vmatprep.subr.bf16.mxu0 0
  %3572 = vmatpush1.bf16.msra.mxu0 %v3525
  %3573 = vmatprep.subr.bf16.mxu0 0
  %3574 = vmatpush1.bf16.msra.mxu0 %v3526
  %3575 = vmatprep.mubr.bf16.mxu0 %v3080
  %3576 = vmatmul.mubr.bf16.gmra.mrb[0].mxu0 %v3079
  %v3577 = vpop.f32.mrb[0].mxu0
  %v3578 = vadd.f32 %v2964, %v3577
  %v3579 = vpop.f32.mrb[0].mxu0
  %v3580 = vpop.f32.mrb[0].mxu0
  %v3581 = vadd.f32 %v2964, %v3580
  %v3582 = vpop.f32.mrb[0].mxu0
  %3583 = vmatprep.mubr.bf16.mxu0 %v3146
  %3584 = vmatmul.mubr.bf16.gmra.mrb[0].mxu0 %v3145
  %v3585 = vpop.f32.mrb[0].mxu0
  %v3586 = vadd.f32 %v2964, %v3585
  %v3587 = vpop.f32.mrb[0].mxu0
  %v3588 = vpop.f32.mrb[0].mxu0
  %v3589 = vadd.f32 %v2964, %v3588
  %v3590 = vpop.f32.mrb[0].mxu0
  %3591 = vmatprep.mubr.bf16.mxu0 %v3212
  %3592 = vmatmul.mubr.bf16.gmra.mrb[0].mxu0 %v3211
  %v3593 = vpop.f32.mrb[0].mxu0
  %v3594 = vadd.f32 %v2964, %v3593
  %v3595 = vpop.f32.mrb[0].mxu0
  %v3596 = vpop.f32.mrb[0].mxu0
  %v3597 = vadd.f32 %v2964, %v3596
  %v3598 = vpop.f32.mrb[0].mxu0
  %3599 = vmatprep.mubr.bf16.mxu0 %v3278
  %3600 = vmatmul.mubr.bf16.gmra.mrb[0].mxu0 %v3277
  %v3601 = vpop.f32.mrb[0].mxu0
  %v3602 = vadd.f32 %v2964, %v3601
  %v3603 = vpop.f32.mrb[0].mxu0
  %v3604 = vpop.f32.mrb[0].mxu0
  %v3605 = vadd.f32 %v2964, %v3604
  %v3606 = vpop.f32.mrb[0].mxu0
  %3607 = vmatprep.mubr.bf16.mxu0 %v3344
  %3608 = vmatmul.mubr.bf16.gmra.mrb[0].mxu0 %v3343
  %v3609 = vpop.f32.mrb[0].mxu0
  %v3610 = vadd.f32 %v2964, %v3609
  %v3611 = vpop.f32.mrb[0].mxu0
  %v3612 = vpop.f32.mrb[0].mxu0
  %v3613 = vadd.f32 %v2964, %v3612
  %v3614 = vpop.f32.mrb[0].mxu0
  %3615 = vmatprep.mubr.bf16.mxu0 %v3410
  %3616 = vmatmul.mubr.bf16.gmra.mrb[0].mxu0 %v3409
  %v3617 = vpop.f32.mrb[0].mxu0
  %v3618 = vadd.f32 %v2964, %v3617
  %v3619 = vpop.f32.mrb[0].mxu0
  %v3620 = vpop.f32.mrb[0].mxu0
  %v3621 = vadd.f32 %v2964, %v3620
  %v3622 = vpop.f32.mrb[0].mxu0
  %3623 = vmatprep.mubr.bf16.mxu0 %v3432
  %3624 = vmatmul.mubr.bf16.gmra.mrb[0].mxu0 %v3425
  %v3625 = vpop.f32.mrb[0].mxu0
  %v3626 = vadd.f32 %v2964, %v3625
  %v3627 = vpop.f32.mrb[0].mxu0
  %v3628 = vpop.f32.mrb[0].mxu0
  %v3629 = vpop.f32.mrb[0].mxu0
  %3630 = vdwg.mxu0
  %v3631 = vmax.f32 %v3578, 0.0
  %v3632 = vmax.f32 %v3581, 0.0
  %v3633 = vmax.f32 %v3586, 0.0
  %v3634 = vmax.f32 %v3589, 0.0
  %v3635 = vmax.f32 %v3594, 0.0
  %v3636 = vmax.f32 %v3597, 0.0
  %v3637 = vmax.f32 %v3602, 0.0
  %v3638 = vmax.f32 %v3605, 0.0
  %v3639 = vmax.f32 %v3610, 0.0
  %v3640 = vmax.f32 %v3613, 0.0
  %v3641 = vmax.f32 %v3618, 0.0
  %v3642 = vmax.f32 %v3621, 0.0
  %v3643 = vmax.f32 %v3626, 0.0
  %v3657 = vcombine.high %v3631, %v3631
  %v3659 = vunpack.c.l.s4 1966171168
  %v3660 = vunpack.c.0.s8 %v3659
  %v3661 = vlaneseq
  %v3662 = vshrl.u32 %v3661, 7
  %v3663 = vsub.s32 %v3660, %v3662
  %v3664 = vrot.slane %v3631, %v3663
  %v3666 = vunpack.c.l.s4 1966171168
  %v3667 = vunpack.c.0.s8 %v3666
  %v3668 = vlaneseq
  %v3669 = vshrl.u32 %v3668, 7
  %v3670 = vsub.s32 %v3667, %v3669
  %v3671 = vrot.slane %v3657, %v3670
  %v3672 = vcombine.high %v3664, %v3664
  %v3673 = vcombine.high %v3671, %v3671
  %v3675 = vunpack.c.l.s4 1966171168
  %v3676 = vunpack.c.0.s8 %v3675
  %v3677 = vlaneseq
  %v3678 = vshrl.u32 %v3677, 7
  %v3679 = vsub.s32 %v3676, %v3678
  %v3680 = vrot.slane %v3664, %v3679
  %v3682 = vunpack.c.l.s4 1966171168
  %v3683 = vunpack.c.0.s8 %v3682
  %v3684 = vlaneseq
  %v3685 = vshrl.u32 %v3684, 7
  %v3686 = vsub.s32 %v3683, %v3685
  %v3687 = vrot.slane %v3671, %v3686
  %v3689 = vunpack.c.l.s4 1966171168
  %v3690 = vunpack.c.0.s8 %v3689
  %v3691 = vlaneseq
  %v3692 = vshrl.u32 %v3691, 7
  %v3693 = vsub.s32 %v3690, %v3692
  %v3694 = vrot.slane %v3672, %v3693
  %v3696 = vunpack.c.l.s4 1966171168
  %v3697 = vunpack.c.0.s8 %v3696
  %v3698 = vlaneseq
  %v3699 = vshrl.u32 %v3698, 7
  %v3700 = vsub.s32 %v3697, %v3699
  %v3701 = vrot.slane %v3673, %v3700
  %v3702 = vcombine.high %v3680, %v3680
  %v3703 = vcombine.high %v3687, %v3687
  %v3704 = vcombine.high %v3694, %v3694
  %v3705 = vcombine.high %v3701, %v3701
  %v3706 = vcombine.high %v3632, %v3632
  %v3708 = vunpack.c.l.s4 1966171168
  %v3709 = vunpack.c.0.s8 %v3708
  %v3710 = vlaneseq
  %v3711 = vshrl.u32 %v3710, 7
  %v3712 = vsub.s32 %v3709, %v3711
  %v3713 = vrot.slane %v3632, %v3712
  %v3715 = vunpack.c.l.s4 1966171168
  %v3716 = vunpack.c.0.s8 %v3715
  %v3717 = vlaneseq
  %v3718 = vshrl.u32 %v3717, 7
  %v3719 = vsub.s32 %v3716, %v3718
  %v3720 = vrot.slane %v3706, %v3719
  %v3721 = vcombine.high %v3713, %v3713
  %v3722 = vcombine.high %v3720, %v3720
  %v3724 = vunpack.c.l.s4 1966171168
  %v3725 = vunpack.c.0.s8 %v3724
  %v3726 = vlaneseq
  %v3727 = vshrl.u32 %v3726, 7
  %v3728 = vsub.s32 %v3725, %v3727
  %v3729 = vrot.slane %v3713, %v3728
  %v3731 = vunpack.c.l.s4 1966171168
  %v3732 = vunpack.c.0.s8 %v3731
  %v3733 = vlaneseq
  %v3734 = vshrl.u32 %v3733, 7
  %v3735 = vsub.s32 %v3732, %v3734
  %v3736 = vrot.slane %v3720, %v3735
  %v3738 = vunpack.c.l.s4 1966171168
  %v3739 = vunpack.c.0.s8 %v3738
  %v3740 = vlaneseq
  %v3741 = vshrl.u32 %v3740, 7
  %v3742 = vsub.s32 %v3739, %v3741
  %v3743 = vrot.slane %v3721, %v3742
  %v3745 = vunpack.c.l.s4 1966171168
  %v3746 = vunpack.c.0.s8 %v3745
  %v3747 = vlaneseq
  %v3748 = vshrl.u32 %v3747, 7
  %v3749 = vsub.s32 %v3746, %v3748
  %v3750 = vrot.slane %v3722, %v3749
  %v3751 = vcombine.high %v3729, %v3729
  %v3752 = vcombine.high %v3736, %v3736
  %v3753 = vcombine.high %v3743, %v3743
  %v3754 = vcombine.high %v3750, %v3750
  %v3755 = vcombine.high %v3633, %v3633
  %v3757 = vunpack.c.l.s4 1966171168
  %v3758 = vunpack.c.0.s8 %v3757
  %v3759 = vlaneseq
  %v3760 = vshrl.u32 %v3759, 7
  %v3761 = vsub.s32 %v3758, %v3760
  %v3762 = vrot.slane %v3633, %v3761
  %v3764 = vunpack.c.l.s4 1966171168
  %v3765 = vunpack.c.0.s8 %v3764
  %v3766 = vlaneseq
  %v3767 = vshrl.u32 %v3766, 7
  %v3768 = vsub.s32 %v3765, %v3767
  %v3769 = vrot.slane %v3755, %v3768
  %v3770 = vcombine.high %v3762, %v3762
  %v3771 = vcombine.high %v3769, %v3769
  %v3773 = vunpack.c.l.s4 1966171168
  %v3774 = vunpack.c.0.s8 %v3773
  %v3775 = vlaneseq
  %v3776 = vshrl.u32 %v3775, 7
  %v3777 = vsub.s32 %v3774, %v3776
  %v3778 = vrot.slane %v3762, %v3777
  %v3780 = vunpack.c.l.s4 1966171168
  %v3781 = vunpack.c.0.s8 %v3780
  %v3782 = vlaneseq
  %v3783 = vshrl.u32 %v3782, 7
  %v3784 = vsub.s32 %v3781, %v3783
  %v3785 = vrot.slane %v3769, %v3784
  %v3787 = vunpack.c.l.s4 1966171168
  %v3788 = vunpack.c.0.s8 %v3787
  %v3789 = vlaneseq
  %v3790 = vshrl.u32 %v3789, 7
  %v3791 = vsub.s32 %v3788, %v3790
  %v3792 = vrot.slane %v3770, %v3791
  %v3794 = vunpack.c.l.s4 1966171168
  %v3795 = vunpack.c.0.s8 %v3794
  %v3796 = vlaneseq
  %v3797 = vshrl.u32 %v3796, 7
  %v3798 = vsub.s32 %v3795, %v3797
  %v3799 = vrot.slane %v3771, %v3798
  %v3800 = vcombine.high %v3778, %v3778
  %v3801 = vcombine.high %v3785, %v3785
  %v3802 = vcombine.high %v3792, %v3792
  %v3803 = vcombine.high %v3799, %v3799
  %v3804 = vcombine.high %v3634, %v3634
  %v3806 = vunpack.c.l.s4 1966171168
  %v3807 = vunpack.c.0.s8 %v3806
  %v3808 = vlaneseq
  %v3809 = vshrl.u32 %v3808, 7
  %v3810 = vsub.s32 %v3807, %v3809
  %v3811 = vrot.slane %v3634, %v3810
  %v3813 = vunpack.c.l.s4 1966171168
  %v3814 = vunpack.c.0.s8 %v3813
  %v3815 = vlaneseq
  %v3816 = vshrl.u32 %v3815, 7
  %v3817 = vsub.s32 %v3814, %v3816
  %v3818 = vrot.slane %v3804, %v3817
  %v3819 = vcombine.high %v3811, %v3811
  %v3820 = vcombine.high %v3818, %v3818
  %v3822 = vunpack.c.l.s4 1966171168
  %v3823 = vunpack.c.0.s8 %v3822
  %v3824 = vlaneseq
  %v3825 = vshrl.u32 %v3824, 7
  %v3826 = vsub.s32 %v3823, %v3825
  %v3827 = vrot.slane %v3811, %v3826
  %v3829 = vunpack.c.l.s4 1966171168
  %v3830 = vunpack.c.0.s8 %v3829
  %v3831 = vlaneseq
  %v3832 = vshrl.u32 %v3831, 7
  %v3833 = vsub.s32 %v3830, %v3832
  %v3834 = vrot.slane %v3818, %v3833
  %v3836 = vunpack.c.l.s4 1966171168
  %v3837 = vunpack.c.0.s8 %v3836
  %v3838 = vlaneseq
  %v3839 = vshrl.u32 %v3838, 7
  %v3840 = vsub.s32 %v3837, %v3839
  %v3841 = vrot.slane %v3819, %v3840
  %v3843 = vunpack.c.l.s4 1966171168
  %v3844 = vunpack.c.0.s8 %v3843
  %v3845 = vlaneseq
  %v3846 = vshrl.u32 %v3845, 7
  %v3847 = vsub.s32 %v3844, %v3846
  %v3848 = vrot.slane %v3820, %v3847
  %v3849 = vcombine.high %v3827, %v3827
  %v3850 = vcombine.high %v3834, %v3834
  %v3851 = vcombine.high %v3841, %v3841
  %v3852 = vcombine.high %v3848, %v3848
  %v3853 = vcombine.high %v3635, %v3635
  %v3855 = vunpack.c.l.s4 1966171168
  %v3856 = vunpack.c.0.s8 %v3855
  %v3857 = vlaneseq
  %v3858 = vshrl.u32 %v3857, 7
  %v3859 = vsub.s32 %v3856, %v3858
  %v3860 = vrot.slane %v3635, %v3859
  %v3862 = vunpack.c.l.s4 1966171168
  %v3863 = vunpack.c.0.s8 %v3862
  %v3864 = vlaneseq
  %v3865 = vshrl.u32 %v3864, 7
  %v3866 = vsub.s32 %v3863, %v3865
  %v3867 = vrot.slane %v3853, %v3866
  %v3868 = vcombine.high %v3860, %v3860
  %v3869 = vcombine.high %v3867, %v3867
  %v3871 = vunpack.c.l.s4 1966171168
  %v3872 = vunpack.c.0.s8 %v3871
  %v3873 = vlaneseq
  %v3874 = vshrl.u32 %v3873, 7
  %v3875 = vsub.s32 %v3872, %v3874
  %v3876 = vrot.slane %v3860, %v3875
  %v3878 = vunpack.c.l.s4 1966171168
  %v3879 = vunpack.c.0.s8 %v3878
  %v3880 = vlaneseq
  %v3881 = vshrl.u32 %v3880, 7
  %v3882 = vsub.s32 %v3879, %v3881
  %v3883 = vrot.slane %v3867, %v3882
  %v3885 = vunpack.c.l.s4 1966171168
  %v3886 = vunpack.c.0.s8 %v3885
  %v3887 = vlaneseq
  %v3888 = vshrl.u32 %v3887, 7
  %v3889 = vsub.s32 %v3886, %v3888
  %v3890 = vrot.slane %v3868, %v3889
  %v3892 = vunpack.c.l.s4 1966171168
  %v3893 = vunpack.c.0.s8 %v3892
  %v3894 = vlaneseq
  %v3895 = vshrl.u32 %v3894, 7
  %v3896 = vsub.s32 %v3893, %v3895
  %v3897 = vrot.slane %v3869, %v3896
  %v3898 = vcombine.high %v3876, %v3876
  %v3899 = vcombine.high %v3883, %v3883
  %v3900 = vcombine.high %v3890, %v3890
  %v3901 = vcombine.high %v3897, %v3897
  %v3902 = vcombine.high %v3636, %v3636
  %v3904 = vunpack.c.l.s4 1966171168
  %v3905 = vunpack.c.0.s8 %v3904
  %v3906 = vlaneseq
  %v3907 = vshrl.u32 %v3906, 7
  %v3908 = vsub.s32 %v3905, %v3907
  %v3909 = vrot.slane %v3636, %v3908
  %v3911 = vunpack.c.l.s4 1966171168
  %v3912 = vunpack.c.0.s8 %v3911
  %v3913 = vlaneseq
  %v3914 = vshrl.u32 %v3913, 7
  %v3915 = vsub.s32 %v3912, %v3914
  %v3916 = vrot.slane %v3902, %v3915
  %v3917 = vcombine.high %v3909, %v3909
  %v3918 = vcombine.high %v3916, %v3916
  %v3920 = vunpack.c.l.s4 1966171168
  %v3921 = vunpack.c.0.s8 %v3920
  %v3922 = vlaneseq
  %v3923 = vshrl.u32 %v3922, 7
  %v3924 = vsub.s32 %v3921, %v3923
  %v3925 = vrot.slane %v3909, %v3924
  %v3927 = vunpack.c.l.s4 1966171168
  %v3928 = vunpack.c.0.s8 %v3927
  %v3929 = vlaneseq
  %v3930 = vshrl.u32 %v3929, 7
  %v3931 = vsub.s32 %v3928, %v3930
  %v3932 = vrot.slane %v3916, %v3931
  %v3934 = vunpack.c.l.s4 1966171168
  %v3935 = vunpack.c.0.s8 %v3934
  %v3936 = vlaneseq
  %v3937 = vshrl.u32 %v3936, 7
  %v3938 = vsub.s32 %v3935, %v3937
  %v3939 = vrot.slane %v3917, %v3938
  %v3941 = vunpack.c.l.s4 1966171168
  %v3942 = vunpack.c.0.s8 %v3941
  %v3943 = vlaneseq
  %v3944 = vshrl.u32 %v3943, 7
  %v3945 = vsub.s32 %v3942, %v3944
  %v3946 = vrot.slane %v3918, %v3945
  %v3947 = vcombine.high %v3925, %v3925
  %v3948 = vcombine.high %v3932, %v3932
  %v3949 = vcombine.high %v3939, %v3939
  %v3950 = vcombine.high %v3946, %v3946
  %v3951 = vcombine.high %v3637, %v3637
  %v3953 = vunpack.c.l.s4 1966171168
  %v3954 = vunpack.c.0.s8 %v3953
  %v3955 = vlaneseq
  %v3956 = vshrl.u32 %v3955, 7
  %v3957 = vsub.s32 %v3954, %v3956
  %v3958 = vrot.slane %v3637, %v3957
  %v3960 = vunpack.c.l.s4 1966171168
  %v3961 = vunpack.c.0.s8 %v3960
  %v3962 = vlaneseq
  %v3963 = vshrl.u32 %v3962, 7
  %v3964 = vsub.s32 %v3961, %v3963
  %v3965 = vrot.slane %v3951, %v3964
  %v3966 = vcombine.high %v3958, %v3958
  %v3967 = vcombine.high %v3965, %v3965
  %v3969 = vunpack.c.l.s4 1966171168
  %v3970 = vunpack.c.0.s8 %v3969
  %v3971 = vlaneseq
  %v3972 = vshrl.u32 %v3971, 7
  %v3973 = vsub.s32 %v3970, %v3972
  %v3974 = vrot.slane %v3958, %v3973
  %v3976 = vunpack.c.l.s4 1966171168
  %v3977 = vunpack.c.0.s8 %v3976
  %v3978 = vlaneseq
  %v3979 = vshrl.u32 %v3978, 7
  %v3980 = vsub.s32 %v3977, %v3979
  %v3981 = vrot.slane %v3965, %v3980
  %v3983 = vunpack.c.l.s4 1966171168
  %v3984 = vunpack.c.0.s8 %v3983
  %v3985 = vlaneseq
  %v3986 = vshrl.u32 %v3985, 7
  %v3987 = vsub.s32 %v3984, %v3986
  %v3988 = vrot.slane %v3966, %v3987
  %v3990 = vunpack.c.l.s4 1966171168
  %v3991 = vunpack.c.0.s8 %v3990
  %v3992 = vlaneseq
  %v3993 = vshrl.u32 %v3992, 7
  %v3994 = vsub.s32 %v3991, %v3993
  %v3995 = vrot.slane %v3967, %v3994
  %v3996 = vcombine.high %v3974, %v3974
  %v3997 = vcombine.high %v3981, %v3981
  %v3998 = vcombine.high %v3988, %v3988
  %v3999 = vcombine.high %v3995, %v3995
  %v4000 = vcombine.high %v3638, %v3638
  %v4002 = vunpack.c.l.s4 1966171168
  %v4003 = vunpack.c.0.s8 %v4002
  %v4004 = vlaneseq
  %v4005 = vshrl.u32 %v4004, 7
  %v4006 = vsub.s32 %v4003, %v4005
  %v4007 = vrot.slane %v3638, %v4006
  %v4009 = vunpack.c.l.s4 1966171168
  %v4010 = vunpack.c.0.s8 %v4009
  %v4011 = vlaneseq
  %v4012 = vshrl.u32 %v4011, 7
  %v4013 = vsub.s32 %v4010, %v4012
  %v4014 = vrot.slane %v4000, %v4013
  %v4015 = vcombine.high %v4007, %v4007
  %v4016 = vcombine.high %v4014, %v4014
  %v4018 = vunpack.c.l.s4 1966171168
  %v4019 = vunpack.c.0.s8 %v4018
  %v4020 = vlaneseq
  %v4021 = vshrl.u32 %v4020, 7
  %v4022 = vsub.s32 %v4019, %v4021
  %v4023 = vrot.slane %v4007, %v4022
  %v4025 = vunpack.c.l.s4 1966171168
  %v4026 = vunpack.c.0.s8 %v4025
  %v4027 = vlaneseq
  %v4028 = vshrl.u32 %v4027, 7
  %v4029 = vsub.s32 %v4026, %v4028
  %v4030 = vrot.slane %v4014, %v4029
  %v4032 = vunpack.c.l.s4 1966171168
  %v4033 = vunpack.c.0.s8 %v4032
  %v4034 = vlaneseq
  %v4035 = vshrl.u32 %v4034, 7
  %v4036 = vsub.s32 %v4033, %v4035
  %v4037 = vrot.slane %v4015, %v4036
  %v4039 = vunpack.c.l.s4 1966171168
  %v4040 = vunpack.c.0.s8 %v4039
  %v4041 = vlaneseq
  %v4042 = vshrl.u32 %v4041, 7
  %v4043 = vsub.s32 %v4040, %v4042
  %v4044 = vrot.slane %v4016, %v4043
  %v4045 = vcombine.high %v4023, %v4023
  %v4046 = vcombine.high %v4030, %v4030
  %v4047 = vcombine.high %v4037, %v4037
  %v4048 = vcombine.high %v4044, %v4044
  %v4049 = vcombine.high %v3639, %v3639
  %v4051 = vunpack.c.l.s4 1966171168
  %v4052 = vunpack.c.0.s8 %v4051
  %v4053 = vlaneseq
  %v4054 = vshrl.u32 %v4053, 7
  %v4055 = vsub.s32 %v4052, %v4054
  %v4056 = vrot.slane %v3639, %v4055
  %v4058 = vunpack.c.l.s4 1966171168
  %v4059 = vunpack.c.0.s8 %v4058
  %v4060 = vlaneseq
  %v4061 = vshrl.u32 %v4060, 7
  %v4062 = vsub.s32 %v4059, %v4061
  %v4063 = vrot.slane %v4049, %v4062
  %v4064 = vcombine.high %v4056, %v4056
  %v4065 = vcombine.high %v4063, %v4063
  %v4067 = vunpack.c.l.s4 1966171168
  %v4068 = vunpack.c.0.s8 %v4067
  %v4069 = vlaneseq
  %v4070 = vshrl.u32 %v4069, 7
  %v4071 = vsub.s32 %v4068, %v4070
  %v4072 = vrot.slane %v4056, %v4071
  %v4074 = vunpack.c.l.s4 1966171168
  %v4075 = vunpack.c.0.s8 %v4074
  %v4076 = vlaneseq
  %v4077 = vshrl.u32 %v4076, 7
  %v4078 = vsub.s32 %v4075, %v4077
  %v4079 = vrot.slane %v4063, %v4078
  %v4081 = vunpack.c.l.s4 1966171168
  %v4082 = vunpack.c.0.s8 %v4081
  %v4083 = vlaneseq
  %v4084 = vshrl.u32 %v4083, 7
  %v4085 = vsub.s32 %v4082, %v4084
  %v4086 = vrot.slane %v4064, %v4085
  %v4088 = vunpack.c.l.s4 1966171168
  %v4089 = vunpack.c.0.s8 %v4088
  %v4090 = vlaneseq
  %v4091 = vshrl.u32 %v4090, 7
  %v4092 = vsub.s32 %v4089, %v4091
  %v4093 = vrot.slane %v4065, %v4092
  %v4094 = vcombine.high %v4072, %v4072
  %v4095 = vcombine.high %v4079, %v4079
  %v4096 = vcombine.high %v4086, %v4086
  %v4097 = vcombine.high %v4093, %v4093
  %v4098 = vcombine.high %v3640, %v3640
  %v4100 = vunpack.c.l.s4 1966171168
  %v4101 = vunpack.c.0.s8 %v4100
  %v4102 = vlaneseq
  %v4103 = vshrl.u32 %v4102, 7
  %v4104 = vsub.s32 %v4101, %v4103
  %v4105 = vrot.slane %v3640, %v4104
  %v4107 = vunpack.c.l.s4 1966171168
  %v4108 = vunpack.c.0.s8 %v4107
  %v4109 = vlaneseq
  %v4110 = vshrl.u32 %v4109, 7
  %v4111 = vsub.s32 %v4108, %v4110
  %v4112 = vrot.slane %v4098, %v4111
  %v4113 = vcombine.high %v4105, %v4105
  %v4114 = vcombine.high %v4112, %v4112
  %v4116 = vunpack.c.l.s4 1966171168
  %v4117 = vunpack.c.0.s8 %v4116
  %v4118 = vlaneseq
  %v4119 = vshrl.u32 %v4118, 7
  %v4120 = vsub.s32 %v4117, %v4119
  %v4121 = vrot.slane %v4105, %v4120
  %v4123 = vunpack.c.l.s4 1966171168
  %v4124 = vunpack.c.0.s8 %v4123
  %v4125 = vlaneseq
  %v4126 = vshrl.u32 %v4125, 7
  %v4127 = vsub.s32 %v4124, %v4126
  %v4128 = vrot.slane %v4112, %v4127
  %v4130 = vunpack.c.l.s4 1966171168
  %v4131 = vunpack.c.0.s8 %v4130
  %v4132 = vlaneseq
  %v4133 = vshrl.u32 %v4132, 7
  %v4134 = vsub.s32 %v4131, %v4133
  %v4135 = vrot.slane %v4113, %v4134
  %v4137 = vunpack.c.l.s4 1966171168
  %v4138 = vunpack.c.0.s8 %v4137
  %v4139 = vlaneseq
  %v4140 = vshrl.u32 %v4139, 7
  %v4141 = vsub.s32 %v4138, %v4140
  %v4142 = vrot.slane %v4114, %v4141
  %v4143 = vcombine.high %v4121, %v4121
  %v4144 = vcombine.high %v4128, %v4128
  %v4145 = vcombine.high %v4135, %v4135
  %v4146 = vcombine.high %v4142, %v4142
  %v4147 = vcombine.high %v3641, %v3641
  %v4149 = vunpack.c.l.s4 1966171168
  %v4150 = vunpack.c.0.s8 %v4149
  %v4151 = vlaneseq
  %v4152 = vshrl.u32 %v4151, 7
  %v4153 = vsub.s32 %v4150, %v4152
  %v4154 = vrot.slane %v3641, %v4153
  %v4156 = vunpack.c.l.s4 1966171168
  %v4157 = vunpack.c.0.s8 %v4156
  %v4158 = vlaneseq
  %v4159 = vshrl.u32 %v4158, 7
  %v4160 = vsub.s32 %v4157, %v4159
  %v4161 = vrot.slane %v4147, %v4160
  %v4162 = vcombine.high %v4154, %v4154
  %v4163 = vcombine.high %v4161, %v4161
  %v4165 = vunpack.c.l.s4 1966171168
  %v4166 = vunpack.c.0.s8 %v4165
  %v4167 = vlaneseq
  %v4168 = vshrl.u32 %v4167, 7
  %v4169 = vsub.s32 %v4166, %v4168
  %v4170 = vrot.slane %v4154, %v4169
  %v4172 = vunpack.c.l.s4 1966171168
  %v4173 = vunpack.c.0.s8 %v4172
  %v4174 = vlaneseq
  %v4175 = vshrl.u32 %v4174, 7
  %v4176 = vsub.s32 %v4173, %v4175
  %v4177 = vrot.slane %v4161, %v4176
  %v4179 = vunpack.c.l.s4 1966171168
  %v4180 = vunpack.c.0.s8 %v4179
  %v4181 = vlaneseq
  %v4182 = vshrl.u32 %v4181, 7
  %v4183 = vsub.s32 %v4180, %v4182
  %v4184 = vrot.slane %v4162, %v4183
  %v4186 = vunpack.c.l.s4 1966171168
  %v4187 = vunpack.c.0.s8 %v4186
  %v4188 = vlaneseq
  %v4189 = vshrl.u32 %v4188, 7
  %v4190 = vsub.s32 %v4187, %v4189
  %v4191 = vrot.slane %v4163, %v4190
  %v4192 = vcombine.high %v4170, %v4170
  %v4193 = vcombine.high %v4177, %v4177
  %v4194 = vcombine.high %v4184, %v4184
  %v4195 = vcombine.high %v4191, %v4191
  %v4196 = vcombine.high %v3642, %v3642
  %v4198 = vunpack.c.l.s4 1966171168
  %v4199 = vunpack.c.0.s8 %v4198
  %v4200 = vlaneseq
  %v4201 = vshrl.u32 %v4200, 7
  %v4202 = vsub.s32 %v4199, %v4201
  %v4203 = vrot.slane %v3642, %v4202
  %v4205 = vunpack.c.l.s4 1966171168
  %v4206 = vunpack.c.0.s8 %v4205
  %v4207 = vlaneseq
  %v4208 = vshrl.u32 %v4207, 7
  %v4209 = vsub.s32 %v4206, %v4208
  %v4210 = vrot.slane %v4196, %v4209
  %v4211 = vcombine.high %v4203, %v4203
  %v4212 = vcombine.high %v4210, %v4210
  %v4214 = vunpack.c.l.s4 1966171168
  %v4215 = vunpack.c.0.s8 %v4214
  %v4216 = vlaneseq
  %v4217 = vshrl.u32 %v4216, 7
  %v4218 = vsub.s32 %v4215, %v4217
  %v4219 = vrot.slane %v4203, %v4218
  %v4221 = vunpack.c.l.s4 1966171168
  %v4222 = vunpack.c.0.s8 %v4221
  %v4223 = vlaneseq
  %v4224 = vshrl.u32 %v4223, 7
  %v4225 = vsub.s32 %v4222, %v4224
  %v4226 = vrot.slane %v4210, %v4225
  %v4228 = vunpack.c.l.s4 1966171168
  %v4229 = vunpack.c.0.s8 %v4228
  %v4230 = vlaneseq
  %v4231 = vshrl.u32 %v4230, 7
  %v4232 = vsub.s32 %v4229, %v4231
  %v4233 = vrot.slane %v4211, %v4232
  %v4235 = vunpack.c.l.s4 1966171168
  %v4236 = vunpack.c.0.s8 %v4235
  %v4237 = vlaneseq
  %v4238 = vshrl.u32 %v4237, 7
  %v4239 = vsub.s32 %v4236, %v4238
  %v4240 = vrot.slane %v4212, %v4239
  %v4241 = vcombine.high %v4219, %v4219
  %v4242 = vcombine.high %v4226, %v4226
  %v4243 = vcombine.high %v4233, %v4233
  %v4244 = vcombine.high %v4240, %v4240
  %v4246 = vunpack.c.l.s4 1966171168
  %v4247 = vunpack.c.0.s8 %v4246
  %v4248 = vlaneseq
  %v4249 = vshrl.u32 %v4248, 7
  %v4250 = vsub.s32 %v4247, %v4249
  %v4251 = vrot.slane %v3643, %v4250
  %v4252 = vcombine.high %v4251, %v4251
  %v4254 = vunpack.c.l.s4 1966171168
  %v4255 = vunpack.c.0.s8 %v4254
  %v4256 = vlaneseq
  %v4257 = vshrl.u32 %v4256, 7
  %v4258 = vsub.s32 %v4255, %v4257
  %v4259 = vrot.slane %v4251, %v4258
  %v4261 = vunpack.c.l.s4 1966171168
  %v4262 = vunpack.c.0.s8 %v4261
  %v4263 = vlaneseq
  %v4264 = vshrl.u32 %v4263, 7
  %v4265 = vsub.s32 %v4262, %v4264
  %v4266 = vrot.slane %v4252, %v4265
  %v4267 = vcombine.low %v3680, %v3694
  %v4268 = vcombine.low %v3702, %v3704
  %v4269 = vcombine.low %v3687, %v3701
  %v4270 = vcombine.low %v3703, %v3705
  %v4272 = vunpack.c.l.s4 1966171168
  %v4273 = vunpack.c.0.s8 %v4272
  %v4274 = vlaneseq
  %v4275 = vshrl.u32 %v4274, 7
  %v4276 = vsub.s32 %v4273, %v4275
  %v4277 = vrot.slane %v4267, %v4276
  %v4279 = vunpack.c.l.s4 1966171168
  %v4280 = vunpack.c.0.s8 %v4279
  %v4281 = vlaneseq
  %v4282 = vshrl.u32 %v4281, 7
  %v4283 = vsub.s32 %v4280, %v4282
  %v4284 = vrot.slane %v4268, %v4283
  %v4286 = vunpack.c.l.s4 1966171168
  %v4287 = vunpack.c.0.s8 %v4286
  %v4288 = vlaneseq
  %v4289 = vshrl.u32 %v4288, 7
  %v4290 = vsub.s32 %v4287, %v4289
  %v4291 = vrot.slane %v4269, %v4290
  %v4293 = vunpack.c.l.s4 1966171168
  %v4294 = vunpack.c.0.s8 %v4293
  %v4295 = vlaneseq
  %v4296 = vshrl.u32 %v4295, 7
  %v4297 = vsub.s32 %v4294, %v4296
  %v4298 = vrot.slane %v4270, %v4297
  %v4299 = vcombine.low %v4277, %v4284
  %v4300 = vcombine.low %v4291, %v4298
  %v4302 = vunpack.c.l.s4 1966171168
  %v4303 = vunpack.c.0.s8 %v4302
  %v4304 = vlaneseq
  %v4305 = vshrl.u32 %v4304, 7
  %v4306 = vsub.s32 %v4303, %v4305
  %v4307 = vrot.slane %v4299, %v4306
  %v4309 = vunpack.c.l.s4 1966171168
  %v4310 = vunpack.c.0.s8 %v4309
  %v4311 = vlaneseq
  %v4312 = vshrl.u32 %v4311, 7
  %v4313 = vsub.s32 %v4310, %v4312
  %v4314 = vrot.slane %v4300, %v4313
  %v4315 = vcombine.low %v4307, %v4314
  %v4316 = vcombine.low %v3729, %v3743
  %v4317 = vcombine.low %v3751, %v3753
  %v4318 = vcombine.low %v3736, %v3750
  %v4319 = vcombine.low %v3752, %v3754
  %v4321 = vunpack.c.l.s4 1966171168
  %v4322 = vunpack.c.0.s8 %v4321
  %v4323 = vlaneseq
  %v4324 = vshrl.u32 %v4323, 7
  %v4325 = vsub.s32 %v4322, %v4324
  %v4326 = vrot.slane %v4316, %v4325
  %v4328 = vunpack.c.l.s4 1966171168
  %v4329 = vunpack.c.0.s8 %v4328
  %v4330 = vlaneseq
  %v4331 = vshrl.u32 %v4330, 7
  %v4332 = vsub.s32 %v4329, %v4331
  %v4333 = vrot.slane %v4317, %v4332
  %v4335 = vunpack.c.l.s4 1966171168
  %v4336 = vunpack.c.0.s8 %v4335
  %v4337 = vlaneseq
  %v4338 = vshrl.u32 %v4337, 7
  %v4339 = vsub.s32 %v4336, %v4338
  %v4340 = vrot.slane %v4318, %v4339
  %v4342 = vunpack.c.l.s4 1966171168
  %v4343 = vunpack.c.0.s8 %v4342
  %v4344 = vlaneseq
  %v4345 = vshrl.u32 %v4344, 7
  %v4346 = vsub.s32 %v4343, %v4345
  %v4347 = vrot.slane %v4319, %v4346
  %v4348 = vcombine.low %v4326, %v4333
  %v4349 = vcombine.low %v4340, %v4347
  %v4351 = vunpack.c.l.s4 1966171168
  %v4352 = vunpack.c.0.s8 %v4351
  %v4353 = vlaneseq
  %v4354 = vshrl.u32 %v4353, 7
  %v4355 = vsub.s32 %v4352, %v4354
  %v4356 = vrot.slane %v4348, %v4355
  %v4358 = vunpack.c.l.s4 1966171168
  %v4359 = vunpack.c.0.s8 %v4358
  %v4360 = vlaneseq
  %v4361 = vshrl.u32 %v4360, 7
  %v4362 = vsub.s32 %v4359, %v4361
  %v4363 = vrot.slane %v4349, %v4362
  %v4364 = vcombine.low %v4356, %v4363
  %v4365 = vcombine.low %v3778, %v3792
  %v4366 = vcombine.low %v3800, %v3802
  %v4367 = vcombine.low %v3785, %v3799
  %v4368 = vcombine.low %v3801, %v3803
  %v4370 = vunpack.c.l.s4 1966171168
  %v4371 = vunpack.c.0.s8 %v4370
  %v4372 = vlaneseq
  %v4373 = vshrl.u32 %v4372, 7
  %v4374 = vsub.s32 %v4371, %v4373
  %v4375 = vrot.slane %v4365, %v4374
  %v4377 = vunpack.c.l.s4 1966171168
  %v4378 = vunpack.c.0.s8 %v4377
  %v4379 = vlaneseq
  %v4380 = vshrl.u32 %v4379, 7
  %v4381 = vsub.s32 %v4378, %v4380
  %v4382 = vrot.slane %v4366, %v4381
  %v4384 = vunpack.c.l.s4 1966171168
  %v4385 = vunpack.c.0.s8 %v4384
  %v4386 = vlaneseq
  %v4387 = vshrl.u32 %v4386, 7
  %v4388 = vsub.s32 %v4385, %v4387
  %v4389 = vrot.slane %v4367, %v4388
  %v4391 = vunpack.c.l.s4 1966171168
  %v4392 = vunpack.c.0.s8 %v4391
  %v4393 = vlaneseq
  %v4394 = vshrl.u32 %v4393, 7
  %v4395 = vsub.s32 %v4392, %v4394
  %v4396 = vrot.slane %v4368, %v4395
  %v4397 = vcombine.low %v4375, %v4382
  %v4398 = vcombine.low %v4389, %v4396
  %v4400 = vunpack.c.l.s4 1966171168
  %v4401 = vunpack.c.0.s8 %v4400
  %v4402 = vlaneseq
  %v4403 = vshrl.u32 %v4402, 7
  %v4404 = vsub.s32 %v4401, %v4403
  %v4405 = vrot.slane %v4397, %v4404
  %v4407 = vunpack.c.l.s4 1966171168
  %v4408 = vunpack.c.0.s8 %v4407
  %v4409 = vlaneseq
  %v4410 = vshrl.u32 %v4409, 7
  %v4411 = vsub.s32 %v4408, %v4410
  %v4412 = vrot.slane %v4398, %v4411
  %v4413 = vcombine.low %v4405, %v4412
  %v4414 = vcombine.low %v3827, %v3841
  %v4415 = vcombine.low %v3849, %v3851
  %v4416 = vcombine.low %v3834, %v3848
  %v4417 = vcombine.low %v3850, %v3852
  %v4419 = vunpack.c.l.s4 1966171168
  %v4420 = vunpack.c.0.s8 %v4419
  %v4421 = vlaneseq
  %v4422 = vshrl.u32 %v4421, 7
  %v4423 = vsub.s32 %v4420, %v4422
  %v4424 = vrot.slane %v4414, %v4423
  %v4426 = vunpack.c.l.s4 1966171168
  %v4427 = vunpack.c.0.s8 %v4426
  %v4428 = vlaneseq
  %v4429 = vshrl.u32 %v4428, 7
  %v4430 = vsub.s32 %v4427, %v4429
  %v4431 = vrot.slane %v4415, %v4430
  %v4433 = vunpack.c.l.s4 1966171168
  %v4434 = vunpack.c.0.s8 %v4433
  %v4435 = vlaneseq
  %v4436 = vshrl.u32 %v4435, 7
  %v4437 = vsub.s32 %v4434, %v4436
  %v4438 = vrot.slane %v4416, %v4437
  %v4440 = vunpack.c.l.s4 1966171168
  %v4441 = vunpack.c.0.s8 %v4440
  %v4442 = vlaneseq
  %v4443 = vshrl.u32 %v4442, 7
  %v4444 = vsub.s32 %v4441, %v4443
  %v4445 = vrot.slane %v4417, %v4444
  %v4446 = vcombine.low %v4424, %v4431
  %v4447 = vcombine.low %v4438, %v4445
  %v4449 = vunpack.c.l.s4 1966171168
  %v4450 = vunpack.c.0.s8 %v4449
  %v4451 = vlaneseq
  %v4452 = vshrl.u32 %v4451, 7
  %v4453 = vsub.s32 %v4450, %v4452
  %v4454 = vrot.slane %v4446, %v4453
  %v4456 = vunpack.c.l.s4 1966171168
  %v4457 = vunpack.c.0.s8 %v4456
  %v4458 = vlaneseq
  %v4459 = vshrl.u32 %v4458, 7
  %v4460 = vsub.s32 %v4457, %v4459
  %v4461 = vrot.slane %v4447, %v4460
  %v4462 = vcombine.low %v4454, %v4461
  %v4463 = vcombine.low %v3876, %v3890
  %v4464 = vcombine.low %v3898, %v3900
  %v4465 = vcombine.low %v3883, %v3897
  %v4466 = vcombine.low %v3899, %v3901
  %v4468 = vunpack.c.l.s4 1966171168
  %v4469 = vunpack.c.0.s8 %v4468
  %v4470 = vlaneseq
  %v4471 = vshrl.u32 %v4470, 7
  %v4472 = vsub.s32 %v4469, %v4471
  %v4473 = vrot.slane %v4463, %v4472
  %v4475 = vunpack.c.l.s4 1966171168
  %v4476 = vunpack.c.0.s8 %v4475
  %v4477 = vlaneseq
  %v4478 = vshrl.u32 %v4477, 7
  %v4479 = vsub.s32 %v4476, %v4478
  %v4480 = vrot.slane %v4464, %v4479
  %v4482 = vunpack.c.l.s4 1966171168
  %v4483 = vunpack.c.0.s8 %v4482
  %v4484 = vlaneseq
  %v4485 = vshrl.u32 %v4484, 7
  %v4486 = vsub.s32 %v4483, %v4485
  %v4487 = vrot.slane %v4465, %v4486
  %v4489 = vunpack.c.l.s4 1966171168
  %v4490 = vunpack.c.0.s8 %v4489
  %v4491 = vlaneseq
  %v4492 = vshrl.u32 %v4491, 7
  %v4493 = vsub.s32 %v4490, %v4492
  %v4494 = vrot.slane %v4466, %v4493
  %v4495 = vcombine.low %v4473, %v4480
  %v4496 = vcombine.low %v4487, %v4494
  %v4498 = vunpack.c.l.s4 1966171168
  %v4499 = vunpack.c.0.s8 %v4498
  %v4500 = vlaneseq
  %v4501 = vshrl.u32 %v4500, 7
  %v4502 = vsub.s32 %v4499, %v4501
  %v4503 = vrot.slane %v4495, %v4502
  %v4505 = vunpack.c.l.s4 1966171168
  %v4506 = vunpack.c.0.s8 %v4505
  %v4507 = vlaneseq
  %v4508 = vshrl.u32 %v4507, 7
  %v4509 = vsub.s32 %v4506, %v4508
  %v4510 = vrot.slane %v4496, %v4509
  %v4511 = vcombine.low %v4503, %v4510
  %v4512 = vcombine.low %v3925, %v3939
  %v4513 = vcombine.low %v3947, %v3949
  %v4514 = vcombine.low %v3932, %v3946
  %v4515 = vcombine.low %v3948, %v3950
  %v4517 = vunpack.c.l.s4 1966171168
  %v4518 = vunpack.c.0.s8 %v4517
  %v4519 = vlaneseq
  %v4520 = vshrl.u32 %v4519, 7
  %v4521 = vsub.s32 %v4518, %v4520
  %v4522 = vrot.slane %v4512, %v4521
  %v4524 = vunpack.c.l.s4 1966171168
  %v4525 = vunpack.c.0.s8 %v4524
  %v4526 = vlaneseq
  %v4527 = vshrl.u32 %v4526, 7
  %v4528 = vsub.s32 %v4525, %v4527
  %v4529 = vrot.slane %v4513, %v4528
  %v4531 = vunpack.c.l.s4 1966171168
  %v4532 = vunpack.c.0.s8 %v4531
  %v4533 = vlaneseq
  %v4534 = vshrl.u32 %v4533, 7
  %v4535 = vsub.s32 %v4532, %v4534
  %v4536 = vrot.slane %v4514, %v4535
  %v4538 = vunpack.c.l.s4 1966171168
  %v4539 = vunpack.c.0.s8 %v4538
  %v4540 = vlaneseq
  %v4541 = vshrl.u32 %v4540, 7
  %v4542 = vsub.s32 %v4539, %v4541
  %v4543 = vrot.slane %v4515, %v4542
  %v4544 = vcombine.low %v4522, %v4529
  %v4545 = vcombine.low %v4536, %v4543
  %v4547 = vunpack.c.l.s4 1966171168
  %v4548 = vunpack.c.0.s8 %v4547
  %v4549 = vlaneseq
  %v4550 = vshrl.u32 %v4549, 7
  %v4551 = vsub.s32 %v4548, %v4550
  %v4552 = vrot.slane %v4544, %v4551
  %v4554 = vunpack.c.l.s4 1966171168
  %v4555 = vunpack.c.0.s8 %v4554
  %v4556 = vlaneseq
  %v4557 = vshrl.u32 %v4556, 7
  %v4558 = vsub.s32 %v4555, %v4557
  %v4559 = vrot.slane %v4545, %v4558
  %v4560 = vcombine.low %v4552, %v4559
  %v4562 = vunpack.c.l.s4 1966171168
  %v4563 = vunpack.c.0.s8 %v4562
  %v4564 = vlaneseq
  %v4565 = vshrl.u32 %v4564, 7
  %v4566 = vsub.s32 %v4563, %v4565
  %v4567 = vrot.slane %v3974, %v4566
  %v4569 = vunpack.c.l.s4 1966171168
  %v4570 = vunpack.c.0.s8 %v4569
  %v4571 = vlaneseq
  %v4572 = vshrl.u32 %v4571, 7
  %v4573 = vsub.s32 %v4570, %v4572
  %v4574 = vrot.slane %v4567, %v4573
  %v4575 = vcombine.low %v3988, %v3996
  %v4576 = vcombine.low %v3998, %v3981
  %v4577 = vcombine.low %v3995, %v3997
  %v4578 = vcombine.low %v3999, %v4023
  %v4580 = vunpack.c.l.s4 1966171168
  %v4581 = vunpack.c.0.s8 %v4580
  %v4582 = vlaneseq
  %v4583 = vshrl.u32 %v4582, 7
  %v4584 = vsub.s32 %v4581, %v4583
  %v4585 = vrot.slane %v4575, %v4584
  %v4587 = vunpack.c.l.s4 1966171168
  %v4588 = vunpack.c.0.s8 %v4587
  %v4589 = vlaneseq
  %v4590 = vshrl.u32 %v4589, 7
  %v4591 = vsub.s32 %v4588, %v4590
  %v4592 = vrot.slane %v4576, %v4591
  %v4594 = vunpack.c.l.s4 1966171168
  %v4595 = vunpack.c.0.s8 %v4594
  %v4596 = vlaneseq
  %v4597 = vshrl.u32 %v4596, 7
  %v4598 = vsub.s32 %v4595, %v4597
  %v4599 = vrot.slane %v4577, %v4598
  %v4601 = vunpack.c.l.s4 1966171168
  %v4602 = vunpack.c.0.s8 %v4601
  %v4603 = vlaneseq
  %v4604 = vshrl.u32 %v4603, 7
  %v4605 = vsub.s32 %v4602, %v4604
  %v4606 = vrot.slane %v4578, %v4605
  %v4607 = vcombine.low %v4585, %v4592
  %v4608 = vcombine.low %v4599, %v4606
  %v4610 = vunpack.c.l.s4 1966171168
  %v4611 = vunpack.c.0.s8 %v4610
  %v4612 = vlaneseq
  %v4613 = vshrl.u32 %v4612, 7
  %v4614 = vsub.s32 %v4611, %v4613
  %v4615 = vrot.slane %v4607, %v4614
  %v4617 = vunpack.c.l.s4 1966171168
  %v4618 = vunpack.c.0.s8 %v4617
  %v4619 = vlaneseq
  %v4620 = vshrl.u32 %v4619, 7
  %v4621 = vsub.s32 %v4618, %v4620
  %v4622 = vrot.slane %v4608, %v4621
  %v4623 = vcombine.low %v4615, %v4622
  %v4624 = vcombine.low %v4037, %v4045
  %v4625 = vcombine.low %v4047, %v4030
  %v4626 = vcombine.low %v4044, %v4046
  %v4627 = vcombine.low %v4048, %v4072
  %v4629 = vunpack.c.l.s4 1966171168
  %v4630 = vunpack.c.0.s8 %v4629
  %v4631 = vlaneseq
  %v4632 = vshrl.u32 %v4631, 7
  %v4633 = vsub.s32 %v4630, %v4632
  %v4634 = vrot.slane %v4624, %v4633
  %v4636 = vunpack.c.l.s4 1966171168
  %v4637 = vunpack.c.0.s8 %v4636
  %v4638 = vlaneseq
  %v4639 = vshrl.u32 %v4638, 7
  %v4640 = vsub.s32 %v4637, %v4639
  %v4641 = vrot.slane %v4625, %v4640
  %v4643 = vunpack.c.l.s4 1966171168
  %v4644 = vunpack.c.0.s8 %v4643
  %v4645 = vlaneseq
  %v4646 = vshrl.u32 %v4645, 7
  %v4647 = vsub.s32 %v4644, %v4646
  %v4648 = vrot.slane %v4626, %v4647
  %v4650 = vunpack.c.l.s4 1966171168
  %v4651 = vunpack.c.0.s8 %v4650
  %v4652 = vlaneseq
  %v4653 = vshrl.u32 %v4652, 7
  %v4654 = vsub.s32 %v4651, %v4653
  %v4655 = vrot.slane %v4627, %v4654
  %v4656 = vcombine.low %v4634, %v4641
  %v4657 = vcombine.low %v4648, %v4655
  %v4659 = vunpack.c.l.s4 1966171168
  %v4660 = vunpack.c.0.s8 %v4659
  %v4661 = vlaneseq
  %v4662 = vshrl.u32 %v4661, 7
  %v4663 = vsub.s32 %v4660, %v4662
  %v4664 = vrot.slane %v4656, %v4663
  %v4666 = vunpack.c.l.s4 1966171168
  %v4667 = vunpack.c.0.s8 %v4666
  %v4668 = vlaneseq
  %v4669 = vshrl.u32 %v4668, 7
  %v4670 = vsub.s32 %v4667, %v4669
  %v4671 = vrot.slane %v4657, %v4670
  %v4672 = vcombine.low %v4664, %v4671
  %v4673 = vcombine.low %v4086, %v4094
  %v4674 = vcombine.low %v4096, %v4079
  %v4675 = vcombine.low %v4093, %v4095
  %v4676 = vcombine.low %v4097, %v4121
  %v4678 = vunpack.c.l.s4 1966171168
  %v4679 = vunpack.c.0.s8 %v4678
  %v4680 = vlaneseq
  %v4681 = vshrl.u32 %v4680, 7
  %v4682 = vsub.s32 %v4679, %v4681
  %v4683 = vrot.slane %v4673, %v4682
  %v4685 = vunpack.c.l.s4 1966171168
  %v4686 = vunpack.c.0.s8 %v4685
  %v4687 = vlaneseq
  %v4688 = vshrl.u32 %v4687, 7
  %v4689 = vsub.s32 %v4686, %v4688
  %v4690 = vrot.slane %v4674, %v4689
  %v4692 = vunpack.c.l.s4 1966171168
  %v4693 = vunpack.c.0.s8 %v4692
  %v4694 = vlaneseq
  %v4695 = vshrl.u32 %v4694, 7
  %v4696 = vsub.s32 %v4693, %v4695
  %v4697 = vrot.slane %v4675, %v4696
  %v4699 = vunpack.c.l.s4 1966171168
  %v4700 = vunpack.c.0.s8 %v4699
  %v4701 = vlaneseq
  %v4702 = vshrl.u32 %v4701, 7
  %v4703 = vsub.s32 %v4700, %v4702
  %v4704 = vrot.slane %v4676, %v4703
  %v4705 = vcombine.low %v4683, %v4690
  %v4706 = vcombine.low %v4697, %v4704
  %v4708 = vunpack.c.l.s4 1966171168
  %v4709 = vunpack.c.0.s8 %v4708
  %v4710 = vlaneseq
  %v4711 = vshrl.u32 %v4710, 7
  %v4712 = vsub.s32 %v4709, %v4711
  %v4713 = vrot.slane %v4705, %v4712
  %v4715 = vunpack.c.l.s4 1966171168
  %v4716 = vunpack.c.0.s8 %v4715
  %v4717 = vlaneseq
  %v4718 = vshrl.u32 %v4717, 7
  %v4719 = vsub.s32 %v4716, %v4718
  %v4720 = vrot.slane %v4706, %v4719
  %v4721 = vcombine.low %v4713, %v4720
  %v4722 = vcombine.low %v4135, %v4143
  %v4723 = vcombine.low %v4145, %v4128
  %v4724 = vcombine.low %v4142, %v4144
  %v4725 = vcombine.low %v4146, %v4170
  %v4727 = vunpack.c.l.s4 1966171168
  %v4728 = vunpack.c.0.s8 %v4727
  %v4729 = vlaneseq
  %v4730 = vshrl.u32 %v4729, 7
  %v4731 = vsub.s32 %v4728, %v4730
  %v4732 = vrot.slane %v4722, %v4731
  %v4734 = vunpack.c.l.s4 1966171168
  %v4735 = vunpack.c.0.s8 %v4734
  %v4736 = vlaneseq
  %v4737 = vshrl.u32 %v4736, 7
  %v4738 = vsub.s32 %v4735, %v4737
  %v4739 = vrot.slane %v4723, %v4738
  %v4741 = vunpack.c.l.s4 1966171168
  %v4742 = vunpack.c.0.s8 %v4741
  %v4743 = vlaneseq
  %v4744 = vshrl.u32 %v4743, 7
  %v4745 = vsub.s32 %v4742, %v4744
  %v4746 = vrot.slane %v4724, %v4745
  %v4748 = vunpack.c.l.s4 1966171168
  %v4749 = vunpack.c.0.s8 %v4748
  %v4750 = vlaneseq
  %v4751 = vshrl.u32 %v4750, 7
  %v4752 = vsub.s32 %v4749, %v4751
  %v4753 = vrot.slane %v4725, %v4752
  %v4754 = vcombine.low %v4732, %v4739
  %v4755 = vcombine.low %v4746, %v4753
  %v4757 = vunpack.c.l.s4 1966171168
  %v4758 = vunpack.c.0.s8 %v4757
  %v4759 = vlaneseq
  %v4760 = vshrl.u32 %v4759, 7
  %v4761 = vsub.s32 %v4758, %v4760
  %v4762 = vrot.slane %v4754, %v4761
  %v4764 = vunpack.c.l.s4 1966171168
  %v4765 = vunpack.c.0.s8 %v4764
  %v4766 = vlaneseq
  %v4767 = vshrl.u32 %v4766, 7
  %v4768 = vsub.s32 %v4765, %v4767
  %v4769 = vrot.slane %v4755, %v4768
  %v4770 = vcombine.low %v4762, %v4769
  %v4771 = vcombine.low %v4184, %v4192
  %v4772 = vcombine.low %v4194, %v4177
  %v4773 = vcombine.low %v4191, %v4193
  %v4774 = vcombine.low %v4195, %v4219
  %v4776 = vunpack.c.l.s4 1966171168
  %v4777 = vunpack.c.0.s8 %v4776
  %v4778 = vlaneseq
  %v4779 = vshrl.u32 %v4778, 7
  %v4780 = vsub.s32 %v4777, %v4779
  %v4781 = vrot.slane %v4771, %v4780
  %v4783 = vunpack.c.l.s4 1966171168
  %v4784 = vunpack.c.0.s8 %v4783
  %v4785 = vlaneseq
  %v4786 = vshrl.u32 %v4785, 7
  %v4787 = vsub.s32 %v4784, %v4786
  %v4788 = vrot.slane %v4772, %v4787
  %v4790 = vunpack.c.l.s4 1966171168
  %v4791 = vunpack.c.0.s8 %v4790
  %v4792 = vlaneseq
  %v4793 = vshrl.u32 %v4792, 7
  %v4794 = vsub.s32 %v4791, %v4793
  %v4795 = vrot.slane %v4773, %v4794
  %v4797 = vunpack.c.l.s4 1966171168
  %v4798 = vunpack.c.0.s8 %v4797
  %v4799 = vlaneseq
  %v4800 = vshrl.u32 %v4799, 7
  %v4801 = vsub.s32 %v4798, %v4800
  %v4802 = vrot.slane %v4774, %v4801
  %v4803 = vcombine.low %v4781, %v4788
  %v4804 = vcombine.low %v4795, %v4802
  %v4806 = vunpack.c.l.s4 1966171168
  %v4807 = vunpack.c.0.s8 %v4806
  %v4808 = vlaneseq
  %v4809 = vshrl.u32 %v4808, 7
  %v4810 = vsub.s32 %v4807, %v4809
  %v4811 = vrot.slane %v4803, %v4810
  %v4813 = vunpack.c.l.s4 1966171168
  %v4814 = vunpack.c.0.s8 %v4813
  %v4815 = vlaneseq
  %v4816 = vshrl.u32 %v4815, 7
  %v4817 = vsub.s32 %v4814, %v4816
  %v4818 = vrot.slane %v4804, %v4817
  %v4819 = vcombine.low %v4811, %v4818
  %v4820 = vcombine.low %v4233, %v4241
  %v4821 = vcombine.low %v4243, %v4226
  %v4822 = vcombine.low %v4240, %v4242
  %v4823 = vcombine.low %v4244, %v4259
  %v4825 = vunpack.c.l.s4 1966171168
  %v4826 = vunpack.c.0.s8 %v4825
  %v4827 = vlaneseq
  %v4828 = vshrl.u32 %v4827, 7
  %v4829 = vsub.s32 %v4826, %v4828
  %v4830 = vrot.slane %v4820, %v4829
  %v4832 = vunpack.c.l.s4 1966171168
  %v4833 = vunpack.c.0.s8 %v4832
  %v4834 = vlaneseq
  %v4835 = vshrl.u32 %v4834, 7
  %v4836 = vsub.s32 %v4833, %v4835
  %v4837 = vrot.slane %v4821, %v4836
  %v4839 = vunpack.c.l.s4 1966171168
  %v4840 = vunpack.c.0.s8 %v4839
  %v4841 = vlaneseq
  %v4842 = vshrl.u32 %v4841, 7
  %v4843 = vsub.s32 %v4840, %v4842
  %v4844 = vrot.slane %v4822, %v4843
  %v4846 = vunpack.c.l.s4 1966171168
  %v4847 = vunpack.c.0.s8 %v4846
  %v4848 = vlaneseq
  %v4849 = vshrl.u32 %v4848, 7
  %v4850 = vsub.s32 %v4847, %v4849
  %v4851 = vrot.slane %v4823, %v4850
  %v4852 = vcombine.low %v4830, %v4837
  %v4853 = vcombine.low %v4844, %v4851
  %v4855 = vunpack.c.l.s4 1966171168
  %v4856 = vunpack.c.0.s8 %v4855
  %v4857 = vlaneseq
  %v4858 = vshrl.u32 %v4857, 7
  %v4859 = vsub.s32 %v4856, %v4858
  %v4860 = vrot.slane %v4852, %v4859
  %v4862 = vunpack.c.l.s4 1966171168
  %v4863 = vunpack.c.0.s8 %v4862
  %v4864 = vlaneseq
  %v4865 = vshrl.u32 %v4864, 7
  %v4866 = vsub.s32 %v4863, %v4865
  %v4867 = vrot.slane %v4853, %v4866
  %v4868 = vcombine.low %v4860, %v4867
  %v4870 = vunpack.c.l.s4 1966171168
  %v4871 = vunpack.c.0.s8 %v4870
  %v4872 = vlaneseq
  %v4873 = vshrl.u32 %v4872, 7
  %v4874 = vsub.s32 %v4871, %v4873
  %v4875 = vrot.slane %v4266, %v4874
  %v4877 = vunpack.c.l.s4 1966171168
  %v4878 = vunpack.c.0.s8 %v4877
  %v4879 = vlaneseq
  %v4880 = vshrl.u32 %v4879, 7
  %v4881 = vsub.s32 %v4878, %v4880
  %v4882 = vrot.slane %v4875, %v4881
  %v4897 = vpack.c.bf16 %v4364, %v4315
  %v4898 = vpack.c.bf16 %v4462, %v4413
  %v4899 = vpack.c.bf16 %v4560, %v4511
  %v4900 = vpack.c.bf16 %v4574, %v4574
  %v4901 = vpack.c.bf16 %v4672, %v4623
  %v4902 = vpack.c.bf16 %v4770, %v4721
  %v4903 = vpack.c.bf16 %v4868, %v4819
  %v4904 = vpack.c.bf16 %v4882, %v4882
  %v4913 = vunpack.c.l.b16 %v4897
  %v4914 = vunpack.c.h.b16 %v4897
  %v4915 = vunpack.c.l.b16 %v4898
  %v4916 = vunpack.c.h.b16 %v4898
  %v4917 = vunpack.c.l.b16 %v4899
  %v4918 = vunpack.c.h.b16 %v4899
  %v4919 = vunpack.c.l.b16 %v4900
  %v4920 = vunpack.c.l.b16 %v4901
  %v4921 = vunpack.c.h.b16 %v4901
  %v4922 = vunpack.c.l.b16 %v4902
  %v4923 = vunpack.c.h.b16 %v4902
  %v4924 = vunpack.c.l.b16 %v4903
  %v4925 = vunpack.c.h.b16 %v4903
  %v4926 = vunpack.c.l.b16 %v4904
  %v4927 = vpack.c.b16 %v4913, %v4913
  %v4928 = vpack.c.b16 %v4914, %v4914
  %v4929 = vpack.c.b16 %v4915, %v4915
  %v4930 = vpack.c.b16 %v4916, %v4916
  %v4931 = vpack.c.b16 %v4917, %v4917
  %v4932 = vpack.c.b16 %v4918, %v4918
  %v4933 = vpack.c.b16 %v4919, %v4919
  %v4934 = vpack.c.b16 %v4920, %v4920
  %v4935 = vpack.c.b16 %v4921, %v4921
  %v4936 = vpack.c.b16 %v4922, %v4922
  %v4937 = vpack.c.b16 %v4923, %v4923
  %v4938 = vpack.c.b16 %v4924, %v4924
  %v4939 = vpack.c.b16 %v4925, %v4925
  %v4940 = vpack.c.b16 %v4926, %v4926
  %vm4955 = vcmask 257024
  %4956 = vst.msk [vmem:[%s5] sm:$0xf] %vm4955, %v4927
  %4957 = vst.msk [vmem:[%s5 + $0x4] sm:$0xf] %vm4955, %v4928
  %4958 = vst.msk [vmem:[%s5 + $0x8] sm:$0xf] %vm4955, %v4929
  %4959 = vst.msk [vmem:[%s5 + $0xc] sm:$0xf] %vm4955, %v4930
  %4960 = vst.msk [vmem:[%s5 + $0x10] sm:$0xf] %vm4955, %v4931
  %4961 = vst.msk [vmem:[%s5 + $0x14] sm:$0xf] %vm4955, %v4932
  %vm4962 = vcmask 253952
  %vm4963 = vmand %vm4962, %vm2282
  %v4964 = vld [vmem:[%s5 + $0x18] sm:$0x1]
  %v4965 = vsel %vm4963, %v4933, %v4964
  %4966 = vst [vmem:[%s5 + $0x18] sm:$0x1] %v4965
  %4967 = vst.msk [vmem:[%s5 + $0x1c] sm:$0xf] %vm4955, %v4934
  %4968 = vst.msk [vmem:[%s5 + $0x20] sm:$0xf] %vm4955, %v4935
  %4969 = vst.msk [vmem:[%s5 + $0x24] sm:$0xf] %vm4955, %v4936
  %4970 = vst.msk [vmem:[%s5 + $0x28] sm:$0xf] %vm4955, %v4937
  %4971 = vst.msk [vmem:[%s5 + $0x2c] sm:$0xf] %vm4955, %v4938
  %4972 = vst.msk [vmem:[%s5 + $0x30] sm:$0xf] %vm4955, %v4939
  %v4973 = vld [vmem:[%s5 + $0x34] sm:$0x1]
  %v4974 = vsel %vm4963, %v4940, %v4973
  %4975 = vst [vmem:[%s5 + $0x34] sm:$0x1] %v4974
  // Predicated region
  $region22: #{vae_forward.3} parent=0 // pred_check
    _
  $region23: #{vae_forward.3} parent=0 // pred_check_branch
    %4977 = sbr.rel (0) target = $region25
  $region24: #{vae_forward.3} parent=0 // pred_region
    _
  $region25: #{vae_forward.3} parent=0 // pred_fallthru
    _
  // Predicated region
  $region26: #{vae_forward.3} parent=0 // pred_check
    _
  $region27: #{vae_forward.3} parent=0 // pred_check_branch
    %4979 = sbr.rel (0) target = $region29
  $region28: #{vae_forward.3} parent=0 // pred_region
    _
  $region29: #{vae_forward.3} parent=0 // pred_fallthru
    _

// kernel: vae_forward.5
$region0: #{vae_forward.5}
  #allocation0 [shape = 'u32[]', space=smem, size = 0x4, offset = 0x4, fixed_abs, tag = 'smem constant byte address 0x4 - core index']
  #allocation1 [shape = 'u32[144,128]{1,0:T(1,128)}', space=vmem, size = 0x12000, scoped, tag = 'internal scratch']
  %s0 = inlined_call_operand.vmem [shape: bf16[2,7,7,32], index: 0, kind: input, shape index: {}]
  %s1 = inlined_call_operand.vmem [shape: bf16[128,64], index: 1, kind: input, shape index: {}]
  %s2 = inlined_call_operand.vmem [shape: f32[1,64], index: 2, kind: input, shape index: {}]
  %s3 = inlined_call_operand.vmem [shape: bf16[256,16], index: 3, kind: input, shape index: {}]
  %s4 = inlined_call_operand.vmem [shape: f32[1,16], index: 4, kind: input, shape index: {}]
  %s5 = inlined_call_operand.vmem [shape: f32[2,7,7,16], index: 5, kind: output, shape index: {}]
  %s6 = sld [smem:[#allocation0]]
  $region30: #{vae_forward.5} parent=0
    _
  %s8 = ssub.s32 1, %s6
  %s9 = scalar_select 0, %s8, %s6
  // Predicated region
  $region2: #{vae_forward.5} parent=0 // pred_check
    _
  $region3: #{vae_forward.5} parent=0 // pred_check_branch
    %11 = sbr.rel (0) target = $region5
  $region4: #{vae_forward.5} parent=0 // pred_region
    _
  $region5: #{vae_forward.5} parent=0 // pred_fallthru
    _
  // Predicated region
  $region6: #{vae_forward.5} parent=0 // pred_check
    _
  $region7: #{vae_forward.5} parent=0 // pred_check_branch
    %13 = sbr.rel (0) target = $region9
  $region8: #{vae_forward.5} parent=0 // pred_region
    _
  $region9: #{vae_forward.5} parent=0 // pred_fallthru
    _
  // Predicated region
  $region10: #{vae_forward.5} parent=0 // pred_check
    _
  $region11: #{vae_forward.5} parent=0 // pred_check_branch
    %15 = sbr.rel (0) target = $region13
  $region12: #{vae_forward.5} parent=0 // pred_region
    _
  $region13: #{vae_forward.5} parent=0 // pred_fallthru
    _
  // Predicated region
  $region14: #{vae_forward.5} parent=0 // pred_check
    _
  $region15: #{vae_forward.5} parent=0 // pred_check_branch
    %17 = sbr.rel (0) target = $region17
  $region16: #{vae_forward.5} parent=0 // pred_region
    _
  $region17: #{vae_forward.5} parent=0 // pred_fallthru
    _
  // Predicated region
  $region18: #{vae_forward.5} parent=0 // pred_check
    _
  $region19: #{vae_forward.5} parent=0 // pred_check_branch
    %19 = sbr.rel (0) target = $region21
  $region20: #{vae_forward.5} parent=0 // pred_region
    _
  $region21: #{vae_forward.5} parent=0 // pred_fallthru
    _
  %v21 = vld [vmem:[%s0] sm:$0xf]
  %v22 = vld [vmem:[%s0 + $0x4] sm:$0xf]
  %v23 = vld [vmem:[%s0 + $0x8] sm:$0xf]
  %v24 = vld [vmem:[%s0 + $0xc] sm:$0xf]
  %v25 = vld [vmem:[%s0 + $0x10] sm:$0xf]
  %v26 = vld [vmem:[%s0 + $0x14] sm:$0xf]
  %v27 = vld [vmem:[%s0 + $0x18] sm:$0xf]
  %v28 = vld [vmem:[%s0 + $0x1c] sm:$0xf]
  %v29 = vld [vmem:[%s0 + $0x20] sm:$0xf]
  %v30 = vld [vmem:[%s0 + $0x24] sm:$0xf]
  %v31 = vld [vmem:[%s0 + $0x28] sm:$0xf]
  %v32 = vld [vmem:[%s0 + $0x2c] sm:$0xf]
  %v33 = vld [vmem:[%s0 + $0x30] sm:$0xf]
  %v34 = vld [vmem:[%s0 + $0x34] sm:$0xf]
  %vm35 = vcmask 1043456
  %vm36 = vsmask.f32 3328
  %vm37 = vmand %vm35, %vm36
  %v38 = vsel %vm37, %v21, 0
  %v39 = vsel %vm37, %v22, 0
  %v40 = vsel %vm37, %v23, 0
  %v41 = vsel %vm37, %v24, 0
  %v42 = vsel %vm37, %v25, 0
  %v43 = vsel %vm37, %v26, 0
  %v44 = vsel %vm37, %v27, 0
  %v45 = vsel %vm37, %v28, 0
  %v46 = vsel %vm37, %v29, 0
  %v47 = vsel %vm37, %v30, 0
  %v48 = vsel %vm37, %v31, 0
  %v49 = vsel %vm37, %v32, 0
  %v50 = vsel %vm37, %v33, 0
  %v51 = vsel %vm37, %v34, 0
  %v53 = vshrl.u32 %v38, 16
  %v55 = vshll.u32 %v38, 16
  %v57 = vrot.slane %v55, 1
  %v58 = vor.u32 %v53, %v57
  %v60 = vshrl.u32 %v39, 16
  %v62 = vshll.u32 %v39, 16
  %v64 = vrot.slane %v62, 1
  %v65 = vor.u32 %v60, %v64
  %v67 = vshrl.u32 %v40, 16
  %v69 = vshll.u32 %v40, 16
  %v71 = vrot.slane %v69, 1
  %v72 = vor.u32 %v67, %v71
  %v74 = vshrl.u32 %v41, 16
  %v76 = vshll.u32 %v41, 16
  %v78 = vrot.slane %v76, 1
  %v79 = vor.u32 %v74, %v78
  %v81 = vshrl.u32 %v42, 16
  %v83 = vshll.u32 %v42, 16
  %v85 = vrot.slane %v83, 1
  %v86 = vor.u32 %v81, %v85
  %v88 = vshrl.u32 %v43, 16
  %v90 = vshll.u32 %v43, 16
  %v92 = vrot.slane %v90, 1
  %v93 = vor.u32 %v88, %v92
  %v95 = vshrl.u32 %v44, 16
  %v97 = vshll.u32 %v44, 16
  %v99 = vrot.slane %v97, 1
  %v100 = vor.u32 %v95, %v99
  %v102 = vshrl.u32 %v45, 16
  %v104 = vshll.u32 %v45, 16
  %v106 = vrot.slane %v104, 1
  %v107 = vor.u32 %v102, %v106
  %v109 = vshrl.u32 %v46, 16
  %v111 = vshll.u32 %v46, 16
  %v113 = vrot.slane %v111, 1
  %v114 = vor.u32 %v109, %v113
  %v116 = vshrl.u32 %v47, 16
  %v118 = vshll.u32 %v47, 16
  %v120 = vrot.slane %v118, 1
  %v121 = vor.u32 %v116, %v120
  %v123 = vshrl.u32 %v48, 16
  %v125 = vshll.u32 %v48, 16
  %v127 = vrot.slane %v125, 1
  %v128 = vor.u32 %v123, %v127
  %v130 = vshrl.u32 %v49, 16
  %v132 = vshll.u32 %v49, 16
  %v134 = vrot.slane %v132, 1
  %v135 = vor.u32 %v130, %v134
  %v137 = vshrl.u32 %v50, 16
  %v139 = vshll.u32 %v50, 16
  %v141 = vrot.slane %v139, 1
  %v142 = vor.u32 %v137, %v141
  %v144 = vshrl.u32 %v51, 16
  %v146 = vshll.u32 %v51, 16
  %v148 = vrot.slane %v146, 1
  %v149 = vor.u32 %v144, %v148
  %150 = vrot.lane.b32.xlu0 %v58, 32
  %v151 = vpop.permute.xlu0 %150
  %152 = vrot.lane.b32.xlu0 %v65, 32
  %v153 = vpop.permute.xlu0 %152
  %154 = vrot.lane.b32.xlu0 %v72, 32
  %v155 = vpop.permute.xlu0 %154
  %156 = vrot.lane.b32.xlu0 %v79, 32
  %v157 = vpop.permute.xlu0 %156
  %158 = vrot.lane.b32.xlu0 %v86, 32
  %v159 = vpop.permute.xlu0 %158
  %160 = vrot.lane.b32.xlu0 %v93, 32
  %v161 = vpop.permute.xlu0 %160
  %162 = vrot.lane.b32.xlu0 %v100, 32
  %v163 = vpop.permute.xlu0 %162
  %164 = vrot.lane.b32.xlu0 %v107, 32
  %v165 = vpop.permute.xlu0 %164
  %166 = vrot.lane.b32.xlu0 %v114, 32
  %v167 = vpop.permute.xlu0 %166
  %168 = vrot.lane.b32.xlu0 %v121, 32
  %v169 = vpop.permute.xlu0 %168
  %170 = vrot.lane.b32.xlu0 %v128, 32
  %v171 = vpop.permute.xlu0 %170
  %172 = vrot.lane.b32.xlu0 %v135, 32
  %v173 = vpop.permute.xlu0 %172
  %174 = vrot.lane.b32.xlu0 %v142, 32
  %v175 = vpop.permute.xlu0 %174
  %176 = vrot.lane.b32.xlu0 %v149, 32
  %v177 = vpop.permute.xlu0 %176
  %191 = vrot.lane.b32.xlu0 %v39, 64
  %v192 = vpop.permute.xlu0 %191
  %193 = vrot.lane.b32.xlu0 %v40, 64
  %v194 = vpop.permute.xlu0 %193
  %195 = vrot.lane.b32.xlu0 %v41, 64
  %v196 = vpop.permute.xlu0 %195
  %197 = vrot.lane.b32.xlu0 %v42, 64
  %v198 = vpop.permute.xlu0 %197
  %199 = vrot.lane.b32.xlu0 %v43, 64
  %v200 = vpop.permute.xlu0 %199
  %201 = vrot.lane.b32.xlu0 %v44, 64
  %v202 = vpop.permute.xlu0 %201
  %203 = vrot.lane.b32.xlu0 0, 64
  %v204 = vpop.permute.xlu0 %203
  %205 = vrot.lane.b32.xlu0 %v46, 64
  %v206 = vpop.permute.xlu0 %205
  %207 = vrot.lane.b32.xlu0 %v47, 64
  %v208 = vpop.permute.xlu0 %207
  %209 = vrot.lane.b32.xlu0 %v48, 64
  %v210 = vpop.permute.xlu0 %209
  %211 = vrot.lane.b32.xlu0 %v49, 64
  %v212 = vpop.permute.xlu0 %211
  %213 = vrot.lane.b32.xlu0 %v50, 64
  %v214 = vpop.permute.xlu0 %213
  %215 = vrot.lane.b32.xlu0 %v51, 64
  %v216 = vpop.permute.xlu0 %215
  %v218 = vshrl.u32 0, 16
  %v220 = vshll.u32 0, 16
  %v222 = vrot.slane %v220, 1
  %v223 = vor.u32 %v218, %v222
  %224 = vrot.lane.b32.xlu0 %v65, 96
  %v225 = vpop.permute.xlu0 %224
  %226 = vrot.lane.b32.xlu0 %v72, 96
  %v227 = vpop.permute.xlu0 %226
  %228 = vrot.lane.b32.xlu0 %v79, 96
  %v229 = vpop.permute.xlu0 %228
  %230 = vrot.lane.b32.xlu0 %v86, 96
  %v231 = vpop.permute.xlu0 %230
  %232 = vrot.lane.b32.xlu0 %v93, 96
  %v233 = vpop.permute.xlu0 %232
  %234 = vrot.lane.b32.xlu0 %v100, 96
  %v235 = vpop.permute.xlu0 %234
  %236 = vrot.lane.b32.xlu0 %v223, 96
  %v237 = vpop.permute.xlu0 %236
  %238 = vrot.lane.b32.xlu0 %v114, 96
  %v239 = vpop.permute.xlu0 %238
  %240 = vrot.lane.b32.xlu0 %v121, 96
  %v241 = vpop.permute.xlu0 %240
  %242 = vrot.lane.b32.xlu0 %v128, 96
  %v243 = vpop.permute.xlu0 %242
  %244 = vrot.lane.b32.xlu0 %v135, 96
  %v245 = vpop.permute.xlu0 %244
  %246 = vrot.lane.b32.xlu0 %v142, 96
  %v247 = vpop.permute.xlu0 %246
  %248 = vrot.lane.b32.xlu0 %v149, 96
  %v249 = vpop.permute.xlu0 %248
  %vm250 = vcmask 261120
  %v252 = vsel %vm250, %v38, %v151
  %v254 = vsel %vm250, %v39, %v153
  %v256 = vsel %vm250, %v40, %v155
  %v258 = vsel %vm250, %v41, %v157
  %v260 = vsel %vm250, %v42, %v159
  %v262 = vsel %vm250, %v43, %v161
  %v264 = vsel %vm250, %v44, %v163
  %v266 = vsel %vm250, %v45, %v165
  %v268 = vsel %vm250, %v46, %v167
  %v270 = vsel %vm250, %v47, %v169
  %v272 = vsel %vm250, %v48, %v171
  %v274 = vsel %vm250, %v49, %v173
  %v276 = vsel %vm250, %v50, %v175
  %v278 = vsel %vm250, %v51, %v177
  %vm279 = vcmask 523264
  %v281 = vsel %vm279, %v252, %v192
  %v283 = vsel %vm279, %v254, %v194
  %v285 = vsel %vm279, %v256, %v196
  %v287 = vsel %vm279, %v258, %v198
  %v289 = vsel %vm279, %v260, %v200
  %v291 = vsel %vm279, %v262, %v202
  %v293 = vsel %vm279, %v264, %v204
  %v295 = vsel %vm279, %v266, %v206
  %v297 = vsel %vm279, %v268, %v208
  %v299 = vsel %vm279, %v270, %v210
  %v301 = vsel %vm279, %v272, %v212
  %v303 = vsel %vm279, %v274, %v214
  %v305 = vsel %vm279, %v276, %v216
  %v306 = vsel %vm279, %v278, %v204
  %vm307 = vcmask 785408
  %v309 = vsel %vm307, %v281, %v225
  %v311 = vsel %vm307, %v283, %v227
  %v313 = vsel %vm307, %v285, %v229
  %v315 = vsel %vm307, %v287, %v231
  %v317 = vsel %vm307, %v289, %v233
  %v319 = vsel %vm307, %v291, %v235
  %v321 = vsel %vm307, %v293, %v237
  %v323 = vsel %vm307, %v295, %v239
  %v325 = vsel %vm307, %v297, %v241
  %v327 = vsel %vm307, %v299, %v243
  %v329 = vsel %vm307, %v301, %v245
  %v331 = vsel %vm307, %v303, %v247
  %v333 = vsel %vm307, %v305, %v249
  %v334 = vsel %vm307, %v306, %v237
  %v350 = vunpack.c.l.s4 1966171168
  %v351 = vunpack.c.0.s8 %v350
  %v352 = vlaneseq
  %v353 = vshrl.u32 %v352, 7
  %v354 = vsub.s32 %v351, %v353
  %v355 = vrot.slane %v309, %v354
  %v356 = vcombine.high %v355, %v355
  %v358 = vunpack.c.l.s4 1966171168
  %v359 = vunpack.c.0.s8 %v358
  %v360 = vlaneseq
  %v361 = vshrl.u32 %v360, 7
  %v362 = vsub.s32 %v359, %v361
  %v363 = vrot.slane %v355, %v362
  %v365 = vunpack.c.l.s4 1966171168
  %v366 = vunpack.c.0.s8 %v365
  %v367 = vlaneseq
  %v368 = vshrl.u32 %v367, 7
  %v369 = vsub.s32 %v366, %v368
  %v370 = vrot.slane %v356, %v369
  %v371 = vcombine.high %v363, %v363
  %v372 = vcombine.high %v370, %v370
  %v374 = vunpack.c.l.s4 1966171168
  %v375 = vunpack.c.0.s8 %v374
  %v376 = vlaneseq
  %v377 = vshrl.u32 %v376, 7
  %v378 = vsub.s32 %v375, %v377
  %v379 = vrot.slane %v311, %v378
  %v380 = vcombine.high %v379, %v379
  %v382 = vunpack.c.l.s4 1966171168
  %v383 = vunpack.c.0.s8 %v382
  %v384 = vlaneseq
  %v385 = vshrl.u32 %v384, 7
  %v386 = vsub.s32 %v383, %v385
  %v387 = vrot.slane %v379, %v386
  %v389 = vunpack.c.l.s4 1966171168
  %v390 = vunpack.c.0.s8 %v389
  %v391 = vlaneseq
  %v392 = vshrl.u32 %v391, 7
  %v393 = vsub.s32 %v390, %v392
  %v394 = vrot.slane %v380, %v393
  %v395 = vcombine.high %v387, %v387
  %v396 = vcombine.high %v394, %v394
  %v398 = vunpack.c.l.s4 1966171168
  %v399 = vunpack.c.0.s8 %v398
  %v400 = vlaneseq
  %v401 = vshrl.u32 %v400, 7
  %v402 = vsub.s32 %v399, %v401
  %v403 = vrot.slane %v313, %v402
  %v404 = vcombine.high %v403, %v403
  %v406 = vunpack.c.l.s4 1966171168
  %v407 = vunpack.c.0.s8 %v406
  %v408 = vlaneseq
  %v409 = vshrl.u32 %v408, 7
  %v410 = vsub.s32 %v407, %v409
  %v411 = vrot.slane %v403, %v410
  %v413 = vunpack.c.l.s4 1966171168
  %v414 = vunpack.c.0.s8 %v413
  %v415 = vlaneseq
  %v416 = vshrl.u32 %v415, 7
  %v417 = vsub.s32 %v414, %v416
  %v418 = vrot.slane %v404, %v417
  %v419 = vcombine.high %v411, %v411
  %v420 = vcombine.high %v418, %v418
  %v422 = vunpack.c.l.s4 1966171168
  %v423 = vunpack.c.0.s8 %v422
  %v424 = vlaneseq
  %v425 = vshrl.u32 %v424, 7
  %v426 = vsub.s32 %v423, %v425
  %v427 = vrot.slane %v315, %v426
  %v428 = vcombine.high %v427, %v427
  %v430 = vunpack.c.l.s4 1966171168
  %v431 = vunpack.c.0.s8 %v430
  %v432 = vlaneseq
  %v433 = vshrl.u32 %v432, 7
  %v434 = vsub.s32 %v431, %v433
  %v435 = vrot.slane %v427, %v434
  %v437 = vunpack.c.l.s4 1966171168
  %v438 = vunpack.c.0.s8 %v437
  %v439 = vlaneseq
  %v440 = vshrl.u32 %v439, 7
  %v441 = vsub.s32 %v438, %v440
  %v442 = vrot.slane %v428, %v441
  %v443 = vcombine.high %v435, %v435
  %v444 = vcombine.high %v442, %v442
  %v446 = vunpack.c.l.s4 1966171168
  %v447 = vunpack.c.0.s8 %v446
  %v448 = vlaneseq
  %v449 = vshrl.u32 %v448, 7
  %v450 = vsub.s32 %v447, %v449
  %v451 = vrot.slane %v317, %v450
  %v452 = vcombine.high %v451, %v451
  %v454 = vunpack.c.l.s4 1966171168
  %v455 = vunpack.c.0.s8 %v454
  %v456 = vlaneseq
  %v457 = vshrl.u32 %v456, 7
  %v458 = vsub.s32 %v455, %v457
  %v459 = vrot.slane %v451, %v458
  %v461 = vunpack.c.l.s4 1966171168
  %v462 = vunpack.c.0.s8 %v461
  %v463 = vlaneseq
  %v464 = vshrl.u32 %v463, 7
  %v465 = vsub.s32 %v462, %v464
  %v466 = vrot.slane %v452, %v465
  %v467 = vcombine.high %v459, %v459
  %v468 = vcombine.high %v466, %v466
  %v470 = vunpack.c.l.s4 1966171168
  %v471 = vunpack.c.0.s8 %v470
  %v472 = vlaneseq
  %v473 = vshrl.u32 %v472, 7
  %v474 = vsub.s32 %v471, %v473
  %v475 = vrot.slane %v319, %v474
  %v476 = vcombine.high %v475, %v475
  %v478 = vunpack.c.l.s4 1966171168
  %v479 = vunpack.c.0.s8 %v478
  %v480 = vlaneseq
  %v481 = vshrl.u32 %v480, 7
  %v482 = vsub.s32 %v479, %v481
  %v483 = vrot.slane %v475, %v482
  %v485 = vunpack.c.l.s4 1966171168
  %v486 = vunpack.c.0.s8 %v485
  %v487 = vlaneseq
  %v488 = vshrl.u32 %v487, 7
  %v489 = vsub.s32 %v486, %v488
  %v490 = vrot.slane %v476, %v489
  %v491 = vcombine.high %v483, %v483
  %v492 = vcombine.high %v490, %v490
  %v494 = vunpack.c.l.s4 1966171168
  %v495 = vunpack.c.0.s8 %v494
  %v496 = vlaneseq
  %v497 = vshrl.u32 %v496, 7
  %v498 = vsub.s32 %v495, %v497
  %v499 = vrot.slane %v321, %v498
  %v500 = vcombine.high %v499, %v499
  %v502 = vunpack.c.l.s4 1966171168
  %v503 = vunpack.c.0.s8 %v502
  %v504 = vlaneseq
  %v505 = vshrl.u32 %v504, 7
  %v506 = vsub.s32 %v503, %v505
  %v507 = vrot.slane %v499, %v506
  %v509 = vunpack.c.l.s4 1966171168
  %v510 = vunpack.c.0.s8 %v509
  %v511 = vlaneseq
  %v512 = vshrl.u32 %v511, 7
  %v513 = vsub.s32 %v510, %v512
  %v514 = vrot.slane %v500, %v513
  %v515 = vcombine.high %v507, %v507
  %v516 = vcombine.high %v514, %v514
  %v518 = vunpack.c.l.s4 1966171168
  %v519 = vunpack.c.0.s8 %v518
  %v520 = vlaneseq
  %v521 = vshrl.u32 %v520, 7
  %v522 = vsub.s32 %v519, %v521
  %v523 = vrot.slane %v323, %v522
  %v524 = vcombine.high %v523, %v523
  %v526 = vunpack.c.l.s4 1966171168
  %v527 = vunpack.c.0.s8 %v526
  %v528 = vlaneseq
  %v529 = vshrl.u32 %v528, 7
  %v530 = vsub.s32 %v527, %v529
  %v531 = vrot.slane %v523, %v530
  %v533 = vunpack.c.l.s4 1966171168
  %v534 = vunpack.c.0.s8 %v533
  %v535 = vlaneseq
  %v536 = vshrl.u32 %v535, 7
  %v537 = vsub.s32 %v534, %v536
  %v538 = vrot.slane %v524, %v537
  %v539 = vcombine.high %v531, %v531
  %v540 = vcombine.high %v538, %v538
  %v542 = vunpack.c.l.s4 1966171168
  %v543 = vunpack.c.0.s8 %v542
  %v544 = vlaneseq
  %v545 = vshrl.u32 %v544, 7
  %v546 = vsub.s32 %v543, %v545
  %v547 = vrot.slane %v325, %v546
  %v548 = vcombine.high %v547, %v547
  %v550 = vunpack.c.l.s4 1966171168
  %v551 = vunpack.c.0.s8 %v550
  %v552 = vlaneseq
  %v553 = vshrl.u32 %v552, 7
  %v554 = vsub.s32 %v551, %v553
  %v555 = vrot.slane %v547, %v554
  %v557 = vunpack.c.l.s4 1966171168
  %v558 = vunpack.c.0.s8 %v557
  %v559 = vlaneseq
  %v560 = vshrl.u32 %v559, 7
  %v561 = vsub.s32 %v558, %v560
  %v562 = vrot.slane %v548, %v561
  %v563 = vcombine.high %v555, %v555
  %v564 = vcombine.high %v562, %v562
  %v566 = vunpack.c.l.s4 1966171168
  %v567 = vunpack.c.0.s8 %v566
  %v568 = vlaneseq
  %v569 = vshrl.u32 %v568, 7
  %v570 = vsub.s32 %v567, %v569
  %v571 = vrot.slane %v327, %v570
  %v572 = vcombine.high %v571, %v571
  %v574 = vunpack.c.l.s4 1966171168
  %v575 = vunpack.c.0.s8 %v574
  %v576 = vlaneseq
  %v577 = vshrl.u32 %v576, 7
  %v578 = vsub.s32 %v575, %v577
  %v579 = vrot.slane %v571, %v578
  %v581 = vunpack.c.l.s4 1966171168
  %v582 = vunpack.c.0.s8 %v581
  %v583 = vlaneseq
  %v584 = vshrl.u32 %v583, 7
  %v585 = vsub.s32 %v582, %v584
  %v586 = vrot.slane %v572, %v585
  %v587 = vcombine.high %v579, %v579
  %v588 = vcombine.high %v586, %v586
  %v590 = vunpack.c.l.s4 1966171168
  %v591 = vunpack.c.0.s8 %v590
  %v592 = vlaneseq
  %v593 = vshrl.u32 %v592, 7
  %v594 = vsub.s32 %v591, %v593
  %v595 = vrot.slane %v329, %v594
  %v596 = vcombine.high %v595, %v595
  %v598 = vunpack.c.l.s4 1966171168
  %v599 = vunpack.c.0.s8 %v598
  %v600 = vlaneseq
  %v601 = vshrl.u32 %v600, 7
  %v602 = vsub.s32 %v599, %v601
  %v603 = vrot.slane %v595, %v602
  %v605 = vunpack.c.l.s4 1966171168
  %v606 = vunpack.c.0.s8 %v605
  %v607 = vlaneseq
  %v608 = vshrl.u32 %v607, 7
  %v609 = vsub.s32 %v606, %v608
  %v610 = vrot.slane %v596, %v609
  %v611 = vcombine.high %v603, %v603
  %v612 = vcombine.high %v610, %v610
  %v614 = vunpack.c.l.s4 1966171168
  %v615 = vunpack.c.0.s8 %v614
  %v616 = vlaneseq
  %v617 = vshrl.u32 %v616, 7
  %v618 = vsub.s32 %v615, %v617
  %v619 = vrot.slane %v331, %v618
  %v620 = vcombine.high %v619, %v619
  %v622 = vunpack.c.l.s4 1966171168
  %v623 = vunpack.c.0.s8 %v622
  %v624 = vlaneseq
  %v625 = vshrl.u32 %v624, 7
  %v626 = vsub.s32 %v623, %v625
  %v627 = vrot.slane %v619, %v626
  %v629 = vunpack.c.l.s4 1966171168
  %v630 = vunpack.c.0.s8 %v629
  %v631 = vlaneseq
  %v632 = vshrl.u32 %v631, 7
  %v633 = vsub.s32 %v630, %v632
  %v634 = vrot.slane %v620, %v633
  %v635 = vcombine.high %v627, %v627
  %v636 = vcombine.high %v634, %v634
  %v638 = vunpack.c.l.s4 1966171168
  %v639 = vunpack.c.0.s8 %v638
  %v640 = vlaneseq
  %v641 = vshrl.u32 %v640, 7
  %v642 = vsub.s32 %v639, %v641
  %v643 = vrot.slane %v333, %v642
  %v644 = vcombine.high %v643, %v643
  %v646 = vunpack.c.l.s4 1966171168
  %v647 = vunpack.c.0.s8 %v646
  %v648 = vlaneseq
  %v649 = vshrl.u32 %v648, 7
  %v650 = vsub.s32 %v647, %v649
  %v651 = vrot.slane %v643, %v650
  %v653 = vunpack.c.l.s4 1966171168
  %v654 = vunpack.c.0.s8 %v653
  %v655 = vlaneseq
  %v656 = vshrl.u32 %v655, 7
  %v657 = vsub.s32 %v654, %v656
  %v658 = vrot.slane %v644, %v657
  %v659 = vcombine.high %v651, %v651
  %v660 = vcombine.high %v658, %v658
  %v662 = vunpack.c.l.s4 1966171168
  %v663 = vunpack.c.0.s8 %v662
  %v664 = vlaneseq
  %v665 = vshrl.u32 %v664, 7
  %v666 = vsub.s32 %v663, %v665
  %v667 = vrot.slane %v334, %v666
  %v668 = vcombine.high %v667, %v667
  %v670 = vunpack.c.l.s4 1966171168
  %v671 = vunpack.c.0.s8 %v670
  %v672 = vlaneseq
  %v673 = vshrl.u32 %v672, 7
  %v674 = vsub.s32 %v671, %v673
  %v675 = vrot.slane %v667, %v674
  %v677 = vunpack.c.l.s4 1966171168
  %v678 = vunpack.c.0.s8 %v677
  %v679 = vlaneseq
  %v680 = vshrl.u32 %v679, 7
  %v681 = vsub.s32 %v678, %v680
  %v682 = vrot.slane %v668, %v681
  %v683 = vcombine.high %v675, %v675
  %v684 = vcombine.high %v682, %v682
  %v685 = vunpack.i.l.s16 %v363
  %v686 = vunpack.i.h.s16 %v363
  %v687 = vunpack.i.l.s16 %v370
  %v688 = vunpack.i.h.s16 %v370
  %v689 = vunpack.i.l.s16 %v371
  %v690 = vunpack.i.h.s16 %v371
  %v691 = vunpack.i.l.s16 %v372
  %v692 = vunpack.i.l.s16 %v387
  %v693 = vunpack.i.h.s16 %v387
  %v694 = vunpack.i.l.s16 %v394
  %v695 = vunpack.i.h.s16 %v394
  %v696 = vunpack.i.l.s16 %v395
  %v697 = vunpack.i.h.s16 %v395
  %v698 = vunpack.i.l.s16 %v396
  %v699 = vunpack.i.l.s16 %v411
  %v700 = vunpack.i.h.s16 %v411
  %v701 = vunpack.i.l.s16 %v418
  %v702 = vunpack.i.h.s16 %v418
  %v703 = vunpack.i.l.s16 %v419
  %v704 = vunpack.i.h.s16 %v419
  %v705 = vunpack.i.l.s16 %v420
  %v706 = vunpack.i.l.s16 %v435
  %v707 = vunpack.i.h.s16 %v435
  %v708 = vunpack.i.l.s16 %v442
  %v709 = vunpack.i.h.s16 %v442
  %v710 = vunpack.i.l.s16 %v443
  %v711 = vunpack.i.h.s16 %v443
  %v712 = vunpack.i.l.s16 %v444
  %v713 = vunpack.i.l.s16 %v459
  %v714 = vunpack.i.h.s16 %v459
  %v715 = vunpack.i.l.s16 %v466
  %v716 = vunpack.i.h.s16 %v466
  %v717 = vunpack.i.l.s16 %v467
  %v718 = vunpack.i.h.s16 %v467
  %v719 = vunpack.i.l.s16 %v468
  %v720 = vunpack.i.l.s16 %v483
  %v721 = vunpack.i.h.s16 %v483
  %v722 = vunpack.i.l.s16 %v490
  %v723 = vunpack.i.h.s16 %v490
  %v724 = vunpack.i.l.s16 %v491
  %v725 = vunpack.i.h.s16 %v491
  %v726 = vunpack.i.l.s16 %v492
  %v727 = vunpack.i.l.s16 %v507
  %v728 = vunpack.i.h.s16 %v507
  %v729 = vunpack.i.l.s16 %v514
  %v730 = vunpack.i.h.s16 %v514
  %v731 = vunpack.i.l.s16 %v515
  %v732 = vunpack.i.h.s16 %v515
  %v733 = vunpack.i.l.s16 %v516
  %v734 = vunpack.i.l.s16 %v531
  %v735 = vunpack.i.h.s16 %v531
  %v736 = vunpack.i.l.s16 %v538
  %v737 = vunpack.i.h.s16 %v538
  %v738 = vunpack.i.l.s16 %v539
  %v739 = vunpack.i.h.s16 %v539
  %v740 = vunpack.i.l.s16 %v540
  %v741 = vunpack.i.l.s16 %v555
  %v742 = vunpack.i.h.s16 %v555
  %v743 = vunpack.i.l.s16 %v562
  %v744 = vunpack.i.h.s16 %v562
  %v745 = vunpack.i.l.s16 %v563
  %v746 = vunpack.i.h.s16 %v563
  %v747 = vunpack.i.l.s16 %v564
  %v748 = vunpack.i.l.s16 %v579
  %v749 = vunpack.i.h.s16 %v579
  %v750 = vunpack.i.l.s16 %v586
  %v751 = vunpack.i.h.s16 %v586
  %v752 = vunpack.i.l.s16 %v587
  %v753 = vunpack.i.h.s16 %v587
  %v754 = vunpack.i.l.s16 %v588
  %v755 = vunpack.i.l.s16 %v603
  %v756 = vunpack.i.h.s16 %v603
  %v757 = vunpack.i.l.s16 %v610
  %v758 = vunpack.i.h.s16 %v610
  %v759 = vunpack.i.l.s16 %v611
  %v760 = vunpack.i.h.s16 %v611
  %v761 = vunpack.i.l.s16 %v612
  %v762 = vunpack.i.l.s16 %v627
  %v763 = vunpack.i.h.s16 %v627
  %v764 = vunpack.i.l.s16 %v634
  %v765 = vunpack.i.h.s16 %v634
  %v766 = vunpack.i.l.s16 %v635
  %v767 = vunpack.i.h.s16 %v635
  %v768 = vunpack.i.l.s16 %v636
  %v769 = vunpack.i.l.s16 %v651
  %v770 = vunpack.i.h.s16 %v651
  %v771 = vunpack.i.l.s16 %v658
  %v772 = vunpack.i.h.s16 %v658
  %v773 = vunpack.i.l.s16 %v659
  %v774 = vunpack.i.h.s16 %v659
  %v775 = vunpack.i.l.s16 %v660
  %v776 = vunpack.i.l.s16 %v675
  %v777 = vunpack.i.h.s16 %v675
  %v778 = vunpack.i.l.s16 %v682
  %v779 = vunpack.i.h.s16 %v682
  %v780 = vunpack.i.l.s16 %v683
  %v781 = vunpack.i.h.s16 %v683
  %v782 = vunpack.i.l.s16 %v684
  %v783 = vld [vmem:[%s1] sm:$0xf]
  %v784 = vld [vmem:[%s1 + $0x4] sm:$0xf]
  %v785 = vld [vmem:[%s1 + $0x8] sm:$0xf]
  %v786 = vld [vmem:[%s1 + $0xc] sm:$0xf]
  %v787 = vld [vmem:[%s1 + $0x10] sm:$0xf]
  %v788 = vld [vmem:[%s1 + $0x14] sm:$0xf]
  %v789 = vld [vmem:[%s1 + $0x18] sm:$0xf]
  %v790 = vld [vmem:[%s1 + $0x1c] sm:$0xf]
  %v791 = vld [vmem:[%s1 + $0x20] sm:$0xf]
  %v792 = vld [vmem:[%s1 + $0x24] sm:$0xf]
  %v793 = vld [vmem:[%s1 + $0x28] sm:$0xf]
  %v794 = vld [vmem:[%s1 + $0x2c] sm:$0xf]
  %v795 = vld [vmem:[%s1 + $0x30] sm:$0xf]
  %v796 = vld [vmem:[%s1 + $0x34] sm:$0xf]
  %v797 = vld [vmem:[%s1 + $0x38] sm:$0xf]
  %v798 = vld [vmem:[%s1 + $0x3c] sm:$0xf]
  %v799 = vld [vmem:[%s2] sm:$0x1]
  %v801 = vlaneseq
  %v802 = vshrl.u32 %v801, 7
  %v803 = vsub.s32 0, %v802
  %v804 = vrot.slane %v799, %v803
  %v806 = vpack.i.b16 %v686, %v685
  %v807 = vpack.i.b16 %v688, %v687
  %v808 = vpack.i.b16 %v690, %v689
  %v809 = vpack.i.b16 %v692, %v691
  %v810 = vpack.i.b16 %v694, %v693
  %v811 = vpack.i.b16 %v696, %v695
  %v812 = vpack.i.b16 %v698, %v697
  %v813 = vpack.i.b16 %v700, %v699
  %v814 = vpack.i.b16 %v702, %v701
  %v815 = vpack.i.b16 %v704, %v703
  %v816 = vpack.i.b16 %v706, %v705
  %v817 = vpack.i.b16 %v708, %v707
  %v818 = vpack.i.b16 %v710, %v709
  %v819 = vpack.i.b16 %v712, %v711
  %v820 = vpack.i.b16 %v714, %v713
  %v821 = vpack.i.b16 %v716, %v715
  %v822 = vpack.i.b16 %v718, %v717
  %v823 = vpack.i.b16 %v720, %v719
  %v824 = vpack.i.b16 %v722, %v721
  %v825 = vpack.i.b16 %v724, %v723
  %v826 = vpack.i.b16 %v726, %v725
  %v827 = vpack.i.b16 %v728, %v727
  %v828 = vpack.i.b16 %v730, %v729
  %v829 = vpack.i.b16 %v732, %v731
  %v830 = vpack.i.b16 %v734, %v733
  %v831 = vpack.i.b16 %v736, %v735
  %v832 = vpack.i.b16 %v738, %v737
  %v833 = vpack.i.b16 %v740, %v739
  %v834 = vpack.i.b16 %v742, %v741
  %v835 = vpack.i.b16 %v744, %v743
  %v836 = vpack.i.b16 %v746, %v745
  %v837 = vpack.i.b16 %v748, %v747
  %v838 = vpack.i.b16 %v750, %v749
  %v839 = vpack.i.b16 %v752, %v751
  %v840 = vpack.i.b16 %v754, %v753
  %v841 = vpack.i.b16 %v756, %v755
  %v842 = vpack.i.b16 %v758, %v757
  %v843 = vpack.i.b16 %v760, %v759
  %v844 = vpack.i.b16 %v762, %v761
  %v845 = vpack.i.b16 %v764, %v763
  %v846 = vpack.i.b16 %v766, %v765
  %v847 = vpack.i.b16 %v768, %v767
  %v848 = vpack.i.b16 %v770, %v769
  %v849 = vpack.i.b16 %v772, %v771
  %v850 = vpack.i.b16 %v774, %v773
  %v851 = vpack.i.b16 %v776, %v775
  %v852 = vpack.i.b16 %v778, %v777
  %v853 = vpack.i.b16 %v780, %v779
  %v854 = vpack.i.b16 %v782, %v781
  %v855 = vcombine.low %v806, %v807
  %v856 = vcombine.low %v808, %v809
  %v857 = vcombine.low %v810, %v811
  %v858 = vcombine.low %v812, %v813
  %v860 = vunpack.c.l.s4 1966171168
  %v861 = vunpack.c.0.s8 %v860
  %v862 = vlaneseq
  %v863 = vshrl.u32 %v862, 7
  %v864 = vsub.s32 %v861, %v863
  %v865 = vrot.slane %v855, %v864
  %v867 = vunpack.c.l.s4 1966171168
  %v868 = vunpack.c.0.s8 %v867
  %v869 = vlaneseq
  %v870 = vshrl.u32 %v869, 7
  %v871 = vsub.s32 %v868, %v870
  %v872 = vrot.slane %v856, %v871
  %v874 = vunpack.c.l.s4 1966171168
  %v875 = vunpack.c.0.s8 %v874
  %v876 = vlaneseq
  %v877 = vshrl.u32 %v876, 7
  %v878 = vsub.s32 %v875, %v877
  %v879 = vrot.slane %v857, %v878
  %v881 = vunpack.c.l.s4 1966171168
  %v882 = vunpack.c.0.s8 %v881
  %v883 = vlaneseq
  %v884 = vshrl.u32 %v883, 7
  %v885 = vsub.s32 %v882, %v884
  %v886 = vrot.slane %v858, %v885
  %v887 = vcombine.low %v865, %v872
  %v888 = vcombine.low %v879, %v886
  %v890 = vunpack.c.l.s4 1966171168
  %v891 = vunpack.c.0.s8 %v890
  %v892 = vlaneseq
  %v893 = vshrl.u32 %v892, 7
  %v894 = vsub.s32 %v891, %v893
  %v895 = vrot.slane %v887, %v894
  %v897 = vunpack.c.l.s4 1966171168
  %v898 = vunpack.c.0.s8 %v897
  %v899 = vlaneseq
  %v900 = vshrl.u32 %v899, 7
  %v901 = vsub.s32 %v898, %v900
  %v902 = vrot.slane %v888, %v901
  %v903 = vcombine.low %v895, %v902
  %v904 = vcombine.low %v814, %v815
  %v905 = vcombine.low %v816, %v817
  %v906 = vcombine.low %v818, %v819
  %v907 = vcombine.low %v820, %v821
  %v909 = vunpack.c.l.s4 1966171168
  %v910 = vunpack.c.0.s8 %v909
  %v911 = vlaneseq
  %v912 = vshrl.u32 %v911, 7
  %v913 = vsub.s32 %v910, %v912
  %v914 = vrot.slane %v904, %v913
  %v916 = vunpack.c.l.s4 1966171168
  %v917 = vunpack.c.0.s8 %v916
  %v918 = vlaneseq
  %v919 = vshrl.u32 %v918, 7
  %v920 = vsub.s32 %v917, %v919
  %v921 = vrot.slane %v905, %v920
  %v923 = vunpack.c.l.s4 1966171168
  %v924 = vunpack.c.0.s8 %v923
  %v925 = vlaneseq
  %v926 = vshrl.u32 %v925, 7
  %v927 = vsub.s32 %v924, %v926
  %v928 = vrot.slane %v906, %v927
  %v930 = vunpack.c.l.s4 1966171168
  %v931 = vunpack.c.0.s8 %v930
  %v932 = vlaneseq
  %v933 = vshrl.u32 %v932, 7
  %v934 = vsub.s32 %v931, %v933
  %v935 = vrot.slane %v907, %v934
  %v936 = vcombine.low %v914, %v921
  %v937 = vcombine.low %v928, %v935
  %v939 = vunpack.c.l.s4 1966171168
  %v940 = vunpack.c.0.s8 %v939
  %v941 = vlaneseq
  %v942 = vshrl.u32 %v941, 7
  %v943 = vsub.s32 %v940, %v942
  %v944 = vrot.slane %v936, %v943
  %v946 = vunpack.c.l.s4 1966171168
  %v947 = vunpack.c.0.s8 %v946
  %v948 = vlaneseq
  %v949 = vshrl.u32 %v948, 7
  %v950 = vsub.s32 %v947, %v949
  %v951 = vrot.slane %v937, %v950
  %v952 = vcombine.low %v944, %v951
  %v953 = vcombine.low %v822, %v823
  %v954 = vcombine.low %v824, %v825
  %v955 = vcombine.low %v826, %v827
  %v956 = vcombine.low %v828, %v829
  %v958 = vunpack.c.l.s4 1966171168
  %v959 = vunpack.c.0.s8 %v958
  %v960 = vlaneseq
  %v961 = vshrl.u32 %v960, 7
  %v962 = vsub.s32 %v959, %v961
  %v963 = vrot.slane %v953, %v962
  %v965 = vunpack.c.l.s4 1966171168
  %v966 = vunpack.c.0.s8 %v965
  %v967 = vlaneseq
  %v968 = vshrl.u32 %v967, 7
  %v969 = vsub.s32 %v966, %v968
  %v970 = vrot.slane %v954, %v969
  %v972 = vunpack.c.l.s4 1966171168
  %v973 = vunpack.c.0.s8 %v972
  %v974 = vlaneseq
  %v975 = vshrl.u32 %v974, 7
  %v976 = vsub.s32 %v973, %v975
  %v977 = vrot.slane %v955, %v976
  %v979 = vunpack.c.l.s4 1966171168
  %v980 = vunpack.c.0.s8 %v979
  %v981 = vlaneseq
  %v982 = vshrl.u32 %v981, 7
  %v983 = vsub.s32 %v980, %v982
  %v984 = vrot.slane %v956, %v983
  %v985 = vcombine.low %v963, %v970
  %v986 = vcombine.low %v977, %v984
  %v988 = vunpack.c.l.s4 1966171168
  %v989 = vunpack.c.0.s8 %v988
  %v990 = vlaneseq
  %v991 = vshrl.u32 %v990, 7
  %v992 = vsub.s32 %v989, %v991
  %v993 = vrot.slane %v985, %v992
  %v995 = vunpack.c.l.s4 1966171168
  %v996 = vunpack.c.0.s8 %v995
  %v997 = vlaneseq
  %v998 = vshrl.u32 %v997, 7
  %v999 = vsub.s32 %v996, %v998
  %v1000 = vrot.slane %v986, %v999
  %v1001 = vcombine.low %v993, %v1000
  %v1002 = vcombine.low %v830, %v831
  %v1003 = vcombine.low %v832, %v833
  %v1004 = vcombine.low %v834, %v835
  %v1005 = vcombine.low %v836, %v837
  %v1007 = vunpack.c.l.s4 1966171168
  %v1008 = vunpack.c.0.s8 %v1007
  %v1009 = vlaneseq
  %v1010 = vshrl.u32 %v1009, 7
  %v1011 = vsub.s32 %v1008, %v1010
  %v1012 = vrot.slane %v1002, %v1011
  %v1014 = vunpack.c.l.s4 1966171168
  %v1015 = vunpack.c.0.s8 %v1014
  %v1016 = vlaneseq
  %v1017 = vshrl.u32 %v1016, 7
  %v1018 = vsub.s32 %v1015, %v1017
  %v1019 = vrot.slane %v1003, %v1018
  %v1021 = vunpack.c.l.s4 1966171168
  %v1022 = vunpack.c.0.s8 %v1021
  %v1023 = vlaneseq
  %v1024 = vshrl.u32 %v1023, 7
  %v1025 = vsub.s32 %v1022, %v1024
  %v1026 = vrot.slane %v1004, %v1025
  %v1028 = vunpack.c.l.s4 1966171168
  %v1029 = vunpack.c.0.s8 %v1028
  %v1030 = vlaneseq
  %v1031 = vshrl.u32 %v1030, 7
  %v1032 = vsub.s32 %v1029, %v1031
  %v1033 = vrot.slane %v1005, %v1032
  %v1034 = vcombine.low %v1012, %v1019
  %v1035 = vcombine.low %v1026, %v1033
  %v1037 = vunpack.c.l.s4 1966171168
  %v1038 = vunpack.c.0.s8 %v1037
  %v1039 = vlaneseq
  %v1040 = vshrl.u32 %v1039, 7
  %v1041 = vsub.s32 %v1038, %v1040
  %v1042 = vrot.slane %v1034, %v1041
  %v1044 = vunpack.c.l.s4 1966171168
  %v1045 = vunpack.c.0.s8 %v1044
  %v1046 = vlaneseq
  %v1047 = vshrl.u32 %v1046, 7
  %v1048 = vsub.s32 %v1045, %v1047
  %v1049 = vrot.slane %v1035, %v1048
  %v1050 = vcombine.low %v1042, %v1049
  %v1051 = vcombine.low %v838, %v839
  %v1052 = vcombine.low %v840, %v841
  %v1053 = vcombine.low %v842, %v843
  %v1054 = vcombine.low %v844, %v845
  %v1056 = vunpack.c.l.s4 1966171168
  %v1057 = vunpack.c.0.s8 %v1056
  %v1058 = vlaneseq
  %v1059 = vshrl.u32 %v1058, 7
  %v1060 = vsub.s32 %v1057, %v1059
  %v1061 = vrot.slane %v1051, %v1060
  %v1063 = vunpack.c.l.s4 1966171168
  %v1064 = vunpack.c.0.s8 %v1063
  %v1065 = vlaneseq
  %v1066 = vshrl.u32 %v1065, 7
  %v1067 = vsub.s32 %v1064, %v1066
  %v1068 = vrot.slane %v1052, %v1067
  %v1070 = vunpack.c.l.s4 1966171168
  %v1071 = vunpack.c.0.s8 %v1070
  %v1072 = vlaneseq
  %v1073 = vshrl.u32 %v1072, 7
  %v1074 = vsub.s32 %v1071, %v1073
  %v1075 = vrot.slane %v1053, %v1074
  %v1077 = vunpack.c.l.s4 1966171168
  %v1078 = vunpack.c.0.s8 %v1077
  %v1079 = vlaneseq
  %v1080 = vshrl.u32 %v1079, 7
  %v1081 = vsub.s32 %v1078, %v1080
  %v1082 = vrot.slane %v1054, %v1081
  %v1083 = vcombine.low %v1061, %v1068
  %v1084 = vcombine.low %v1075, %v1082
  %v1086 = vunpack.c.l.s4 1966171168
  %v1087 = vunpack.c.0.s8 %v1086
  %v1088 = vlaneseq
  %v1089 = vshrl.u32 %v1088, 7
  %v1090 = vsub.s32 %v1087, %v1089
  %v1091 = vrot.slane %v1083, %v1090
  %v1093 = vunpack.c.l.s4 1966171168
  %v1094 = vunpack.c.0.s8 %v1093
  %v1095 = vlaneseq
  %v1096 = vshrl.u32 %v1095, 7
  %v1097 = vsub.s32 %v1094, %v1096
  %v1098 = vrot.slane %v1084, %v1097
  %v1099 = vcombine.low %v1091, %v1098
  %v1100 = vcombine.low %v846, %v847
  %v1101 = vcombine.low %v848, %v849
  %v1102 = vcombine.low %v850, %v851
  %v1103 = vcombine.low %v852, %v853
  %v1105 = vunpack.c.l.s4 1966171168
  %v1106 = vunpack.c.0.s8 %v1105
  %v1107 = vlaneseq
  %v1108 = vshrl.u32 %v1107, 7
  %v1109 = vsub.s32 %v1106, %v1108
  %v1110 = vrot.slane %v1100, %v1109
  %v1112 = vunpack.c.l.s4 1966171168
  %v1113 = vunpack.c.0.s8 %v1112
  %v1114 = vlaneseq
  %v1115 = vshrl.u32 %v1114, 7
  %v1116 = vsub.s32 %v1113, %v1115
  %v1117 = vrot.slane %v1101, %v1116
  %v1119 = vunpack.c.l.s4 1966171168
  %v1120 = vunpack.c.0.s8 %v1119
  %v1121 = vlaneseq
  %v1122 = vshrl.u32 %v1121, 7
  %v1123 = vsub.s32 %v1120, %v1122
  %v1124 = vrot.slane %v1102, %v1123
  %v1126 = vunpack.c.l.s4 1966171168
  %v1127 = vunpack.c.0.s8 %v1126
  %v1128 = vlaneseq
  %v1129 = vshrl.u32 %v1128, 7
  %v1130 = vsub.s32 %v1127, %v1129
  %v1131 = vrot.slane %v1103, %v1130
  %v1132 = vcombine.low %v1110, %v1117
  %v1133 = vcombine.low %v1124, %v1131
  %v1135 = vunpack.c.l.s4 1966171168
  %v1136 = vunpack.c.0.s8 %v1135
  %v1137 = vlaneseq
  %v1138 = vshrl.u32 %v1137, 7
  %v1139 = vsub.s32 %v1136, %v1138
  %v1140 = vrot.slane %v1132, %v1139
  %v1142 = vunpack.c.l.s4 1966171168
  %v1143 = vunpack.c.0.s8 %v1142
  %v1144 = vlaneseq
  %v1145 = vshrl.u32 %v1144, 7
  %v1146 = vsub.s32 %v1143, %v1145
  %v1147 = vrot.slane %v1133, %v1146
  %v1148 = vcombine.low %v1140, %v1147
  %v1150 = vunpack.c.l.s4 1966171168
  %v1151 = vunpack.c.0.s8 %v1150
  %v1152 = vlaneseq
  %v1153 = vshrl.u32 %v1152, 7
  %v1154 = vsub.s32 %v1151, %v1153
  %v1155 = vrot.slane %v854, %v1154
  %v1157 = vunpack.c.l.s4 1966171168
  %v1158 = vunpack.c.0.s8 %v1157
  %v1159 = vlaneseq
  %v1160 = vshrl.u32 %v1159, 7
  %v1161 = vsub.s32 %v1158, %v1160
  %v1162 = vrot.slane %v1155, %v1161
  %v1186 = vunpack.c.l.b16 %v783
  %v1187 = vunpack.c.l.b16 %v784
  %v1188 = vunpack.c.l.b16 %v785
  %v1189 = vunpack.c.l.b16 %v786
  %v1190 = vunpack.c.l.b16 %v787
  %v1191 = vunpack.c.l.b16 %v788
  %v1192 = vunpack.c.l.b16 %v789
  %v1193 = vunpack.c.l.b16 %v790
  %v1194 = vunpack.c.l.b16 %v791
  %v1195 = vunpack.c.l.b16 %v792
  %v1196 = vunpack.c.l.b16 %v793
  %v1197 = vunpack.c.l.b16 %v794
  %v1198 = vunpack.c.l.b16 %v795
  %v1199 = vunpack.c.l.b16 %v796
  %v1200 = vunpack.c.l.b16 %v797
  %v1201 = vunpack.c.l.b16 %v798
  %v1202 = vpack.c.b16 %v1187, %v1186
  %v1203 = vpack.c.b16 %v1189, %v1188
  %v1204 = vpack.c.b16 %v1191, %v1190
  %v1205 = vpack.c.b16 %v1193, %v1192
  %v1206 = vpack.c.b16 %v1195, %v1194
  %v1207 = vpack.c.b16 %v1197, %v1196
  %v1208 = vpack.c.b16 %v1199, %v1198
  %v1209 = vpack.c.b16 %v1201, %v1200
  %1218 = vmatprep.subr.bf16.mxu0 0
  %1219 = vmatpush1.bf16.msra.mxu0 %v1202
  %1220 = vmatprep.subr.bf16.mxu0 0
  %1221 = vmatpush1.bf16.msra.mxu0 %v1203
  %1222 = vmatprep.subr.bf16.mxu0 0
  %1223 = vmatpush1.bf16.msra.mxu0 %v1204
  %1224 = vmatprep.subr.bf16.mxu0 0
  %1225 = vmatpush1.bf16.msra.mxu0 %v1205
  %1226 = vmatprep.subr.bf16.mxu0 0
  %1227 = vmatpush1.bf16.msra.mxu0 %v1206
  %1228 = vmatprep.subr.bf16.mxu0 0
  %1229 = vmatpush1.bf16.msra.mxu0 %v1207
  %1230 = vmatprep.subr.bf16.mxu0 0
  %1231 = vmatpush1.bf16.msra.mxu0 %v1208
  %1232 = vmatprep.subr.bf16.mxu0 0
  %1233 = vmatpush1.bf16.msra.mxu0 %v1209
  %1234 = vmatprep.subr.bf16.mxu0 0
  %1235 = vmatpush1.bf16.msra.mxu0 0
  %1236 = vmatprep.subr.bf16.mxu0 0
  %1237 = vmatpush1.bf16.msra.mxu0 0
  %1238 = vmatprep.subr.bf16.mxu0 0
  %1239 = vmatpush1.bf16.msra.mxu0 0
  %1240 = vmatprep.subr.bf16.mxu0 0
  %1241 = vmatpush1.bf16.msra.mxu0 0
  %1242 = vmatprep.subr.bf16.mxu0 0
  %1243 = vmatpush1.bf16.msra.mxu0 0
  %1244 = vmatprep.subr.bf16.mxu0 0
  %1245 = vmatpush1.bf16.msra.mxu0 0
  %1246 = vmatprep.subr.bf16.mxu0 0
  %1247 = vmatpush1.bf16.msra.mxu0 0
  %1248 = vmatprep.subr.bf16.mxu0 0
  %1249 = vmatpush1.bf16.msra.mxu0 0
  %1250 = vmatprep.mubr.bf16.mxu0 0
  %1251 = vmatmul.mubr.bf16.gmra.mrb[0].mxu0 %v903
  %v1252 = vpop.f32.mrb[0].mxu0
  %v1253 = vadd.f32 %v804, %v1252
  %v1254 = vpop.f32.mrb[0].mxu0
  %v1255 = vpop.f32.mrb[0].mxu0
  %v1256 = vadd.f32 %v804, %v1255
  %v1257 = vpop.f32.mrb[0].mxu0
  %1258 = vmatprep.mubr.bf16.mxu0 0
  %1259 = vmatmul.mubr.bf16.gmra.mrb[0].mxu0 %v952
  %v1260 = vpop.f32.mrb[0].mxu0
  %v1261 = vadd.f32 %v804, %v1260
  %v1262 = vpop.f32.mrb[0].mxu0
  %v1263 = vpop.f32.mrb[0].mxu0
  %v1264 = vadd.f32 %v804, %v1263
  %v1265 = vpop.f32.mrb[0].mxu0
  %1266 = vmatprep.mubr.bf16.mxu0 0
  %1267 = vmatmul.mubr.bf16.gmra.mrb[0].mxu0 %v1001
  %v1268 = vpop.f32.mrb[0].mxu0
  %v1269 = vadd.f32 %v804, %v1268
  %v1270 = vpop.f32.mrb[0].mxu0
  %v1271 = vpop.f32.mrb[0].mxu0
  %v1272 = vadd.f32 %v804, %v1271
  %v1273 = vpop.f32.mrb[0].mxu0
  %1274 = vmatprep.mubr.bf16.mxu0 0
  %1275 = vmatmul.mubr.bf16.gmra.mrb[0].mxu0 %v1050
  %v1276 = vpop.f32.mrb[0].mxu0
  %v1277 = vadd.f32 %v804, %v1276
  %v1278 = vpop.f32.mrb[0].mxu0
  %v1279 = vpop.f32.mrb[0].mxu0
  %v1280 = vadd.f32 %v804, %v1279
  %v1281 = vpop.f32.mrb[0].mxu0
  %1282 = vmatprep.mubr.bf16.mxu0 0
  %1283 = vmatmul.mubr.bf16.gmra.mrb[0].mxu0 %v1099
  %v1284 = vpop.f32.mrb[0].mxu0
  %v1285 = vadd.f32 %v804, %v1284
  %v1286 = vpop.f32.mrb[0].mxu0
  %v1287 = vpop.f32.mrb[0].mxu0
  %v1288 = vadd.f32 %v804, %v1287
  %v1289 = vpop.f32.mrb[0].mxu0
  %1290 = vmatprep.mubr.bf16.mxu0 0
  %1291 = vmatmul.mubr.bf16.gmra.mrb[0].mxu0 %v1148
  %v1292 = vpop.f32.mrb[0].mxu0
  %v1293 = vadd.f32 %v804, %v1292
  %v1294 = vpop.f32.mrb[0].mxu0
  %v1295 = vpop.f32.mrb[0].mxu0
  %v1296 = vadd.f32 %v804, %v1295
  %v1297 = vpop.f32.mrb[0].mxu0
  %1298 = vmatprep.mubr.bf16.mxu0 0
  %1299 = vmatmul.mubr.bf16.gmra.mrb[0].mxu0 %v1162
  %v1300 = vpop.f32.mrb[0].mxu0
  %v1301 = vadd.f32 %v804, %v1300
  %v1302 = vpop.f32.mrb[0].mxu0
  %v1303 = vpop.f32.mrb[0].mxu0
  %v1304 = vpop.f32.mrb[0].mxu0
  %1305 = vdwg.mxu0
  %v1306 = vmax.f32 %v1253, 0.0
  %v1307 = vmax.f32 %v1256, 0.0
  %v1308 = vmax.f32 %v1261, 0.0
  %v1309 = vmax.f32 %v1264, 0.0
  %v1310 = vmax.f32 %v1269, 0.0
  %v1311 = vmax.f32 %v1272, 0.0
  %v1312 = vmax.f32 %v1277, 0.0
  %v1313 = vmax.f32 %v1280, 0.0
  %v1314 = vmax.f32 %v1285, 0.0
  %v1315 = vmax.f32 %v1288, 0.0
  %v1316 = vmax.f32 %v1293, 0.0
  %v1317 = vmax.f32 %v1296, 0.0
  %v1318 = vmax.f32 %v1301, 0.0
  %v1319 = vpack.c.bf16 %v1307, %v1306
  %v1320 = vpack.c.bf16 %v1309, %v1308
  %v1321 = vpack.c.bf16 %v1311, %v1310
  %v1322 = vpack.c.bf16 %v1313, %v1312
  %v1323 = vpack.c.bf16 %v1315, %v1314
  %v1324 = vpack.c.bf16 %v1317, %v1316
  %v1325 = vpack.c.bf16 %v1318, %v1318
  %v1333 = vcombine.high %v1319, %v1319
  %v1335 = vunpack.c.l.s4 1966171168
  %v1336 = vunpack.c.0.s8 %v1335
  %v1337 = vlaneseq
  %v1338 = vshrl.u32 %v1337, 7
  %v1339 = vsub.s32 %v1336, %v1338
  %v1340 = vrot.slane %v1319, %v1339
  %v1342 = vunpack.c.l.s4 1966171168
  %v1343 = vunpack.c.0.s8 %v1342
  %v1344 = vlaneseq
  %v1345 = vshrl.u32 %v1344, 7
  %v1346 = vsub.s32 %v1343, %v1345
  %v1347 = vrot.slane %v1333, %v1346
  %v1348 = vcombine.high %v1340, %v1340
  %v1349 = vcombine.high %v1347, %v1347
  %v1351 = vunpack.c.l.s4 1966171168
  %v1352 = vunpack.c.0.s8 %v1351
  %v1353 = vlaneseq
  %v1354 = vshrl.u32 %v1353, 7
  %v1355 = vsub.s32 %v1352, %v1354
  %v1356 = vrot.slane %v1340, %v1355
  %v1358 = vunpack.c.l.s4 1966171168
  %v1359 = vunpack.c.0.s8 %v1358
  %v1360 = vlaneseq
  %v1361 = vshrl.u32 %v1360, 7
  %v1362 = vsub.s32 %v1359, %v1361
  %v1363 = vrot.slane %v1347, %v1362
  %v1365 = vunpack.c.l.s4 1966171168
  %v1366 = vunpack.c.0.s8 %v1365
  %v1367 = vlaneseq
  %v1368 = vshrl.u32 %v1367, 7
  %v1369 = vsub.s32 %v1366, %v1368
  %v1370 = vrot.slane %v1348, %v1369
  %v1372 = vunpack.c.l.s4 1966171168
  %v1373 = vunpack.c.0.s8 %v1372
  %v1374 = vlaneseq
  %v1375 = vshrl.u32 %v1374, 7
  %v1376 = vsub.s32 %v1373, %v1375
  %v1377 = vrot.slane %v1349, %v1376
  %v1378 = vcombine.high %v1356, %v1356
  %v1379 = vcombine.high %v1363, %v1363
  %v1380 = vcombine.high %v1370, %v1370
  %v1381 = vcombine.high %v1377, %v1377
  %v1382 = vcombine.high %v1320, %v1320
  %v1384 = vunpack.c.l.s4 1966171168
  %v1385 = vunpack.c.0.s8 %v1384
  %v1386 = vlaneseq
  %v1387 = vshrl.u32 %v1386, 7
  %v1388 = vsub.s32 %v1385, %v1387
  %v1389 = vrot.slane %v1320, %v1388
  %v1391 = vunpack.c.l.s4 1966171168
  %v1392 = vunpack.c.0.s8 %v1391
  %v1393 = vlaneseq
  %v1394 = vshrl.u32 %v1393, 7
  %v1395 = vsub.s32 %v1392, %v1394
  %v1396 = vrot.slane %v1382, %v1395
  %v1397 = vcombine.high %v1389, %v1389
  %v1398 = vcombine.high %v1396, %v1396
  %v1400 = vunpack.c.l.s4 1966171168
  %v1401 = vunpack.c.0.s8 %v1400
  %v1402 = vlaneseq
  %v1403 = vshrl.u32 %v1402, 7
  %v1404 = vsub.s32 %v1401, %v1403
  %v1405 = vrot.slane %v1389, %v1404
  %v1407 = vunpack.c.l.s4 1966171168
  %v1408 = vunpack.c.0.s8 %v1407
  %v1409 = vlaneseq
  %v1410 = vshrl.u32 %v1409, 7
  %v1411 = vsub.s32 %v1408, %v1410
  %v1412 = vrot.slane %v1396, %v1411
  %v1414 = vunpack.c.l.s4 1966171168
  %v1415 = vunpack.c.0.s8 %v1414
  %v1416 = vlaneseq
  %v1417 = vshrl.u32 %v1416, 7
  %v1418 = vsub.s32 %v1415, %v1417
  %v1419 = vrot.slane %v1397, %v1418
  %v1421 = vunpack.c.l.s4 1966171168
  %v1422 = vunpack.c.0.s8 %v1421
  %v1423 = vlaneseq
  %v1424 = vshrl.u32 %v1423, 7
  %v1425 = vsub.s32 %v1422, %v1424
  %v1426 = vrot.slane %v1398, %v1425
  %v1427 = vcombine.high %v1405, %v1405
  %v1428 = vcombine.high %v1412, %v1412
  %v1429 = vcombine.high %v1419, %v1419
  %v1430 = vcombine.high %v1426, %v1426
  %v1431 = vcombine.high %v1321, %v1321
  %v1433 = vunpack.c.l.s4 1966171168
  %v1434 = vunpack.c.0.s8 %v1433
  %v1435 = vlaneseq
  %v1436 = vshrl.u32 %v1435, 7
  %v1437 = vsub.s32 %v1434, %v1436
  %v1438 = vrot.slane %v1321, %v1437
  %v1440 = vunpack.c.l.s4 1966171168
  %v1441 = vunpack.c.0.s8 %v1440
  %v1442 = vlaneseq
  %v1443 = vshrl.u32 %v1442, 7
  %v1444 = vsub.s32 %v1441, %v1443
  %v1445 = vrot.slane %v1431, %v1444
  %v1446 = vcombine.high %v1438, %v1438
  %v1447 = vcombine.high %v1445, %v1445
  %v1449 = vunpack.c.l.s4 1966171168
  %v1450 = vunpack.c.0.s8 %v1449
  %v1451 = vlaneseq
  %v1452 = vshrl.u32 %v1451, 7
  %v1453 = vsub.s32 %v1450, %v1452
  %v1454 = vrot.slane %v1438, %v1453
  %v1456 = vunpack.c.l.s4 1966171168
  %v1457 = vunpack.c.0.s8 %v1456
  %v1458 = vlaneseq
  %v1459 = vshrl.u32 %v1458, 7
  %v1460 = vsub.s32 %v1457, %v1459
  %v1461 = vrot.slane %v1445, %v1460
  %v1463 = vunpack.c.l.s4 1966171168
  %v1464 = vunpack.c.0.s8 %v1463
  %v1465 = vlaneseq
  %v1466 = vshrl.u32 %v1465, 7
  %v1467 = vsub.s32 %v1464, %v1466
  %v1468 = vrot.slane %v1446, %v1467
  %v1470 = vunpack.c.l.s4 1966171168
  %v1471 = vunpack.c.0.s8 %v1470
  %v1472 = vlaneseq
  %v1473 = vshrl.u32 %v1472, 7
  %v1474 = vsub.s32 %v1471, %v1473
  %v1475 = vrot.slane %v1447, %v1474
  %v1476 = vcombine.high %v1454, %v1454
  %v1477 = vcombine.high %v1461, %v1461
  %v1478 = vcombine.high %v1468, %v1468
  %v1479 = vcombine.high %v1475, %v1475
  %v1480 = vcombine.high %v1322, %v1322
  %v1482 = vunpack.c.l.s4 1966171168
  %v1483 = vunpack.c.0.s8 %v1482
  %v1484 = vlaneseq
  %v1485 = vshrl.u32 %v1484, 7
  %v1486 = vsub.s32 %v1483, %v1485
  %v1487 = vrot.slane %v1322, %v1486
  %v1489 = vunpack.c.l.s4 1966171168
  %v1490 = vunpack.c.0.s8 %v1489
  %v1491 = vlaneseq
  %v1492 = vshrl.u32 %v1491, 7
  %v1493 = vsub.s32 %v1490, %v1492
  %v1494 = vrot.slane %v1480, %v1493
  %v1495 = vcombine.high %v1487, %v1487
  %v1496 = vcombine.high %v1494, %v1494
  %v1498 = vunpack.c.l.s4 1966171168
  %v1499 = vunpack.c.0.s8 %v1498
  %v1500 = vlaneseq
  %v1501 = vshrl.u32 %v1500, 7
  %v1502 = vsub.s32 %v1499, %v1501
  %v1503 = vrot.slane %v1487, %v1502
  %v1505 = vunpack.c.l.s4 1966171168
  %v1506 = vunpack.c.0.s8 %v1505
  %v1507 = vlaneseq
  %v1508 = vshrl.u32 %v1507, 7
  %v1509 = vsub.s32 %v1506, %v1508
  %v1510 = vrot.slane %v1494, %v1509
  %v1512 = vunpack.c.l.s4 1966171168
  %v1513 = vunpack.c.0.s8 %v1512
  %v1514 = vlaneseq
  %v1515 = vshrl.u32 %v1514, 7
  %v1516 = vsub.s32 %v1513, %v1515
  %v1517 = vrot.slane %v1495, %v1516
  %v1519 = vunpack.c.l.s4 1966171168
  %v1520 = vunpack.c.0.s8 %v1519
  %v1521 = vlaneseq
  %v1522 = vshrl.u32 %v1521, 7
  %v1523 = vsub.s32 %v1520, %v1522
  %v1524 = vrot.slane %v1496, %v1523
  %v1525 = vcombine.high %v1503, %v1503
  %v1526 = vcombine.high %v1510, %v1510
  %v1527 = vcombine.high %v1517, %v1517
  %v1528 = vcombine.high %v1524, %v1524
  %v1529 = vcombine.high %v1323, %v1323
  %v1531 = vunpack.c.l.s4 1966171168
  %v1532 = vunpack.c.0.s8 %v1531
  %v1533 = vlaneseq
  %v1534 = vshrl.u32 %v1533, 7
  %v1535 = vsub.s32 %v1532, %v1534
  %v1536 = vrot.slane %v1323, %v1535
  %v1538 = vunpack.c.l.s4 1966171168
  %v1539 = vunpack.c.0.s8 %v1538
  %v1540 = vlaneseq
  %v1541 = vshrl.u32 %v1540, 7
  %v1542 = vsub.s32 %v1539, %v1541
  %v1543 = vrot.slane %v1529, %v1542
  %v1544 = vcombine.high %v1536, %v1536
  %v1545 = vcombine.high %v1543, %v1543
  %v1547 = vunpack.c.l.s4 1966171168
  %v1548 = vunpack.c.0.s8 %v1547
  %v1549 = vlaneseq
  %v1550 = vshrl.u32 %v1549, 7
  %v1551 = vsub.s32 %v1548, %v1550
  %v1552 = vrot.slane %v1536, %v1551
  %v1554 = vunpack.c.l.s4 1966171168
  %v1555 = vunpack.c.0.s8 %v1554
  %v1556 = vlaneseq
  %v1557 = vshrl.u32 %v1556, 7
  %v1558 = vsub.s32 %v1555, %v1557
  %v1559 = vrot.slane %v1543, %v1558
  %v1561 = vunpack.c.l.s4 1966171168
  %v1562 = vunpack.c.0.s8 %v1561
  %v1563 = vlaneseq
  %v1564 = vshrl.u32 %v1563, 7
  %v1565 = vsub.s32 %v1562, %v1564
  %v1566 = vrot.slane %v1544, %v1565
  %v1568 = vunpack.c.l.s4 1966171168
  %v1569 = vunpack.c.0.s8 %v1568
  %v1570 = vlaneseq
  %v1571 = vshrl.u32 %v1570, 7
  %v1572 = vsub.s32 %v1569, %v1571
  %v1573 = vrot.slane %v1545, %v1572
  %v1574 = vcombine.high %v1552, %v1552
  %v1575 = vcombine.high %v1559, %v1559
  %v1576 = vcombine.high %v1566, %v1566
  %v1577 = vcombine.high %v1573, %v1573
  %v1578 = vcombine.high %v1324, %v1324
  %v1580 = vunpack.c.l.s4 1966171168
  %v1581 = vunpack.c.0.s8 %v1580
  %v1582 = vlaneseq
  %v1583 = vshrl.u32 %v1582, 7
  %v1584 = vsub.s32 %v1581, %v1583
  %v1585 = vrot.slane %v1324, %v1584
  %v1587 = vunpack.c.l.s4 1966171168
  %v1588 = vunpack.c.0.s8 %v1587
  %v1589 = vlaneseq
  %v1590 = vshrl.u32 %v1589, 7
  %v1591 = vsub.s32 %v1588, %v1590
  %v1592 = vrot.slane %v1578, %v1591
  %v1593 = vcombine.high %v1585, %v1585
  %v1594 = vcombine.high %v1592, %v1592
  %v1596 = vunpack.c.l.s4 1966171168
  %v1597 = vunpack.c.0.s8 %v1596
  %v1598 = vlaneseq
  %v1599 = vshrl.u32 %v1598, 7
  %v1600 = vsub.s32 %v1597, %v1599
  %v1601 = vrot.slane %v1585, %v1600
  %v1603 = vunpack.c.l.s4 1966171168
  %v1604 = vunpack.c.0.s8 %v1603
  %v1605 = vlaneseq
  %v1606 = vshrl.u32 %v1605, 7
  %v1607 = vsub.s32 %v1604, %v1606
  %v1608 = vrot.slane %v1592, %v1607
  %v1610 = vunpack.c.l.s4 1966171168
  %v1611 = vunpack.c.0.s8 %v1610
  %v1612 = vlaneseq
  %v1613 = vshrl.u32 %v1612, 7
  %v1614 = vsub.s32 %v1611, %v1613
  %v1615 = vrot.slane %v1593, %v1614
  %v1617 = vunpack.c.l.s4 1966171168
  %v1618 = vunpack.c.0.s8 %v1617
  %v1619 = vlaneseq
  %v1620 = vshrl.u32 %v1619, 7
  %v1621 = vsub.s32 %v1618, %v1620
  %v1622 = vrot.slane %v1594, %v1621
  %v1623 = vcombine.high %v1601, %v1601
  %v1624 = vcombine.high %v1608, %v1608
  %v1625 = vcombine.high %v1615, %v1615
  %v1626 = vcombine.high %v1622, %v1622
  %v1628 = vunpack.c.l.s4 1966171168
  %v1629 = vunpack.c.0.s8 %v1628
  %v1630 = vlaneseq
  %v1631 = vshrl.u32 %v1630, 7
  %v1632 = vsub.s32 %v1629, %v1631
  %v1633 = vrot.slane %v1325, %v1632
  %v1635 = vunpack.c.l.s4 1966171168
  %v1636 = vunpack.c.0.s8 %v1635
  %v1637 = vlaneseq
  %v1638 = vshrl.u32 %v1637, 7
  %v1639 = vsub.s32 %v1636, %v1638
  %v1640 = vrot.slane %v1633, %v1639
  %v1641 = vunpack.i.l.s16 %v1356
  %v1642 = vunpack.i.h.s16 %v1356
  %v1643 = vunpack.i.l.s16 %v1370
  %v1644 = vunpack.i.h.s16 %v1370
  %v1645 = vunpack.i.l.s16 %v1378
  %v1646 = vunpack.i.h.s16 %v1378
  %v1647 = vunpack.i.l.s16 %v1380
  %v1648 = vunpack.i.h.s16 %v1380
  %v1649 = vunpack.i.l.s16 %v1363
  %v1650 = vunpack.i.h.s16 %v1363
  %v1651 = vunpack.i.l.s16 %v1377
  %v1652 = vunpack.i.h.s16 %v1377
  %v1653 = vunpack.i.l.s16 %v1379
  %v1654 = vunpack.i.h.s16 %v1379
  %v1655 = vunpack.i.l.s16 %v1381
  %v1656 = vunpack.i.h.s16 %v1381
  %v1657 = vunpack.i.l.s16 %v1405
  %v1658 = vunpack.i.h.s16 %v1405
  %v1659 = vunpack.i.l.s16 %v1419
  %v1660 = vunpack.i.h.s16 %v1419
  %v1661 = vunpack.i.l.s16 %v1427
  %v1662 = vunpack.i.h.s16 %v1427
  %v1663 = vunpack.i.l.s16 %v1429
  %v1664 = vunpack.i.h.s16 %v1429
  %v1665 = vunpack.i.l.s16 %v1412
  %v1666 = vunpack.i.h.s16 %v1412
  %v1667 = vunpack.i.l.s16 %v1426
  %v1668 = vunpack.i.h.s16 %v1426
  %v1669 = vunpack.i.l.s16 %v1428
  %v1670 = vunpack.i.h.s16 %v1428
  %v1671 = vunpack.i.l.s16 %v1430
  %v1672 = vunpack.i.h.s16 %v1430
  %v1673 = vunpack.i.l.s16 %v1454
  %v1674 = vunpack.i.h.s16 %v1454
  %v1675 = vunpack.i.l.s16 %v1468
  %v1676 = vunpack.i.h.s16 %v1468
  %v1677 = vunpack.i.l.s16 %v1476
  %v1678 = vunpack.i.h.s16 %v1476
  %v1679 = vunpack.i.l.s16 %v1478
  %v1680 = vunpack.i.h.s16 %v1478
  %v1681 = vunpack.i.l.s16 %v1461
  %v1682 = vunpack.i.h.s16 %v1461
  %v1683 = vunpack.i.l.s16 %v1475
  %v1684 = vunpack.i.h.s16 %v1475
  %v1685 = vunpack.i.l.s16 %v1477
  %v1686 = vunpack.i.h.s16 %v1477
  %v1687 = vunpack.i.l.s16 %v1479
  %v1688 = vunpack.i.h.s16 %v1479
  %v1689 = vunpack.i.l.s16 %v1503
  %v1690 = vunpack.i.h.s16 %v1503
  %v1691 = vunpack.i.l.s16 %v1517
  %v1692 = vunpack.i.h.s16 %v1517
  %v1693 = vunpack.i.l.s16 %v1525
  %v1694 = vunpack.i.h.s16 %v1525
  %v1695 = vunpack.i.l.s16 %v1527
  %v1696 = vunpack.i.h.s16 %v1527
  %v1697 = vunpack.i.l.s16 %v1510
  %v1698 = vunpack.i.h.s16 %v1510
  %v1699 = vunpack.i.l.s16 %v1524
  %v1700 = vunpack.i.h.s16 %v1524
  %v1701 = vunpack.i.l.s16 %v1526
  %v1702 = vunpack.i.h.s16 %v1526
  %v1703 = vunpack.i.l.s16 %v1528
  %v1704 = vunpack.i.h.s16 %v1528
  %v1705 = vunpack.i.l.s16 %v1552
  %v1706 = vunpack.i.h.s16 %v1552
  %v1707 = vunpack.i.l.s16 %v1566
  %v1708 = vunpack.i.h.s16 %v1566
  %v1709 = vunpack.i.l.s16 %v1574
  %v1710 = vunpack.i.h.s16 %v1574
  %v1711 = vunpack.i.l.s16 %v1576
  %v1712 = vunpack.i.h.s16 %v1576
  %v1713 = vunpack.i.l.s16 %v1559
  %v1714 = vunpack.i.h.s16 %v1559
  %v1715 = vunpack.i.l.s16 %v1573
  %v1716 = vunpack.i.h.s16 %v1573
  %v1717 = vunpack.i.l.s16 %v1575
  %v1718 = vunpack.i.h.s16 %v1575
  %v1719 = vunpack.i.l.s16 %v1577
  %v1720 = vunpack.i.h.s16 %v1577
  %v1721 = vunpack.i.l.s16 %v1601
  %v1722 = vunpack.i.h.s16 %v1601
  %v1723 = vunpack.i.l.s16 %v1615
  %v1724 = vunpack.i.h.s16 %v1615
  %v1725 = vunpack.i.l.s16 %v1623
  %v1726 = vunpack.i.h.s16 %v1623
  %v1727 = vunpack.i.l.s16 %v1625
  %v1728 = vunpack.i.h.s16 %v1625
  %v1729 = vunpack.i.l.s16 %v1608
  %v1730 = vunpack.i.h.s16 %v1608
  %v1731 = vunpack.i.l.s16 %v1622
  %v1732 = vunpack.i.h.s16 %v1622
  %v1733 = vunpack.i.l.s16 %v1624
  %v1734 = vunpack.i.h.s16 %v1624
  %v1735 = vunpack.i.l.s16 %v1626
  %v1736 = vunpack.i.h.s16 %v1626
  %v1737 = vunpack.i.l.s16 %v1640
  %v1738 = vunpack.i.h.s16 %v1640
  %v1739 = vunpack.c.l.b16 0
  %v1740 = vpack.i.b16 %v1642, %v1641
  %v1741 = vpack.i.b16 %v1644, %v1643
  %v1742 = vpack.i.b16 %v1646, %v1645
  %v1744 = vpack.i.b16 %v1649, %v1648
  %v1745 = vpack.i.b16 %v1651, %v1650
  %v1746 = vpack.i.b16 %v1653, %v1652
  %v1748 = vpack.i.b16 %v1656, %v1655
  %v1749 = vpack.i.b16 %v1658, %v1657
  %v1750 = vpack.i.b16 %v1660, %v1659
  %v1752 = vpack.i.b16 %v1663, %v1662
  %v1753 = vpack.i.b16 %v1665, %v1664
  %v1754 = vpack.i.b16 %v1667, %v1666
  %v1756 = vpack.i.b16 %v1670, %v1669
  %v1757 = vpack.i.b16 %v1672, %v1671
  %v1758 = vpack.i.b16 %v1674, %v1673
  %v1760 = vpack.i.b16 %v1677, %v1676
  %v1761 = vpack.i.b16 %v1679, %v1678
  %v1762 = vpack.i.b16 %v1681, %v1680
  %v1764 = vpack.i.b16 %v1684, %v1683
  %v1765 = vpack.i.b16 %v1686, %v1685
  %v1766 = vpack.i.b16 %v1688, %v1687
  %v1768 = vpack.i.b16 %v1739, %v1739
  %v1770 = vpack.i.b16 %v1691, %v1690
  %v1771 = vpack.i.b16 %v1693, %v1692
  %v1772 = vpack.i.b16 %v1695, %v1694
  %v1774 = vpack.i.b16 %v1698, %v1697
  %v1775 = vpack.i.b16 %v1700, %v1699
  %v1776 = vpack.i.b16 %v1702, %v1701
  %v1778 = vpack.i.b16 %v1705, %v1704
  %v1779 = vpack.i.b16 %v1707, %v1706
  %v1780 = vpack.i.b16 %v1709, %v1708
  %v1782 = vpack.i.b16 %v1712, %v1711
  %v1783 = vpack.i.b16 %v1714, %v1713
  %v1784 = vpack.i.b16 %v1716, %v1715
  %v1786 = vpack.i.b16 %v1719, %v1718
  %v1787 = vpack.i.b16 %v1721, %v1720
  %v1788 = vpack.i.b16 %v1723, %v1722
  %v1790 = vpack.i.b16 %v1726, %v1725
  %v1791 = vpack.i.b16 %v1728, %v1727
  %v1792 = vpack.i.b16 %v1730, %v1729
  %v1794 = vpack.i.b16 %v1733, %v1732
  %v1795 = vpack.i.b16 %v1735, %v1734
  %v1796 = vpack.i.b16 %v1737, %v1736
  %v1798 = vcombine.low %v1740, %v1741
  %v1799 = vcombine.low %v1742, %v1647
  %v1801 = vunpack.c.l.s4 1966171168
  %v1802 = vunpack.c.0.s8 %v1801
  %v1803 = vlaneseq
  %v1804 = vshrl.u32 %v1803, 7
  %v1805 = vsub.s32 %v1802, %v1804
  %v1806 = vrot.slane %v1798, %v1805
  %v1808 = vunpack.c.l.s4 1966171168
  %v1809 = vunpack.c.0.s8 %v1808
  %v1810 = vlaneseq
  %v1811 = vshrl.u32 %v1810, 7
  %v1812 = vsub.s32 %v1809, %v1811
  %v1813 = vrot.slane %v1799, %v1812
  %v1814 = vcombine.low %v1806, %v1813
  %v1816 = vunpack.c.l.s4 1966171168
  %v1817 = vunpack.c.0.s8 %v1816
  %v1818 = vlaneseq
  %v1819 = vshrl.u32 %v1818, 7
  %v1820 = vsub.s32 %v1817, %v1819
  %v1821 = vrot.slane %v1814, %v1820
  %v1822 = vcombine.low %v1744, %v1745
  %v1823 = vcombine.low %v1746, %v1654
  %v1825 = vunpack.c.l.s4 1966171168
  %v1826 = vunpack.c.0.s8 %v1825
  %v1827 = vlaneseq
  %v1828 = vshrl.u32 %v1827, 7
  %v1829 = vsub.s32 %v1826, %v1828
  %v1830 = vrot.slane %v1822, %v1829
  %v1832 = vunpack.c.l.s4 1966171168
  %v1833 = vunpack.c.0.s8 %v1832
  %v1834 = vlaneseq
  %v1835 = vshrl.u32 %v1834, 7
  %v1836 = vsub.s32 %v1833, %v1835
  %v1837 = vrot.slane %v1823, %v1836
  %v1838 = vcombine.low %v1830, %v1837
  %v1840 = vunpack.c.l.s4 1966171168
  %v1841 = vunpack.c.0.s8 %v1840
  %v1842 = vlaneseq
  %v1843 = vshrl.u32 %v1842, 7
  %v1844 = vsub.s32 %v1841, %v1843
  %v1845 = vrot.slane %v1838, %v1844
  %v1846 = vcombine.low %v1748, %v1749
  %v1847 = vcombine.low %v1750, %v1661
  %v1849 = vunpack.c.l.s4 1966171168
  %v1850 = vunpack.c.0.s8 %v1849
  %v1851 = vlaneseq
  %v1852 = vshrl.u32 %v1851, 7
  %v1853 = vsub.s32 %v1850, %v1852
  %v1854 = vrot.slane %v1846, %v1853
  %v1856 = vunpack.c.l.s4 1966171168
  %v1857 = vunpack.c.0.s8 %v1856
  %v1858 = vlaneseq
  %v1859 = vshrl.u32 %v1858, 7
  %v1860 = vsub.s32 %v1857, %v1859
  %v1861 = vrot.slane %v1847, %v1860
  %v1862 = vcombine.low %v1854, %v1861
  %v1864 = vunpack.c.l.s4 1966171168
  %v1865 = vunpack.c.0.s8 %v1864
  %v1866 = vlaneseq
  %v1867 = vshrl.u32 %v1866, 7
  %v1868 = vsub.s32 %v1865, %v1867
  %v1869 = vrot.slane %v1862, %v1868
  %v1870 = vcombine.low %v1752, %v1753
  %v1871 = vcombine.low %v1754, %v1668
  %v1873 = vunpack.c.l.s4 1966171168
  %v1874 = vunpack.c.0.s8 %v1873
  %v1875 = vlaneseq
  %v1876 = vshrl.u32 %v1875, 7
  %v1877 = vsub.s32 %v1874, %v1876
  %v1878 = vrot.slane %v1870, %v1877
  %v1880 = vunpack.c.l.s4 1966171168
  %v1881 = vunpack.c.0.s8 %v1880
  %v1882 = vlaneseq
  %v1883 = vshrl.u32 %v1882, 7
  %v1884 = vsub.s32 %v1881, %v1883
  %v1885 = vrot.slane %v1871, %v1884
  %v1886 = vcombine.low %v1878, %v1885
  %v1888 = vunpack.c.l.s4 1966171168
  %v1889 = vunpack.c.0.s8 %v1888
  %v1890 = vlaneseq
  %v1891 = vshrl.u32 %v1890, 7
  %v1892 = vsub.s32 %v1889, %v1891
  %v1893 = vrot.slane %v1886, %v1892
  %v1894 = vcombine.low %v1756, %v1757
  %v1895 = vcombine.low %v1758, %v1675
  %v1897 = vunpack.c.l.s4 1966171168
  %v1898 = vunpack.c.0.s8 %v1897
  %v1899 = vlaneseq
  %v1900 = vshrl.u32 %v1899, 7
  %v1901 = vsub.s32 %v1898, %v1900
  %v1902 = vrot.slane %v1894, %v1901
  %v1904 = vunpack.c.l.s4 1966171168
  %v1905 = vunpack.c.0.s8 %v1904
  %v1906 = vlaneseq
  %v1907 = vshrl.u32 %v1906, 7
  %v1908 = vsub.s32 %v1905, %v1907
  %v1909 = vrot.slane %v1895, %v1908
  %v1910 = vcombine.low %v1902, %v1909
  %v1912 = vunpack.c.l.s4 1966171168
  %v1913 = vunpack.c.0.s8 %v1912
  %v1914 = vlaneseq
  %v1915 = vshrl.u32 %v1914, 7
  %v1916 = vsub.s32 %v1913, %v1915
  %v1917 = vrot.slane %v1910, %v1916
  %v1918 = vcombine.low %v1760, %v1761
  %v1919 = vcombine.low %v1762, %v1682
  %v1921 = vunpack.c.l.s4 1966171168
  %v1922 = vunpack.c.0.s8 %v1921
  %v1923 = vlaneseq
  %v1924 = vshrl.u32 %v1923, 7
  %v1925 = vsub.s32 %v1922, %v1924
  %v1926 = vrot.slane %v1918, %v1925
  %v1928 = vunpack.c.l.s4 1966171168
  %v1929 = vunpack.c.0.s8 %v1928
  %v1930 = vlaneseq
  %v1931 = vshrl.u32 %v1930, 7
  %v1932 = vsub.s32 %v1929, %v1931
  %v1933 = vrot.slane %v1919, %v1932
  %v1934 = vcombine.low %v1926, %v1933
  %v1936 = vunpack.c.l.s4 1966171168
  %v1937 = vunpack.c.0.s8 %v1936
  %v1938 = vlaneseq
  %v1939 = vshrl.u32 %v1938, 7
  %v1940 = vsub.s32 %v1937, %v1939
  %v1941 = vrot.slane %v1934, %v1940
  %v1942 = vcombine.low %v1764, %v1765
  %v1943 = vcombine.low %v1766, %v1689
  %v1945 = vunpack.c.l.s4 1966171168
  %v1946 = vunpack.c.0.s8 %v1945
  %v1947 = vlaneseq
  %v1948 = vshrl.u32 %v1947, 7
  %v1949 = vsub.s32 %v1946, %v1948
  %v1950 = vrot.slane %v1942, %v1949
  %v1952 = vunpack.c.l.s4 1966171168
  %v1953 = vunpack.c.0.s8 %v1952
  %v1954 = vlaneseq
  %v1955 = vshrl.u32 %v1954, 7
  %v1956 = vsub.s32 %v1953, %v1955
  %v1957 = vrot.slane %v1943, %v1956
  %v1958 = vcombine.low %v1950, %v1957
  %v1960 = vunpack.c.l.s4 1966171168
  %v1961 = vunpack.c.0.s8 %v1960
  %v1962 = vlaneseq
  %v1963 = vshrl.u32 %v1962, 7
  %v1964 = vsub.s32 %v1961, %v1963
  %v1965 = vrot.slane %v1958, %v1964
  %v1966 = vcombine.low %v1768, %v1768
  %v1967 = vcombine.low %v1768, %v1739
  %v1969 = vunpack.c.l.s4 1966171168
  %v1970 = vunpack.c.0.s8 %v1969
  %v1971 = vlaneseq
  %v1972 = vshrl.u32 %v1971, 7
  %v1973 = vsub.s32 %v1970, %v1972
  %v1974 = vrot.slane %v1966, %v1973
  %v1976 = vunpack.c.l.s4 1966171168
  %v1977 = vunpack.c.0.s8 %v1976
  %v1978 = vlaneseq
  %v1979 = vshrl.u32 %v1978, 7
  %v1980 = vsub.s32 %v1977, %v1979
  %v1981 = vrot.slane %v1967, %v1980
  %v1982 = vcombine.low %v1974, %v1981
  %v1984 = vunpack.c.l.s4 1966171168
  %v1985 = vunpack.c.0.s8 %v1984
  %v1986 = vlaneseq
  %v1987 = vshrl.u32 %v1986, 7
  %v1988 = vsub.s32 %v1985, %v1987
  %v1989 = vrot.slane %v1982, %v1988
  %v1990 = vcombine.low %v1770, %v1771
  %v1991 = vcombine.low %v1772, %v1696
  %v1993 = vunpack.c.l.s4 1966171168
  %v1994 = vunpack.c.0.s8 %v1993
  %v1995 = vlaneseq
  %v1996 = vshrl.u32 %v1995, 7
  %v1997 = vsub.s32 %v1994, %v1996
  %v1998 = vrot.slane %v1990, %v1997
  %v2000 = vunpack.c.l.s4 1966171168
  %v2001 = vunpack.c.0.s8 %v2000
  %v2002 = vlaneseq
  %v2003 = vshrl.u32 %v2002, 7
  %v2004 = vsub.s32 %v2001, %v2003
  %v2005 = vrot.slane %v1991, %v2004
  %v2006 = vcombine.low %v1998, %v2005
  %v2008 = vunpack.c.l.s4 1966171168
  %v2009 = vunpack.c.0.s8 %v2008
  %v2010 = vlaneseq
  %v2011 = vshrl.u32 %v2010, 7
  %v2012 = vsub.s32 %v2009, %v2011
  %v2013 = vrot.slane %v2006, %v2012
  %v2014 = vcombine.low %v1774, %v1775
  %v2015 = vcombine.low %v1776, %v1703
  %v2017 = vunpack.c.l.s4 1966171168
  %v2018 = vunpack.c.0.s8 %v2017
  %v2019 = vlaneseq
  %v2020 = vshrl.u32 %v2019, 7
  %v2021 = vsub.s32 %v2018, %v2020
  %v2022 = vrot.slane %v2014, %v2021
  %v2024 = vunpack.c.l.s4 1966171168
  %v2025 = vunpack.c.0.s8 %v2024
  %v2026 = vlaneseq
  %v2027 = vshrl.u32 %v2026, 7
  %v2028 = vsub.s32 %v2025, %v2027
  %v2029 = vrot.slane %v2015, %v2028
  %v2030 = vcombine.low %v2022, %v2029
  %v2032 = vunpack.c.l.s4 1966171168
  %v2033 = vunpack.c.0.s8 %v2032
  %v2034 = vlaneseq
  %v2035 = vshrl.u32 %v2034, 7
  %v2036 = vsub.s32 %v2033, %v2035
  %v2037 = vrot.slane %v2030, %v2036
  %v2038 = vcombine.low %v1778, %v1779
  %v2039 = vcombine.low %v1780, %v1710
  %v2041 = vunpack.c.l.s4 1966171168
  %v2042 = vunpack.c.0.s8 %v2041
  %v2043 = vlaneseq
  %v2044 = vshrl.u32 %v2043, 7
  %v2045 = vsub.s32 %v2042, %v2044
  %v2046 = vrot.slane %v2038, %v2045
  %v2048 = vunpack.c.l.s4 1966171168
  %v2049 = vunpack.c.0.s8 %v2048
  %v2050 = vlaneseq
  %v2051 = vshrl.u32 %v2050, 7
  %v2052 = vsub.s32 %v2049, %v2051
  %v2053 = vrot.slane %v2039, %v2052
  %v2054 = vcombine.low %v2046, %v2053
  %v2056 = vunpack.c.l.s4 1966171168
  %v2057 = vunpack.c.0.s8 %v2056
  %v2058 = vlaneseq
  %v2059 = vshrl.u32 %v2058, 7
  %v2060 = vsub.s32 %v2057, %v2059
  %v2061 = vrot.slane %v2054, %v2060
  %v2062 = vcombine.low %v1782, %v1783
  %v2063 = vcombine.low %v1784, %v1717
  %v2065 = vunpack.c.l.s4 1966171168
  %v2066 = vunpack.c.0.s8 %v2065
  %v2067 = vlaneseq
  %v2068 = vshrl.u32 %v2067, 7
  %v2069 = vsub.s32 %v2066, %v2068
  %v2070 = vrot.slane %v2062, %v2069
  %v2072 = vunpack.c.l.s4 1966171168
  %v2073 = vunpack.c.0.s8 %v2072
  %v2074 = vlaneseq
  %v2075 = vshrl.u32 %v2074, 7
  %v2076 = vsub.s32 %v2073, %v2075
  %v2077 = vrot.slane %v2063, %v2076
  %v2078 = vcombine.low %v2070, %v2077
  %v2080 = vunpack.c.l.s4 1966171168
  %v2081 = vunpack.c.0.s8 %v2080
  %v2082 = vlaneseq
  %v2083 = vshrl.u32 %v2082, 7
  %v2084 = vsub.s32 %v2081, %v2083
  %v2085 = vrot.slane %v2078, %v2084
  %v2086 = vcombine.low %v1786, %v1787
  %v2087 = vcombine.low %v1788, %v1724
  %v2089 = vunpack.c.l.s4 1966171168
  %v2090 = vunpack.c.0.s8 %v2089
  %v2091 = vlaneseq
  %v2092 = vshrl.u32 %v2091, 7
  %v2093 = vsub.s32 %v2090, %v2092
  %v2094 = vrot.slane %v2086, %v2093
  %v2096 = vunpack.c.l.s4 1966171168
  %v2097 = vunpack.c.0.s8 %v2096
  %v2098 = vlaneseq
  %v2099 = vshrl.u32 %v2098, 7
  %v2100 = vsub.s32 %v2097, %v2099
  %v2101 = vrot.slane %v2087, %v2100
  %v2102 = vcombine.low %v2094, %v2101
  %v2104 = vunpack.c.l.s4 1966171168
  %v2105 = vunpack.c.0.s8 %v2104
  %v2106 = vlaneseq
  %v2107 = vshrl.u32 %v2106, 7
  %v2108 = vsub.s32 %v2105, %v2107
  %v2109 = vrot.slane %v2102, %v2108
  %v2110 = vcombine.low %v1790, %v1791
  %v2111 = vcombine.low %v1792, %v1731
  %v2113 = vunpack.c.l.s4 1966171168
  %v2114 = vunpack.c.0.s8 %v2113
  %v2115 = vlaneseq
  %v2116 = vshrl.u32 %v2115, 7
  %v2117 = vsub.s32 %v2114, %v2116
  %v2118 = vrot.slane %v2110, %v2117
  %v2120 = vunpack.c.l.s4 1966171168
  %v2121 = vunpack.c.0.s8 %v2120
  %v2122 = vlaneseq
  %v2123 = vshrl.u32 %v2122, 7
  %v2124 = vsub.s32 %v2121, %v2123
  %v2125 = vrot.slane %v2111, %v2124
  %v2126 = vcombine.low %v2118, %v2125
  %v2128 = vunpack.c.l.s4 1966171168
  %v2129 = vunpack.c.0.s8 %v2128
  %v2130 = vlaneseq
  %v2131 = vshrl.u32 %v2130, 7
  %v2132 = vsub.s32 %v2129, %v2131
  %v2133 = vrot.slane %v2126, %v2132
  %v2134 = vcombine.low %v1794, %v1795
  %v2135 = vcombine.low %v1796, %v1738
  %v2137 = vunpack.c.l.s4 1966171168
  %v2138 = vunpack.c.0.s8 %v2137
  %v2139 = vlaneseq
  %v2140 = vshrl.u32 %v2139, 7
  %v2141 = vsub.s32 %v2138, %v2140
  %v2142 = vrot.slane %v2134, %v2141
  %v2144 = vunpack.c.l.s4 1966171168
  %v2145 = vunpack.c.0.s8 %v2144
  %v2146 = vlaneseq
  %v2147 = vshrl.u32 %v2146, 7
  %v2148 = vsub.s32 %v2145, %v2147
  %v2149 = vrot.slane %v2135, %v2148
  %v2150 = vcombine.low %v2142, %v2149
  %v2152 = vunpack.c.l.s4 1966171168
  %v2153 = vunpack.c.0.s8 %v2152
  %v2154 = vlaneseq
  %v2155 = vshrl.u32 %v2154, 7
  %v2156 = vsub.s32 %v2153, %v2155
  %v2157 = vrot.slane %v2150, %v2156
  %v2173 = vsel %vm37, %v1821, 0
  %v2174 = vsel %vm37, %v1845, 0
  %v2175 = vsel %vm37, %v1869, 0
  %v2176 = vsel %vm37, %v1893, 0
  %v2177 = vsel %vm37, %v1917, 0
  %v2178 = vsel %vm37, %v1941, 0
  %v2179 = vsel %vm37, %v1965, 0
  %v2180 = vsel %vm37, %v1989, 0
  %v2181 = vsel %vm37, %v2013, 0
  %v2182 = vsel %vm37, %v2037, 0
  %v2183 = vsel %vm37, %v2061, 0
  %v2184 = vsel %vm37, %v2085, 0
  %v2185 = vsel %vm37, %v2109, 0
  %v2186 = vsel %vm37, %v2133, 0
  %v2187 = vsel %vm37, %v2157, 0
  %v2189 = vshrl.u32 %v2173, 16
  %v2191 = vshll.u32 %v2173, 16
  %v2193 = vrot.slane %v2191, 1
  %v2194 = vor.u32 %v2189, %v2193
  %v2196 = vshrl.u32 %v2174, 16
  %v2198 = vshll.u32 %v2174, 16
  %v2200 = vrot.slane %v2198, 1
  %v2201 = vor.u32 %v2196, %v2200
  %v2203 = vshrl.u32 %v2175, 16
  %v2205 = vshll.u32 %v2175, 16
  %v2207 = vrot.slane %v2205, 1
  %v2208 = vor.u32 %v2203, %v2207
  %v2210 = vshrl.u32 %v2176, 16
  %v2212 = vshll.u32 %v2176, 16
  %v2214 = vrot.slane %v2212, 1
  %v2215 = vor.u32 %v2210, %v2214
  %v2217 = vshrl.u32 %v2177, 16
  %v2219 = vshll.u32 %v2177, 16
  %v2221 = vrot.slane %v2219, 1
  %v2222 = vor.u32 %v2217, %v2221
  %v2224 = vshrl.u32 %v2178, 16
  %v2226 = vshll.u32 %v2178, 16
  %v2228 = vrot.slane %v2226, 1
  %v2229 = vor.u32 %v2224, %v2228
  %v2231 = vshrl.u32 %v2179, 16
  %v2233 = vshll.u32 %v2179, 16
  %v2235 = vrot.slane %v2233, 1
  %v2236 = vor.u32 %v2231, %v2235
  %v2238 = vshrl.u32 %v2181, 16
  %v2240 = vshll.u32 %v2181, 16
  %v2242 = vrot.slane %v2240, 1
  %v2243 = vor.u32 %v2238, %v2242
  %v2245 = vshrl.u32 %v2182, 16
  %v2247 = vshll.u32 %v2182, 16
  %v2249 = vrot.slane %v2247, 1
  %v2250 = vor.u32 %v2245, %v2249
  %v2252 = vshrl.u32 %v2183, 16
  %v2254 = vshll.u32 %v2183, 16
  %v2256 = vrot.slane %v2254, 1
  %v2257 = vor.u32 %v2252, %v2256
  %v2259 = vshrl.u32 %v2184, 16
  %v2261 = vshll.u32 %v2184, 16
  %v2263 = vrot.slane %v2261, 1
  %v2264 = vor.u32 %v2259, %v2263
  %v2266 = vshrl.u32 %v2185, 16
  %v2268 = vshll.u32 %v2185, 16
  %v2270 = vrot.slane %v2268, 1
  %v2271 = vor.u32 %v2266, %v2270
  %v2273 = vshrl.u32 %v2186, 16
  %v2275 = vshll.u32 %v2186, 16
  %v2277 = vrot.slane %v2275, 1
  %v2278 = vor.u32 %v2273, %v2277
  %v2280 = vshrl.u32 %v2187, 16
  %v2282 = vshll.u32 %v2187, 16
  %v2284 = vrot.slane %v2282, 1
  %v2285 = vor.u32 %v2280, %v2284
  %2286 = vrot.lane.b32.xlu0 %v2194, 64
  %v2287 = vpop.permute.xlu0 %2286
  %2288 = vrot.lane.b32.xlu0 %v2201, 64
  %v2289 = vpop.permute.xlu0 %2288
  %2290 = vrot.lane.b32.xlu0 %v2208, 64
  %v2291 = vpop.permute.xlu0 %2290
  %2292 = vrot.lane.b32.xlu0 %v2215, 64
  %v2293 = vpop.permute.xlu0 %2292
  %2294 = vrot.lane.b32.xlu0 %v2222, 64
  %v2295 = vpop.permute.xlu0 %2294
  %2296 = vrot.lane.b32.xlu0 %v2229, 64
  %v2297 = vpop.permute.xlu0 %2296
  %2298 = vrot.lane.b32.xlu0 %v2236, 64
  %v2299 = vpop.permute.xlu0 %2298
  %2300 = vrot.lane.b32.xlu0 %v2243, 64
  %v2301 = vpop.permute.xlu0 %2300
  %2302 = vrot.lane.b32.xlu0 %v2250, 64
  %v2303 = vpop.permute.xlu0 %2302
  %2304 = vrot.lane.b32.xlu0 %v2257, 64
  %v2305 = vpop.permute.xlu0 %2304
  %2306 = vrot.lane.b32.xlu0 %v2264, 64
  %v2307 = vpop.permute.xlu0 %2306
  %2308 = vrot.lane.b32.xlu0 %v2271, 64
  %v2309 = vpop.permute.xlu0 %2308
  %2310 = vrot.lane.b32.xlu0 %v2278, 64
  %v2311 = vpop.permute.xlu0 %2310
  %2312 = vrot.lane.b32.xlu0 %v2285, 64
  %v2313 = vpop.permute.xlu0 %2312
  %v2315 = vshrl.u32 %v2180, 16
  %v2317 = vshll.u32 %v2180, 16
  %v2319 = vrot.slane %v2317, 1
  %v2320 = vor.u32 %v2315, %v2319
  %2321 = vrot.lane.b32.xlu0 %v2320, 64
  %v2322 = vpop.permute.xlu0 %2321
  %v2324 = vsel %vm279, %v2173, %v2287
  %v2326 = vsel %vm279, %v2174, %v2289
  %v2328 = vsel %vm279, %v2175, %v2291
  %v2330 = vsel %vm279, %v2176, %v2293
  %v2332 = vsel %vm279, %v2177, %v2295
  %v2334 = vsel %vm279, %v2178, %v2297
  %v2336 = vsel %vm279, %v2179, %v2299
  %v2338 = vsel %vm279, %v2181, %v2301
  %v2340 = vsel %vm279, %v2182, %v2303
  %v2342 = vsel %vm279, %v2183, %v2305
  %v2344 = vsel %vm279, %v2184, %v2307
  %v2346 = vsel %vm279, %v2185, %v2309
  %v2348 = vsel %vm279, %v2186, %v2311
  %v2350 = vsel %vm279, %v2187, %v2313
  %v2352 = vsel %vm279, %v2180, %v2322
  %v2368 = vcombine.low %v2324, %v2326
  %v2370 = vunpack.c.l.s4 1966171168
  %v2371 = vunpack.c.0.s8 %v2370
  %v2372 = vlaneseq
  %v2373 = vshrl.u32 %v2372, 7
  %v2374 = vsub.s32 %v2371, %v2373
  %v2375 = vrot.slane %v2368, %v2374
  %v2376 = vcombine.high %v2375, %v2375
  %v2378 = vunpack.c.l.s4 1966171168
  %v2379 = vunpack.c.0.s8 %v2378
  %v2380 = vlaneseq
  %v2381 = vshrl.u32 %v2380, 7
  %v2382 = vsub.s32 %v2379, %v2381
  %v2383 = vrot.slane %v2375, %v2382
  %v2385 = vunpack.c.l.s4 1966171168
  %v2386 = vunpack.c.0.s8 %v2385
  %v2387 = vlaneseq
  %v2388 = vshrl.u32 %v2387, 7
  %v2389 = vsub.s32 %v2386, %v2388
  %v2390 = vrot.slane %v2376, %v2389
  %v2391 = vcombine.high %v2383, %v2383
  %v2392 = vcombine.high %v2390, %v2390
  %v2393 = vcombine.low %v2326, %v2328
  %v2395 = vunpack.c.l.s4 1966171168
  %v2396 = vunpack.c.0.s8 %v2395
  %v2397 = vlaneseq
  %v2398 = vshrl.u32 %v2397, 7
  %v2399 = vsub.s32 %v2396, %v2398
  %v2400 = vrot.slane %v2393, %v2399
  %v2401 = vcombine.high %v2400, %v2400
  %v2403 = vunpack.c.l.s4 1966171168
  %v2404 = vunpack.c.0.s8 %v2403
  %v2405 = vlaneseq
  %v2406 = vshrl.u32 %v2405, 7
  %v2407 = vsub.s32 %v2404, %v2406
  %v2408 = vrot.slane %v2400, %v2407
  %v2410 = vunpack.c.l.s4 1966171168
  %v2411 = vunpack.c.0.s8 %v2410
  %v2412 = vlaneseq
  %v2413 = vshrl.u32 %v2412, 7
  %v2414 = vsub.s32 %v2411, %v2413
  %v2415 = vrot.slane %v2401, %v2414
  %v2416 = vcombine.high %v2408, %v2408
  %v2417 = vcombine.high %v2415, %v2415
  %v2418 = vcombine.low %v2328, %v2330
  %v2420 = vunpack.c.l.s4 1966171168
  %v2421 = vunpack.c.0.s8 %v2420
  %v2422 = vlaneseq
  %v2423 = vshrl.u32 %v2422, 7
  %v2424 = vsub.s32 %v2421, %v2423
  %v2425 = vrot.slane %v2418, %v2424
  %v2426 = vcombine.high %v2425, %v2425
  %v2428 = vunpack.c.l.s4 1966171168
  %v2429 = vunpack.c.0.s8 %v2428
  %v2430 = vlaneseq
  %v2431 = vshrl.u32 %v2430, 7
  %v2432 = vsub.s32 %v2429, %v2431
  %v2433 = vrot.slane %v2425, %v2432
  %v2435 = vunpack.c.l.s4 1966171168
  %v2436 = vunpack.c.0.s8 %v2435
  %v2437 = vlaneseq
  %v2438 = vshrl.u32 %v2437, 7
  %v2439 = vsub.s32 %v2436, %v2438
  %v2440 = vrot.slane %v2426, %v2439
  %v2441 = vcombine.high %v2433, %v2433
  %v2442 = vcombine.high %v2440, %v2440
  %v2443 = vcombine.low %v2330, %v2332
  %v2445 = vunpack.c.l.s4 1966171168
  %v2446 = vunpack.c.0.s8 %v2445
  %v2447 = vlaneseq
  %v2448 = vshrl.u32 %v2447, 7
  %v2449 = vsub.s32 %v2446, %v2448
  %v2450 = vrot.slane %v2443, %v2449
  %v2451 = vcombine.high %v2450, %v2450
  %v2453 = vunpack.c.l.s4 1966171168
  %v2454 = vunpack.c.0.s8 %v2453
  %v2455 = vlaneseq
  %v2456 = vshrl.u32 %v2455, 7
  %v2457 = vsub.s32 %v2454, %v2456
  %v2458 = vrot.slane %v2450, %v2457
  %v2460 = vunpack.c.l.s4 1966171168
  %v2461 = vunpack.c.0.s8 %v2460
  %v2462 = vlaneseq
  %v2463 = vshrl.u32 %v2462, 7
  %v2464 = vsub.s32 %v2461, %v2463
  %v2465 = vrot.slane %v2451, %v2464
  %v2466 = vcombine.high %v2458, %v2458
  %v2467 = vcombine.high %v2465, %v2465
  %v2468 = vcombine.low %v2332, %v2334
  %v2470 = vunpack.c.l.s4 1966171168
  %v2471 = vunpack.c.0.s8 %v2470
  %v2472 = vlaneseq
  %v2473 = vshrl.u32 %v2472, 7
  %v2474 = vsub.s32 %v2471, %v2473
  %v2475 = vrot.slane %v2468, %v2474
  %v2476 = vcombine.high %v2475, %v2475
  %v2478 = vunpack.c.l.s4 1966171168
  %v2479 = vunpack.c.0.s8 %v2478
  %v2480 = vlaneseq
  %v2481 = vshrl.u32 %v2480, 7
  %v2482 = vsub.s32 %v2479, %v2481
  %v2483 = vrot.slane %v2475, %v2482
  %v2485 = vunpack.c.l.s4 1966171168
  %v2486 = vunpack.c.0.s8 %v2485
  %v2487 = vlaneseq
  %v2488 = vshrl.u32 %v2487, 7
  %v2489 = vsub.s32 %v2486, %v2488
  %v2490 = vrot.slane %v2476, %v2489
  %v2491 = vcombine.high %v2483, %v2483
  %v2492 = vcombine.high %v2490, %v2490
  %v2493 = vcombine.low %v2334, %v2336
  %v2495 = vunpack.c.l.s4 1966171168
  %v2496 = vunpack.c.0.s8 %v2495
  %v2497 = vlaneseq
  %v2498 = vshrl.u32 %v2497, 7
  %v2499 = vsub.s32 %v2496, %v2498
  %v2500 = vrot.slane %v2493, %v2499
  %v2501 = vcombine.high %v2500, %v2500
  %v2503 = vunpack.c.l.s4 1966171168
  %v2504 = vunpack.c.0.s8 %v2503
  %v2505 = vlaneseq
  %v2506 = vshrl.u32 %v2505, 7
  %v2507 = vsub.s32 %v2504, %v2506
  %v2508 = vrot.slane %v2500, %v2507
  %v2510 = vunpack.c.l.s4 1966171168
  %v2511 = vunpack.c.0.s8 %v2510
  %v2512 = vlaneseq
  %v2513 = vshrl.u32 %v2512, 7
  %v2514 = vsub.s32 %v2511, %v2513
  %v2515 = vrot.slane %v2501, %v2514
  %v2516 = vcombine.high %v2508, %v2508
  %v2517 = vcombine.high %v2515, %v2515
  %v2518 = vcombine.low %v2336, %v2352
  %v2520 = vunpack.c.l.s4 1966171168
  %v2521 = vunpack.c.0.s8 %v2520
  %v2522 = vlaneseq
  %v2523 = vshrl.u32 %v2522, 7
  %v2524 = vsub.s32 %v2521, %v2523
  %v2525 = vrot.slane %v2518, %v2524
  %v2526 = vcombine.high %v2525, %v2525
  %v2528 = vunpack.c.l.s4 1966171168
  %v2529 = vunpack.c.0.s8 %v2528
  %v2530 = vlaneseq
  %v2531 = vshrl.u32 %v2530, 7
  %v2532 = vsub.s32 %v2529, %v2531
  %v2533 = vrot.slane %v2525, %v2532
  %v2535 = vunpack.c.l.s4 1966171168
  %v2536 = vunpack.c.0.s8 %v2535
  %v2537 = vlaneseq
  %v2538 = vshrl.u32 %v2537, 7
  %v2539 = vsub.s32 %v2536, %v2538
  %v2540 = vrot.slane %v2526, %v2539
  %v2541 = vcombine.high %v2533, %v2533
  %v2542 = vcombine.high %v2540, %v2540
  %v2543 = vcombine.low %v2338, %v2340
  %v2545 = vunpack.c.l.s4 1966171168
  %v2546 = vunpack.c.0.s8 %v2545
  %v2547 = vlaneseq
  %v2548 = vshrl.u32 %v2547, 7
  %v2549 = vsub.s32 %v2546, %v2548
  %v2550 = vrot.slane %v2543, %v2549
  %v2551 = vcombine.high %v2550, %v2550
  %v2553 = vunpack.c.l.s4 1966171168
  %v2554 = vunpack.c.0.s8 %v2553
  %v2555 = vlaneseq
  %v2556 = vshrl.u32 %v2555, 7
  %v2557 = vsub.s32 %v2554, %v2556
  %v2558 = vrot.slane %v2550, %v2557
  %v2560 = vunpack.c.l.s4 1966171168
  %v2561 = vunpack.c.0.s8 %v2560
  %v2562 = vlaneseq
  %v2563 = vshrl.u32 %v2562, 7
  %v2564 = vsub.s32 %v2561, %v2563
  %v2565 = vrot.slane %v2551, %v2564
  %v2566 = vcombine.high %v2558, %v2558
  %v2567 = vcombine.high %v2565, %v2565
  %v2568 = vcombine.low %v2340, %v2342
  %v2570 = vunpack.c.l.s4 1966171168
  %v2571 = vunpack.c.0.s8 %v2570
  %v2572 = vlaneseq
  %v2573 = vshrl.u32 %v2572, 7
  %v2574 = vsub.s32 %v2571, %v2573
  %v2575 = vrot.slane %v2568, %v2574
  %v2576 = vcombine.high %v2575, %v2575
  %v2578 = vunpack.c.l.s4 1966171168
  %v2579 = vunpack.c.0.s8 %v2578
  %v2580 = vlaneseq
  %v2581 = vshrl.u32 %v2580, 7
  %v2582 = vsub.s32 %v2579, %v2581
  %v2583 = vrot.slane %v2575, %v2582
  %v2585 = vunpack.c.l.s4 1966171168
  %v2586 = vunpack.c.0.s8 %v2585
  %v2587 = vlaneseq
  %v2588 = vshrl.u32 %v2587, 7
  %v2589 = vsub.s32 %v2586, %v2588
  %v2590 = vrot.slane %v2576, %v2589
  %v2591 = vcombine.high %v2583, %v2583
  %v2592 = vcombine.high %v2590, %v2590
  %v2593 = vcombine.low %v2342, %v2344
  %v2595 = vunpack.c.l.s4 1966171168
  %v2596 = vunpack.c.0.s8 %v2595
  %v2597 = vlaneseq
  %v2598 = vshrl.u32 %v2597, 7
  %v2599 = vsub.s32 %v2596, %v2598
  %v2600 = vrot.slane %v2593, %v2599
  %v2601 = vcombine.high %v2600, %v2600
  %v2603 = vunpack.c.l.s4 1966171168
  %v2604 = vunpack.c.0.s8 %v2603
  %v2605 = vlaneseq
  %v2606 = vshrl.u32 %v2605, 7
  %v2607 = vsub.s32 %v2604, %v2606
  %v2608 = vrot.slane %v2600, %v2607
  %v2610 = vunpack.c.l.s4 1966171168
  %v2611 = vunpack.c.0.s8 %v2610
  %v2612 = vlaneseq
  %v2613 = vshrl.u32 %v2612, 7
  %v2614 = vsub.s32 %v2611, %v2613
  %v2615 = vrot.slane %v2601, %v2614
  %v2616 = vcombine.high %v2608, %v2608
  %v2617 = vcombine.high %v2615, %v2615
  %v2618 = vcombine.low %v2344, %v2346
  %v2620 = vunpack.c.l.s4 1966171168
  %v2621 = vunpack.c.0.s8 %v2620
  %v2622 = vlaneseq
  %v2623 = vshrl.u32 %v2622, 7
  %v2624 = vsub.s32 %v2621, %v2623
  %v2625 = vrot.slane %v2618, %v2624
  %v2626 = vcombine.high %v2625, %v2625
  %v2628 = vunpack.c.l.s4 1966171168
  %v2629 = vunpack.c.0.s8 %v2628
  %v2630 = vlaneseq
  %v2631 = vshrl.u32 %v2630, 7
  %v2632 = vsub.s32 %v2629, %v2631
  %v2633 = vrot.slane %v2625, %v2632
  %v2635 = vunpack.c.l.s4 1966171168
  %v2636 = vunpack.c.0.s8 %v2635
  %v2637 = vlaneseq
  %v2638 = vshrl.u32 %v2637, 7
  %v2639 = vsub.s32 %v2636, %v2638
  %v2640 = vrot.slane %v2626, %v2639
  %v2641 = vcombine.high %v2633, %v2633
  %v2642 = vcombine.high %v2640, %v2640
  %v2643 = vcombine.low %v2346, %v2348
  %v2645 = vunpack.c.l.s4 1966171168
  %v2646 = vunpack.c.0.s8 %v2645
  %v2647 = vlaneseq
  %v2648 = vshrl.u32 %v2647, 7
  %v2649 = vsub.s32 %v2646, %v2648
  %v2650 = vrot.slane %v2643, %v2649
  %v2651 = vcombine.high %v2650, %v2650
  %v2653 = vunpack.c.l.s4 1966171168
  %v2654 = vunpack.c.0.s8 %v2653
  %v2655 = vlaneseq
  %v2656 = vshrl.u32 %v2655, 7
  %v2657 = vsub.s32 %v2654, %v2656
  %v2658 = vrot.slane %v2650, %v2657
  %v2660 = vunpack.c.l.s4 1966171168
  %v2661 = vunpack.c.0.s8 %v2660
  %v2662 = vlaneseq
  %v2663 = vshrl.u32 %v2662, 7
  %v2664 = vsub.s32 %v2661, %v2663
  %v2665 = vrot.slane %v2651, %v2664
  %v2666 = vcombine.high %v2658, %v2658
  %v2667 = vcombine.high %v2665, %v2665
  %v2668 = vcombine.low %v2348, %v2350
  %v2670 = vunpack.c.l.s4 1966171168
  %v2671 = vunpack.c.0.s8 %v2670
  %v2672 = vlaneseq
  %v2673 = vshrl.u32 %v2672, 7
  %v2674 = vsub.s32 %v2671, %v2673
  %v2675 = vrot.slane %v2668, %v2674
  %v2676 = vcombine.high %v2675, %v2675
  %v2678 = vunpack.c.l.s4 1966171168
  %v2679 = vunpack.c.0.s8 %v2678
  %v2680 = vlaneseq
  %v2681 = vshrl.u32 %v2680, 7
  %v2682 = vsub.s32 %v2679, %v2681
  %v2683 = vrot.slane %v2675, %v2682
  %v2685 = vunpack.c.l.s4 1966171168
  %v2686 = vunpack.c.0.s8 %v2685
  %v2687 = vlaneseq
  %v2688 = vshrl.u32 %v2687, 7
  %v2689 = vsub.s32 %v2686, %v2688
  %v2690 = vrot.slane %v2676, %v2689
  %v2691 = vcombine.high %v2683, %v2683
  %v2692 = vcombine.high %v2690, %v2690
  %v2693 = vcombine.low %v2350, %v2352
  %v2695 = vunpack.c.l.s4 1966171168
  %v2696 = vunpack.c.0.s8 %v2695
  %v2697 = vlaneseq
  %v2698 = vshrl.u32 %v2697, 7
  %v2699 = vsub.s32 %v2696, %v2698
  %v2700 = vrot.slane %v2693, %v2699
  %v2701 = vcombine.high %v2700, %v2700
  %v2703 = vunpack.c.l.s4 1966171168
  %v2704 = vunpack.c.0.s8 %v2703
  %v2705 = vlaneseq
  %v2706 = vshrl.u32 %v2705, 7
  %v2707 = vsub.s32 %v2704, %v2706
  %v2708 = vrot.slane %v2700, %v2707
  %v2710 = vunpack.c.l.s4 1966171168
  %v2711 = vunpack.c.0.s8 %v2710
  %v2712 = vlaneseq
  %v2713 = vshrl.u32 %v2712, 7
  %v2714 = vsub.s32 %v2711, %v2713
  %v2715 = vrot.slane %v2701, %v2714
  %v2716 = vcombine.high %v2708, %v2708
  %v2717 = vcombine.high %v2715, %v2715
  %v2718 = vunpack.i.l.s16 %v2383
  %v2719 = vunpack.i.h.s16 %v2383
  %v2720 = vunpack.i.l.s16 %v2390
  %v2721 = vunpack.i.h.s16 %v2390
  %v2722 = vunpack.i.l.s16 %v2391
  %v2723 = vunpack.i.h.s16 %v2391
  %v2724 = vunpack.i.l.s16 %v2392
  %v2725 = vunpack.i.l.s16 %v2408
  %v2726 = vunpack.i.h.s16 %v2408
  %v2727 = vunpack.i.l.s16 %v2415
  %v2728 = vunpack.i.h.s16 %v2415
  %v2729 = vunpack.i.l.s16 %v2416
  %v2730 = vunpack.i.h.s16 %v2416
  %v2731 = vunpack.i.l.s16 %v2417
  %v2732 = vunpack.i.l.s16 %v2433
  %v2733 = vunpack.i.h.s16 %v2433
  %v2734 = vunpack.i.l.s16 %v2440
  %v2735 = vunpack.i.h.s16 %v2440
  %v2736 = vunpack.i.l.s16 %v2441
  %v2737 = vunpack.i.h.s16 %v2441
  %v2738 = vunpack.i.l.s16 %v2442
  %v2739 = vunpack.i.l.s16 %v2458
  %v2740 = vunpack.i.h.s16 %v2458
  %v2741 = vunpack.i.l.s16 %v2465
  %v2742 = vunpack.i.h.s16 %v2465
  %v2743 = vunpack.i.l.s16 %v2466
  %v2744 = vunpack.i.h.s16 %v2466
  %v2745 = vunpack.i.l.s16 %v2467
  %v2746 = vunpack.i.l.s16 %v2483
  %v2747 = vunpack.i.h.s16 %v2483
  %v2748 = vunpack.i.l.s16 %v2490
  %v2749 = vunpack.i.h.s16 %v2490
  %v2750 = vunpack.i.l.s16 %v2491
  %v2751 = vunpack.i.h.s16 %v2491
  %v2752 = vunpack.i.l.s16 %v2492
  %v2753 = vunpack.i.l.s16 %v2508
  %v2754 = vunpack.i.h.s16 %v2508
  %v2755 = vunpack.i.l.s16 %v2515
  %v2756 = vunpack.i.h.s16 %v2515
  %v2757 = vunpack.i.l.s16 %v2516
  %v2758 = vunpack.i.h.s16 %v2516
  %v2759 = vunpack.i.l.s16 %v2517
  %v2760 = vunpack.i.l.s16 %v2533
  %v2761 = vunpack.i.h.s16 %v2533
  %v2762 = vunpack.i.l.s16 %v2540
  %v2763 = vunpack.i.h.s16 %v2540
  %v2764 = vunpack.i.l.s16 %v2541
  %v2765 = vunpack.i.h.s16 %v2541
  %v2766 = vunpack.i.l.s16 %v2542
  %v2767 = vunpack.i.l.s16 %v2558
  %v2768 = vunpack.i.h.s16 %v2558
  %v2769 = vunpack.i.l.s16 %v2565
  %v2770 = vunpack.i.h.s16 %v2565
  %v2771 = vunpack.i.l.s16 %v2566
  %v2772 = vunpack.i.h.s16 %v2566
  %v2773 = vunpack.i.l.s16 %v2567
  %v2774 = vunpack.i.l.s16 %v2583
  %v2775 = vunpack.i.h.s16 %v2583
  %v2776 = vunpack.i.l.s16 %v2590
  %v2777 = vunpack.i.h.s16 %v2590
  %v2778 = vunpack.i.l.s16 %v2591
  %v2779 = vunpack.i.h.s16 %v2591
  %v2780 = vunpack.i.l.s16 %v2592
  %v2781 = vunpack.i.l.s16 %v2608
  %v2782 = vunpack.i.h.s16 %v2608
  %v2783 = vunpack.i.l.s16 %v2615
  %v2784 = vunpack.i.h.s16 %v2615
  %v2785 = vunpack.i.l.s16 %v2616
  %v2786 = vunpack.i.h.s16 %v2616
  %v2787 = vunpack.i.l.s16 %v2617
  %v2788 = vunpack.i.l.s16 %v2633
  %v2789 = vunpack.i.h.s16 %v2633
  %v2790 = vunpack.i.l.s16 %v2640
  %v2791 = vunpack.i.h.s16 %v2640
  %v2792 = vunpack.i.l.s16 %v2641
  %v2793 = vunpack.i.h.s16 %v2641
  %v2794 = vunpack.i.l.s16 %v2642
  %v2795 = vunpack.i.l.s16 %v2658
  %v2796 = vunpack.i.h.s16 %v2658
  %v2797 = vunpack.i.l.s16 %v2665
  %v2798 = vunpack.i.h.s16 %v2665
  %v2799 = vunpack.i.l.s16 %v2666
  %v2800 = vunpack.i.h.s16 %v2666
  %v2801 = vunpack.i.l.s16 %v2667
  %v2802 = vunpack.i.l.s16 %v2683
  %v2803 = vunpack.i.h.s16 %v2683
  %v2804 = vunpack.i.l.s16 %v2690
  %v2805 = vunpack.i.h.s16 %v2690
  %v2806 = vunpack.i.l.s16 %v2691
  %v2807 = vunpack.i.h.s16 %v2691
  %v2808 = vunpack.i.l.s16 %v2692
  %v2809 = vunpack.i.l.s16 %v2708
  %v2810 = vunpack.i.h.s16 %v2708
  %v2811 = vunpack.i.l.s16 %v2715
  %v2812 = vunpack.i.h.s16 %v2715
  %v2813 = vunpack.i.l.s16 %v2716
  %v2814 = vunpack.i.h.s16 %v2716
  %v2815 = vunpack.i.l.s16 %v2717
  %v2816 = vld [vmem:[%s3] sm:$0xf]
  %v2817 = vld [vmem:[%s3 + $0x4] sm:$0xf]
  %v2818 = vld [vmem:[%s3 + $0x8] sm:$0xf]
  %v2819 = vld [vmem:[%s3 + $0xc] sm:$0xf]
  %v2820 = vld [vmem:[%s3 + $0x10] sm:$0xf]
  %v2821 = vld [vmem:[%s3 + $0x14] sm:$0xf]
  %v2822 = vld [vmem:[%s3 + $0x18] sm:$0xf]
  %v2823 = vld [vmem:[%s3 + $0x1c] sm:$0xf]
  %v2824 = vld [vmem:[%s3 + $0x20] sm:$0xf]
  %v2825 = vld [vmem:[%s3 + $0x24] sm:$0xf]
  %v2826 = vld [vmem:[%s3 + $0x28] sm:$0xf]
  %v2827 = vld [vmem:[%s3 + $0x2c] sm:$0xf]
  %v2828 = vld [vmem:[%s3 + $0x30] sm:$0xf]
  %v2829 = vld [vmem:[%s3 + $0x34] sm:$0xf]
  %v2830 = vld [vmem:[%s3 + $0x38] sm:$0xf]
  %v2831 = vld [vmem:[%s3 + $0x3c] sm:$0xf]
  %v2832 = vld [vmem:[%s3 + $0x40] sm:$0xf]
  %v2833 = vld [vmem:[%s3 + $0x44] sm:$0xf]
  %v2834 = vld [vmem:[%s3 + $0x48] sm:$0xf]
  %v2835 = vld [vmem:[%s3 + $0x4c] sm:$0xf]
  %v2836 = vld [vmem:[%s3 + $0x50] sm:$0xf]
  %v2837 = vld [vmem:[%s3 + $0x54] sm:$0xf]
  %v2838 = vld [vmem:[%s3 + $0x58] sm:$0xf]
  %v2839 = vld [vmem:[%s3 + $0x5c] sm:$0xf]
  %v2840 = vld [vmem:[%s3 + $0x60] sm:$0xf]
  %v2841 = vld [vmem:[%s3 + $0x64] sm:$0xf]
  %v2842 = vld [vmem:[%s3 + $0x68] sm:$0xf]
  %v2843 = vld [vmem:[%s3 + $0x6c] sm:$0xf]
  %v2844 = vld [vmem:[%s3 + $0x70] sm:$0xf]
  %v2845 = vld [vmem:[%s3 + $0x74] sm:$0xf]
  %v2846 = vld [vmem:[%s3 + $0x78] sm:$0xf]
  %v2847 = vld [vmem:[%s3 + $0x7c] sm:$0xf]
  %v2848 = vld [vmem:[%s4] sm:$0x1]
  %v2850 = vlaneseq
  %v2851 = vshrl.u32 %v2850, 7
  %v2852 = vsub.s32 0, %v2851
  %v2853 = vrot.slane %v2848, %v2852
  %v2855 = vpack.i.b16 %v2719, %v2718
  %v2856 = vpack.i.b16 %v2721, %v2720
  %v2857 = vpack.i.b16 %v2723, %v2722
  %v2858 = vpack.i.b16 %v2725, %v2724
  %v2859 = vpack.i.b16 %v2727, %v2726
  %v2860 = vpack.i.b16 %v2729, %v2728
  %v2861 = vpack.i.b16 %v2731, %v2730
  %v2862 = vpack.i.b16 %v2733, %v2732
  %v2863 = vpack.i.b16 %v2735, %v2734
  %v2864 = vpack.i.b16 %v2737, %v2736
  %v2865 = vpack.i.b16 %v2739, %v2738
  %v2866 = vpack.i.b16 %v2741, %v2740
  %v2867 = vpack.i.b16 %v2743, %v2742
  %v2868 = vpack.i.b16 %v2745, %v2744
  %v2869 = vpack.i.b16 %v2747, %v2746
  %v2870 = vpack.i.b16 %v2749, %v2748
  %v2871 = vpack.i.b16 %v2751, %v2750
  %v2872 = vpack.i.b16 %v2753, %v2752
  %v2873 = vpack.i.b16 %v2755, %v2754
  %v2874 = vpack.i.b16 %v2757, %v2756
  %v2875 = vpack.i.b16 %v2759, %v2758
  %v2876 = vpack.i.b16 %v2761, %v2760
  %v2877 = vpack.i.b16 %v2763, %v2762
  %v2878 = vpack.i.b16 %v2765, %v2764
  %v2879 = vpack.i.b16 %v2767, %v2766
  %v2880 = vpack.i.b16 %v2769, %v2768
  %v2881 = vpack.i.b16 %v2771, %v2770
  %v2882 = vpack.i.b16 %v2773, %v2772
  %v2883 = vpack.i.b16 %v2775, %v2774
  %v2884 = vpack.i.b16 %v2777, %v2776
  %v2885 = vpack.i.b16 %v2779, %v2778
  %v2886 = vpack.i.b16 %v2781, %v2780
  %v2887 = vpack.i.b16 %v2783, %v2782
  %v2888 = vpack.i.b16 %v2785, %v2784
  %v2889 = vpack.i.b16 %v2787, %v2786
  %v2890 = vpack.i.b16 %v2789, %v2788
  %v2891 = vpack.i.b16 %v2791, %v2790
  %v2892 = vpack.i.b16 %v2793, %v2792
  %v2893 = vpack.i.b16 %v2795, %v2794
  %v2894 = vpack.i.b16 %v2797, %v2796
  %v2895 = vpack.i.b16 %v2799, %v2798
  %v2896 = vpack.i.b16 %v2801, %v2800
  %v2897 = vpack.i.b16 %v2803, %v2802
  %v2898 = vpack.i.b16 %v2805, %v2804
  %v2899 = vpack.i.b16 %v2807, %v2806
  %v2900 = vpack.i.b16 %v2809, %v2808
  %v2901 = vpack.i.b16 %v2811, %v2810
  %v2902 = vpack.i.b16 %v2813, %v2812
  %v2903 = vpack.i.b16 %v2815, %v2814
  %v2904 = vcombine.low %v2855, %v2856
  %v2905 = vcombine.low %v2857, %v2858
  %v2906 = vcombine.low %v2859, %v2860
  %v2907 = vcombine.low %v2861, %v2862
  %v2909 = vunpack.c.l.s4 1966171168
  %v2910 = vunpack.c.0.s8 %v2909
  %v2911 = vlaneseq
  %v2912 = vshrl.u32 %v2911, 7
  %v2913 = vsub.s32 %v2910, %v2912
  %v2914 = vrot.slane %v2904, %v2913
  %v2916 = vunpack.c.l.s4 1966171168
  %v2917 = vunpack.c.0.s8 %v2916
  %v2918 = vlaneseq
  %v2919 = vshrl.u32 %v2918, 7
  %v2920 = vsub.s32 %v2917, %v2919
  %v2921 = vrot.slane %v2905, %v2920
  %v2923 = vunpack.c.l.s4 1966171168
  %v2924 = vunpack.c.0.s8 %v2923
  %v2925 = vlaneseq
  %v2926 = vshrl.u32 %v2925, 7
  %v2927 = vsub.s32 %v2924, %v2926
  %v2928 = vrot.slane %v2906, %v2927
  %v2930 = vunpack.c.l.s4 1966171168
  %v2931 = vunpack.c.0.s8 %v2930
  %v2932 = vlaneseq
  %v2933 = vshrl.u32 %v2932, 7
  %v2934 = vsub.s32 %v2931, %v2933
  %v2935 = vrot.slane %v2907, %v2934
  %v2936 = vcombine.low %v2914, %v2921
  %v2937 = vcombine.high %v2914, %v2921
  %v2938 = vcombine.low %v2928, %v2935
  %v2939 = vcombine.high %v2928, %v2935
  %v2941 = vunpack.c.l.s4 1966171168
  %v2942 = vunpack.c.0.s8 %v2941
  %v2943 = vlaneseq
  %v2944 = vshrl.u32 %v2943, 7
  %v2945 = vsub.s32 %v2942, %v2944
  %v2946 = vrot.slane %v2936, %v2945
  %v2948 = vunpack.c.l.s4 1966171168
  %v2949 = vunpack.c.0.s8 %v2948
  %v2950 = vlaneseq
  %v2951 = vshrl.u32 %v2950, 7
  %v2952 = vsub.s32 %v2949, %v2951
  %v2953 = vrot.slane %v2937, %v2952
  %v2955 = vunpack.c.l.s4 1966171168
  %v2956 = vunpack.c.0.s8 %v2955
  %v2957 = vlaneseq
  %v2958 = vshrl.u32 %v2957, 7
  %v2959 = vsub.s32 %v2956, %v2958
  %v2960 = vrot.slane %v2938, %v2959
  %v2962 = vunpack.c.l.s4 1966171168
  %v2963 = vunpack.c.0.s8 %v2962
  %v2964 = vlaneseq
  %v2965 = vshrl.u32 %v2964, 7
  %v2966 = vsub.s32 %v2963, %v2965
  %v2967 = vrot.slane %v2939, %v2966
  %v2968 = vcombine.low %v2946, %v2960
  %v2969 = vcombine.low %v2953, %v2967
  %v2970 = vcombine.low %v2863, %v2864
  %v2971 = vcombine.low %v2865, %v2866
  %v2972 = vcombine.low %v2867, %v2868
  %v2973 = vcombine.low %v2869, %v2870
  %v2975 = vunpack.c.l.s4 1966171168
  %v2976 = vunpack.c.0.s8 %v2975
  %v2977 = vlaneseq
  %v2978 = vshrl.u32 %v2977, 7
  %v2979 = vsub.s32 %v2976, %v2978
  %v2980 = vrot.slane %v2970, %v2979
  %v2982 = vunpack.c.l.s4 1966171168
  %v2983 = vunpack.c.0.s8 %v2982
  %v2984 = vlaneseq
  %v2985 = vshrl.u32 %v2984, 7
  %v2986 = vsub.s32 %v2983, %v2985
  %v2987 = vrot.slane %v2971, %v2986
  %v2989 = vunpack.c.l.s4 1966171168
  %v2990 = vunpack.c.0.s8 %v2989
  %v2991 = vlaneseq
  %v2992 = vshrl.u32 %v2991, 7
  %v2993 = vsub.s32 %v2990, %v2992
  %v2994 = vrot.slane %v2972, %v2993
  %v2996 = vunpack.c.l.s4 1966171168
  %v2997 = vunpack.c.0.s8 %v2996
  %v2998 = vlaneseq
  %v2999 = vshrl.u32 %v2998, 7
  %v3000 = vsub.s32 %v2997, %v2999
  %v3001 = vrot.slane %v2973, %v3000
  %v3002 = vcombine.low %v2980, %v2987
  %v3003 = vcombine.high %v2980, %v2987
  %v3004 = vcombine.low %v2994, %v3001
  %v3005 = vcombine.high %v2994, %v3001
  %v3007 = vunpack.c.l.s4 1966171168
  %v3008 = vunpack.c.0.s8 %v3007
  %v3009 = vlaneseq
  %v3010 = vshrl.u32 %v3009, 7
  %v3011 = vsub.s32 %v3008, %v3010
  %v3012 = vrot.slane %v3002, %v3011
  %v3014 = vunpack.c.l.s4 1966171168
  %v3015 = vunpack.c.0.s8 %v3014
  %v3016 = vlaneseq
  %v3017 = vshrl.u32 %v3016, 7
  %v3018 = vsub.s32 %v3015, %v3017
  %v3019 = vrot.slane %v3003, %v3018
  %v3021 = vunpack.c.l.s4 1966171168
  %v3022 = vunpack.c.0.s8 %v3021
  %v3023 = vlaneseq
  %v3024 = vshrl.u32 %v3023, 7
  %v3025 = vsub.s32 %v3022, %v3024
  %v3026 = vrot.slane %v3004, %v3025
  %v3028 = vunpack.c.l.s4 1966171168
  %v3029 = vunpack.c.0.s8 %v3028
  %v3030 = vlaneseq
  %v3031 = vshrl.u32 %v3030, 7
  %v3032 = vsub.s32 %v3029, %v3031
  %v3033 = vrot.slane %v3005, %v3032
  %v3034 = vcombine.low %v3012, %v3026
  %v3035 = vcombine.low %v3019, %v3033
  %v3036 = vcombine.low %v2871, %v2872
  %v3037 = vcombine.low %v2873, %v2874
  %v3038 = vcombine.low %v2875, %v2876
  %v3039 = vcombine.low %v2877, %v2878
  %v3041 = vunpack.c.l.s4 1966171168
  %v3042 = vunpack.c.0.s8 %v3041
  %v3043 = vlaneseq
  %v3044 = vshrl.u32 %v3043, 7
  %v3045 = vsub.s32 %v3042, %v3044
  %v3046 = vrot.slane %v3036, %v3045
  %v3048 = vunpack.c.l.s4 1966171168
  %v3049 = vunpack.c.0.s8 %v3048
  %v3050 = vlaneseq
  %v3051 = vshrl.u32 %v3050, 7
  %v3052 = vsub.s32 %v3049, %v3051
  %v3053 = vrot.slane %v3037, %v3052
  %v3055 = vunpack.c.l.s4 1966171168
  %v3056 = vunpack.c.0.s8 %v3055
  %v3057 = vlaneseq
  %v3058 = vshrl.u32 %v3057, 7
  %v3059 = vsub.s32 %v3056, %v3058
  %v3060 = vrot.slane %v3038, %v3059
  %v3062 = vunpack.c.l.s4 1966171168
  %v3063 = vunpack.c.0.s8 %v3062
  %v3064 = vlaneseq
  %v3065 = vshrl.u32 %v3064, 7
  %v3066 = vsub.s32 %v3063, %v3065
  %v3067 = vrot.slane %v3039, %v3066
  %v3068 = vcombine.low %v3046, %v3053
  %v3069 = vcombine.high %v3046, %v3053
  %v3070 = vcombine.low %v3060, %v3067
  %v3071 = vcombine.high %v3060, %v3067
  %v3073 = vunpack.c.l.s4 1966171168
  %v3074 = vunpack.c.0.s8 %v3073
  %v3075 = vlaneseq
  %v3076 = vshrl.u32 %v3075, 7
  %v3077 = vsub.s32 %v3074, %v3076
  %v3078 = vrot.slane %v3068, %v3077
  %v3080 = vunpack.c.l.s4 1966171168
  %v3081 = vunpack.c.0.s8 %v3080
  %v3082 = vlaneseq
  %v3083 = vshrl.u32 %v3082, 7
  %v3084 = vsub.s32 %v3081, %v3083
  %v3085 = vrot.slane %v3069, %v3084
  %v3087 = vunpack.c.l.s4 1966171168
  %v3088 = vunpack.c.0.s8 %v3087
  %v3089 = vlaneseq
  %v3090 = vshrl.u32 %v3089, 7
  %v3091 = vsub.s32 %v3088, %v3090
  %v3092 = vrot.slane %v3070, %v3091
  %v3094 = vunpack.c.l.s4 1966171168
  %v3095 = vunpack.c.0.s8 %v3094
  %v3096 = vlaneseq
  %v3097 = vshrl.u32 %v3096, 7
  %v3098 = vsub.s32 %v3095, %v3097
  %v3099 = vrot.slane %v3071, %v3098
  %v3100 = vcombine.low %v3078, %v3092
  %v3101 = vcombine.low %v3085, %v3099
  %v3102 = vcombine.low %v2879, %v2880
  %v3103 = vcombine.low %v2881, %v2882
  %v3104 = vcombine.low %v2883, %v2884
  %v3105 = vcombine.low %v2885, %v2886
  %v3107 = vunpack.c.l.s4 1966171168
  %v3108 = vunpack.c.0.s8 %v3107
  %v3109 = vlaneseq
  %v3110 = vshrl.u32 %v3109, 7
  %v3111 = vsub.s32 %v3108, %v3110
  %v3112 = vrot.slane %v3102, %v3111
  %v3114 = vunpack.c.l.s4 1966171168
  %v3115 = vunpack.c.0.s8 %v3114
  %v3116 = vlaneseq
  %v3117 = vshrl.u32 %v3116, 7
  %v3118 = vsub.s32 %v3115, %v3117
  %v3119 = vrot.slane %v3103, %v3118
  %v3121 = vunpack.c.l.s4 1966171168
  %v3122 = vunpack.c.0.s8 %v3121
  %v3123 = vlaneseq
  %v3124 = vshrl.u32 %v3123, 7
  %v3125 = vsub.s32 %v3122, %v3124
  %v3126 = vrot.slane %v3104, %v3125
  %v3128 = vunpack.c.l.s4 1966171168
  %v3129 = vunpack.c.0.s8 %v3128
  %v3130 = vlaneseq
  %v3131 = vshrl.u32 %v3130, 7
  %v3132 = vsub.s32 %v3129, %v3131
  %v3133 = vrot.slane %v3105, %v3132
  %v3134 = vcombine.low %v3112, %v3119
  %v3135 = vcombine.high %v3112, %v3119
  %v3136 = vcombine.low %v3126, %v3133
  %v3137 = vcombine.high %v3126, %v3133
  %v3139 = vunpack.c.l.s4 1966171168
  %v3140 = vunpack.c.0.s8 %v3139
  %v3141 = vlaneseq
  %v3142 = vshrl.u32 %v3141, 7
  %v3143 = vsub.s32 %v3140, %v3142
  %v3144 = vrot.slane %v3134, %v3143
  %v3146 = vunpack.c.l.s4 1966171168
  %v3147 = vunpack.c.0.s8 %v3146
  %v3148 = vlaneseq
  %v3149 = vshrl.u32 %v3148, 7
  %v3150 = vsub.s32 %v3147, %v3149
  %v3151 = vrot.slane %v3135, %v3150
  %v3153 = vunpack.c.l.s4 1966171168
  %v3154 = vunpack.c.0.s8 %v3153
  %v3155 = vlaneseq
  %v3156 = vshrl.u32 %v3155, 7
  %v3157 = vsub.s32 %v3154, %v3156
  %v3158 = vrot.slane %v3136, %v3157
  %v3160 = vunpack.c.l.s4 1966171168
  %v3161 = vunpack.c.0.s8 %v3160
  %v3162 = vlaneseq
  %v3163 = vshrl.u32 %v3162, 7
  %v3164 = vsub.s32 %v3161, %v3163
  %v3165 = vrot.slane %v3137, %v3164
  %v3166 = vcombine.low %v3144, %v3158
  %v3167 = vcombine.low %v3151, %v3165
  %v3168 = vcombine.low %v2887, %v2888
  %v3169 = vcombine.low %v2889, %v2890
  %v3170 = vcombine.low %v2891, %v2892
  %v3171 = vcombine.low %v2893, %v2894
  %v3173 = vunpack.c.l.s4 1966171168
  %v3174 = vunpack.c.0.s8 %v3173
  %v3175 = vlaneseq
  %v3176 = vshrl.u32 %v3175, 7
  %v3177 = vsub.s32 %v3174, %v3176
  %v3178 = vrot.slane %v3168, %v3177
  %v3180 = vunpack.c.l.s4 1966171168
  %v3181 = vunpack.c.0.s8 %v3180
  %v3182 = vlaneseq
  %v3183 = vshrl.u32 %v3182, 7
  %v3184 = vsub.s32 %v3181, %v3183
  %v3185 = vrot.slane %v3169, %v3184
  %v3187 = vunpack.c.l.s4 1966171168
  %v3188 = vunpack.c.0.s8 %v3187
  %v3189 = vlaneseq
  %v3190 = vshrl.u32 %v3189, 7
  %v3191 = vsub.s32 %v3188, %v3190
  %v3192 = vrot.slane %v3170, %v3191
  %v3194 = vunpack.c.l.s4 1966171168
  %v3195 = vunpack.c.0.s8 %v3194
  %v3196 = vlaneseq
  %v3197 = vshrl.u32 %v3196, 7
  %v3198 = vsub.s32 %v3195, %v3197
  %v3199 = vrot.slane %v3171, %v3198
  %v3200 = vcombine.low %v3178, %v3185
  %v3201 = vcombine.high %v3178, %v3185
  %v3202 = vcombine.low %v3192, %v3199
  %v3203 = vcombine.high %v3192, %v3199
  %v3205 = vunpack.c.l.s4 1966171168
  %v3206 = vunpack.c.0.s8 %v3205
  %v3207 = vlaneseq
  %v3208 = vshrl.u32 %v3207, 7
  %v3209 = vsub.s32 %v3206, %v3208
  %v3210 = vrot.slane %v3200, %v3209
  %v3212 = vunpack.c.l.s4 1966171168
  %v3213 = vunpack.c.0.s8 %v3212
  %v3214 = vlaneseq
  %v3215 = vshrl.u32 %v3214, 7
  %v3216 = vsub.s32 %v3213, %v3215
  %v3217 = vrot.slane %v3201, %v3216
  %v3219 = vunpack.c.l.s4 1966171168
  %v3220 = vunpack.c.0.s8 %v3219
  %v3221 = vlaneseq
  %v3222 = vshrl.u32 %v3221, 7
  %v3223 = vsub.s32 %v3220, %v3222
  %v3224 = vrot.slane %v3202, %v3223
  %v3226 = vunpack.c.l.s4 1966171168
  %v3227 = vunpack.c.0.s8 %v3226
  %v3228 = vlaneseq
  %v3229 = vshrl.u32 %v3228, 7
  %v3230 = vsub.s32 %v3227, %v3229
  %v3231 = vrot.slane %v3203, %v3230
  %v3232 = vcombine.low %v3210, %v3224
  %v3233 = vcombine.low %v3217, %v3231
  %v3234 = vcombine.low %v2895, %v2896
  %v3235 = vcombine.low %v2897, %v2898
  %v3236 = vcombine.low %v2899, %v2900
  %v3237 = vcombine.low %v2901, %v2902
  %v3239 = vunpack.c.l.s4 1966171168
  %v3240 = vunpack.c.0.s8 %v3239
  %v3241 = vlaneseq
  %v3242 = vshrl.u32 %v3241, 7
  %v3243 = vsub.s32 %v3240, %v3242
  %v3244 = vrot.slane %v3234, %v3243
  %v3246 = vunpack.c.l.s4 1966171168
  %v3247 = vunpack.c.0.s8 %v3246
  %v3248 = vlaneseq
  %v3249 = vshrl.u32 %v3248, 7
  %v3250 = vsub.s32 %v3247, %v3249
  %v3251 = vrot.slane %v3235, %v3250
  %v3253 = vunpack.c.l.s4 1966171168
  %v3254 = vunpack.c.0.s8 %v3253
  %v3255 = vlaneseq
  %v3256 = vshrl.u32 %v3255, 7
  %v3257 = vsub.s32 %v3254, %v3256
  %v3258 = vrot.slane %v3236, %v3257
  %v3260 = vunpack.c.l.s4 1966171168
  %v3261 = vunpack.c.0.s8 %v3260
  %v3262 = vlaneseq
  %v3263 = vshrl.u32 %v3262, 7
  %v3264 = vsub.s32 %v3261, %v3263
  %v3265 = vrot.slane %v3237, %v3264
  %v3266 = vcombine.low %v3244, %v3251
  %v3267 = vcombine.high %v3244, %v3251
  %v3268 = vcombine.low %v3258, %v3265
  %v3269 = vcombine.high %v3258, %v3265
  %v3271 = vunpack.c.l.s4 1966171168
  %v3272 = vunpack.c.0.s8 %v3271
  %v3273 = vlaneseq
  %v3274 = vshrl.u32 %v3273, 7
  %v3275 = vsub.s32 %v3272, %v3274
  %v3276 = vrot.slane %v3266, %v3275
  %v3278 = vunpack.c.l.s4 1966171168
  %v3279 = vunpack.c.0.s8 %v3278
  %v3280 = vlaneseq
  %v3281 = vshrl.u32 %v3280, 7
  %v3282 = vsub.s32 %v3279, %v3281
  %v3283 = vrot.slane %v3267, %v3282
  %v3285 = vunpack.c.l.s4 1966171168
  %v3286 = vunpack.c.0.s8 %v3285
  %v3287 = vlaneseq
  %v3288 = vshrl.u32 %v3287, 7
  %v3289 = vsub.s32 %v3286, %v3288
  %v3290 = vrot.slane %v3268, %v3289
  %v3292 = vunpack.c.l.s4 1966171168
  %v3293 = vunpack.c.0.s8 %v3292
  %v3294 = vlaneseq
  %v3295 = vshrl.u32 %v3294, 7
  %v3296 = vsub.s32 %v3293, %v3295
  %v3297 = vrot.slane %v3269, %v3296
  %v3298 = vcombine.low %v3276, %v3290
  %v3299 = vcombine.low %v3283, %v3297
  %v3301 = vunpack.c.l.s4 1966171168
  %v3302 = vunpack.c.0.s8 %v3301
  %v3303 = vlaneseq
  %v3304 = vshrl.u32 %v3303, 7
  %v3305 = vsub.s32 %v3302, %v3304
  %v3306 = vrot.slane %v2903, %v3305
  %v3307 = vcombine.high %v3306, %v3306
  %v3309 = vunpack.c.l.s4 1966171168
  %v3310 = vunpack.c.0.s8 %v3309
  %v3311 = vlaneseq
  %v3312 = vshrl.u32 %v3311, 7
  %v3313 = vsub.s32 %v3310, %v3312
  %v3314 = vrot.slane %v3306, %v3313
  %v3316 = vunpack.c.l.s4 1966171168
  %v3317 = vunpack.c.0.s8 %v3316
  %v3318 = vlaneseq
  %v3319 = vshrl.u32 %v3318, 7
  %v3320 = vsub.s32 %v3317, %v3319
  %v3321 = vrot.slane %v3307, %v3320
  %v3368 = vunpack.c.l.b16 %v2816
  %v3369 = vunpack.c.l.b16 %v2817
  %v3370 = vunpack.c.l.b16 %v2818
  %v3371 = vunpack.c.l.b16 %v2819
  %v3372 = vunpack.c.l.b16 %v2820
  %v3373 = vunpack.c.l.b16 %v2821
  %v3374 = vunpack.c.l.b16 %v2822
  %v3375 = vunpack.c.l.b16 %v2823
  %v3376 = vunpack.c.l.b16 %v2824
  %v3377 = vunpack.c.l.b16 %v2825
  %v3378 = vunpack.c.l.b16 %v2826
  %v3379 = vunpack.c.l.b16 %v2827
  %v3380 = vunpack.c.l.b16 %v2828
  %v3381 = vunpack.c.l.b16 %v2829
  %v3382 = vunpack.c.l.b16 %v2830
  %v3383 = vunpack.c.l.b16 %v2831
  %v3384 = vunpack.c.l.b16 %v2832
  %v3385 = vunpack.c.l.b16 %v2833
  %v3386 = vunpack.c.l.b16 %v2834
  %v3387 = vunpack.c.l.b16 %v2835
  %v3388 = vunpack.c.l.b16 %v2836
  %v3389 = vunpack.c.l.b16 %v2837
  %v3390 = vunpack.c.l.b16 %v2838
  %v3391 = vunpack.c.l.b16 %v2839
  %v3392 = vunpack.c.l.b16 %v2840
  %v3393 = vunpack.c.l.b16 %v2841
  %v3394 = vunpack.c.l.b16 %v2842
  %v3395 = vunpack.c.l.b16 %v2843
  %v3396 = vunpack.c.l.b16 %v2844
  %v3397 = vunpack.c.l.b16 %v2845
  %v3398 = vunpack.c.l.b16 %v2846
  %v3399 = vunpack.c.l.b16 %v2847
  %v3400 = vpack.c.b16 %v3369, %v3368
  %v3401 = vpack.c.b16 %v3371, %v3370
  %v3402 = vpack.c.b16 %v3373, %v3372
  %v3403 = vpack.c.b16 %v3375, %v3374
  %v3404 = vpack.c.b16 %v3377, %v3376
  %v3405 = vpack.c.b16 %v3379, %v3378
  %v3406 = vpack.c.b16 %v3381, %v3380
  %v3407 = vpack.c.b16 %v3383, %v3382
  %v3408 = vpack.c.b16 %v3385, %v3384
  %v3409 = vpack.c.b16 %v3387, %v3386
  %v3410 = vpack.c.b16 %v3389, %v3388
  %v3411 = vpack.c.b16 %v3391, %v3390
  %v3412 = vpack.c.b16 %v3393, %v3392
  %v3413 = vpack.c.b16 %v3395, %v3394
  %v3414 = vpack.c.b16 %v3397, %v3396
  %v3415 = vpack.c.b16 %v3399, %v3398
  %3432 = vmatprep.subr.bf16.mxu0 0
  %3433 = vmatpush1.bf16.msra.mxu0 %v3400
  %3434 = vmatprep.subr.bf16.mxu0 0
  %3435 = vmatpush1.bf16.msra.mxu0 %v3401
  %3436 = vmatprep.subr.bf16.mxu0 0
  %3437 = vmatpush1.bf16.msra.mxu0 %v3402
  %3438 = vmatprep.subr.bf16.mxu0 0
  %3439 = vmatpush1.bf16.msra.mxu0 %v3403
  %3440 = vmatprep.subr.bf16.mxu0 0
  %3441 = vmatpush1.bf16.msra.mxu0 %v3404
  %3442 = vmatprep.subr.bf16.mxu0 0
  %3443 = vmatpush1.bf16.msra.mxu0 %v3405
  %3444 = vmatprep.subr.bf16.mxu0 0
  %3445 = vmatpush1.bf16.msra.mxu0 %v3406
  %3446 = vmatprep.subr.bf16.mxu0 0
  %3447 = vmatpush1.bf16.msra.mxu0 %v3407
  %3448 = vmatprep.subr.bf16.mxu0 0
  %3449 = vmatpush1.bf16.msra.mxu0 %v3408
  %3450 = vmatprep.subr.bf16.mxu0 0
  %3451 = vmatpush1.bf16.msra.mxu0 %v3409
  %3452 = vmatprep.subr.bf16.mxu0 0
  %3453 = vmatpush1.bf16.msra.mxu0 %v3410
  %3454 = vmatprep.subr.bf16.mxu0 0
  %3455 = vmatpush1.bf16.msra.mxu0 %v3411
  %3456 = vmatprep.subr.bf16.mxu0 0
  %3457 = vmatpush1.bf16.msra.mxu0 %v3412
  %3458 = vmatprep.subr.bf16.mxu0 0
  %3459 = vmatpush1.bf16.msra.mxu0 %v3413
  %3460 = vmatprep.subr.bf16.mxu0 0
  %3461 = vmatpush1.bf16.msra.mxu0 %v3414
  %3462 = vmatprep.subr.bf16.mxu0 0
  %3463 = vmatpush1.bf16.msra.mxu0 %v3415
  %3464 = vmatprep.mubr.bf16.mxu0 %v2969
  %3465 = vmatmul.mubr.bf16.gmra.mrb[0].mxu0 %v2968
  %v3466 = vpop.f32.mrb[0].mxu0
  %v3467 = vadd.f32 %v2853, %v3466
  %v3468 = vpop.f32.mrb[0].mxu0
  %v3469 = vpop.f32.mrb[0].mxu0
  %v3470 = vadd.f32 %v2853, %v3469
  %v3471 = vpop.f32.mrb[0].mxu0
  %3472 = vmatprep.mubr.bf16.mxu0 %v3035
  %3473 = vmatmul.mubr.bf16.gmra.mrb[0].mxu0 %v3034
  %v3474 = vpop.f32.mrb[0].mxu0
  %v3475 = vadd.f32 %v2853, %v3474
  %v3476 = vpop.f32.mrb[0].mxu0
  %v3477 = vpop.f32.mrb[0].mxu0
  %v3478 = vadd.f32 %v2853, %v3477
  %v3479 = vpop.f32.mrb[0].mxu0
  %3480 = vmatprep.mubr.bf16.mxu0 %v3101
  %3481 = vmatmul.mubr.bf16.gmra.mrb[0].mxu0 %v3100
  %v3482 = vpop.f32.mrb[0].mxu0
  %v3483 = vadd.f32 %v2853, %v3482
  %v3484 = vpop.f32.mrb[0].mxu0
  %v3485 = vpop.f32.mrb[0].mxu0
  %v3486 = vadd.f32 %v2853, %v3485
  %v3487 = vpop.f32.mrb[0].mxu0
  %3488 = vmatprep.mubr.bf16.mxu0 %v3167
  %3489 = vmatmul.mubr.bf16.gmra.mrb[0].mxu0 %v3166
  %v3490 = vpop.f32.mrb[0].mxu0
  %v3491 = vadd.f32 %v2853, %v3490
  %v3492 = vpop.f32.mrb[0].mxu0
  %v3493 = vpop.f32.mrb[0].mxu0
  %v3494 = vadd.f32 %v2853, %v3493
  %v3495 = vpop.f32.mrb[0].mxu0
  %3496 = vmatprep.mubr.bf16.mxu0 %v3233
  %3497 = vmatmul.mubr.bf16.gmra.mrb[0].mxu0 %v3232
  %v3498 = vpop.f32.mrb[0].mxu0
  %v3499 = vadd.f32 %v2853, %v3498
  %v3500 = vpop.f32.mrb[0].mxu0
  %v3501 = vpop.f32.mrb[0].mxu0
  %v3502 = vadd.f32 %v2853, %v3501
  %v3503 = vpop.f32.mrb[0].mxu0
  %3504 = vmatprep.mubr.bf16.mxu0 %v3299
  %3505 = vmatmul.mubr.bf16.gmra.mrb[0].mxu0 %v3298
  %v3506 = vpop.f32.mrb[0].mxu0
  %v3507 = vadd.f32 %v2853, %v3506
  %v3508 = vpop.f32.mrb[0].mxu0
  %v3509 = vpop.f32.mrb[0].mxu0
  %v3510 = vadd.f32 %v2853, %v3509
  %v3511 = vpop.f32.mrb[0].mxu0
  %3512 = vmatprep.mubr.bf16.mxu0 %v3321
  %3513 = vmatmul.mubr.bf16.gmra.mrb[0].mxu0 %v3314
  %v3514 = vpop.f32.mrb[0].mxu0
  %v3515 = vadd.f32 %v2853, %v3514
  %v3516 = vpop.f32.mrb[0].mxu0
  %v3517 = vpop.f32.mrb[0].mxu0
  %v3518 = vpop.f32.mrb[0].mxu0
  %3519 = vdwg.mxu0
  %v3520 = vtanh.pop %v3467
  %v3521 = vtanh.pop %v3470
  %v3522 = vtanh.pop %v3475
  %v3523 = vtanh.pop %v3478
  %v3524 = vtanh.pop %v3483
  %v3525 = vtanh.pop %v3486
  %v3526 = vtanh.pop %v3491
  %v3527 = vtanh.pop %v3494
  %v3528 = vtanh.pop %v3499
  %v3529 = vtanh.pop %v3502
  %v3530 = vtanh.pop %v3507
  %v3531 = vtanh.pop %v3510
  %v3532 = vtanh.pop %v3515
  %v3546 = vcombine.high %v3520, %v3520
  %v3548 = vunpack.c.l.s4 1966171168
  %v3549 = vunpack.c.0.s8 %v3548
  %v3550 = vlaneseq
  %v3551 = vshrl.u32 %v3550, 7
  %v3552 = vsub.s32 %v3549, %v3551
  %v3553 = vrot.slane %v3520, %v3552
  %v3555 = vunpack.c.l.s4 1966171168
  %v3556 = vunpack.c.0.s8 %v3555
  %v3557 = vlaneseq
  %v3558 = vshrl.u32 %v3557, 7
  %v3559 = vsub.s32 %v3556, %v3558
  %v3560 = vrot.slane %v3546, %v3559
  %v3561 = vcombine.high %v3553, %v3553
  %v3562 = vcombine.high %v3560, %v3560
  %v3564 = vunpack.c.l.s4 1966171168
  %v3565 = vunpack.c.0.s8 %v3564
  %v3566 = vlaneseq
  %v3567 = vshrl.u32 %v3566, 7
  %v3568 = vsub.s32 %v3565, %v3567
  %v3569 = vrot.slane %v3553, %v3568
  %v3571 = vunpack.c.l.s4 1966171168
  %v3572 = vunpack.c.0.s8 %v3571
  %v3573 = vlaneseq
  %v3574 = vshrl.u32 %v3573, 7
  %v3575 = vsub.s32 %v3572, %v3574
  %v3576 = vrot.slane %v3560, %v3575
  %v3578 = vunpack.c.l.s4 1966171168
  %v3579 = vunpack.c.0.s8 %v3578
  %v3580 = vlaneseq
  %v3581 = vshrl.u32 %v3580, 7
  %v3582 = vsub.s32 %v3579, %v3581
  %v3583 = vrot.slane %v3561, %v3582
  %v3585 = vunpack.c.l.s4 1966171168
  %v3586 = vunpack.c.0.s8 %v3585
  %v3587 = vlaneseq
  %v3588 = vshrl.u32 %v3587, 7
  %v3589 = vsub.s32 %v3586, %v3588
  %v3590 = vrot.slane %v3562, %v3589
  %v3591 = vcombine.high %v3569, %v3569
  %v3592 = vcombine.high %v3576, %v3576
  %v3593 = vcombine.high %v3583, %v3583
  %v3594 = vcombine.high %v3590, %v3590
  %v3595 = vcombine.high %v3521, %v3521
  %v3597 = vunpack.c.l.s4 1966171168
  %v3598 = vunpack.c.0.s8 %v3597
  %v3599 = vlaneseq
  %v3600 = vshrl.u32 %v3599, 7
  %v3601 = vsub.s32 %v3598, %v3600
  %v3602 = vrot.slane %v3521, %v3601
  %v3604 = vunpack.c.l.s4 1966171168
  %v3605 = vunpack.c.0.s8 %v3604
  %v3606 = vlaneseq
  %v3607 = vshrl.u32 %v3606, 7
  %v3608 = vsub.s32 %v3605, %v3607
  %v3609 = vrot.slane %v3595, %v3608
  %v3610 = vcombine.high %v3602, %v3602
  %v3611 = vcombine.high %v3609, %v3609
  %v3613 = vunpack.c.l.s4 1966171168
  %v3614 = vunpack.c.0.s8 %v3613
  %v3615 = vlaneseq
  %v3616 = vshrl.u32 %v3615, 7
  %v3617 = vsub.s32 %v3614, %v3616
  %v3618 = vrot.slane %v3602, %v3617
  %v3620 = vunpack.c.l.s4 1966171168
  %v3621 = vunpack.c.0.s8 %v3620
  %v3622 = vlaneseq
  %v3623 = vshrl.u32 %v3622, 7
  %v3624 = vsub.s32 %v3621, %v3623
  %v3625 = vrot.slane %v3609, %v3624
  %v3627 = vunpack.c.l.s4 1966171168
  %v3628 = vunpack.c.0.s8 %v3627
  %v3629 = vlaneseq
  %v3630 = vshrl.u32 %v3629, 7
  %v3631 = vsub.s32 %v3628, %v3630
  %v3632 = vrot.slane %v3610, %v3631
  %v3634 = vunpack.c.l.s4 1966171168
  %v3635 = vunpack.c.0.s8 %v3634
  %v3636 = vlaneseq
  %v3637 = vshrl.u32 %v3636, 7
  %v3638 = vsub.s32 %v3635, %v3637
  %v3639 = vrot.slane %v3611, %v3638
  %v3640 = vcombine.high %v3618, %v3618
  %v3641 = vcombine.high %v3625, %v3625
  %v3642 = vcombine.high %v3632, %v3632
  %v3643 = vcombine.high %v3639, %v3639
  %v3644 = vcombine.high %v3522, %v3522
  %v3646 = vunpack.c.l.s4 1966171168
  %v3647 = vunpack.c.0.s8 %v3646
  %v3648 = vlaneseq
  %v3649 = vshrl.u32 %v3648, 7
  %v3650 = vsub.s32 %v3647, %v3649
  %v3651 = vrot.slane %v3522, %v3650
  %v3653 = vunpack.c.l.s4 1966171168
  %v3654 = vunpack.c.0.s8 %v3653
  %v3655 = vlaneseq
  %v3656 = vshrl.u32 %v3655, 7
  %v3657 = vsub.s32 %v3654, %v3656
  %v3658 = vrot.slane %v3644, %v3657
  %v3659 = vcombine.high %v3651, %v3651
  %v3660 = vcombine.high %v3658, %v3658
  %v3662 = vunpack.c.l.s4 1966171168
  %v3663 = vunpack.c.0.s8 %v3662
  %v3664 = vlaneseq
  %v3665 = vshrl.u32 %v3664, 7
  %v3666 = vsub.s32 %v3663, %v3665
  %v3667 = vrot.slane %v3651, %v3666
  %v3669 = vunpack.c.l.s4 1966171168
  %v3670 = vunpack.c.0.s8 %v3669
  %v3671 = vlaneseq
  %v3672 = vshrl.u32 %v3671, 7
  %v3673 = vsub.s32 %v3670, %v3672
  %v3674 = vrot.slane %v3658, %v3673
  %v3676 = vunpack.c.l.s4 1966171168
  %v3677 = vunpack.c.0.s8 %v3676
  %v3678 = vlaneseq
  %v3679 = vshrl.u32 %v3678, 7
  %v3680 = vsub.s32 %v3677, %v3679
  %v3681 = vrot.slane %v3659, %v3680
  %v3683 = vunpack.c.l.s4 1966171168
  %v3684 = vunpack.c.0.s8 %v3683
  %v3685 = vlaneseq
  %v3686 = vshrl.u32 %v3685, 7
  %v3687 = vsub.s32 %v3684, %v3686
  %v3688 = vrot.slane %v3660, %v3687
  %v3689 = vcombine.high %v3667, %v3667
  %v3690 = vcombine.high %v3674, %v3674
  %v3691 = vcombine.high %v3681, %v3681
  %v3692 = vcombine.high %v3688, %v3688
  %v3693 = vcombine.high %v3523, %v3523
  %v3695 = vunpack.c.l.s4 1966171168
  %v3696 = vunpack.c.0.s8 %v3695
  %v3697 = vlaneseq
  %v3698 = vshrl.u32 %v3697, 7
  %v3699 = vsub.s32 %v3696, %v3698
  %v3700 = vrot.slane %v3523, %v3699
  %v3702 = vunpack.c.l.s4 1966171168
  %v3703 = vunpack.c.0.s8 %v3702
  %v3704 = vlaneseq
  %v3705 = vshrl.u32 %v3704, 7
  %v3706 = vsub.s32 %v3703, %v3705
  %v3707 = vrot.slane %v3693, %v3706
  %v3708 = vcombine.high %v3700, %v3700
  %v3709 = vcombine.high %v3707, %v3707
  %v3711 = vunpack.c.l.s4 1966171168
  %v3712 = vunpack.c.0.s8 %v3711
  %v3713 = vlaneseq
  %v3714 = vshrl.u32 %v3713, 7
  %v3715 = vsub.s32 %v3712, %v3714
  %v3716 = vrot.slane %v3700, %v3715
  %v3718 = vunpack.c.l.s4 1966171168
  %v3719 = vunpack.c.0.s8 %v3718
  %v3720 = vlaneseq
  %v3721 = vshrl.u32 %v3720, 7
  %v3722 = vsub.s32 %v3719, %v3721
  %v3723 = vrot.slane %v3707, %v3722
  %v3725 = vunpack.c.l.s4 1966171168
  %v3726 = vunpack.c.0.s8 %v3725
  %v3727 = vlaneseq
  %v3728 = vshrl.u32 %v3727, 7
  %v3729 = vsub.s32 %v3726, %v3728
  %v3730 = vrot.slane %v3708, %v3729
  %v3732 = vunpack.c.l.s4 1966171168
  %v3733 = vunpack.c.0.s8 %v3732
  %v3734 = vlaneseq
  %v3735 = vshrl.u32 %v3734, 7
  %v3736 = vsub.s32 %v3733, %v3735
  %v3737 = vrot.slane %v3709, %v3736
  %v3738 = vcombine.high %v3716, %v3716
  %v3739 = vcombine.high %v3723, %v3723
  %v3740 = vcombine.high %v3730, %v3730
  %v3741 = vcombine.high %v3737, %v3737
  %v3742 = vcombine.high %v3524, %v3524
  %v3744 = vunpack.c.l.s4 1966171168
  %v3745 = vunpack.c.0.s8 %v3744
  %v3746 = vlaneseq
  %v3747 = vshrl.u32 %v3746, 7
  %v3748 = vsub.s32 %v3745, %v3747
  %v3749 = vrot.slane %v3524, %v3748
  %v3751 = vunpack.c.l.s4 1966171168
  %v3752 = vunpack.c.0.s8 %v3751
  %v3753 = vlaneseq
  %v3754 = vshrl.u32 %v3753, 7
  %v3755 = vsub.s32 %v3752, %v3754
  %v3756 = vrot.slane %v3742, %v3755
  %v3757 = vcombine.high %v3749, %v3749
  %v3758 = vcombine.high %v3756, %v3756
  %v3760 = vunpack.c.l.s4 1966171168
  %v3761 = vunpack.c.0.s8 %v3760
  %v3762 = vlaneseq
  %v3763 = vshrl.u32 %v3762, 7
  %v3764 = vsub.s32 %v3761, %v3763
  %v3765 = vrot.slane %v3749, %v3764
  %v3767 = vunpack.c.l.s4 1966171168
  %v3768 = vunpack.c.0.s8 %v3767
  %v3769 = vlaneseq
  %v3770 = vshrl.u32 %v3769, 7
  %v3771 = vsub.s32 %v3768, %v3770
  %v3772 = vrot.slane %v3756, %v3771
  %v3774 = vunpack.c.l.s4 1966171168
  %v3775 = vunpack.c.0.s8 %v3774
  %v3776 = vlaneseq
  %v3777 = vshrl.u32 %v3776, 7
  %v3778 = vsub.s32 %v3775, %v3777
  %v3779 = vrot.slane %v3757, %v3778
  %v3781 = vunpack.c.l.s4 1966171168
  %v3782 = vunpack.c.0.s8 %v3781
  %v3783 = vlaneseq
  %v3784 = vshrl.u32 %v3783, 7
  %v3785 = vsub.s32 %v3782, %v3784
  %v3786 = vrot.slane %v3758, %v3785
  %v3787 = vcombine.high %v3765, %v3765
  %v3788 = vcombine.high %v3772, %v3772
  %v3789 = vcombine.high %v3779, %v3779
  %v3790 = vcombine.high %v3786, %v3786
  %v3791 = vcombine.high %v3525, %v3525
  %v3793 = vunpack.c.l.s4 1966171168
  %v3794 = vunpack.c.0.s8 %v3793
  %v3795 = vlaneseq
  %v3796 = vshrl.u32 %v3795, 7
  %v3797 = vsub.s32 %v3794, %v3796
  %v3798 = vrot.slane %v3525, %v3797
  %v3800 = vunpack.c.l.s4 1966171168
  %v3801 = vunpack.c.0.s8 %v3800
  %v3802 = vlaneseq
  %v3803 = vshrl.u32 %v3802, 7
  %v3804 = vsub.s32 %v3801, %v3803
  %v3805 = vrot.slane %v3791, %v3804
  %v3806 = vcombine.high %v3798, %v3798
  %v3807 = vcombine.high %v3805, %v3805
  %v3809 = vunpack.c.l.s4 1966171168
  %v3810 = vunpack.c.0.s8 %v3809
  %v3811 = vlaneseq
  %v3812 = vshrl.u32 %v3811, 7
  %v3813 = vsub.s32 %v3810, %v3812
  %v3814 = vrot.slane %v3798, %v3813
  %v3816 = vunpack.c.l.s4 1966171168
  %v3817 = vunpack.c.0.s8 %v3816
  %v3818 = vlaneseq
  %v3819 = vshrl.u32 %v3818, 7
  %v3820 = vsub.s32 %v3817, %v3819
  %v3821 = vrot.slane %v3805, %v3820
  %v3823 = vunpack.c.l.s4 1966171168
  %v3824 = vunpack.c.0.s8 %v3823
  %v3825 = vlaneseq
  %v3826 = vshrl.u32 %v3825, 7
  %v3827 = vsub.s32 %v3824, %v3826
  %v3828 = vrot.slane %v3806, %v3827
  %v3830 = vunpack.c.l.s4 1966171168
  %v3831 = vunpack.c.0.s8 %v3830
  %v3832 = vlaneseq
  %v3833 = vshrl.u32 %v3832, 7
  %v3834 = vsub.s32 %v3831, %v3833
  %v3835 = vrot.slane %v3807, %v3834
  %v3836 = vcombine.high %v3814, %v3814
  %v3837 = vcombine.high %v3821, %v3821
  %v3838 = vcombine.high %v3828, %v3828
  %v3839 = vcombine.high %v3835, %v3835
  %v3840 = vcombine.high %v3526, %v3526
  %v3842 = vunpack.c.l.s4 1966171168
  %v3843 = vunpack.c.0.s8 %v3842
  %v3844 = vlaneseq
  %v3845 = vshrl.u32 %v3844, 7
  %v3846 = vsub.s32 %v3843, %v3845
  %v3847 = vrot.slane %v3526, %v3846
  %v3849 = vunpack.c.l.s4 1966171168
  %v3850 = vunpack.c.0.s8 %v3849
  %v3851 = vlaneseq
  %v3852 = vshrl.u32 %v3851, 7
  %v3853 = vsub.s32 %v3850, %v3852
  %v3854 = vrot.slane %v3840, %v3853
  %v3855 = vcombine.high %v3847, %v3847
  %v3856 = vcombine.high %v3854, %v3854
  %v3858 = vunpack.c.l.s4 1966171168
  %v3859 = vunpack.c.0.s8 %v3858
  %v3860 = vlaneseq
  %v3861 = vshrl.u32 %v3860, 7
  %v3862 = vsub.s32 %v3859, %v3861
  %v3863 = vrot.slane %v3847, %v3862
  %v3865 = vunpack.c.l.s4 1966171168
  %v3866 = vunpack.c.0.s8 %v3865
  %v3867 = vlaneseq
  %v3868 = vshrl.u32 %v3867, 7
  %v3869 = vsub.s32 %v3866, %v3868
  %v3870 = vrot.slane %v3854, %v3869
  %v3872 = vunpack.c.l.s4 1966171168
  %v3873 = vunpack.c.0.s8 %v3872
  %v3874 = vlaneseq
  %v3875 = vshrl.u32 %v3874, 7
  %v3876 = vsub.s32 %v3873, %v3875
  %v3877 = vrot.slane %v3855, %v3876
  %v3879 = vunpack.c.l.s4 1966171168
  %v3880 = vunpack.c.0.s8 %v3879
  %v3881 = vlaneseq
  %v3882 = vshrl.u32 %v3881, 7
  %v3883 = vsub.s32 %v3880, %v3882
  %v3884 = vrot.slane %v3856, %v3883
  %v3885 = vcombine.high %v3863, %v3863
  %v3886 = vcombine.high %v3870, %v3870
  %v3887 = vcombine.high %v3877, %v3877
  %v3888 = vcombine.high %v3884, %v3884
  %v3889 = vcombine.high %v3527, %v3527
  %v3891 = vunpack.c.l.s4 1966171168
  %v3892 = vunpack.c.0.s8 %v3891
  %v3893 = vlaneseq
  %v3894 = vshrl.u32 %v3893, 7
  %v3895 = vsub.s32 %v3892, %v3894
  %v3896 = vrot.slane %v3527, %v3895
  %v3898 = vunpack.c.l.s4 1966171168
  %v3899 = vunpack.c.0.s8 %v3898
  %v3900 = vlaneseq
  %v3901 = vshrl.u32 %v3900, 7
  %v3902 = vsub.s32 %v3899, %v3901
  %v3903 = vrot.slane %v3889, %v3902
  %v3904 = vcombine.high %v3896, %v3896
  %v3905 = vcombine.high %v3903, %v3903
  %v3907 = vunpack.c.l.s4 1966171168
  %v3908 = vunpack.c.0.s8 %v3907
  %v3909 = vlaneseq
  %v3910 = vshrl.u32 %v3909, 7
  %v3911 = vsub.s32 %v3908, %v3910
  %v3912 = vrot.slane %v3896, %v3911
  %v3914 = vunpack.c.l.s4 1966171168
  %v3915 = vunpack.c.0.s8 %v3914
  %v3916 = vlaneseq
  %v3917 = vshrl.u32 %v3916, 7
  %v3918 = vsub.s32 %v3915, %v3917
  %v3919 = vrot.slane %v3903, %v3918
  %v3921 = vunpack.c.l.s4 1966171168
  %v3922 = vunpack.c.0.s8 %v3921
  %v3923 = vlaneseq
  %v3924 = vshrl.u32 %v3923, 7
  %v3925 = vsub.s32 %v3922, %v3924
  %v3926 = vrot.slane %v3904, %v3925
  %v3928 = vunpack.c.l.s4 1966171168
  %v3929 = vunpack.c.0.s8 %v3928
  %v3930 = vlaneseq
  %v3931 = vshrl.u32 %v3930, 7
  %v3932 = vsub.s32 %v3929, %v3931
  %v3933 = vrot.slane %v3905, %v3932
  %v3934 = vcombine.high %v3912, %v3912
  %v3935 = vcombine.high %v3919, %v3919
  %v3936 = vcombine.high %v3926, %v3926
  %v3937 = vcombine.high %v3933, %v3933
  %v3938 = vcombine.high %v3528, %v3528
  %v3940 = vunpack.c.l.s4 1966171168
  %v3941 = vunpack.c.0.s8 %v3940
  %v3942 = vlaneseq
  %v3943 = vshrl.u32 %v3942, 7
  %v3944 = vsub.s32 %v3941, %v3943
  %v3945 = vrot.slane %v3528, %v3944
  %v3947 = vunpack.c.l.s4 1966171168
  %v3948 = vunpack.c.0.s8 %v3947
  %v3949 = vlaneseq
  %v3950 = vshrl.u32 %v3949, 7
  %v3951 = vsub.s32 %v3948, %v3950
  %v3952 = vrot.slane %v3938, %v3951
  %v3953 = vcombine.high %v3945, %v3945
  %v3954 = vcombine.high %v3952, %v3952
  %v3956 = vunpack.c.l.s4 1966171168
  %v3957 = vunpack.c.0.s8 %v3956
  %v3958 = vlaneseq
  %v3959 = vshrl.u32 %v3958, 7
  %v3960 = vsub.s32 %v3957, %v3959
  %v3961 = vrot.slane %v3945, %v3960
  %v3963 = vunpack.c.l.s4 1966171168
  %v3964 = vunpack.c.0.s8 %v3963
  %v3965 = vlaneseq
  %v3966 = vshrl.u32 %v3965, 7
  %v3967 = vsub.s32 %v3964, %v3966
  %v3968 = vrot.slane %v3952, %v3967
  %v3970 = vunpack.c.l.s4 1966171168
  %v3971 = vunpack.c.0.s8 %v3970
  %v3972 = vlaneseq
  %v3973 = vshrl.u32 %v3972, 7
  %v3974 = vsub.s32 %v3971, %v3973
  %v3975 = vrot.slane %v3953, %v3974
  %v3977 = vunpack.c.l.s4 1966171168
  %v3978 = vunpack.c.0.s8 %v3977
  %v3979 = vlaneseq
  %v3980 = vshrl.u32 %v3979, 7
  %v3981 = vsub.s32 %v3978, %v3980
  %v3982 = vrot.slane %v3954, %v3981
  %v3983 = vcombine.high %v3961, %v3961
  %v3984 = vcombine.high %v3968, %v3968
  %v3985 = vcombine.high %v3975, %v3975
  %v3986 = vcombine.high %v3982, %v3982
  %v3987 = vcombine.high %v3529, %v3529
  %v3989 = vunpack.c.l.s4 1966171168
  %v3990 = vunpack.c.0.s8 %v3989
  %v3991 = vlaneseq
  %v3992 = vshrl.u32 %v3991, 7
  %v3993 = vsub.s32 %v3990, %v3992
  %v3994 = vrot.slane %v3529, %v3993
  %v3996 = vunpack.c.l.s4 1966171168
  %v3997 = vunpack.c.0.s8 %v3996
  %v3998 = vlaneseq
  %v3999 = vshrl.u32 %v3998, 7
  %v4000 = vsub.s32 %v3997, %v3999
  %v4001 = vrot.slane %v3987, %v4000
  %v4002 = vcombine.high %v3994, %v3994
  %v4003 = vcombine.high %v4001, %v4001
  %v4005 = vunpack.c.l.s4 1966171168
  %v4006 = vunpack.c.0.s8 %v4005
  %v4007 = vlaneseq
  %v4008 = vshrl.u32 %v4007, 7
  %v4009 = vsub.s32 %v4006, %v4008
  %v4010 = vrot.slane %v3994, %v4009
  %v4012 = vunpack.c.l.s4 1966171168
  %v4013 = vunpack.c.0.s8 %v4012
  %v4014 = vlaneseq
  %v4015 = vshrl.u32 %v4014, 7
  %v4016 = vsub.s32 %v4013, %v4015
  %v4017 = vrot.slane %v4001, %v4016
  %v4019 = vunpack.c.l.s4 1966171168
  %v4020 = vunpack.c.0.s8 %v4019
  %v4021 = vlaneseq
  %v4022 = vshrl.u32 %v4021, 7
  %v4023 = vsub.s32 %v4020, %v4022
  %v4024 = vrot.slane %v4002, %v4023
  %v4026 = vunpack.c.l.s4 1966171168
  %v4027 = vunpack.c.0.s8 %v4026
  %v4028 = vlaneseq
  %v4029 = vshrl.u32 %v4028, 7
  %v4030 = vsub.s32 %v4027, %v4029
  %v4031 = vrot.slane %v4003, %v4030
  %v4032 = vcombine.high %v4010, %v4010
  %v4033 = vcombine.high %v4017, %v4017
  %v4034 = vcombine.high %v4024, %v4024
  %v4035 = vcombine.high %v4031, %v4031
  %v4036 = vcombine.high %v3530, %v3530
  %v4038 = vunpack.c.l.s4 1966171168
  %v4039 = vunpack.c.0.s8 %v4038
  %v4040 = vlaneseq
  %v4041 = vshrl.u32 %v4040, 7
  %v4042 = vsub.s32 %v4039, %v4041
  %v4043 = vrot.slane %v3530, %v4042
  %v4045 = vunpack.c.l.s4 1966171168
  %v4046 = vunpack.c.0.s8 %v4045
  %v4047 = vlaneseq
  %v4048 = vshrl.u32 %v4047, 7
  %v4049 = vsub.s32 %v4046, %v4048
  %v4050 = vrot.slane %v4036, %v4049
  %v4051 = vcombine.high %v4043, %v4043
  %v4052 = vcombine.high %v4050, %v4050
  %v4054 = vunpack.c.l.s4 1966171168
  %v4055 = vunpack.c.0.s8 %v4054
  %v4056 = vlaneseq
  %v4057 = vshrl.u32 %v4056, 7
  %v4058 = vsub.s32 %v4055, %v4057
  %v4059 = vrot.slane %v4043, %v4058
  %v4061 = vunpack.c.l.s4 1966171168
  %v4062 = vunpack.c.0.s8 %v4061
  %v4063 = vlaneseq
  %v4064 = vshrl.u32 %v4063, 7
  %v4065 = vsub.s32 %v4062, %v4064
  %v4066 = vrot.slane %v4050, %v4065
  %v4068 = vunpack.c.l.s4 1966171168
  %v4069 = vunpack.c.0.s8 %v4068
  %v4070 = vlaneseq
  %v4071 = vshrl.u32 %v4070, 7
  %v4072 = vsub.s32 %v4069, %v4071
  %v4073 = vrot.slane %v4051, %v4072
  %v4075 = vunpack.c.l.s4 1966171168
  %v4076 = vunpack.c.0.s8 %v4075
  %v4077 = vlaneseq
  %v4078 = vshrl.u32 %v4077, 7
  %v4079 = vsub.s32 %v4076, %v4078
  %v4080 = vrot.slane %v4052, %v4079
  %v4081 = vcombine.high %v4059, %v4059
  %v4082 = vcombine.high %v4066, %v4066
  %v4083 = vcombine.high %v4073, %v4073
  %v4084 = vcombine.high %v4080, %v4080
  %v4085 = vcombine.high %v3531, %v3531
  %v4087 = vunpack.c.l.s4 1966171168
  %v4088 = vunpack.c.0.s8 %v4087
  %v4089 = vlaneseq
  %v4090 = vshrl.u32 %v4089, 7
  %v4091 = vsub.s32 %v4088, %v4090
  %v4092 = vrot.slane %v3531, %v4091
  %v4094 = vunpack.c.l.s4 1966171168
  %v4095 = vunpack.c.0.s8 %v4094
  %v4096 = vlaneseq
  %v4097 = vshrl.u32 %v4096, 7
  %v4098 = vsub.s32 %v4095, %v4097
  %v4099 = vrot.slane %v4085, %v4098
  %v4100 = vcombine.high %v4092, %v4092
  %v4101 = vcombine.high %v4099, %v4099
  %v4103 = vunpack.c.l.s4 1966171168
  %v4104 = vunpack.c.0.s8 %v4103
  %v4105 = vlaneseq
  %v4106 = vshrl.u32 %v4105, 7
  %v4107 = vsub.s32 %v4104, %v4106
  %v4108 = vrot.slane %v4092, %v4107
  %v4110 = vunpack.c.l.s4 1966171168
  %v4111 = vunpack.c.0.s8 %v4110
  %v4112 = vlaneseq
  %v4113 = vshrl.u32 %v4112, 7
  %v4114 = vsub.s32 %v4111, %v4113
  %v4115 = vrot.slane %v4099, %v4114
  %v4117 = vunpack.c.l.s4 1966171168
  %v4118 = vunpack.c.0.s8 %v4117
  %v4119 = vlaneseq
  %v4120 = vshrl.u32 %v4119, 7
  %v4121 = vsub.s32 %v4118, %v4120
  %v4122 = vrot.slane %v4100, %v4121
  %v4124 = vunpack.c.l.s4 1966171168
  %v4125 = vunpack.c.0.s8 %v4124
  %v4126 = vlaneseq
  %v4127 = vshrl.u32 %v4126, 7
  %v4128 = vsub.s32 %v4125, %v4127
  %v4129 = vrot.slane %v4101, %v4128
  %v4130 = vcombine.high %v4108, %v4108
  %v4131 = vcombine.high %v4115, %v4115
  %v4132 = vcombine.high %v4122, %v4122
  %v4133 = vcombine.high %v4129, %v4129
  %v4135 = vunpack.c.l.s4 1966171168
  %v4136 = vunpack.c.0.s8 %v4135
  %v4137 = vlaneseq
  %v4138 = vshrl.u32 %v4137, 7
  %v4139 = vsub.s32 %v4136, %v4138
  %v4140 = vrot.slane %v3532, %v4139
  %v4141 = vcombine.high %v4140, %v4140
  %v4143 = vunpack.c.l.s4 1966171168
  %v4144 = vunpack.c.0.s8 %v4143
  %v4145 = vlaneseq
  %v4146 = vshrl.u32 %v4145, 7
  %v4147 = vsub.s32 %v4144, %v4146
  %v4148 = vrot.slane %v4140, %v4147
  %v4150 = vunpack.c.l.s4 1966171168
  %v4151 = vunpack.c.0.s8 %v4150
  %v4152 = vlaneseq
  %v4153 = vshrl.u32 %v4152, 7
  %v4154 = vsub.s32 %v4151, %v4153
  %v4155 = vrot.slane %v4141, %v4154
  %v4156 = vcombine.low %v3569, %v3583
  %v4157 = vcombine.low %v3591, %v3593
  %v4158 = vcombine.low %v3576, %v3590
  %v4160 = vunpack.c.l.s4 1966171168
  %v4161 = vunpack.c.0.s8 %v4160
  %v4162 = vlaneseq
  %v4163 = vshrl.u32 %v4162, 7
  %v4164 = vsub.s32 %v4161, %v4163
  %v4165 = vrot.slane %v4156, %v4164
  %v4167 = vunpack.c.l.s4 1966171168
  %v4168 = vunpack.c.0.s8 %v4167
  %v4169 = vlaneseq
  %v4170 = vshrl.u32 %v4169, 7
  %v4171 = vsub.s32 %v4168, %v4170
  %v4172 = vrot.slane %v4157, %v4171
  %v4174 = vunpack.c.l.s4 1966171168
  %v4175 = vunpack.c.0.s8 %v4174
  %v4176 = vlaneseq
  %v4177 = vshrl.u32 %v4176, 7
  %v4178 = vsub.s32 %v4175, %v4177
  %v4179 = vrot.slane %v4158, %v4178
  %v4181 = vunpack.c.l.s4 1966171168
  %v4182 = vunpack.c.0.s8 %v4181
  %v4183 = vlaneseq
  %v4184 = vshrl.u32 %v4183, 7
  %v4185 = vsub.s32 %v4182, %v4184
  %v4186 = vrot.slane %v3592, %v4185
  %v4187 = vcombine.low %v4165, %v4172
  %v4188 = vcombine.low %v4179, %v4186
  %v4190 = vunpack.c.l.s4 1966171168
  %v4191 = vunpack.c.0.s8 %v4190
  %v4192 = vlaneseq
  %v4193 = vshrl.u32 %v4192, 7
  %v4194 = vsub.s32 %v4191, %v4193
  %v4195 = vrot.slane %v4187, %v4194
  %v4197 = vunpack.c.l.s4 1966171168
  %v4198 = vunpack.c.0.s8 %v4197
  %v4199 = vlaneseq
  %v4200 = vshrl.u32 %v4199, 7
  %v4201 = vsub.s32 %v4198, %v4200
  %v4202 = vrot.slane %v4188, %v4201
  %v4203 = vcombine.low %v4195, %v4202
  %v4204 = vcombine.low %v3594, %v3618
  %v4205 = vcombine.low %v3632, %v3640
  %v4206 = vcombine.low %v3642, %v3625
  %v4208 = vunpack.c.l.s4 1966171168
  %v4209 = vunpack.c.0.s8 %v4208
  %v4210 = vlaneseq
  %v4211 = vshrl.u32 %v4210, 7
  %v4212 = vsub.s32 %v4209, %v4211
  %v4213 = vrot.slane %v4204, %v4212
  %v4215 = vunpack.c.l.s4 1966171168
  %v4216 = vunpack.c.0.s8 %v4215
  %v4217 = vlaneseq
  %v4218 = vshrl.u32 %v4217, 7
  %v4219 = vsub.s32 %v4216, %v4218
  %v4220 = vrot.slane %v4205, %v4219
  %v4222 = vunpack.c.l.s4 1966171168
  %v4223 = vunpack.c.0.s8 %v4222
  %v4224 = vlaneseq
  %v4225 = vshrl.u32 %v4224, 7
  %v4226 = vsub.s32 %v4223, %v4225
  %v4227 = vrot.slane %v4206, %v4226
  %v4229 = vunpack.c.l.s4 1966171168
  %v4230 = vunpack.c.0.s8 %v4229
  %v4231 = vlaneseq
  %v4232 = vshrl.u32 %v4231, 7
  %v4233 = vsub.s32 %v4230, %v4232
  %v4234 = vrot.slane %v3639, %v4233
  %v4235 = vcombine.low %v4213, %v4220
  %v4236 = vcombine.low %v4227, %v4234
  %v4238 = vunpack.c.l.s4 1966171168
  %v4239 = vunpack.c.0.s8 %v4238
  %v4240 = vlaneseq
  %v4241 = vshrl.u32 %v4240, 7
  %v4242 = vsub.s32 %v4239, %v4241
  %v4243 = vrot.slane %v4235, %v4242
  %v4245 = vunpack.c.l.s4 1966171168
  %v4246 = vunpack.c.0.s8 %v4245
  %v4247 = vlaneseq
  %v4248 = vshrl.u32 %v4247, 7
  %v4249 = vsub.s32 %v4246, %v4248
  %v4250 = vrot.slane %v4236, %v4249
  %v4251 = vcombine.low %v4243, %v4250
  %v4252 = vcombine.low %v3641, %v3643
  %v4253 = vcombine.low %v3667, %v3681
  %v4254 = vcombine.low %v3689, %v3691
  %v4256 = vunpack.c.l.s4 1966171168
  %v4257 = vunpack.c.0.s8 %v4256
  %v4258 = vlaneseq
  %v4259 = vshrl.u32 %v4258, 7
  %v4260 = vsub.s32 %v4257, %v4259
  %v4261 = vrot.slane %v4252, %v4260
  %v4263 = vunpack.c.l.s4 1966171168
  %v4264 = vunpack.c.0.s8 %v4263
  %v4265 = vlaneseq
  %v4266 = vshrl.u32 %v4265, 7
  %v4267 = vsub.s32 %v4264, %v4266
  %v4268 = vrot.slane %v4253, %v4267
  %v4270 = vunpack.c.l.s4 1966171168
  %v4271 = vunpack.c.0.s8 %v4270
  %v4272 = vlaneseq
  %v4273 = vshrl.u32 %v4272, 7
  %v4274 = vsub.s32 %v4271, %v4273
  %v4275 = vrot.slane %v4254, %v4274
  %v4277 = vunpack.c.l.s4 1966171168
  %v4278 = vunpack.c.0.s8 %v4277
  %v4279 = vlaneseq
  %v4280 = vshrl.u32 %v4279, 7
  %v4281 = vsub.s32 %v4278, %v4280
  %v4282 = vrot.slane %v3674, %v4281
  %v4283 = vcombine.low %v4261, %v4268
  %v4284 = vcombine.low %v4275, %v4282
  %v4286 = vunpack.c.l.s4 1966171168
  %v4287 = vunpack.c.0.s8 %v4286
  %v4288 = vlaneseq
  %v4289 = vshrl.u32 %v4288, 7
  %v4290 = vsub.s32 %v4287, %v4289
  %v4291 = vrot.slane %v4283, %v4290
  %v4293 = vunpack.c.l.s4 1966171168
  %v4294 = vunpack.c.0.s8 %v4293
  %v4295 = vlaneseq
  %v4296 = vshrl.u32 %v4295, 7
  %v4297 = vsub.s32 %v4294, %v4296
  %v4298 = vrot.slane %v4284, %v4297
  %v4299 = vcombine.low %v4291, %v4298
  %v4300 = vcombine.low %v3688, %v3690
  %v4301 = vcombine.low %v3692, %v3716
  %v4302 = vcombine.low %v3730, %v3738
  %v4304 = vunpack.c.l.s4 1966171168
  %v4305 = vunpack.c.0.s8 %v4304
  %v4306 = vlaneseq
  %v4307 = vshrl.u32 %v4306, 7
  %v4308 = vsub.s32 %v4305, %v4307
  %v4309 = vrot.slane %v4300, %v4308
  %v4311 = vunpack.c.l.s4 1966171168
  %v4312 = vunpack.c.0.s8 %v4311
  %v4313 = vlaneseq
  %v4314 = vshrl.u32 %v4313, 7
  %v4315 = vsub.s32 %v4312, %v4314
  %v4316 = vrot.slane %v4301, %v4315
  %v4318 = vunpack.c.l.s4 1966171168
  %v4319 = vunpack.c.0.s8 %v4318
  %v4320 = vlaneseq
  %v4321 = vshrl.u32 %v4320, 7
  %v4322 = vsub.s32 %v4319, %v4321
  %v4323 = vrot.slane %v4302, %v4322
  %v4325 = vunpack.c.l.s4 1966171168
  %v4326 = vunpack.c.0.s8 %v4325
  %v4327 = vlaneseq
  %v4328 = vshrl.u32 %v4327, 7
  %v4329 = vsub.s32 %v4326, %v4328
  %v4330 = vrot.slane %v3740, %v4329
  %v4331 = vcombine.low %v4309, %v4316
  %v4332 = vcombine.low %v4323, %v4330
  %v4334 = vunpack.c.l.s4 1966171168
  %v4335 = vunpack.c.0.s8 %v4334
  %v4336 = vlaneseq
  %v4337 = vshrl.u32 %v4336, 7
  %v4338 = vsub.s32 %v4335, %v4337
  %v4339 = vrot.slane %v4331, %v4338
  %v4341 = vunpack.c.l.s4 1966171168
  %v4342 = vunpack.c.0.s8 %v4341
  %v4343 = vlaneseq
  %v4344 = vshrl.u32 %v4343, 7
  %v4345 = vsub.s32 %v4342, %v4344
  %v4346 = vrot.slane %v4332, %v4345
  %v4347 = vcombine.low %v4339, %v4346
  %v4348 = vcombine.low %v3723, %v3737
  %v4349 = vcombine.low %v3739, %v3741
  %v4350 = vcombine.low %v3765, %v3779
  %v4352 = vunpack.c.l.s4 1966171168
  %v4353 = vunpack.c.0.s8 %v4352
  %v4354 = vlaneseq
  %v4355 = vshrl.u32 %v4354, 7
  %v4356 = vsub.s32 %v4353, %v4355
  %v4357 = vrot.slane %v4348, %v4356
  %v4359 = vunpack.c.l.s4 1966171168
  %v4360 = vunpack.c.0.s8 %v4359
  %v4361 = vlaneseq
  %v4362 = vshrl.u32 %v4361, 7
  %v4363 = vsub.s32 %v4360, %v4362
  %v4364 = vrot.slane %v4349, %v4363
  %v4366 = vunpack.c.l.s4 1966171168
  %v4367 = vunpack.c.0.s8 %v4366
  %v4368 = vlaneseq
  %v4369 = vshrl.u32 %v4368, 7
  %v4370 = vsub.s32 %v4367, %v4369
  %v4371 = vrot.slane %v4350, %v4370
  %v4373 = vunpack.c.l.s4 1966171168
  %v4374 = vunpack.c.0.s8 %v4373
  %v4375 = vlaneseq
  %v4376 = vshrl.u32 %v4375, 7
  %v4377 = vsub.s32 %v4374, %v4376
  %v4378 = vrot.slane %v3787, %v4377
  %v4379 = vcombine.low %v4357, %v4364
  %v4380 = vcombine.low %v4371, %v4378
  %v4382 = vunpack.c.l.s4 1966171168
  %v4383 = vunpack.c.0.s8 %v4382
  %v4384 = vlaneseq
  %v4385 = vshrl.u32 %v4384, 7
  %v4386 = vsub.s32 %v4383, %v4385
  %v4387 = vrot.slane %v4379, %v4386
  %v4389 = vunpack.c.l.s4 1966171168
  %v4390 = vunpack.c.0.s8 %v4389
  %v4391 = vlaneseq
  %v4392 = vshrl.u32 %v4391, 7
  %v4393 = vsub.s32 %v4390, %v4392
  %v4394 = vrot.slane %v4380, %v4393
  %v4395 = vcombine.low %v4387, %v4394
  %v4396 = vcombine.low %v3789, %v3772
  %v4397 = vcombine.low %v3786, %v3788
  %v4398 = vcombine.low %v3790, %v3814
  %v4400 = vunpack.c.l.s4 1966171168
  %v4401 = vunpack.c.0.s8 %v4400
  %v4402 = vlaneseq
  %v4403 = vshrl.u32 %v4402, 7
  %v4404 = vsub.s32 %v4401, %v4403
  %v4405 = vrot.slane %v4396, %v4404
  %v4407 = vunpack.c.l.s4 1966171168
  %v4408 = vunpack.c.0.s8 %v4407
  %v4409 = vlaneseq
  %v4410 = vshrl.u32 %v4409, 7
  %v4411 = vsub.s32 %v4408, %v4410
  %v4412 = vrot.slane %v4397, %v4411
  %v4414 = vunpack.c.l.s4 1966171168
  %v4415 = vunpack.c.0.s8 %v4414
  %v4416 = vlaneseq
  %v4417 = vshrl.u32 %v4416, 7
  %v4418 = vsub.s32 %v4415, %v4417
  %v4419 = vrot.slane %v4398, %v4418
  %v4421 = vunpack.c.l.s4 1966171168
  %v4422 = vunpack.c.0.s8 %v4421
  %v4423 = vlaneseq
  %v4424 = vshrl.u32 %v4423, 7
  %v4425 = vsub.s32 %v4422, %v4424
  %v4426 = vrot.slane %v3828, %v4425
  %v4427 = vcombine.low %v4405, %v4412
  %v4428 = vcombine.low %v4419, %v4426
  %v4430 = vunpack.c.l.s4 1966171168
  %v4431 = vunpack.c.0.s8 %v4430
  %v4432 = vlaneseq
  %v4433 = vshrl.u32 %v4432, 7
  %v4434 = vsub.s32 %v4431, %v4433
  %v4435 = vrot.slane %v4427, %v4434
  %v4437 = vunpack.c.l.s4 1966171168
  %v4438 = vunpack.c.0.s8 %v4437
  %v4439 = vlaneseq
  %v4440 = vshrl.u32 %v4439, 7
  %v4441 = vsub.s32 %v4438, %v4440
  %v4442 = vrot.slane %v4428, %v4441
  %v4443 = vcombine.low %v4435, %v4442
  %v4444 = vcombine.low %v3836, %v3838
  %v4445 = vcombine.low %v3821, %v3835
  %v4446 = vcombine.low %v3837, %v3839
  %v4448 = vunpack.c.l.s4 1966171168
  %v4449 = vunpack.c.0.s8 %v4448
  %v4450 = vlaneseq
  %v4451 = vshrl.u32 %v4450, 7
  %v4452 = vsub.s32 %v4449, %v4451
  %v4453 = vrot.slane %v4444, %v4452
  %v4455 = vunpack.c.l.s4 1966171168
  %v4456 = vunpack.c.0.s8 %v4455
  %v4457 = vlaneseq
  %v4458 = vshrl.u32 %v4457, 7
  %v4459 = vsub.s32 %v4456, %v4458
  %v4460 = vrot.slane %v4445, %v4459
  %v4462 = vunpack.c.l.s4 1966171168
  %v4463 = vunpack.c.0.s8 %v4462
  %v4464 = vlaneseq
  %v4465 = vshrl.u32 %v4464, 7
  %v4466 = vsub.s32 %v4463, %v4465
  %v4467 = vrot.slane %v4446, %v4466
  %v4469 = vunpack.c.l.s4 1966171168
  %v4470 = vunpack.c.0.s8 %v4469
  %v4471 = vlaneseq
  %v4472 = vshrl.u32 %v4471, 7
  %v4473 = vsub.s32 %v4470, %v4472
  %v4474 = vrot.slane %v3863, %v4473
  %v4475 = vcombine.low %v4453, %v4460
  %v4476 = vcombine.low %v4467, %v4474
  %v4478 = vunpack.c.l.s4 1966171168
  %v4479 = vunpack.c.0.s8 %v4478
  %v4480 = vlaneseq
  %v4481 = vshrl.u32 %v4480, 7
  %v4482 = vsub.s32 %v4479, %v4481
  %v4483 = vrot.slane %v4475, %v4482
  %v4485 = vunpack.c.l.s4 1966171168
  %v4486 = vunpack.c.0.s8 %v4485
  %v4487 = vlaneseq
  %v4488 = vshrl.u32 %v4487, 7
  %v4489 = vsub.s32 %v4486, %v4488
  %v4490 = vrot.slane %v4476, %v4489
  %v4491 = vcombine.low %v4483, %v4490
  %v4492 = vcombine.low %v3877, %v3885
  %v4493 = vcombine.low %v3887, %v3870
  %v4494 = vcombine.low %v3884, %v3886
  %v4496 = vunpack.c.l.s4 1966171168
  %v4497 = vunpack.c.0.s8 %v4496
  %v4498 = vlaneseq
  %v4499 = vshrl.u32 %v4498, 7
  %v4500 = vsub.s32 %v4497, %v4499
  %v4501 = vrot.slane %v4492, %v4500
  %v4503 = vunpack.c.l.s4 1966171168
  %v4504 = vunpack.c.0.s8 %v4503
  %v4505 = vlaneseq
  %v4506 = vshrl.u32 %v4505, 7
  %v4507 = vsub.s32 %v4504, %v4506
  %v4508 = vrot.slane %v4493, %v4507
  %v4510 = vunpack.c.l.s4 1966171168
  %v4511 = vunpack.c.0.s8 %v4510
  %v4512 = vlaneseq
  %v4513 = vshrl.u32 %v4512, 7
  %v4514 = vsub.s32 %v4511, %v4513
  %v4515 = vrot.slane %v4494, %v4514
  %v4517 = vunpack.c.l.s4 1966171168
  %v4518 = vunpack.c.0.s8 %v4517
  %v4519 = vlaneseq
  %v4520 = vshrl.u32 %v4519, 7
  %v4521 = vsub.s32 %v4518, %v4520
  %v4522 = vrot.slane %v3888, %v4521
  %v4523 = vcombine.low %v4501, %v4508
  %v4524 = vcombine.low %v4515, %v4522
  %v4526 = vunpack.c.l.s4 1966171168
  %v4527 = vunpack.c.0.s8 %v4526
  %v4528 = vlaneseq
  %v4529 = vshrl.u32 %v4528, 7
  %v4530 = vsub.s32 %v4527, %v4529
  %v4531 = vrot.slane %v4523, %v4530
  %v4533 = vunpack.c.l.s4 1966171168
  %v4534 = vunpack.c.0.s8 %v4533
  %v4535 = vlaneseq
  %v4536 = vshrl.u32 %v4535, 7
  %v4537 = vsub.s32 %v4534, %v4536
  %v4538 = vrot.slane %v4524, %v4537
  %v4539 = vcombine.low %v4531, %v4538
  %v4540 = vcombine.low %v3912, %v3926
  %v4541 = vcombine.low %v3934, %v3936
  %v4542 = vcombine.low %v3919, %v3933
  %v4544 = vunpack.c.l.s4 1966171168
  %v4545 = vunpack.c.0.s8 %v4544
  %v4546 = vlaneseq
  %v4547 = vshrl.u32 %v4546, 7
  %v4548 = vsub.s32 %v4545, %v4547
  %v4549 = vrot.slane %v4540, %v4548
  %v4551 = vunpack.c.l.s4 1966171168
  %v4552 = vunpack.c.0.s8 %v4551
  %v4553 = vlaneseq
  %v4554 = vshrl.u32 %v4553, 7
  %v4555 = vsub.s32 %v4552, %v4554
  %v4556 = vrot.slane %v4541, %v4555
  %v4558 = vunpack.c.l.s4 1966171168
  %v4559 = vunpack.c.0.s8 %v4558
  %v4560 = vlaneseq
  %v4561 = vshrl.u32 %v4560, 7
  %v4562 = vsub.s32 %v4559, %v4561
  %v4563 = vrot.slane %v4542, %v4562
  %v4565 = vunpack.c.l.s4 1966171168
  %v4566 = vunpack.c.0.s8 %v4565
  %v4567 = vlaneseq
  %v4568 = vshrl.u32 %v4567, 7
  %v4569 = vsub.s32 %v4566, %v4568
  %v4570 = vrot.slane %v3935, %v4569
  %v4571 = vcombine.low %v4549, %v4556
  %v4572 = vcombine.low %v4563, %v4570
  %v4574 = vunpack.c.l.s4 1966171168
  %v4575 = vunpack.c.0.s8 %v4574
  %v4576 = vlaneseq
  %v4577 = vshrl.u32 %v4576, 7
  %v4578 = vsub.s32 %v4575, %v4577
  %v4579 = vrot.slane %v4571, %v4578
  %v4581 = vunpack.c.l.s4 1966171168
  %v4582 = vunpack.c.0.s8 %v4581
  %v4583 = vlaneseq
  %v4584 = vshrl.u32 %v4583, 7
  %v4585 = vsub.s32 %v4582, %v4584
  %v4586 = vrot.slane %v4572, %v4585
  %v4587 = vcombine.low %v4579, %v4586
  %v4588 = vcombine.low %v3937, %v3961
  %v4589 = vcombine.low %v3975, %v3983
  %v4590 = vcombine.low %v3985, %v3968
  %v4592 = vunpack.c.l.s4 1966171168
  %v4593 = vunpack.c.0.s8 %v4592
  %v4594 = vlaneseq
  %v4595 = vshrl.u32 %v4594, 7
  %v4596 = vsub.s32 %v4593, %v4595
  %v4597 = vrot.slane %v4588, %v4596
  %v4599 = vunpack.c.l.s4 1966171168
  %v4600 = vunpack.c.0.s8 %v4599
  %v4601 = vlaneseq
  %v4602 = vshrl.u32 %v4601, 7
  %v4603 = vsub.s32 %v4600, %v4602
  %v4604 = vrot.slane %v4589, %v4603
  %v4606 = vunpack.c.l.s4 1966171168
  %v4607 = vunpack.c.0.s8 %v4606
  %v4608 = vlaneseq
  %v4609 = vshrl.u32 %v4608, 7
  %v4610 = vsub.s32 %v4607, %v4609
  %v4611 = vrot.slane %v4590, %v4610
  %v4613 = vunpack.c.l.s4 1966171168
  %v4614 = vunpack.c.0.s8 %v4613
  %v4615 = vlaneseq
  %v4616 = vshrl.u32 %v4615, 7
  %v4617 = vsub.s32 %v4614, %v4616
  %v4618 = vrot.slane %v3982, %v4617
  %v4619 = vcombine.low %v4597, %v4604
  %v4620 = vcombine.low %v4611, %v4618
  %v4622 = vunpack.c.l.s4 1966171168
  %v4623 = vunpack.c.0.s8 %v4622
  %v4624 = vlaneseq
  %v4625 = vshrl.u32 %v4624, 7
  %v4626 = vsub.s32 %v4623, %v4625
  %v4627 = vrot.slane %v4619, %v4626
  %v4629 = vunpack.c.l.s4 1966171168
  %v4630 = vunpack.c.0.s8 %v4629
  %v4631 = vlaneseq
  %v4632 = vshrl.u32 %v4631, 7
  %v4633 = vsub.s32 %v4630, %v4632
  %v4634 = vrot.slane %v4620, %v4633
  %v4635 = vcombine.low %v4627, %v4634
  %v4636 = vcombine.low %v3984, %v3986
  %v4637 = vcombine.low %v4010, %v4024
  %v4638 = vcombine.low %v4032, %v4034
  %v4640 = vunpack.c.l.s4 1966171168
  %v4641 = vunpack.c.0.s8 %v4640
  %v4642 = vlaneseq
  %v4643 = vshrl.u32 %v4642, 7
  %v4644 = vsub.s32 %v4641, %v4643
  %v4645 = vrot.slane %v4636, %v4644
  %v4647 = vunpack.c.l.s4 1966171168
  %v4648 = vunpack.c.0.s8 %v4647
  %v4649 = vlaneseq
  %v4650 = vshrl.u32 %v4649, 7
  %v4651 = vsub.s32 %v4648, %v4650
  %v4652 = vrot.slane %v4637, %v4651
  %v4654 = vunpack.c.l.s4 1966171168
  %v4655 = vunpack.c.0.s8 %v4654
  %v4656 = vlaneseq
  %v4657 = vshrl.u32 %v4656, 7
  %v4658 = vsub.s32 %v4655, %v4657
  %v4659 = vrot.slane %v4638, %v4658
  %v4661 = vunpack.c.l.s4 1966171168
  %v4662 = vunpack.c.0.s8 %v4661
  %v4663 = vlaneseq
  %v4664 = vshrl.u32 %v4663, 7
  %v4665 = vsub.s32 %v4662, %v4664
  %v4666 = vrot.slane %v4017, %v4665
  %v4667 = vcombine.low %v4645, %v4652
  %v4668 = vcombine.low %v4659, %v4666
  %v4670 = vunpack.c.l.s4 1966171168
  %v4671 = vunpack.c.0.s8 %v4670
  %v4672 = vlaneseq
  %v4673 = vshrl.u32 %v4672, 7
  %v4674 = vsub.s32 %v4671, %v4673
  %v4675 = vrot.slane %v4667, %v4674
  %v4677 = vunpack.c.l.s4 1966171168
  %v4678 = vunpack.c.0.s8 %v4677
  %v4679 = vlaneseq
  %v4680 = vshrl.u32 %v4679, 7
  %v4681 = vsub.s32 %v4678, %v4680
  %v4682 = vrot.slane %v4668, %v4681
  %v4683 = vcombine.low %v4675, %v4682
  %v4684 = vcombine.low %v4031, %v4033
  %v4685 = vcombine.low %v4035, %v4059
  %v4686 = vcombine.low %v4073, %v4081
  %v4688 = vunpack.c.l.s4 1966171168
  %v4689 = vunpack.c.0.s8 %v4688
  %v4690 = vlaneseq
  %v4691 = vshrl.u32 %v4690, 7
  %v4692 = vsub.s32 %v4689, %v4691
  %v4693 = vrot.slane %v4684, %v4692
  %v4695 = vunpack.c.l.s4 1966171168
  %v4696 = vunpack.c.0.s8 %v4695
  %v4697 = vlaneseq
  %v4698 = vshrl.u32 %v4697, 7
  %v4699 = vsub.s32 %v4696, %v4698
  %v4700 = vrot.slane %v4685, %v4699
  %v4702 = vunpack.c.l.s4 1966171168
  %v4703 = vunpack.c.0.s8 %v4702
  %v4704 = vlaneseq
  %v4705 = vshrl.u32 %v4704, 7
  %v4706 = vsub.s32 %v4703, %v4705
  %v4707 = vrot.slane %v4686, %v4706
  %v4709 = vunpack.c.l.s4 1966171168
  %v4710 = vunpack.c.0.s8 %v4709
  %v4711 = vlaneseq
  %v4712 = vshrl.u32 %v4711, 7
  %v4713 = vsub.s32 %v4710, %v4712
  %v4714 = vrot.slane %v4083, %v4713
  %v4715 = vcombine.low %v4693, %v4700
  %v4716 = vcombine.low %v4707, %v4714
  %v4718 = vunpack.c.l.s4 1966171168
  %v4719 = vunpack.c.0.s8 %v4718
  %v4720 = vlaneseq
  %v4721 = vshrl.u32 %v4720, 7
  %v4722 = vsub.s32 %v4719, %v4721
  %v4723 = vrot.slane %v4715, %v4722
  %v4725 = vunpack.c.l.s4 1966171168
  %v4726 = vunpack.c.0.s8 %v4725
  %v4727 = vlaneseq
  %v4728 = vshrl.u32 %v4727, 7
  %v4729 = vsub.s32 %v4726, %v4728
  %v4730 = vrot.slane %v4716, %v4729
  %v4731 = vcombine.low %v4723, %v4730
  %v4732 = vcombine.low %v4066, %v4080
  %v4733 = vcombine.low %v4082, %v4084
  %v4734 = vcombine.low %v4108, %v4122
  %v4736 = vunpack.c.l.s4 1966171168
  %v4737 = vunpack.c.0.s8 %v4736
  %v4738 = vlaneseq
  %v4739 = vshrl.u32 %v4738, 7
  %v4740 = vsub.s32 %v4737, %v4739
  %v4741 = vrot.slane %v4732, %v4740
  %v4743 = vunpack.c.l.s4 1966171168
  %v4744 = vunpack.c.0.s8 %v4743
  %v4745 = vlaneseq
  %v4746 = vshrl.u32 %v4745, 7
  %v4747 = vsub.s32 %v4744, %v4746
  %v4748 = vrot.slane %v4733, %v4747
  %v4750 = vunpack.c.l.s4 1966171168
  %v4751 = vunpack.c.0.s8 %v4750
  %v4752 = vlaneseq
  %v4753 = vshrl.u32 %v4752, 7
  %v4754 = vsub.s32 %v4751, %v4753
  %v4755 = vrot.slane %v4734, %v4754
  %v4757 = vunpack.c.l.s4 1966171168
  %v4758 = vunpack.c.0.s8 %v4757
  %v4759 = vlaneseq
  %v4760 = vshrl.u32 %v4759, 7
  %v4761 = vsub.s32 %v4758, %v4760
  %v4762 = vrot.slane %v4130, %v4761
  %v4763 = vcombine.low %v4741, %v4748
  %v4764 = vcombine.low %v4755, %v4762
  %v4766 = vunpack.c.l.s4 1966171168
  %v4767 = vunpack.c.0.s8 %v4766
  %v4768 = vlaneseq
  %v4769 = vshrl.u32 %v4768, 7
  %v4770 = vsub.s32 %v4767, %v4769
  %v4771 = vrot.slane %v4763, %v4770
  %v4773 = vunpack.c.l.s4 1966171168
  %v4774 = vunpack.c.0.s8 %v4773
  %v4775 = vlaneseq
  %v4776 = vshrl.u32 %v4775, 7
  %v4777 = vsub.s32 %v4774, %v4776
  %v4778 = vrot.slane %v4764, %v4777
  %v4779 = vcombine.low %v4771, %v4778
  %v4780 = vcombine.low %v4132, %v4115
  %v4781 = vcombine.low %v4129, %v4131
  %v4782 = vcombine.low %v4133, %v4148
  %v4784 = vunpack.c.l.s4 1966171168
  %v4785 = vunpack.c.0.s8 %v4784
  %v4786 = vlaneseq
  %v4787 = vshrl.u32 %v4786, 7
  %v4788 = vsub.s32 %v4785, %v4787
  %v4789 = vrot.slane %v4780, %v4788
  %v4791 = vunpack.c.l.s4 1966171168
  %v4792 = vunpack.c.0.s8 %v4791
  %v4793 = vlaneseq
  %v4794 = vshrl.u32 %v4793, 7
  %v4795 = vsub.s32 %v4792, %v4794
  %v4796 = vrot.slane %v4781, %v4795
  %v4798 = vunpack.c.l.s4 1966171168
  %v4799 = vunpack.c.0.s8 %v4798
  %v4800 = vlaneseq
  %v4801 = vshrl.u32 %v4800, 7
  %v4802 = vsub.s32 %v4799, %v4801
  %v4803 = vrot.slane %v4782, %v4802
  %v4805 = vunpack.c.l.s4 1966171168
  %v4806 = vunpack.c.0.s8 %v4805
  %v4807 = vlaneseq
  %v4808 = vshrl.u32 %v4807, 7
  %v4809 = vsub.s32 %v4806, %v4808
  %v4810 = vrot.slane %v4155, %v4809
  %v4811 = vcombine.low %v4789, %v4796
  %v4812 = vcombine.low %v4803, %v4810
  %v4814 = vunpack.c.l.s4 1966171168
  %v4815 = vunpack.c.0.s8 %v4814
  %v4816 = vlaneseq
  %v4817 = vshrl.u32 %v4816, 7
  %v4818 = vsub.s32 %v4815, %v4817
  %v4819 = vrot.slane %v4811, %v4818
  %v4821 = vunpack.c.l.s4 1966171168
  %v4822 = vunpack.c.0.s8 %v4821
  %v4823 = vlaneseq
  %v4824 = vshrl.u32 %v4823, 7
  %v4825 = vsub.s32 %v4822, %v4824
  %v4826 = vrot.slane %v4812, %v4825
  %v4827 = vcombine.low %v4819, %v4826
  %vm4842 = vcmask 129024
  %4843 = vst.msk [vmem:[%s5] sm:$0x7f] %vm4842, %v4203
  %4844 = vst.msk [vmem:[%s5 + $0x8] sm:$0x7f] %vm4842, %v4251
  %4845 = vst.msk [vmem:[%s5 + $0x10] sm:$0x7f] %vm4842, %v4299
  %4846 = vst.msk [vmem:[%s5 + $0x18] sm:$0x7f] %vm4842, %v4347
  %4847 = vst.msk [vmem:[%s5 + $0x20] sm:$0x7f] %vm4842, %v4395
  %4848 = vst.msk [vmem:[%s5 + $0x28] sm:$0x7f] %vm4842, %v4443
  %4849 = vst.msk [vmem:[%s5 + $0x30] sm:$0x7f] %vm4842, %v4491
  %4850 = vst.msk [vmem:[%s5 + $0x38] sm:$0x7f] %vm4842, %v4539
  %4851 = vst.msk [vmem:[%s5 + $0x40] sm:$0x7f] %vm4842, %v4587
  %4852 = vst.msk [vmem:[%s5 + $0x48] sm:$0x7f] %vm4842, %v4635
  %4853 = vst.msk [vmem:[%s5 + $0x50] sm:$0x7f] %vm4842, %v4683
  %4854 = vst.msk [vmem:[%s5 + $0x58] sm:$0x7f] %vm4842, %v4731
  %4855 = vst.msk [vmem:[%s5 + $0x60] sm:$0x7f] %vm4842, %v4779
  %4856 = vst.msk [vmem:[%s5 + $0x68] sm:$0x7f] %vm4842, %v4827
  // Predicated region
  $region22: #{vae_forward.5} parent=0 // pred_check
    _
  $region23: #{vae_forward.5} parent=0 // pred_check_branch
    %4858 = sbr.rel (0) target = $region25
  $region24: #{vae_forward.5} parent=0 // pred_region
    _
  $region25: #{vae_forward.5} parent=0 // pred_fallthru
    _
  // Predicated region
  $region26: #{vae_forward.5} parent=0 // pred_check
    _
  $region27: #{vae_forward.5} parent=0 // pred_check_branch
    %4860 = sbr.rel (0) target = $region29
  $region28: #{vae_forward.5} parent=0 // pred_region
    _
  $region29: #{vae_forward.5} parent=0 // pred_fallthru
    _

</llo_original>
